<compile_context>
chip_gen: v5e
topology: v5e:2x2
jax: 0.10.0
libtpu: 0.0.40
codegen_flags: <defaults>
</compile_context>

<pallas_src>
import functools

import jax
import jax.numpy as jnp
from jax.experimental import pallas as pl
from jax.experimental.pallas import tpu as pltpu


def fpn_kernel(x_ref, w1_ref, b1_ref, w2_ref, b2_ref, w3_ref, b3_ref, o_ref):
    # Layer 1: bf16 MXU matmul (K = d_in, small), f32 accumulate; bias + ReLU in f32.
    h = jnp.dot(x_ref[...], w1_ref[...], preferred_element_type=jnp.float32)
    h = jnp.maximum(h + b1_ref[...], 0.0)
    # Layer 2: bf16 MXU matmul, f32 accumulate; bias + ReLU in f32.
    h = jnp.dot(h.astype(jnp.bfloat16), w2_ref[...],
                preferred_element_type=jnp.float32)
    h = jnp.maximum(h + b2_ref[...], 0.0)
    # Output head (out_features == 1): VPU broadcast-multiply + XLU row reduce
    # (keeps the MXU free); store lane-dense with batch on the lane axis (unmasked vst).
    y = jnp.sum(h * w3_ref[...], axis=-1) + b3_ref[0]
    o_ref[...] = y[None, None, :]


def _round_up(x, m):
    return ((x + m - 1) // m) * m


def _tensorcores_per_chip():
    """2 TensorCores on v7x, 1 on v5e/v6e. Defaults to 1 if detection fails."""
    try:
        kind = jax.devices()[0].device_kind.lower()
    except Exception:
        return 1
    return 2 if ("v7" in kind or "7x" in kind) else 1


def _select_batch_tile(B, batch_tile, num_cores):
    """MXU-aligned batch tile. Single big tile on 1-TC chips; >= num_cores tiles on v7x."""
    B_ceil = _round_up(max(B, 1), 128)
    bt = max(128, (min(batch_tile, B_ceil) // 128) * 128)
    if num_cores >= 2 and B_ceil >= 256:
        per_core = max(128, ((B_ceil // num_cores) // 128) * 128)
        bt = min(bt, per_core)
    return bt


def prepare_fpn_params(params):
    """One-time conversion to kernel-ready form. Call OUTSIDE the per-step path.

    Takes [(W1, b1), (W2, b2), (W3, b3)] with W as (in, out); returns a dict of
    bf16 weights / f32 biases in the exact shapes the kernel consumes.
    """
    (w1, b1), (w2, b2), (w3, b3) = params
    h2 = w2.shape[1]
    assert w3.shape[1] == 1, "output head must be Linear(->1)"
    return {
        "w1": jnp.asarray(w1, jnp.bfloat16),              # (d_in, h1)
        "b1": jnp.asarray(b1, jnp.float32).reshape(1, -1),  # (1, h1)
        "w2": jnp.asarray(w2, jnp.bfloat16),              # (h1, h2)
        "b2": jnp.asarray(b2, jnp.float32).reshape(1, -1),  # (1, h2)
        "w3": jnp.asarray(w3, jnp.float32).reshape(1, h2),  # (1, h2) row
        "b3": jnp.asarray(b3, jnp.float32).reshape(1),       # (1,) SMEM scalar
    }


def fpn_forward(x, kparams, *, batch_tile=512, num_tensorcores=1):
    """Fused forward pass. `kparams` must come from prepare_fpn_params()."""
    w1, b1 = kparams["w1"], kparams["b1"]
    w2, b2 = kparams["w2"], kparams["b2"]
    w3, b3 = kparams["w3"], kparams["b3"]

    B, d_in = x.shape
    assert w1.shape[0] == d_in, (w1.shape, d_in)
    h1 = w1.shape[1]
    h2 = w2.shape[1]

    bt = _select_batch_tile(B, batch_tile, num_tensorcores)
    B_pad = _round_up(B, bt)
    num_tiles = B_pad // bt

    # Only per-call prep: cast x to bf16 (MXU operand) and pad batch if needed.
    x_p = x.astype(jnp.bfloat16)
    if B_pad != B:
        x_p = jnp.pad(x_p, ((0, B_pad - B), (0, 0)))

    flops = 2 * B_pad * (d_in * h1 + h1 * h2 + h2)
    bytes_accessed = (
        B_pad * d_in * 2                       # x tile stream (bf16)
        + w1.size * 2 + w2.size * 2            # resident bf16 weights
        + (b1.size + b2.size + w3.size + b3.size) * 4
        + B_pad * 4                            # f32 output
    )

    in_specs = [
        pl.BlockSpec((bt, d_in), lambda i: (i, 0)),         # x tile (bf16), K = full d_in
        pl.BlockSpec((d_in, h1), lambda i: (0, 0)),          # W1 resident (bf16)
        pl.BlockSpec((1, h1), lambda i: (0, 0)),             # b1 (f32)
        pl.BlockSpec((h1, h2), lambda i: (0, 0)),            # W2 resident (bf16)
        pl.BlockSpec((1, h2), lambda i: (0, 0)),             # b2 (f32)
        pl.BlockSpec((1, h2), lambda i: (0, 0)),             # W3 row (f32)
        pl.BlockSpec(memory_space=pltpu.MemorySpace.SMEM),   # b3 scalar
    ]
    out_specs = pl.BlockSpec((1, 1, bt), lambda i: (i, 0, 0))

    out = pl.pallas_call(
        fpn_kernel,
        out_shape=jax.ShapeDtypeStruct((num_tiles, 1, bt), jnp.float32),
        grid=(num_tiles,),
        in_specs=in_specs,
        out_specs=out_specs,
        compiler_params=pltpu.CompilerParams(
            dimension_semantics=("parallel",),
        ),
        cost_estimate=pl.CostEstimate(
            flops=flops, transcendentals=0, bytes_accessed=bytes_accessed),
    )(x_p, w1, b1, w2, b2, w3, b3)

    # (tiles, 1, bt) row-major flatten == batch order; strip padding, restore (B, 1).
    return out.reshape(-1)[:B][:, None]


def init_fpn_params(key, d_in, linear_layers=(1024, 512)):
    """Deterministic synthetic init mirroring the module's (Lazy)Linear shapes.

    Returns [(W1, b1), (W2, b2), (W_out, b_out)] with W stored as (in, out).
    """
    params = []
    sizes = list(linear_layers) + [1]  # final LazyLinear(1)
    fan_in = d_in
    for size in sizes:
        key, wk, bk = jax.random.split(key, 3)
        bound = 1.0 / jnp.sqrt(fan_in)
        w = jax.random.uniform(wk, (fan_in, size), jnp.float32, -bound, bound)
        b = jax.random.uniform(bk, (1, size), jnp.float32, -bound, bound)
        params.append((w, b))
        fan_in = size
    return params


def fpn_reference(x, params):
    """Plain-JAX f32 reference of the PyTorch forward pass."""
    (w1, b1), (w2, b2), (w3, b3) = params
    h = jnp.maximum(x @ w1 + b1, 0.0)
    h = jnp.maximum(h @ w2 + b2, 0.0)
    return h @ w3 + b3


if __name__ == "__main__":
    key = jax.random.PRNGKey(0)
    key, xkey = jax.random.split(key)

    # Shapes consistent with the module's forward: x is (batch, features);
    # hidden sizes match FPN(linear_layers=[1024, 512]).
    B, D_IN = 512, 32
    LINEAR_LAYERS = (1024, 512)

    x = jax.random.normal(xkey, (B, D_IN), dtype=jnp.float32)
    params = init_fpn_params(key, D_IN, LINEAR_LAYERS)

    # One-time weight prep (bf16 cast / reshape) outside the per-call path.
    kparams = jax.tree_util.tree_map(jax.block_until_ready,
                                     prepare_fpn_params(params))

    ncores = _tensorcores_per_chip()
    fwd = jax.jit(functools.partial(fpn_forward,
                                    batch_tile=512,
                                    num_tensorcores=ncores))
    out = jax.block_until_ready(fwd(x, kparams))

    ref = fpn_reference(x, params)
    assert out.shape == (B, 1), out.shape
    # bf16 MXU operands with f32 accumulation -> loosened tolerance vs. the f32 reference.
    max_err = float(jnp.max(jnp.abs(out - ref)))
    assert max_err < 5e-2, max_err

    print("KERNEL_OK")
</pallas_src>

<mosaic_0001>
module attributes {stable_mosaic.version = 11 : i64} {
  func.func @fpn_kernel(%arg0: i32, %arg1: memref<512x32xbf16, #tpu.memory_space<vmem>>, %arg2: memref<32x1024xbf16, #tpu.memory_space<vmem>>, %arg3: memref<1x1024xf32, #tpu.memory_space<vmem>>, %arg4: memref<1024x512xbf16, #tpu.memory_space<vmem>>, %arg5: memref<1x512xf32, #tpu.memory_space<vmem>>, %arg6: memref<1x512xf32, #tpu.memory_space<vmem>>, %arg7: memref<1xf32, #tpu.memory_space<smem>>, %arg8: memref<1x1x512xf32, #tpu.memory_space<vmem>>) attributes {dimension_semantics = [#tpu.dimension_semantics<parallel>], iteration_bounds = array<i64: 1>, scalar_prefetch = 0 : i64, scratch_operands = 0 : i64, tpu.core_type = #tpu.core_type<tc>, window_params = [{transform_indices = @transform_0, window_bounds = array<i64: 512, 32>}, {pipeline_mode = #tpu.pipeline_mode<synchronous>, transform_indices = @transform_1, window_bounds = array<i64: 32, 1024>}, {pipeline_mode = #tpu.pipeline_mode<synchronous>, transform_indices = @transform_2, window_bounds = array<i64: 1, 1024>}, {pipeline_mode = #tpu.pipeline_mode<synchronous>, transform_indices = @transform_3, window_bounds = array<i64: 1024, 512>}, {pipeline_mode = #tpu.pipeline_mode<synchronous>, transform_indices = @transform_4, window_bounds = array<i64: 1, 512>}, {pipeline_mode = #tpu.pipeline_mode<synchronous>, transform_indices = @transform_5, window_bounds = array<i64: 1, 512>}, {transform_indices = @transform_6, window_bounds = array<i64: 1>}, {transform_indices = @transform_7, window_bounds = array<i64: 1, 1, 512>}]} {
    %c0 = arith.constant 0 : index
    %c0_0 = arith.constant 0 : index
    %0 = vector.load %arg1[%c0, %c0_0] : memref<512x32xbf16, #tpu.memory_space<vmem>>, vector<512x32xbf16>
    %c0_1 = arith.constant 0 : index
    %c0_2 = arith.constant 0 : index
    %1 = vector.load %arg2[%c0_1, %c0_2] : memref<32x1024xbf16, #tpu.memory_space<vmem>>, vector<32x1024xbf16>
    %cst = arith.constant dense<0.000000e+00> : vector<512x1024xf32>
    %2 = tpu.matmul %0, %1, %cst {dimension_numbers = #tpu.dot_dimension_numbers<[1], [0], [0], [1], [0, 0, 1, 1], [], []>} : vector<512x32xbf16>, vector<32x1024xbf16>, vector<512x1024xf32> -> vector<512x1024xf32>
    %c0_3 = arith.constant 0 : index
    %c0_4 = arith.constant 0 : index
    %3 = vector.load %arg3[%c0_3, %c0_4] : memref<1x1024xf32, #tpu.memory_space<vmem>>, vector<1x1024xf32>
    %4 = vector.broadcast %3 : vector<1x1024xf32> to vector<512x1024xf32>
    %5 = arith.addf %2, %4 : vector<512x1024xf32>
    %cst_5 = arith.constant 0.000000e+00 : f32
    %6 = vector.broadcast %cst_5 : f32 to vector<512x1024xf32>
    %7 = arith.maximumf %5, %6 : vector<512x1024xf32>
    %8 = arith.truncf %7 : vector<512x1024xf32> to vector<512x1024xbf16>
    %c0_6 = arith.constant 0 : index
    %c0_7 = arith.constant 0 : index
    %9 = vector.load %arg4[%c0_6, %c0_7] : memref<1024x512xbf16, #tpu.memory_space<vmem>>, vector<1024x512xbf16>
    %cst_8 = arith.constant dense<0.000000e+00> : vector<512x512xf32>
    %10 = tpu.matmul %8, %9, %cst_8 {dimension_numbers = #tpu.dot_dimension_numbers<[1], [0], [0], [1], [0, 0, 1, 1], [], []>} : vector<512x1024xbf16>, vector<1024x512xbf16>, vector<512x512xf32> -> vector<512x512xf32>
    %c0_9 = arith.constant 0 : index
    %c0_10 = arith.constant 0 : index
    %11 = vector.load %arg5[%c0_9, %c0_10] : memref<1x512xf32, #tpu.memory_space<vmem>>, vector<1x512xf32>
    %12 = vector.broadcast %11 : vector<1x512xf32> to vector<512x512xf32>
    %13 = arith.addf %10, %12 : vector<512x512xf32>
    %cst_11 = arith.constant 0.000000e+00 : f32
    %14 = vector.broadcast %cst_11 : f32 to vector<512x512xf32>
    %15 = arith.maximumf %13, %14 : vector<512x512xf32>
    %c0_12 = arith.constant 0 : index
    %c0_13 = arith.constant 0 : index
    %16 = vector.load %arg6[%c0_12, %c0_13] : memref<1x512xf32, #tpu.memory_space<vmem>>, vector<1x512xf32>
    %17 = vector.broadcast %16 : vector<1x512xf32> to vector<512x512xf32>
    %18 = arith.mulf %15, %17 : vector<512x512xf32>
    %cst_14 = arith.constant dense<0.000000e+00> : vector<512xf32>
    %19 = vector.multi_reduction <add>, %18, %cst_14 [1] : vector<512x512xf32> to vector<512xf32>
    %c0_15 = arith.constant 0 : index
    %20 = memref.load %arg7[%c0_15] : memref<1xf32, #tpu.memory_space<smem>>
    %21 = vector.broadcast %20 : f32 to vector<512xf32>
    %22 = arith.addf %19, %21 : vector<512xf32>
    %23 = vector.shape_cast %22 : vector<512xf32> to vector<1x1x512xf32>
    %c0_16 = arith.constant 0 : index
    %c0_17 = arith.constant 0 : index
    %c0_18 = arith.constant 0 : index
    %24 = vector.load %arg8[%c0_16, %c0_17, %c0_18] : memref<1x1x512xf32, #tpu.memory_space<vmem>>, vector<1x1x512xf32>
    tpu.vector_store %arg8[%c0_16, %c0_17, %c0_18], %23 {strides = array<i32>} : memref<1x1x512xf32, #tpu.memory_space<vmem>>, vector<1x1x512xf32>,
    return
  }
  func.func @transform_0(%arg0: i32) -> (i32, i32) {
    %c0_i32 = arith.constant 0 : i32
    %c0_i32_0 = arith.constant 0 : i32
    return %arg0, %c0_i32 : i32, i32
  }
  func.func @transform_1(%arg0: i32) -> (i32, i32) {
    %c0_i32 = arith.constant 0 : i32
    %c0_i32_0 = arith.constant 0 : i32
    %c0_i32_1 = arith.constant 0 : i32
    return %c0_i32, %c0_i32_0 : i32, i32
  }
  func.func @transform_2(%arg0: i32) -> (i32, i32) {
    %c0_i32 = arith.constant 0 : i32
    %c0_i32_0 = arith.constant 0 : i32
    %c0_i32_1 = arith.constant 0 : i32
    return %c0_i32, %c0_i32_0 : i32, i32
  }
  func.func @transform_3(%arg0: i32) -> (i32, i32) {
    %c0_i32 = arith.constant 0 : i32
    %c0_i32_0 = arith.constant 0 : i32
    %c0_i32_1 = arith.constant 0 : i32
    return %c0_i32, %c0_i32_0 : i32, i32
  }
  func.func @transform_4(%arg0: i32) -> (i32, i32) {
    %c0_i32 = arith.constant 0 : i32
    %c0_i32_0 = arith.constant 0 : i32
    %c0_i32_1 = arith.constant 0 : i32
    return %c0_i32, %c0_i32_0 : i32, i32
  }
  func.func @transform_5(%arg0: i32) -> (i32, i32) {
    %c0_i32 = arith.constant 0 : i32
    %c0_i32_0 = arith.constant 0 : i32
    %c0_i32_1 = arith.constant 0 : i32
    return %c0_i32, %c0_i32_0 : i32, i32
  }
  func.func @transform_6(%arg0: i32) -> i32 {
    %c0_i32 = arith.constant 0 : i32
    %c0_i32_0 = arith.constant 0 : i32
    return %c0_i32 : i32
  }
  func.func @transform_7(%arg0: i32) -> (i32, i32, i32) {
    %c0_i32 = arith.constant 0 : i32
    %c0_i32_0 = arith.constant 0 : i32
    %c0_i32_1 = arith.constant 0 : i32
    return %arg0, %c0_i32, %c0_i32_0 : i32, i32, i32
  }
}

</mosaic_0001>

<llo_original>
// kernel: fpn_forward.1
$region0: #{fpn_forward.1}
  #allocation0 [shape = 'u32[]', space=smem, size = 0x4, offset = 0x4, fixed_abs, tag = 'smem constant byte address 0x4 - core index']
  #allocation1 [shape = 'u32[72,128]{1,0:T(1,128)}', space=vmem, size = 0x9000, scoped, tag = 'internal scratch']
  #allocation2 [shape = 'f32[1]{0:T(128)S(6)}', space=smem, size = 0x200, scoped, tag = 'scoped memory for fpn_forward.1']
  %s0 = inlined_call_operand.vmem [shape: bf16[512,32], index: 0, kind: input, shape index: {}]
  %s1 = inlined_call_operand.vmem [shape: bf16[32,1024], index: 1, kind: input, shape index: {}]
  %s2 = inlined_call_operand.vmem [shape: f32[1,1024], index: 2, kind: input, shape index: {}]
  %s3 = inlined_call_operand.hbm [shape: bf16[1024,512], index: 3, kind: input, shape index: {}]
  %s4 = inlined_call_operand.vmem [shape: f32[1,512], index: 4, kind: input, shape index: {}]
  %s5 = inlined_call_operand.vmem [shape: f32[1,512], index: 5, kind: input, shape index: {}]
  %s6 = inlined_call_operand.<no memory space> [shape: f32[1], index: 6, kind: input, shape index: {}]
  %s7 = inlined_call_operand.hbm [shape: f32[1,1,512], index: 7, kind: output, shape index: {}]
  %s8 = sld [smem:[#allocation0]]
  $region42: #{fpn_forward.1} parent=0
    _
  %s10 = ssub.s32 1, %s8
  %s11 = scalar_select 0, %s10, %s8
  %12 = sst [smem:[#allocation2]] %s6
  $region1: #{fpn_forward.1} parent=0
    #allocation3 [shape = 'u8[1048576]{0}', space=vmem, size = 0x100000, scoped, tag = 'input window, operand 3, single buffered']
    #allocation4 [shape = 's32[1]{0}', space=sflag, size = 0x4, scoped, tag = 'scoped memory for fpn_forward.1']
    #allocation5 [shape = 's32[1]{0}', space=sflag, size = 0x4, scoped, tag = 'scoped memory for fpn_forward.1']
    #allocation6 [shape = 'u8[2048]{0}', space=vmem, size = 0x800, scoped, tag = 'output window, operand 0, single buffered']
    %13 = vsyncpa [#allocation4], 0
    %14 = vsyncpa [#allocation5], 0
    // Predicated region
    $region2: #{fpn_forward.1} parent=1 // pred_check
      _
    $region3: #{fpn_forward.1} parent=1 // pred_check_branch
      %16 = sbr.rel (0) target = $region5
    $region4: #{fpn_forward.1} parent=1 // pred_region
      _
    $region5: #{fpn_forward.1} parent=1 // pred_fallthru
      _
    // Predicated region
    $region6: #{fpn_forward.1} parent=1 // pred_check
      _
    $region7: #{fpn_forward.1} parent=1 // pred_check_branch
      %18 = sbr.rel (0) target = $region9
    $region8: #{fpn_forward.1} parent=1 // pred_region
      _
    $region9: #{fpn_forward.1} parent=1 // pred_fallthru
      _
    // Predicated region
    $region10: #{fpn_forward.1} parent=1 // pred_check
      _
    $region11: #{fpn_forward.1} parent=1 // pred_check_branch
      %20 = sbr.rel (0) target = $region13
    $region12: #{fpn_forward.1} parent=1 // pred_region
      _
    $region13: #{fpn_forward.1} parent=1 // pred_fallthru
      _
    // Predicated region
    $region14: #{fpn_forward.1} parent=1 // pred_check
      _
    $region15: #{fpn_forward.1} parent=1 // pred_check_branch
      %22 = sbr.rel (0) target = $region17
    $region16: #{fpn_forward.1} parent=1 // pred_region
      %24 = vsyncadd [#allocation4], 0
      %s25 = sshll.u32 %s3, 4
      %s26 = int_to_ptr.hbm [resolvable:$true] %s25
      %s27 = sshll.u32 [#allocation3], 4
      %s28 = int_to_ptr.vmem [resolvable:$true] %s27
      %33 = dma.hbm_to_vmem [thread:$0]  %s26, 32768, %s28, [#allocation4], 256, 256, 16
    $region17: #{fpn_forward.1} parent=1 // pred_fallthru
      _
    // Predicated region
    $region18: #{fpn_forward.1} parent=1 // pred_check
      _
    $region19: #{fpn_forward.1} parent=1 // pred_check_branch
      %35 = sbr.rel (0) target = $region21
    $region20: #{fpn_forward.1} parent=1 // pred_region
      _
    $region21: #{fpn_forward.1} parent=1 // pred_fallthru
      _
    // Predicated region
    $region22: #{fpn_forward.1} parent=1 // pred_check
      _
    $region23: #{fpn_forward.1} parent=1 // pred_check_branch
      %37 = sbr.rel (0) target = $region25
    $region24: #{fpn_forward.1} parent=1 // pred_region
      _
    $region25: #{fpn_forward.1} parent=1 // pred_fallthru
      _
    // Predicated region
    $region26: #{fpn_forward.1} parent=1 // pred_check
      _
    $region27: #{fpn_forward.1} parent=1 // pred_check_branch
      %39 = sbr.rel (0) target = $region29
    $region28: #{fpn_forward.1} parent=1 // pred_region
      _
    $region29: #{fpn_forward.1} parent=1 // pred_fallthru
      _
    // Predicated region
    $region30: #{fpn_forward.1} parent=1 // pred_check
      _
    $region31: #{fpn_forward.1} parent=1 // pred_check_branch
      %41 = sbr.rel (0) target = $region33
    $region32: #{fpn_forward.1} parent=1 // pred_region
      %43 = dma.done [#allocation4], 32768
    $region33: #{fpn_forward.1} parent=1 // pred_fallthru
      _
    %v45 = vld [vmem:[%s0] sm:$0xf]
    %v46 = vld [vmem:[%s0 + $0x4] sm:$0xf]
    %v47 = vld [vmem:[%s0 + $0x8] sm:$0xf]
    %v48 = vld [vmem:[%s0 + $0xc] sm:$0xf]
    %v49 = vld [vmem:[%s0 + $0x10] sm:$0xf]
    %v50 = vld [vmem:[%s0 + $0x14] sm:$0xf]
    %v51 = vld [vmem:[%s0 + $0x18] sm:$0xf]
    %v52 = vld [vmem:[%s0 + $0x1c] sm:$0xf]
    %v53 = vld [vmem:[%s0 + $0x20] sm:$0xf]
    %v54 = vld [vmem:[%s0 + $0x24] sm:$0xf]
    %v55 = vld [vmem:[%s0 + $0x28] sm:$0xf]
    %v56 = vld [vmem:[%s0 + $0x2c] sm:$0xf]
    %v57 = vld [vmem:[%s0 + $0x30] sm:$0xf]
    %v58 = vld [vmem:[%s0 + $0x34] sm:$0xf]
    %v59 = vld [vmem:[%s0 + $0x38] sm:$0xf]
    %v60 = vld [vmem:[%s0 + $0x3c] sm:$0xf]
    %v61 = vld [vmem:[%s0 + $0x40] sm:$0xf]
    %v62 = vld [vmem:[%s0 + $0x44] sm:$0xf]
    %v63 = vld [vmem:[%s0 + $0x48] sm:$0xf]
    %v64 = vld [vmem:[%s0 + $0x4c] sm:$0xf]
    %v65 = vld [vmem:[%s0 + $0x50] sm:$0xf]
    %v66 = vld [vmem:[%s0 + $0x54] sm:$0xf]
    %v67 = vld [vmem:[%s0 + $0x58] sm:$0xf]
    %v68 = vld [vmem:[%s0 + $0x5c] sm:$0xf]
    %v69 = vld [vmem:[%s0 + $0x60] sm:$0xf]
    %v70 = vld [vmem:[%s0 + $0x64] sm:$0xf]
    %v71 = vld [vmem:[%s0 + $0x68] sm:$0xf]
    %v72 = vld [vmem:[%s0 + $0x6c] sm:$0xf]
    %v73 = vld [vmem:[%s0 + $0x70] sm:$0xf]
    %v74 = vld [vmem:[%s0 + $0x74] sm:$0xf]
    %v75 = vld [vmem:[%s0 + $0x78] sm:$0xf]
    %v76 = vld [vmem:[%s0 + $0x7c] sm:$0xf]
    %v77 = vld [vmem:[%s0 + $0x80] sm:$0xf]
    %v78 = vld [vmem:[%s0 + $0x84] sm:$0xf]
    %v79 = vld [vmem:[%s0 + $0x88] sm:$0xf]
    %v80 = vld [vmem:[%s0 + $0x8c] sm:$0xf]
    %v81 = vld [vmem:[%s0 + $0x90] sm:$0xf]
    %v82 = vld [vmem:[%s0 + $0x94] sm:$0xf]
    %v83 = vld [vmem:[%s0 + $0x98] sm:$0xf]
    %v84 = vld [vmem:[%s0 + $0x9c] sm:$0xf]
    %v85 = vld [vmem:[%s0 + $0xa0] sm:$0xf]
    %v86 = vld [vmem:[%s0 + $0xa4] sm:$0xf]
    %v87 = vld [vmem:[%s0 + $0xa8] sm:$0xf]
    %v88 = vld [vmem:[%s0 + $0xac] sm:$0xf]
    %v89 = vld [vmem:[%s0 + $0xb0] sm:$0xf]
    %v90 = vld [vmem:[%s0 + $0xb4] sm:$0xf]
    %v91 = vld [vmem:[%s0 + $0xb8] sm:$0xf]
    %v92 = vld [vmem:[%s0 + $0xbc] sm:$0xf]
    %v93 = vld [vmem:[%s0 + $0xc0] sm:$0xf]
    %v94 = vld [vmem:[%s0 + $0xc4] sm:$0xf]
    %v95 = vld [vmem:[%s0 + $0xc8] sm:$0xf]
    %v96 = vld [vmem:[%s0 + $0xcc] sm:$0xf]
    %v97 = vld [vmem:[%s0 + $0xd0] sm:$0xf]
    %v98 = vld [vmem:[%s0 + $0xd4] sm:$0xf]
    %v99 = vld [vmem:[%s0 + $0xd8] sm:$0xf]
    %v100 = vld [vmem:[%s0 + $0xdc] sm:$0xf]
    %v101 = vld [vmem:[%s0 + $0xe0] sm:$0xf]
    %v102 = vld [vmem:[%s0 + $0xe4] sm:$0xf]
    %v103 = vld [vmem:[%s0 + $0xe8] sm:$0xf]
    %v104 = vld [vmem:[%s0 + $0xec] sm:$0xf]
    %v105 = vld [vmem:[%s0 + $0xf0] sm:$0xf]
    %v106 = vld [vmem:[%s0 + $0xf4] sm:$0xf]
    %v107 = vld [vmem:[%s0 + $0xf8] sm:$0xf]
    %v108 = vld [vmem:[%s0 + $0xfc] sm:$0xf]
    %v109 = vld [vmem:[%s1] sm:$0xff]
    %v110 = vld [vmem:[%s1 + $0x8] sm:$0xff]
    %v111 = vld [vmem:[%s1 + $0x10] sm:$0xff]
    %v112 = vld [vmem:[%s1 + $0x18] sm:$0xff]
    %v113 = vld [vmem:[%s1 + $0x20] sm:$0xff]
    %v114 = vld [vmem:[%s1 + $0x28] sm:$0xff]
    %v115 = vld [vmem:[%s1 + $0x30] sm:$0xff]
    %v116 = vld [vmem:[%s1 + $0x38] sm:$0xff]
    %v117 = vld [vmem:[%s1 + $0x40] sm:$0xff]
    %v118 = vld [vmem:[%s1 + $0x48] sm:$0xff]
    %v119 = vld [vmem:[%s1 + $0x50] sm:$0xff]
    %v120 = vld [vmem:[%s1 + $0x58] sm:$0xff]
    %v121 = vld [vmem:[%s1 + $0x60] sm:$0xff]
    %v122 = vld [vmem:[%s1 + $0x68] sm:$0xff]
    %v123 = vld [vmem:[%s1 + $0x70] sm:$0xff]
    %v124 = vld [vmem:[%s1 + $0x78] sm:$0xff]
    %v125 = vld [vmem:[%s2] sm:$0xff]
    %v127 = vperm.slane %v125, 0
    %v128 = vperm.slane %v125, 1
    %v129 = vperm.slane %v125, 2
    %v130 = vperm.slane %v125, 3
    %v131 = vperm.slane %v125, 4
    %v132 = vperm.slane %v125, 5
    %v133 = vperm.slane %v125, 6
    %v134 = vperm.slane %v125, 7
    %v207 = vunpack.c.l.b16 %v45
    %v208 = vunpack.c.l.b16 %v46
    %v209 = vunpack.c.l.b16 %v47
    %v210 = vunpack.c.l.b16 %v48
    %v211 = vunpack.c.l.b16 %v49
    %v212 = vunpack.c.l.b16 %v50
    %v213 = vunpack.c.l.b16 %v51
    %v214 = vunpack.c.l.b16 %v52
    %v215 = vunpack.c.l.b16 %v53
    %v216 = vunpack.c.l.b16 %v54
    %v217 = vunpack.c.l.b16 %v55
    %v218 = vunpack.c.l.b16 %v56
    %v219 = vunpack.c.l.b16 %v57
    %v220 = vunpack.c.l.b16 %v58
    %v221 = vunpack.c.l.b16 %v59
    %v222 = vunpack.c.l.b16 %v60
    %v223 = vunpack.c.l.b16 %v61
    %v224 = vunpack.c.l.b16 %v62
    %v225 = vunpack.c.l.b16 %v63
    %v226 = vunpack.c.l.b16 %v64
    %v227 = vunpack.c.l.b16 %v65
    %v228 = vunpack.c.l.b16 %v66
    %v229 = vunpack.c.l.b16 %v67
    %v230 = vunpack.c.l.b16 %v68
    %v231 = vunpack.c.l.b16 %v69
    %v232 = vunpack.c.l.b16 %v70
    %v233 = vunpack.c.l.b16 %v71
    %v234 = vunpack.c.l.b16 %v72
    %v235 = vunpack.c.l.b16 %v73
    %v236 = vunpack.c.l.b16 %v74
    %v237 = vunpack.c.l.b16 %v75
    %v238 = vunpack.c.l.b16 %v76
    %v239 = vunpack.c.l.b16 %v77
    %v240 = vunpack.c.l.b16 %v78
    %v241 = vunpack.c.l.b16 %v79
    %v242 = vunpack.c.l.b16 %v80
    %v243 = vunpack.c.l.b16 %v81
    %v244 = vunpack.c.l.b16 %v82
    %v245 = vunpack.c.l.b16 %v83
    %v246 = vunpack.c.l.b16 %v84
    %v247 = vunpack.c.l.b16 %v85
    %v248 = vunpack.c.l.b16 %v86
    %v249 = vunpack.c.l.b16 %v87
    %v250 = vunpack.c.l.b16 %v88
    %v251 = vunpack.c.l.b16 %v89
    %v252 = vunpack.c.l.b16 %v90
    %v253 = vunpack.c.l.b16 %v91
    %v254 = vunpack.c.l.b16 %v92
    %v255 = vunpack.c.l.b16 %v93
    %v256 = vunpack.c.l.b16 %v94
    %v257 = vunpack.c.l.b16 %v95
    %v258 = vunpack.c.l.b16 %v96
    %v259 = vunpack.c.l.b16 %v97
    %v260 = vunpack.c.l.b16 %v98
    %v261 = vunpack.c.l.b16 %v99
    %v262 = vunpack.c.l.b16 %v100
    %v263 = vunpack.c.l.b16 %v101
    %v264 = vunpack.c.l.b16 %v102
    %v265 = vunpack.c.l.b16 %v103
    %v266 = vunpack.c.l.b16 %v104
    %v267 = vunpack.c.l.b16 %v105
    %v268 = vunpack.c.l.b16 %v106
    %v269 = vunpack.c.l.b16 %v107
    %v270 = vunpack.c.l.b16 %v108
    %v271 = vpack.c.b16 %v208, %v207
    %v272 = vpack.c.b16 %v210, %v209
    %v273 = vpack.c.b16 %v212, %v211
    %v274 = vpack.c.b16 %v214, %v213
    %v275 = vpack.c.b16 %v216, %v215
    %v276 = vpack.c.b16 %v218, %v217
    %v277 = vpack.c.b16 %v220, %v219
    %v278 = vpack.c.b16 %v222, %v221
    %v279 = vpack.c.b16 %v224, %v223
    %v280 = vpack.c.b16 %v226, %v225
    %v281 = vpack.c.b16 %v228, %v227
    %v282 = vpack.c.b16 %v230, %v229
    %v283 = vpack.c.b16 %v232, %v231
    %v284 = vpack.c.b16 %v234, %v233
    %v285 = vpack.c.b16 %v236, %v235
    %v286 = vpack.c.b16 %v238, %v237
    %v287 = vpack.c.b16 %v240, %v239
    %v288 = vpack.c.b16 %v242, %v241
    %v289 = vpack.c.b16 %v244, %v243
    %v290 = vpack.c.b16 %v246, %v245
    %v291 = vpack.c.b16 %v248, %v247
    %v292 = vpack.c.b16 %v250, %v249
    %v293 = vpack.c.b16 %v252, %v251
    %v294 = vpack.c.b16 %v254, %v253
    %v295 = vpack.c.b16 %v256, %v255
    %v296 = vpack.c.b16 %v258, %v257
    %v297 = vpack.c.b16 %v260, %v259
    %v298 = vpack.c.b16 %v262, %v261
    %v299 = vpack.c.b16 %v264, %v263
    %v300 = vpack.c.b16 %v266, %v265
    %v301 = vpack.c.b16 %v268, %v267
    %v302 = vpack.c.b16 %v270, %v269
    %v319 = vunpack.c.l.b16 %v109
    %v320 = vunpack.c.h.b16 %v109
    %v321 = vunpack.c.l.b16 %v110
    %v322 = vunpack.c.h.b16 %v110
    %v323 = vunpack.c.l.b16 %v111
    %v324 = vunpack.c.h.b16 %v111
    %v325 = vunpack.c.l.b16 %v112
    %v326 = vunpack.c.h.b16 %v112
    %v327 = vunpack.c.l.b16 %v113
    %v328 = vunpack.c.h.b16 %v113
    %v329 = vunpack.c.l.b16 %v114
    %v330 = vunpack.c.h.b16 %v114
    %v331 = vunpack.c.l.b16 %v115
    %v332 = vunpack.c.h.b16 %v115
    %v333 = vunpack.c.l.b16 %v116
    %v334 = vunpack.c.h.b16 %v116
    %v335 = vunpack.c.l.b16 %v117
    %v336 = vunpack.c.h.b16 %v117
    %v337 = vunpack.c.l.b16 %v118
    %v338 = vunpack.c.h.b16 %v118
    %v339 = vunpack.c.l.b16 %v119
    %v340 = vunpack.c.h.b16 %v119
    %v341 = vunpack.c.l.b16 %v120
    %v342 = vunpack.c.h.b16 %v120
    %v343 = vunpack.c.l.b16 %v121
    %v344 = vunpack.c.h.b16 %v121
    %v345 = vunpack.c.l.b16 %v122
    %v346 = vunpack.c.h.b16 %v122
    %v347 = vunpack.c.l.b16 %v123
    %v348 = vunpack.c.h.b16 %v123
    %v349 = vunpack.c.l.b16 %v124
    %v350 = vunpack.c.h.b16 %v124
    %v351 = vpack.c.b16 %v327, %v319
    %v352 = vpack.c.b16 %v328, %v320
    %v353 = vpack.c.b16 %v329, %v321
    %v354 = vpack.c.b16 %v330, %v322
    %v355 = vpack.c.b16 %v331, %v323
    %v356 = vpack.c.b16 %v332, %v324
    %v357 = vpack.c.b16 %v333, %v325
    %v358 = vpack.c.b16 %v334, %v326
    %v359 = vpack.c.b16 %v343, %v335
    %v360 = vpack.c.b16 %v344, %v336
    %v361 = vpack.c.b16 %v345, %v337
    %v362 = vpack.c.b16 %v346, %v338
    %v363 = vpack.c.b16 %v347, %v339
    %v364 = vpack.c.b16 %v348, %v340
    %v365 = vpack.c.b16 %v349, %v341
    %v366 = vpack.c.b16 %v350, %v342
    %vm383 = vcmask 261120
    %v385 = vsel %vm383, %v271, 0
    %v388 = vsel %vm383, %v272, 0
    %v391 = vsel %vm383, %v273, 0
    %v394 = vsel %vm383, %v274, 0
    %v397 = vsel %vm383, %v275, 0
    %v400 = vsel %vm383, %v276, 0
    %v403 = vsel %vm383, %v277, 0
    %v406 = vsel %vm383, %v278, 0
    %v409 = vsel %vm383, %v279, 0
    %v412 = vsel %vm383, %v280, 0
    %v415 = vsel %vm383, %v281, 0
    %v418 = vsel %vm383, %v282, 0
    %v421 = vsel %vm383, %v283, 0
    %v424 = vsel %vm383, %v284, 0
    %v427 = vsel %vm383, %v285, 0
    %v430 = vsel %vm383, %v286, 0
    %v433 = vsel %vm383, %v287, 0
    %v436 = vsel %vm383, %v288, 0
    %v439 = vsel %vm383, %v289, 0
    %v442 = vsel %vm383, %v290, 0
    %v445 = vsel %vm383, %v291, 0
    %v448 = vsel %vm383, %v292, 0
    %v451 = vsel %vm383, %v293, 0
    %v454 = vsel %vm383, %v294, 0
    %v457 = vsel %vm383, %v295, 0
    %v460 = vsel %vm383, %v296, 0
    %v463 = vsel %vm383, %v297, 0
    %v466 = vsel %vm383, %v298, 0
    %v469 = vsel %vm383, %v299, 0
    %v472 = vsel %vm383, %v300, 0
    %v475 = vsel %vm383, %v301, 0
    %v478 = vsel %vm383, %v302, 0
    %480 = vmatpush.bf16.msra.mxu0 0
    %481 = vmatpush.bf16.msra.mxu0 0
    %482 = vmatpush.bf16.msra.mxu0 0
    %483 = vmatpush.bf16.msra.mxu0 0
    %484 = vmatpush.bf16.msra.mxu0 0
    %485 = vmatpush.bf16.msra.mxu0 0
    %486 = vmatpush.bf16.msra.mxu0 %v359
    %487 = vmatpush.bf16.msra.mxu0 %v351
    %488 = vmatmul.bf16.gmra.mxu0 %v385
    %v489 = vpop.f32.mrf.mxu0
    %v490 = vadd.f32 %v127, %v489
    %v491 = vpop.f32.mrf.mxu0
    %v492 = vadd.f32 %v127, %v491
    %493 = vmatmul.bf16.gmra.mxu0 %v388
    %v494 = vpop.f32.mrf.mxu0
    %v495 = vadd.f32 %v127, %v494
    %v496 = vpop.f32.mrf.mxu0
    %v497 = vadd.f32 %v127, %v496
    %498 = vmatmul.bf16.gmra.mxu0 %v391
    %v499 = vpop.f32.mrf.mxu0
    %v500 = vadd.f32 %v127, %v499
    %v501 = vpop.f32.mrf.mxu0
    %v502 = vadd.f32 %v127, %v501
    %503 = vmatmul.bf16.gmra.mxu0 %v394
    %v504 = vpop.f32.mrf.mxu0
    %v505 = vadd.f32 %v127, %v504
    %v506 = vpop.f32.mrf.mxu0
    %v507 = vadd.f32 %v127, %v506
    %508 = vmatmul.bf16.gmra.mxu0 %v397
    %v509 = vpop.f32.mrf.mxu0
    %v510 = vadd.f32 %v127, %v509
    %v511 = vpop.f32.mrf.mxu0
    %v512 = vadd.f32 %v127, %v511
    %513 = vmatmul.bf16.gmra.mxu0 %v400
    %v514 = vpop.f32.mrf.mxu0
    %v515 = vadd.f32 %v127, %v514
    %v516 = vpop.f32.mrf.mxu0
    %v517 = vadd.f32 %v127, %v516
    %518 = vmatmul.bf16.gmra.mxu0 %v403
    %v519 = vpop.f32.mrf.mxu0
    %v520 = vadd.f32 %v127, %v519
    %v521 = vpop.f32.mrf.mxu0
    %v522 = vadd.f32 %v127, %v521
    %523 = vmatmul.bf16.gmra.mxu0 %v406
    %v524 = vpop.f32.mrf.mxu0
    %v525 = vadd.f32 %v127, %v524
    %v526 = vpop.f32.mrf.mxu0
    %v527 = vadd.f32 %v127, %v526
    %528 = vmatmul.bf16.gmra.mxu0 %v409
    %v529 = vpop.f32.mrf.mxu0
    %v530 = vadd.f32 %v127, %v529
    %v531 = vpop.f32.mrf.mxu0
    %v532 = vadd.f32 %v127, %v531
    %533 = vmatmul.bf16.gmra.mxu0 %v412
    %v534 = vpop.f32.mrf.mxu0
    %v535 = vadd.f32 %v127, %v534
    %v536 = vpop.f32.mrf.mxu0
    %v537 = vadd.f32 %v127, %v536
    %538 = vmatmul.bf16.gmra.mxu0 %v415
    %v539 = vpop.f32.mrf.mxu0
    %v540 = vadd.f32 %v127, %v539
    %v541 = vpop.f32.mrf.mxu0
    %v542 = vadd.f32 %v127, %v541
    %543 = vmatmul.bf16.gmra.mxu0 %v418
    %v544 = vpop.f32.mrf.mxu0
    %v545 = vadd.f32 %v127, %v544
    %v546 = vpop.f32.mrf.mxu0
    %v547 = vadd.f32 %v127, %v546
    %548 = vmatmul.bf16.gmra.mxu0 %v421
    %v549 = vpop.f32.mrf.mxu0
    %v550 = vadd.f32 %v127, %v549
    %v551 = vpop.f32.mrf.mxu0
    %v552 = vadd.f32 %v127, %v551
    %553 = vmatmul.bf16.gmra.mxu0 %v424
    %v554 = vpop.f32.mrf.mxu0
    %v555 = vadd.f32 %v127, %v554
    %v556 = vpop.f32.mrf.mxu0
    %v557 = vadd.f32 %v127, %v556
    %558 = vmatmul.bf16.gmra.mxu0 %v427
    %v559 = vpop.f32.mrf.mxu0
    %v560 = vadd.f32 %v127, %v559
    %v561 = vpop.f32.mrf.mxu0
    %v562 = vadd.f32 %v127, %v561
    %563 = vmatmul.bf16.gmra.mxu0 %v430
    %v564 = vpop.f32.mrf.mxu0
    %v565 = vadd.f32 %v127, %v564
    %v566 = vpop.f32.mrf.mxu0
    %v567 = vadd.f32 %v127, %v566
    %568 = vmatmul.bf16.gmra.mxu0 %v433
    %v569 = vpop.f32.mrf.mxu0
    %v570 = vadd.f32 %v127, %v569
    %v571 = vpop.f32.mrf.mxu0
    %v572 = vadd.f32 %v127, %v571
    %573 = vmatmul.bf16.gmra.mxu0 %v436
    %v574 = vpop.f32.mrf.mxu0
    %v575 = vadd.f32 %v127, %v574
    %v576 = vpop.f32.mrf.mxu0
    %v577 = vadd.f32 %v127, %v576
    %578 = vmatmul.bf16.gmra.mxu0 %v439
    %v579 = vpop.f32.mrf.mxu0
    %v580 = vadd.f32 %v127, %v579
    %v581 = vpop.f32.mrf.mxu0
    %v582 = vadd.f32 %v127, %v581
    %583 = vmatmul.bf16.gmra.mxu0 %v442
    %v584 = vpop.f32.mrf.mxu0
    %v585 = vadd.f32 %v127, %v584
    %v586 = vpop.f32.mrf.mxu0
    %v587 = vadd.f32 %v127, %v586
    %588 = vmatmul.bf16.gmra.mxu0 %v445
    %v589 = vpop.f32.mrf.mxu0
    %v590 = vadd.f32 %v127, %v589
    %v591 = vpop.f32.mrf.mxu0
    %v592 = vadd.f32 %v127, %v591
    %593 = vmatmul.bf16.gmra.mxu0 %v448
    %v594 = vpop.f32.mrf.mxu0
    %v595 = vadd.f32 %v127, %v594
    %v596 = vpop.f32.mrf.mxu0
    %v597 = vadd.f32 %v127, %v596
    %598 = vmatmul.bf16.gmra.mxu0 %v451
    %v599 = vpop.f32.mrf.mxu0
    %v600 = vadd.f32 %v127, %v599
    %v601 = vpop.f32.mrf.mxu0
    %v602 = vadd.f32 %v127, %v601
    %603 = vmatmul.bf16.gmra.mxu0 %v454
    %v604 = vpop.f32.mrf.mxu0
    %v605 = vadd.f32 %v127, %v604
    %v606 = vpop.f32.mrf.mxu0
    %v607 = vadd.f32 %v127, %v606
    %608 = vmatmul.bf16.gmra.mxu0 %v457
    %v609 = vpop.f32.mrf.mxu0
    %v610 = vadd.f32 %v127, %v609
    %v611 = vpop.f32.mrf.mxu0
    %v612 = vadd.f32 %v127, %v611
    %613 = vmatmul.bf16.gmra.mxu0 %v460
    %v614 = vpop.f32.mrf.mxu0
    %v615 = vadd.f32 %v127, %v614
    %v616 = vpop.f32.mrf.mxu0
    %v617 = vadd.f32 %v127, %v616
    %618 = vmatmul.bf16.gmra.mxu0 %v463
    %v619 = vpop.f32.mrf.mxu0
    %v620 = vadd.f32 %v127, %v619
    %v621 = vpop.f32.mrf.mxu0
    %v622 = vadd.f32 %v127, %v621
    %623 = vmatmul.bf16.gmra.mxu0 %v466
    %v624 = vpop.f32.mrf.mxu0
    %v625 = vadd.f32 %v127, %v624
    %v626 = vpop.f32.mrf.mxu0
    %v627 = vadd.f32 %v127, %v626
    %628 = vmatmul.bf16.gmra.mxu0 %v469
    %v629 = vpop.f32.mrf.mxu0
    %v630 = vadd.f32 %v127, %v629
    %v631 = vpop.f32.mrf.mxu0
    %v632 = vadd.f32 %v127, %v631
    %633 = vmatmul.bf16.gmra.mxu0 %v472
    %v634 = vpop.f32.mrf.mxu0
    %v635 = vadd.f32 %v127, %v634
    %v636 = vpop.f32.mrf.mxu0
    %v637 = vadd.f32 %v127, %v636
    %638 = vmatmul.bf16.gmra.mxu0 %v475
    %v639 = vpop.f32.mrf.mxu0
    %v640 = vadd.f32 %v127, %v639
    %v641 = vpop.f32.mrf.mxu0
    %v642 = vadd.f32 %v127, %v641
    %643 = vmatmul.bf16.gmra.mxu0 %v478
    %v644 = vpop.f32.mrf.mxu0
    %v645 = vadd.f32 %v127, %v644
    %v646 = vpop.f32.mrf.mxu0
    %v647 = vadd.f32 %v127, %v646
    %648 = vdwg.mxu0
    %649 = vmatpush.bf16.msra.mxu0 0
    %650 = vmatpush.bf16.msra.mxu0 0
    %651 = vmatpush.bf16.msra.mxu0 0
    %652 = vmatpush.bf16.msra.mxu0 0
    %653 = vmatpush.bf16.msra.mxu0 0
    %654 = vmatpush.bf16.msra.mxu0 0
    %655 = vmatpush.bf16.msra.mxu0 %v360
    %656 = vmatpush.bf16.msra.mxu0 %v352
    %657 = vmatmul.bf16.gmra.mxu0 %v385
    %v658 = vpop.f32.mrf.mxu0
    %v659 = vadd.f32 %v128, %v658
    %v660 = vpop.f32.mrf.mxu0
    %v661 = vadd.f32 %v128, %v660
    %662 = vmatmul.bf16.gmra.mxu0 %v388
    %v663 = vpop.f32.mrf.mxu0
    %v664 = vadd.f32 %v128, %v663
    %v665 = vpop.f32.mrf.mxu0
    %v666 = vadd.f32 %v128, %v665
    %667 = vmatmul.bf16.gmra.mxu0 %v391
    %v668 = vpop.f32.mrf.mxu0
    %v669 = vadd.f32 %v128, %v668
    %v670 = vpop.f32.mrf.mxu0
    %v671 = vadd.f32 %v128, %v670
    %672 = vmatmul.bf16.gmra.mxu0 %v394
    %v673 = vpop.f32.mrf.mxu0
    %v674 = vadd.f32 %v128, %v673
    %v675 = vpop.f32.mrf.mxu0
    %v676 = vadd.f32 %v128, %v675
    %677 = vmatmul.bf16.gmra.mxu0 %v397
    %v678 = vpop.f32.mrf.mxu0
    %v679 = vadd.f32 %v128, %v678
    %v680 = vpop.f32.mrf.mxu0
    %v681 = vadd.f32 %v128, %v680
    %682 = vmatmul.bf16.gmra.mxu0 %v400
    %v683 = vpop.f32.mrf.mxu0
    %v684 = vadd.f32 %v128, %v683
    %v685 = vpop.f32.mrf.mxu0
    %v686 = vadd.f32 %v128, %v685
    %687 = vmatmul.bf16.gmra.mxu0 %v403
    %v688 = vpop.f32.mrf.mxu0
    %v689 = vadd.f32 %v128, %v688
    %v690 = vpop.f32.mrf.mxu0
    %v691 = vadd.f32 %v128, %v690
    %692 = vmatmul.bf16.gmra.mxu0 %v406
    %v693 = vpop.f32.mrf.mxu0
    %v694 = vadd.f32 %v128, %v693
    %v695 = vpop.f32.mrf.mxu0
    %v696 = vadd.f32 %v128, %v695
    %697 = vmatmul.bf16.gmra.mxu0 %v409
    %v698 = vpop.f32.mrf.mxu0
    %v699 = vadd.f32 %v128, %v698
    %v700 = vpop.f32.mrf.mxu0
    %v701 = vadd.f32 %v128, %v700
    %702 = vmatmul.bf16.gmra.mxu0 %v412
    %v703 = vpop.f32.mrf.mxu0
    %v704 = vadd.f32 %v128, %v703
    %v705 = vpop.f32.mrf.mxu0
    %v706 = vadd.f32 %v128, %v705
    %707 = vmatmul.bf16.gmra.mxu0 %v415
    %v708 = vpop.f32.mrf.mxu0
    %v709 = vadd.f32 %v128, %v708
    %v710 = vpop.f32.mrf.mxu0
    %v711 = vadd.f32 %v128, %v710
    %712 = vmatmul.bf16.gmra.mxu0 %v418
    %v713 = vpop.f32.mrf.mxu0
    %v714 = vadd.f32 %v128, %v713
    %v715 = vpop.f32.mrf.mxu0
    %v716 = vadd.f32 %v128, %v715
    %717 = vmatmul.bf16.gmra.mxu0 %v421
    %v718 = vpop.f32.mrf.mxu0
    %v719 = vadd.f32 %v128, %v718
    %v720 = vpop.f32.mrf.mxu0
    %v721 = vadd.f32 %v128, %v720
    %722 = vmatmul.bf16.gmra.mxu0 %v424
    %v723 = vpop.f32.mrf.mxu0
    %v724 = vadd.f32 %v128, %v723
    %v725 = vpop.f32.mrf.mxu0
    %v726 = vadd.f32 %v128, %v725
    %727 = vmatmul.bf16.gmra.mxu0 %v427
    %v728 = vpop.f32.mrf.mxu0
    %v729 = vadd.f32 %v128, %v728
    %v730 = vpop.f32.mrf.mxu0
    %v731 = vadd.f32 %v128, %v730
    %732 = vmatmul.bf16.gmra.mxu0 %v430
    %v733 = vpop.f32.mrf.mxu0
    %v734 = vadd.f32 %v128, %v733
    %v735 = vpop.f32.mrf.mxu0
    %v736 = vadd.f32 %v128, %v735
    %737 = vmatmul.bf16.gmra.mxu0 %v433
    %v738 = vpop.f32.mrf.mxu0
    %v739 = vadd.f32 %v128, %v738
    %v740 = vpop.f32.mrf.mxu0
    %v741 = vadd.f32 %v128, %v740
    %742 = vmatmul.bf16.gmra.mxu0 %v436
    %v743 = vpop.f32.mrf.mxu0
    %v744 = vadd.f32 %v128, %v743
    %v745 = vpop.f32.mrf.mxu0
    %v746 = vadd.f32 %v128, %v745
    %747 = vmatmul.bf16.gmra.mxu0 %v439
    %v748 = vpop.f32.mrf.mxu0
    %v749 = vadd.f32 %v128, %v748
    %v750 = vpop.f32.mrf.mxu0
    %v751 = vadd.f32 %v128, %v750
    %752 = vmatmul.bf16.gmra.mxu0 %v442
    %v753 = vpop.f32.mrf.mxu0
    %v754 = vadd.f32 %v128, %v753
    %v755 = vpop.f32.mrf.mxu0
    %v756 = vadd.f32 %v128, %v755
    %757 = vmatmul.bf16.gmra.mxu0 %v445
    %v758 = vpop.f32.mrf.mxu0
    %v759 = vadd.f32 %v128, %v758
    %v760 = vpop.f32.mrf.mxu0
    %v761 = vadd.f32 %v128, %v760
    %762 = vmatmul.bf16.gmra.mxu0 %v448
    %v763 = vpop.f32.mrf.mxu0
    %v764 = vadd.f32 %v128, %v763
    %v765 = vpop.f32.mrf.mxu0
    %v766 = vadd.f32 %v128, %v765
    %767 = vmatmul.bf16.gmra.mxu0 %v451
    %v768 = vpop.f32.mrf.mxu0
    %v769 = vadd.f32 %v128, %v768
    %v770 = vpop.f32.mrf.mxu0
    %v771 = vadd.f32 %v128, %v770
    %772 = vmatmul.bf16.gmra.mxu0 %v454
    %v773 = vpop.f32.mrf.mxu0
    %v774 = vadd.f32 %v128, %v773
    %v775 = vpop.f32.mrf.mxu0
    %v776 = vadd.f32 %v128, %v775
    %777 = vmatmul.bf16.gmra.mxu0 %v457
    %v778 = vpop.f32.mrf.mxu0
    %v779 = vadd.f32 %v128, %v778
    %v780 = vpop.f32.mrf.mxu0
    %v781 = vadd.f32 %v128, %v780
    %782 = vmatmul.bf16.gmra.mxu0 %v460
    %v783 = vpop.f32.mrf.mxu0
    %v784 = vadd.f32 %v128, %v783
    %v785 = vpop.f32.mrf.mxu0
    %v786 = vadd.f32 %v128, %v785
    %787 = vmatmul.bf16.gmra.mxu0 %v463
    %v788 = vpop.f32.mrf.mxu0
    %v789 = vadd.f32 %v128, %v788
    %v790 = vpop.f32.mrf.mxu0
    %v791 = vadd.f32 %v128, %v790
    %792 = vmatmul.bf16.gmra.mxu0 %v466
    %v793 = vpop.f32.mrf.mxu0
    %v794 = vadd.f32 %v128, %v793
    %v795 = vpop.f32.mrf.mxu0
    %v796 = vadd.f32 %v128, %v795
    %797 = vmatmul.bf16.gmra.mxu0 %v469
    %v798 = vpop.f32.mrf.mxu0
    %v799 = vadd.f32 %v128, %v798
    %v800 = vpop.f32.mrf.mxu0
    %v801 = vadd.f32 %v128, %v800
    %802 = vmatmul.bf16.gmra.mxu0 %v472
    %v803 = vpop.f32.mrf.mxu0
    %v804 = vadd.f32 %v128, %v803
    %v805 = vpop.f32.mrf.mxu0
    %v806 = vadd.f32 %v128, %v805
    %807 = vmatmul.bf16.gmra.mxu0 %v475
    %v808 = vpop.f32.mrf.mxu0
    %v809 = vadd.f32 %v128, %v808
    %v810 = vpop.f32.mrf.mxu0
    %v811 = vadd.f32 %v128, %v810
    %812 = vmatmul.bf16.gmra.mxu0 %v478
    %v813 = vpop.f32.mrf.mxu0
    %v814 = vadd.f32 %v128, %v813
    %v815 = vpop.f32.mrf.mxu0
    %v816 = vadd.f32 %v128, %v815
    %817 = vdwg.mxu0
    %818 = vmatpush.bf16.msra.mxu0 0
    %819 = vmatpush.bf16.msra.mxu0 0
    %820 = vmatpush.bf16.msra.mxu0 0
    %821 = vmatpush.bf16.msra.mxu0 0
    %822 = vmatpush.bf16.msra.mxu0 0
    %823 = vmatpush.bf16.msra.mxu0 0
    %824 = vmatpush.bf16.msra.mxu0 %v361
    %825 = vmatpush.bf16.msra.mxu0 %v353
    %826 = vmatmul.bf16.gmra.mxu0 %v385
    %v827 = vpop.f32.mrf.mxu0
    %v828 = vadd.f32 %v129, %v827
    %v829 = vpop.f32.mrf.mxu0
    %v830 = vadd.f32 %v129, %v829
    %831 = vmatmul.bf16.gmra.mxu0 %v388
    %v832 = vpop.f32.mrf.mxu0
    %v833 = vadd.f32 %v129, %v832
    %v834 = vpop.f32.mrf.mxu0
    %v835 = vadd.f32 %v129, %v834
    %836 = vmatmul.bf16.gmra.mxu0 %v391
    %v837 = vpop.f32.mrf.mxu0
    %v838 = vadd.f32 %v129, %v837
    %v839 = vpop.f32.mrf.mxu0
    %v840 = vadd.f32 %v129, %v839
    %841 = vmatmul.bf16.gmra.mxu0 %v394
    %v842 = vpop.f32.mrf.mxu0
    %v843 = vadd.f32 %v129, %v842
    %v844 = vpop.f32.mrf.mxu0
    %v845 = vadd.f32 %v129, %v844
    %846 = vmatmul.bf16.gmra.mxu0 %v397
    %v847 = vpop.f32.mrf.mxu0
    %v848 = vadd.f32 %v129, %v847
    %v849 = vpop.f32.mrf.mxu0
    %v850 = vadd.f32 %v129, %v849
    %851 = vmatmul.bf16.gmra.mxu0 %v400
    %v852 = vpop.f32.mrf.mxu0
    %v853 = vadd.f32 %v129, %v852
    %v854 = vpop.f32.mrf.mxu0
    %v855 = vadd.f32 %v129, %v854
    %856 = vmatmul.bf16.gmra.mxu0 %v403
    %v857 = vpop.f32.mrf.mxu0
    %v858 = vadd.f32 %v129, %v857
    %v859 = vpop.f32.mrf.mxu0
    %v860 = vadd.f32 %v129, %v859
    %861 = vmatmul.bf16.gmra.mxu0 %v406
    %v862 = vpop.f32.mrf.mxu0
    %v863 = vadd.f32 %v129, %v862
    %v864 = vpop.f32.mrf.mxu0
    %v865 = vadd.f32 %v129, %v864
    %866 = vmatmul.bf16.gmra.mxu0 %v409
    %v867 = vpop.f32.mrf.mxu0
    %v868 = vadd.f32 %v129, %v867
    %v869 = vpop.f32.mrf.mxu0
    %v870 = vadd.f32 %v129, %v869
    %871 = vmatmul.bf16.gmra.mxu0 %v412
    %v872 = vpop.f32.mrf.mxu0
    %v873 = vadd.f32 %v129, %v872
    %v874 = vpop.f32.mrf.mxu0
    %v875 = vadd.f32 %v129, %v874
    %876 = vmatmul.bf16.gmra.mxu0 %v415
    %v877 = vpop.f32.mrf.mxu0
    %v878 = vadd.f32 %v129, %v877
    %v879 = vpop.f32.mrf.mxu0
    %v880 = vadd.f32 %v129, %v879
    %881 = vmatmul.bf16.gmra.mxu0 %v418
    %v882 = vpop.f32.mrf.mxu0
    %v883 = vadd.f32 %v129, %v882
    %v884 = vpop.f32.mrf.mxu0
    %v885 = vadd.f32 %v129, %v884
    %886 = vmatmul.bf16.gmra.mxu0 %v421
    %v887 = vpop.f32.mrf.mxu0
    %v888 = vadd.f32 %v129, %v887
    %v889 = vpop.f32.mrf.mxu0
    %v890 = vadd.f32 %v129, %v889
    %891 = vmatmul.bf16.gmra.mxu0 %v424
    %v892 = vpop.f32.mrf.mxu0
    %v893 = vadd.f32 %v129, %v892
    %v894 = vpop.f32.mrf.mxu0
    %v895 = vadd.f32 %v129, %v894
    %896 = vmatmul.bf16.gmra.mxu0 %v427
    %v897 = vpop.f32.mrf.mxu0
    %v898 = vadd.f32 %v129, %v897
    %v899 = vpop.f32.mrf.mxu0
    %v900 = vadd.f32 %v129, %v899
    %901 = vmatmul.bf16.gmra.mxu0 %v430
    %v902 = vpop.f32.mrf.mxu0
    %v903 = vadd.f32 %v129, %v902
    %v904 = vpop.f32.mrf.mxu0
    %v905 = vadd.f32 %v129, %v904
    %906 = vmatmul.bf16.gmra.mxu0 %v433
    %v907 = vpop.f32.mrf.mxu0
    %v908 = vadd.f32 %v129, %v907
    %v909 = vpop.f32.mrf.mxu0
    %v910 = vadd.f32 %v129, %v909
    %911 = vmatmul.bf16.gmra.mxu0 %v436
    %v912 = vpop.f32.mrf.mxu0
    %v913 = vadd.f32 %v129, %v912
    %v914 = vpop.f32.mrf.mxu0
    %v915 = vadd.f32 %v129, %v914
    %916 = vmatmul.bf16.gmra.mxu0 %v439
    %v917 = vpop.f32.mrf.mxu0
    %v918 = vadd.f32 %v129, %v917
    %v919 = vpop.f32.mrf.mxu0
    %v920 = vadd.f32 %v129, %v919
    %921 = vmatmul.bf16.gmra.mxu0 %v442
    %v922 = vpop.f32.mrf.mxu0
    %v923 = vadd.f32 %v129, %v922
    %v924 = vpop.f32.mrf.mxu0
    %v925 = vadd.f32 %v129, %v924
    %926 = vmatmul.bf16.gmra.mxu0 %v445
    %v927 = vpop.f32.mrf.mxu0
    %v928 = vadd.f32 %v129, %v927
    %v929 = vpop.f32.mrf.mxu0
    %v930 = vadd.f32 %v129, %v929
    %931 = vmatmul.bf16.gmra.mxu0 %v448
    %v932 = vpop.f32.mrf.mxu0
    %v933 = vadd.f32 %v129, %v932
    %v934 = vpop.f32.mrf.mxu0
    %v935 = vadd.f32 %v129, %v934
    %936 = vmatmul.bf16.gmra.mxu0 %v451
    %v937 = vpop.f32.mrf.mxu0
    %v938 = vadd.f32 %v129, %v937
    %v939 = vpop.f32.mrf.mxu0
    %v940 = vadd.f32 %v129, %v939
    %941 = vmatmul.bf16.gmra.mxu0 %v454
    %v942 = vpop.f32.mrf.mxu0
    %v943 = vadd.f32 %v129, %v942
    %v944 = vpop.f32.mrf.mxu0
    %v945 = vadd.f32 %v129, %v944
    %946 = vmatmul.bf16.gmra.mxu0 %v457
    %v947 = vpop.f32.mrf.mxu0
    %v948 = vadd.f32 %v129, %v947
    %v949 = vpop.f32.mrf.mxu0
    %v950 = vadd.f32 %v129, %v949
    %951 = vmatmul.bf16.gmra.mxu0 %v460
    %v952 = vpop.f32.mrf.mxu0
    %v953 = vadd.f32 %v129, %v952
    %v954 = vpop.f32.mrf.mxu0
    %v955 = vadd.f32 %v129, %v954
    %956 = vmatmul.bf16.gmra.mxu0 %v463
    %v957 = vpop.f32.mrf.mxu0
    %v958 = vadd.f32 %v129, %v957
    %v959 = vpop.f32.mrf.mxu0
    %v960 = vadd.f32 %v129, %v959
    %961 = vmatmul.bf16.gmra.mxu0 %v466
    %v962 = vpop.f32.mrf.mxu0
    %v963 = vadd.f32 %v129, %v962
    %v964 = vpop.f32.mrf.mxu0
    %v965 = vadd.f32 %v129, %v964
    %966 = vmatmul.bf16.gmra.mxu0 %v469
    %v967 = vpop.f32.mrf.mxu0
    %v968 = vadd.f32 %v129, %v967
    %v969 = vpop.f32.mrf.mxu0
    %v970 = vadd.f32 %v129, %v969
    %971 = vmatmul.bf16.gmra.mxu0 %v472
    %v972 = vpop.f32.mrf.mxu0
    %v973 = vadd.f32 %v129, %v972
    %v974 = vpop.f32.mrf.mxu0
    %v975 = vadd.f32 %v129, %v974
    %976 = vmatmul.bf16.gmra.mxu0 %v475
    %v977 = vpop.f32.mrf.mxu0
    %v978 = vadd.f32 %v129, %v977
    %v979 = vpop.f32.mrf.mxu0
    %v980 = vadd.f32 %v129, %v979
    %981 = vmatmul.bf16.gmra.mxu0 %v478
    %v982 = vpop.f32.mrf.mxu0
    %v983 = vadd.f32 %v129, %v982
    %v984 = vpop.f32.mrf.mxu0
    %v985 = vadd.f32 %v129, %v984
    %986 = vdwg.mxu0
    %987 = vmatpush.bf16.msra.mxu0 0
    %988 = vmatpush.bf16.msra.mxu0 0
    %989 = vmatpush.bf16.msra.mxu0 0
    %990 = vmatpush.bf16.msra.mxu0 0
    %991 = vmatpush.bf16.msra.mxu0 0
    %992 = vmatpush.bf16.msra.mxu0 0
    %993 = vmatpush.bf16.msra.mxu0 %v362
    %994 = vmatpush.bf16.msra.mxu0 %v354
    %995 = vmatmul.bf16.gmra.mxu0 %v385
    %v996 = vpop.f32.mrf.mxu0
    %v997 = vadd.f32 %v130, %v996
    %v998 = vpop.f32.mrf.mxu0
    %v999 = vadd.f32 %v130, %v998
    %1000 = vmatmul.bf16.gmra.mxu0 %v388
    %v1001 = vpop.f32.mrf.mxu0
    %v1002 = vadd.f32 %v130, %v1001
    %v1003 = vpop.f32.mrf.mxu0
    %v1004 = vadd.f32 %v130, %v1003
    %1005 = vmatmul.bf16.gmra.mxu0 %v391
    %v1006 = vpop.f32.mrf.mxu0
    %v1007 = vadd.f32 %v130, %v1006
    %v1008 = vpop.f32.mrf.mxu0
    %v1009 = vadd.f32 %v130, %v1008
    %1010 = vmatmul.bf16.gmra.mxu0 %v394
    %v1011 = vpop.f32.mrf.mxu0
    %v1012 = vadd.f32 %v130, %v1011
    %v1013 = vpop.f32.mrf.mxu0
    %v1014 = vadd.f32 %v130, %v1013
    %1015 = vmatmul.bf16.gmra.mxu0 %v397
    %v1016 = vpop.f32.mrf.mxu0
    %v1017 = vadd.f32 %v130, %v1016
    %v1018 = vpop.f32.mrf.mxu0
    %v1019 = vadd.f32 %v130, %v1018
    %1020 = vmatmul.bf16.gmra.mxu0 %v400
    %v1021 = vpop.f32.mrf.mxu0
    %v1022 = vadd.f32 %v130, %v1021
    %v1023 = vpop.f32.mrf.mxu0
    %v1024 = vadd.f32 %v130, %v1023
    %1025 = vmatmul.bf16.gmra.mxu0 %v403
    %v1026 = vpop.f32.mrf.mxu0
    %v1027 = vadd.f32 %v130, %v1026
    %v1028 = vpop.f32.mrf.mxu0
    %v1029 = vadd.f32 %v130, %v1028
    %1030 = vmatmul.bf16.gmra.mxu0 %v406
    %v1031 = vpop.f32.mrf.mxu0
    %v1032 = vadd.f32 %v130, %v1031
    %v1033 = vpop.f32.mrf.mxu0
    %v1034 = vadd.f32 %v130, %v1033
    %1035 = vmatmul.bf16.gmra.mxu0 %v409
    %v1036 = vpop.f32.mrf.mxu0
    %v1037 = vadd.f32 %v130, %v1036
    %v1038 = vpop.f32.mrf.mxu0
    %v1039 = vadd.f32 %v130, %v1038
    %1040 = vmatmul.bf16.gmra.mxu0 %v412
    %v1041 = vpop.f32.mrf.mxu0
    %v1042 = vadd.f32 %v130, %v1041
    %v1043 = vpop.f32.mrf.mxu0
    %v1044 = vadd.f32 %v130, %v1043
    %1045 = vmatmul.bf16.gmra.mxu0 %v415
    %v1046 = vpop.f32.mrf.mxu0
    %v1047 = vadd.f32 %v130, %v1046
    %v1048 = vpop.f32.mrf.mxu0
    %v1049 = vadd.f32 %v130, %v1048
    %1050 = vmatmul.bf16.gmra.mxu0 %v418
    %v1051 = vpop.f32.mrf.mxu0
    %v1052 = vadd.f32 %v130, %v1051
    %v1053 = vpop.f32.mrf.mxu0
    %v1054 = vadd.f32 %v130, %v1053
    %1055 = vmatmul.bf16.gmra.mxu0 %v421
    %v1056 = vpop.f32.mrf.mxu0
    %v1057 = vadd.f32 %v130, %v1056
    %v1058 = vpop.f32.mrf.mxu0
    %v1059 = vadd.f32 %v130, %v1058
    %1060 = vmatmul.bf16.gmra.mxu0 %v424
    %v1061 = vpop.f32.mrf.mxu0
    %v1062 = vadd.f32 %v130, %v1061
    %v1063 = vpop.f32.mrf.mxu0
    %v1064 = vadd.f32 %v130, %v1063
    %1065 = vmatmul.bf16.gmra.mxu0 %v427
    %v1066 = vpop.f32.mrf.mxu0
    %v1067 = vadd.f32 %v130, %v1066
    %v1068 = vpop.f32.mrf.mxu0
    %v1069 = vadd.f32 %v130, %v1068
    %1070 = vmatmul.bf16.gmra.mxu0 %v430
    %v1071 = vpop.f32.mrf.mxu0
    %v1072 = vadd.f32 %v130, %v1071
    %v1073 = vpop.f32.mrf.mxu0
    %v1074 = vadd.f32 %v130, %v1073
    %1075 = vmatmul.bf16.gmra.mxu0 %v433
    %v1076 = vpop.f32.mrf.mxu0
    %v1077 = vadd.f32 %v130, %v1076
    %v1078 = vpop.f32.mrf.mxu0
    %v1079 = vadd.f32 %v130, %v1078
    %1080 = vmatmul.bf16.gmra.mxu0 %v436
    %v1081 = vpop.f32.mrf.mxu0
    %v1082 = vadd.f32 %v130, %v1081
    %v1083 = vpop.f32.mrf.mxu0
    %v1084 = vadd.f32 %v130, %v1083
    %1085 = vmatmul.bf16.gmra.mxu0 %v439
    %v1086 = vpop.f32.mrf.mxu0
    %v1087 = vadd.f32 %v130, %v1086
    %v1088 = vpop.f32.mrf.mxu0
    %v1089 = vadd.f32 %v130, %v1088
    %1090 = vmatmul.bf16.gmra.mxu0 %v442
    %v1091 = vpop.f32.mrf.mxu0
    %v1092 = vadd.f32 %v130, %v1091
    %v1093 = vpop.f32.mrf.mxu0
    %v1094 = vadd.f32 %v130, %v1093
    %1095 = vmatmul.bf16.gmra.mxu0 %v445
    %v1096 = vpop.f32.mrf.mxu0
    %v1097 = vadd.f32 %v130, %v1096
    %v1098 = vpop.f32.mrf.mxu0
    %v1099 = vadd.f32 %v130, %v1098
    %1100 = vmatmul.bf16.gmra.mxu0 %v448
    %v1101 = vpop.f32.mrf.mxu0
    %v1102 = vadd.f32 %v130, %v1101
    %v1103 = vpop.f32.mrf.mxu0
    %v1104 = vadd.f32 %v130, %v1103
    %1105 = vmatmul.bf16.gmra.mxu0 %v451
    %v1106 = vpop.f32.mrf.mxu0
    %v1107 = vadd.f32 %v130, %v1106
    %v1108 = vpop.f32.mrf.mxu0
    %v1109 = vadd.f32 %v130, %v1108
    %1110 = vmatmul.bf16.gmra.mxu0 %v454
    %v1111 = vpop.f32.mrf.mxu0
    %v1112 = vadd.f32 %v130, %v1111
    %v1113 = vpop.f32.mrf.mxu0
    %v1114 = vadd.f32 %v130, %v1113
    %1115 = vmatmul.bf16.gmra.mxu0 %v457
    %v1116 = vpop.f32.mrf.mxu0
    %v1117 = vadd.f32 %v130, %v1116
    %v1118 = vpop.f32.mrf.mxu0
    %v1119 = vadd.f32 %v130, %v1118
    %1120 = vmatmul.bf16.gmra.mxu0 %v460
    %v1121 = vpop.f32.mrf.mxu0
    %v1122 = vadd.f32 %v130, %v1121
    %v1123 = vpop.f32.mrf.mxu0
    %v1124 = vadd.f32 %v130, %v1123
    %1125 = vmatmul.bf16.gmra.mxu0 %v463
    %v1126 = vpop.f32.mrf.mxu0
    %v1127 = vadd.f32 %v130, %v1126
    %v1128 = vpop.f32.mrf.mxu0
    %v1129 = vadd.f32 %v130, %v1128
    %1130 = vmatmul.bf16.gmra.mxu0 %v466
    %v1131 = vpop.f32.mrf.mxu0
    %v1132 = vadd.f32 %v130, %v1131
    %v1133 = vpop.f32.mrf.mxu0
    %v1134 = vadd.f32 %v130, %v1133
    %1135 = vmatmul.bf16.gmra.mxu0 %v469
    %v1136 = vpop.f32.mrf.mxu0
    %v1137 = vadd.f32 %v130, %v1136
    %v1138 = vpop.f32.mrf.mxu0
    %v1139 = vadd.f32 %v130, %v1138
    %1140 = vmatmul.bf16.gmra.mxu0 %v472
    %v1141 = vpop.f32.mrf.mxu0
    %v1142 = vadd.f32 %v130, %v1141
    %v1143 = vpop.f32.mrf.mxu0
    %v1144 = vadd.f32 %v130, %v1143
    %1145 = vmatmul.bf16.gmra.mxu0 %v475
    %v1146 = vpop.f32.mrf.mxu0
    %v1147 = vadd.f32 %v130, %v1146
    %v1148 = vpop.f32.mrf.mxu0
    %v1149 = vadd.f32 %v130, %v1148
    %1150 = vmatmul.bf16.gmra.mxu0 %v478
    %v1151 = vpop.f32.mrf.mxu0
    %v1152 = vadd.f32 %v130, %v1151
    %v1153 = vpop.f32.mrf.mxu0
    %v1154 = vadd.f32 %v130, %v1153
    %1155 = vdwg.mxu0
    %1156 = vmatpush.bf16.msra.mxu0 0
    %1157 = vmatpush.bf16.msra.mxu0 0
    %1158 = vmatpush.bf16.msra.mxu0 0
    %1159 = vmatpush.bf16.msra.mxu0 0
    %1160 = vmatpush.bf16.msra.mxu0 0
    %1161 = vmatpush.bf16.msra.mxu0 0
    %1162 = vmatpush.bf16.msra.mxu0 %v363
    %1163 = vmatpush.bf16.msra.mxu0 %v355
    %1164 = vmatmul.bf16.gmra.mxu0 %v385
    %v1165 = vpop.f32.mrf.mxu0
    %v1166 = vadd.f32 %v131, %v1165
    %v1167 = vpop.f32.mrf.mxu0
    %v1168 = vadd.f32 %v131, %v1167
    %1169 = vmatmul.bf16.gmra.mxu0 %v388
    %v1170 = vpop.f32.mrf.mxu0
    %v1171 = vadd.f32 %v131, %v1170
    %v1172 = vpop.f32.mrf.mxu0
    %v1173 = vadd.f32 %v131, %v1172
    %1174 = vmatmul.bf16.gmra.mxu0 %v391
    %v1175 = vpop.f32.mrf.mxu0
    %v1176 = vadd.f32 %v131, %v1175
    %v1177 = vpop.f32.mrf.mxu0
    %v1178 = vadd.f32 %v131, %v1177
    %1179 = vmatmul.bf16.gmra.mxu0 %v394
    %v1180 = vpop.f32.mrf.mxu0
    %v1181 = vadd.f32 %v131, %v1180
    %v1182 = vpop.f32.mrf.mxu0
    %v1183 = vadd.f32 %v131, %v1182
    %1184 = vmatmul.bf16.gmra.mxu0 %v397
    %v1185 = vpop.f32.mrf.mxu0
    %v1186 = vadd.f32 %v131, %v1185
    %v1187 = vpop.f32.mrf.mxu0
    %v1188 = vadd.f32 %v131, %v1187
    %1189 = vmatmul.bf16.gmra.mxu0 %v400
    %v1190 = vpop.f32.mrf.mxu0
    %v1191 = vadd.f32 %v131, %v1190
    %v1192 = vpop.f32.mrf.mxu0
    %v1193 = vadd.f32 %v131, %v1192
    %1194 = vmatmul.bf16.gmra.mxu0 %v403
    %v1195 = vpop.f32.mrf.mxu0
    %v1196 = vadd.f32 %v131, %v1195
    %v1197 = vpop.f32.mrf.mxu0
    %v1198 = vadd.f32 %v131, %v1197
    %1199 = vmatmul.bf16.gmra.mxu0 %v406
    %v1200 = vpop.f32.mrf.mxu0
    %v1201 = vadd.f32 %v131, %v1200
    %v1202 = vpop.f32.mrf.mxu0
    %v1203 = vadd.f32 %v131, %v1202
    %1204 = vmatmul.bf16.gmra.mxu0 %v409
    %v1205 = vpop.f32.mrf.mxu0
    %v1206 = vadd.f32 %v131, %v1205
    %v1207 = vpop.f32.mrf.mxu0
    %v1208 = vadd.f32 %v131, %v1207
    %1209 = vmatmul.bf16.gmra.mxu0 %v412
    %v1210 = vpop.f32.mrf.mxu0
    %v1211 = vadd.f32 %v131, %v1210
    %v1212 = vpop.f32.mrf.mxu0
    %v1213 = vadd.f32 %v131, %v1212
    %1214 = vmatmul.bf16.gmra.mxu0 %v415
    %v1215 = vpop.f32.mrf.mxu0
    %v1216 = vadd.f32 %v131, %v1215
    %v1217 = vpop.f32.mrf.mxu0
    %v1218 = vadd.f32 %v131, %v1217
    %1219 = vmatmul.bf16.gmra.mxu0 %v418
    %v1220 = vpop.f32.mrf.mxu0
    %v1221 = vadd.f32 %v131, %v1220
    %v1222 = vpop.f32.mrf.mxu0
    %v1223 = vadd.f32 %v131, %v1222
    %1224 = vmatmul.bf16.gmra.mxu0 %v421
    %v1225 = vpop.f32.mrf.mxu0
    %v1226 = vadd.f32 %v131, %v1225
    %v1227 = vpop.f32.mrf.mxu0
    %v1228 = vadd.f32 %v131, %v1227
    %1229 = vmatmul.bf16.gmra.mxu0 %v424
    %v1230 = vpop.f32.mrf.mxu0
    %v1231 = vadd.f32 %v131, %v1230
    %v1232 = vpop.f32.mrf.mxu0
    %v1233 = vadd.f32 %v131, %v1232
    %1234 = vmatmul.bf16.gmra.mxu0 %v427
    %v1235 = vpop.f32.mrf.mxu0
    %v1236 = vadd.f32 %v131, %v1235
    %v1237 = vpop.f32.mrf.mxu0
    %v1238 = vadd.f32 %v131, %v1237
    %1239 = vmatmul.bf16.gmra.mxu0 %v430
    %v1240 = vpop.f32.mrf.mxu0
    %v1241 = vadd.f32 %v131, %v1240
    %v1242 = vpop.f32.mrf.mxu0
    %v1243 = vadd.f32 %v131, %v1242
    %1244 = vmatmul.bf16.gmra.mxu0 %v433
    %v1245 = vpop.f32.mrf.mxu0
    %v1246 = vadd.f32 %v131, %v1245
    %v1247 = vpop.f32.mrf.mxu0
    %v1248 = vadd.f32 %v131, %v1247
    %1249 = vmatmul.bf16.gmra.mxu0 %v436
    %v1250 = vpop.f32.mrf.mxu0
    %v1251 = vadd.f32 %v131, %v1250
    %v1252 = vpop.f32.mrf.mxu0
    %v1253 = vadd.f32 %v131, %v1252
    %1254 = vmatmul.bf16.gmra.mxu0 %v439
    %v1255 = vpop.f32.mrf.mxu0
    %v1256 = vadd.f32 %v131, %v1255
    %v1257 = vpop.f32.mrf.mxu0
    %v1258 = vadd.f32 %v131, %v1257
    %1259 = vmatmul.bf16.gmra.mxu0 %v442
    %v1260 = vpop.f32.mrf.mxu0
    %v1261 = vadd.f32 %v131, %v1260
    %v1262 = vpop.f32.mrf.mxu0
    %v1263 = vadd.f32 %v131, %v1262
    %1264 = vmatmul.bf16.gmra.mxu0 %v445
    %v1265 = vpop.f32.mrf.mxu0
    %v1266 = vadd.f32 %v131, %v1265
    %v1267 = vpop.f32.mrf.mxu0
    %v1268 = vadd.f32 %v131, %v1267
    %1269 = vmatmul.bf16.gmra.mxu0 %v448
    %v1270 = vpop.f32.mrf.mxu0
    %v1271 = vadd.f32 %v131, %v1270
    %v1272 = vpop.f32.mrf.mxu0
    %v1273 = vadd.f32 %v131, %v1272
    %1274 = vmatmul.bf16.gmra.mxu0 %v451
    %v1275 = vpop.f32.mrf.mxu0
    %v1276 = vadd.f32 %v131, %v1275
    %v1277 = vpop.f32.mrf.mxu0
    %v1278 = vadd.f32 %v131, %v1277
    %1279 = vmatmul.bf16.gmra.mxu0 %v454
    %v1280 = vpop.f32.mrf.mxu0
    %v1281 = vadd.f32 %v131, %v1280
    %v1282 = vpop.f32.mrf.mxu0
    %v1283 = vadd.f32 %v131, %v1282
    %1284 = vmatmul.bf16.gmra.mxu0 %v457
    %v1285 = vpop.f32.mrf.mxu0
    %v1286 = vadd.f32 %v131, %v1285
    %v1287 = vpop.f32.mrf.mxu0
    %v1288 = vadd.f32 %v131, %v1287
    %1289 = vmatmul.bf16.gmra.mxu0 %v460
    %v1290 = vpop.f32.mrf.mxu0
    %v1291 = vadd.f32 %v131, %v1290
    %v1292 = vpop.f32.mrf.mxu0
    %v1293 = vadd.f32 %v131, %v1292
    %1294 = vmatmul.bf16.gmra.mxu0 %v463
    %v1295 = vpop.f32.mrf.mxu0
    %v1296 = vadd.f32 %v131, %v1295
    %v1297 = vpop.f32.mrf.mxu0
    %v1298 = vadd.f32 %v131, %v1297
    %1299 = vmatmul.bf16.gmra.mxu0 %v466
    %v1300 = vpop.f32.mrf.mxu0
    %v1301 = vadd.f32 %v131, %v1300
    %v1302 = vpop.f32.mrf.mxu0
    %v1303 = vadd.f32 %v131, %v1302
    %1304 = vmatmul.bf16.gmra.mxu0 %v469
    %v1305 = vpop.f32.mrf.mxu0
    %v1306 = vadd.f32 %v131, %v1305
    %v1307 = vpop.f32.mrf.mxu0
    %v1308 = vadd.f32 %v131, %v1307
    %1309 = vmatmul.bf16.gmra.mxu0 %v472
    %v1310 = vpop.f32.mrf.mxu0
    %v1311 = vadd.f32 %v131, %v1310
    %v1312 = vpop.f32.mrf.mxu0
    %v1313 = vadd.f32 %v131, %v1312
    %1314 = vmatmul.bf16.gmra.mxu0 %v475
    %v1315 = vpop.f32.mrf.mxu0
    %v1316 = vadd.f32 %v131, %v1315
    %v1317 = vpop.f32.mrf.mxu0
    %v1318 = vadd.f32 %v131, %v1317
    %1319 = vmatmul.bf16.gmra.mxu0 %v478
    %v1320 = vpop.f32.mrf.mxu0
    %v1321 = vadd.f32 %v131, %v1320
    %v1322 = vpop.f32.mrf.mxu0
    %v1323 = vadd.f32 %v131, %v1322
    %1324 = vdwg.mxu0
    %1325 = vmatpush.bf16.msra.mxu0 0
    %1326 = vmatpush.bf16.msra.mxu0 0
    %1327 = vmatpush.bf16.msra.mxu0 0
    %1328 = vmatpush.bf16.msra.mxu0 0
    %1329 = vmatpush.bf16.msra.mxu0 0
    %1330 = vmatpush.bf16.msra.mxu0 0
    %1331 = vmatpush.bf16.msra.mxu0 %v364
    %1332 = vmatpush.bf16.msra.mxu0 %v356
    %1333 = vmatmul.bf16.gmra.mxu0 %v385
    %v1334 = vpop.f32.mrf.mxu0
    %v1335 = vadd.f32 %v132, %v1334
    %v1336 = vpop.f32.mrf.mxu0
    %v1337 = vadd.f32 %v132, %v1336
    %1338 = vmatmul.bf16.gmra.mxu0 %v388
    %v1339 = vpop.f32.mrf.mxu0
    %v1340 = vadd.f32 %v132, %v1339
    %v1341 = vpop.f32.mrf.mxu0
    %v1342 = vadd.f32 %v132, %v1341
    %1343 = vmatmul.bf16.gmra.mxu0 %v391
    %v1344 = vpop.f32.mrf.mxu0
    %v1345 = vadd.f32 %v132, %v1344
    %v1346 = vpop.f32.mrf.mxu0
    %v1347 = vadd.f32 %v132, %v1346
    %1348 = vmatmul.bf16.gmra.mxu0 %v394
    %v1349 = vpop.f32.mrf.mxu0
    %v1350 = vadd.f32 %v132, %v1349
    %v1351 = vpop.f32.mrf.mxu0
    %v1352 = vadd.f32 %v132, %v1351
    %1353 = vmatmul.bf16.gmra.mxu0 %v397
    %v1354 = vpop.f32.mrf.mxu0
    %v1355 = vadd.f32 %v132, %v1354
    %v1356 = vpop.f32.mrf.mxu0
    %v1357 = vadd.f32 %v132, %v1356
    %1358 = vmatmul.bf16.gmra.mxu0 %v400
    %v1359 = vpop.f32.mrf.mxu0
    %v1360 = vadd.f32 %v132, %v1359
    %v1361 = vpop.f32.mrf.mxu0
    %v1362 = vadd.f32 %v132, %v1361
    %1363 = vmatmul.bf16.gmra.mxu0 %v403
    %v1364 = vpop.f32.mrf.mxu0
    %v1365 = vadd.f32 %v132, %v1364
    %v1366 = vpop.f32.mrf.mxu0
    %v1367 = vadd.f32 %v132, %v1366
    %1368 = vmatmul.bf16.gmra.mxu0 %v406
    %v1369 = vpop.f32.mrf.mxu0
    %v1370 = vadd.f32 %v132, %v1369
    %v1371 = vpop.f32.mrf.mxu0
    %v1372 = vadd.f32 %v132, %v1371
    %1373 = vmatmul.bf16.gmra.mxu0 %v409
    %v1374 = vpop.f32.mrf.mxu0
    %v1375 = vadd.f32 %v132, %v1374
    %v1376 = vpop.f32.mrf.mxu0
    %v1377 = vadd.f32 %v132, %v1376
    %1378 = vmatmul.bf16.gmra.mxu0 %v412
    %v1379 = vpop.f32.mrf.mxu0
    %v1380 = vadd.f32 %v132, %v1379
    %v1381 = vpop.f32.mrf.mxu0
    %v1382 = vadd.f32 %v132, %v1381
    %1383 = vmatmul.bf16.gmra.mxu0 %v415
    %v1384 = vpop.f32.mrf.mxu0
    %v1385 = vadd.f32 %v132, %v1384
    %v1386 = vpop.f32.mrf.mxu0
    %v1387 = vadd.f32 %v132, %v1386
    %1388 = vmatmul.bf16.gmra.mxu0 %v418
    %v1389 = vpop.f32.mrf.mxu0
    %v1390 = vadd.f32 %v132, %v1389
    %v1391 = vpop.f32.mrf.mxu0
    %v1392 = vadd.f32 %v132, %v1391
    %1393 = vmatmul.bf16.gmra.mxu0 %v421
    %v1394 = vpop.f32.mrf.mxu0
    %v1395 = vadd.f32 %v132, %v1394
    %v1396 = vpop.f32.mrf.mxu0
    %v1397 = vadd.f32 %v132, %v1396
    %1398 = vmatmul.bf16.gmra.mxu0 %v424
    %v1399 = vpop.f32.mrf.mxu0
    %v1400 = vadd.f32 %v132, %v1399
    %v1401 = vpop.f32.mrf.mxu0
    %v1402 = vadd.f32 %v132, %v1401
    %1403 = vmatmul.bf16.gmra.mxu0 %v427
    %v1404 = vpop.f32.mrf.mxu0
    %v1405 = vadd.f32 %v132, %v1404
    %v1406 = vpop.f32.mrf.mxu0
    %v1407 = vadd.f32 %v132, %v1406
    %1408 = vmatmul.bf16.gmra.mxu0 %v430
    %v1409 = vpop.f32.mrf.mxu0
    %v1410 = vadd.f32 %v132, %v1409
    %v1411 = vpop.f32.mrf.mxu0
    %v1412 = vadd.f32 %v132, %v1411
    %1413 = vmatmul.bf16.gmra.mxu0 %v433
    %v1414 = vpop.f32.mrf.mxu0
    %v1415 = vadd.f32 %v132, %v1414
    %v1416 = vpop.f32.mrf.mxu0
    %v1417 = vadd.f32 %v132, %v1416
    %1418 = vmatmul.bf16.gmra.mxu0 %v436
    %v1419 = vpop.f32.mrf.mxu0
    %v1420 = vadd.f32 %v132, %v1419
    %v1421 = vpop.f32.mrf.mxu0
    %v1422 = vadd.f32 %v132, %v1421
    %1423 = vmatmul.bf16.gmra.mxu0 %v439
    %v1424 = vpop.f32.mrf.mxu0
    %v1425 = vadd.f32 %v132, %v1424
    %v1426 = vpop.f32.mrf.mxu0
    %v1427 = vadd.f32 %v132, %v1426
    %1428 = vmatmul.bf16.gmra.mxu0 %v442
    %v1429 = vpop.f32.mrf.mxu0
    %v1430 = vadd.f32 %v132, %v1429
    %v1431 = vpop.f32.mrf.mxu0
    %v1432 = vadd.f32 %v132, %v1431
    %1433 = vmatmul.bf16.gmra.mxu0 %v445
    %v1434 = vpop.f32.mrf.mxu0
    %v1435 = vadd.f32 %v132, %v1434
    %v1436 = vpop.f32.mrf.mxu0
    %v1437 = vadd.f32 %v132, %v1436
    %1438 = vmatmul.bf16.gmra.mxu0 %v448
    %v1439 = vpop.f32.mrf.mxu0
    %v1440 = vadd.f32 %v132, %v1439
    %v1441 = vpop.f32.mrf.mxu0
    %v1442 = vadd.f32 %v132, %v1441
    %1443 = vmatmul.bf16.gmra.mxu0 %v451
    %v1444 = vpop.f32.mrf.mxu0
    %v1445 = vadd.f32 %v132, %v1444
    %v1446 = vpop.f32.mrf.mxu0
    %v1447 = vadd.f32 %v132, %v1446
    %1448 = vmatmul.bf16.gmra.mxu0 %v454
    %v1449 = vpop.f32.mrf.mxu0
    %v1450 = vadd.f32 %v132, %v1449
    %v1451 = vpop.f32.mrf.mxu0
    %v1452 = vadd.f32 %v132, %v1451
    %1453 = vmatmul.bf16.gmra.mxu0 %v457
    %v1454 = vpop.f32.mrf.mxu0
    %v1455 = vadd.f32 %v132, %v1454
    %v1456 = vpop.f32.mrf.mxu0
    %v1457 = vadd.f32 %v132, %v1456
    %1458 = vmatmul.bf16.gmra.mxu0 %v460
    %v1459 = vpop.f32.mrf.mxu0
    %v1460 = vadd.f32 %v132, %v1459
    %v1461 = vpop.f32.mrf.mxu0
    %v1462 = vadd.f32 %v132, %v1461
    %1463 = vmatmul.bf16.gmra.mxu0 %v463
    %v1464 = vpop.f32.mrf.mxu0
    %v1465 = vadd.f32 %v132, %v1464
    %v1466 = vpop.f32.mrf.mxu0
    %v1467 = vadd.f32 %v132, %v1466
    %1468 = vmatmul.bf16.gmra.mxu0 %v466
    %v1469 = vpop.f32.mrf.mxu0
    %v1470 = vadd.f32 %v132, %v1469
    %v1471 = vpop.f32.mrf.mxu0
    %v1472 = vadd.f32 %v132, %v1471
    %1473 = vmatmul.bf16.gmra.mxu0 %v469
    %v1474 = vpop.f32.mrf.mxu0
    %v1475 = vadd.f32 %v132, %v1474
    %v1476 = vpop.f32.mrf.mxu0
    %v1477 = vadd.f32 %v132, %v1476
    %1478 = vmatmul.bf16.gmra.mxu0 %v472
    %v1479 = vpop.f32.mrf.mxu0
    %v1480 = vadd.f32 %v132, %v1479
    %v1481 = vpop.f32.mrf.mxu0
    %v1482 = vadd.f32 %v132, %v1481
    %1483 = vmatmul.bf16.gmra.mxu0 %v475
    %v1484 = vpop.f32.mrf.mxu0
    %v1485 = vadd.f32 %v132, %v1484
    %v1486 = vpop.f32.mrf.mxu0
    %v1487 = vadd.f32 %v132, %v1486
    %1488 = vmatmul.bf16.gmra.mxu0 %v478
    %v1489 = vpop.f32.mrf.mxu0
    %v1490 = vadd.f32 %v132, %v1489
    %v1491 = vpop.f32.mrf.mxu0
    %v1492 = vadd.f32 %v132, %v1491
    %1493 = vdwg.mxu0
    %1494 = vmatpush.bf16.msra.mxu0 0
    %1495 = vmatpush.bf16.msra.mxu0 0
    %1496 = vmatpush.bf16.msra.mxu0 0
    %1497 = vmatpush.bf16.msra.mxu0 0
    %1498 = vmatpush.bf16.msra.mxu0 0
    %1499 = vmatpush.bf16.msra.mxu0 0
    %1500 = vmatpush.bf16.msra.mxu0 %v365
    %1501 = vmatpush.bf16.msra.mxu0 %v357
    %1502 = vmatmul.bf16.gmra.mxu0 %v385
    %v1503 = vpop.f32.mrf.mxu0
    %v1504 = vadd.f32 %v133, %v1503
    %v1505 = vpop.f32.mrf.mxu0
    %v1506 = vadd.f32 %v133, %v1505
    %1507 = vmatmul.bf16.gmra.mxu0 %v388
    %v1508 = vpop.f32.mrf.mxu0
    %v1509 = vadd.f32 %v133, %v1508
    %v1510 = vpop.f32.mrf.mxu0
    %v1511 = vadd.f32 %v133, %v1510
    %1512 = vmatmul.bf16.gmra.mxu0 %v391
    %v1513 = vpop.f32.mrf.mxu0
    %v1514 = vadd.f32 %v133, %v1513
    %v1515 = vpop.f32.mrf.mxu0
    %v1516 = vadd.f32 %v133, %v1515
    %1517 = vmatmul.bf16.gmra.mxu0 %v394
    %v1518 = vpop.f32.mrf.mxu0
    %v1519 = vadd.f32 %v133, %v1518
    %v1520 = vpop.f32.mrf.mxu0
    %v1521 = vadd.f32 %v133, %v1520
    %1522 = vmatmul.bf16.gmra.mxu0 %v397
    %v1523 = vpop.f32.mrf.mxu0
    %v1524 = vadd.f32 %v133, %v1523
    %v1525 = vpop.f32.mrf.mxu0
    %v1526 = vadd.f32 %v133, %v1525
    %1527 = vmatmul.bf16.gmra.mxu0 %v400
    %v1528 = vpop.f32.mrf.mxu0
    %v1529 = vadd.f32 %v133, %v1528
    %v1530 = vpop.f32.mrf.mxu0
    %v1531 = vadd.f32 %v133, %v1530
    %1532 = vmatmul.bf16.gmra.mxu0 %v403
    %v1533 = vpop.f32.mrf.mxu0
    %v1534 = vadd.f32 %v133, %v1533
    %v1535 = vpop.f32.mrf.mxu0
    %v1536 = vadd.f32 %v133, %v1535
    %1537 = vmatmul.bf16.gmra.mxu0 %v406
    %v1538 = vpop.f32.mrf.mxu0
    %v1539 = vadd.f32 %v133, %v1538
    %v1540 = vpop.f32.mrf.mxu0
    %v1541 = vadd.f32 %v133, %v1540
    %1542 = vmatmul.bf16.gmra.mxu0 %v409
    %v1543 = vpop.f32.mrf.mxu0
    %v1544 = vadd.f32 %v133, %v1543
    %v1545 = vpop.f32.mrf.mxu0
    %v1546 = vadd.f32 %v133, %v1545
    %1547 = vmatmul.bf16.gmra.mxu0 %v412
    %v1548 = vpop.f32.mrf.mxu0
    %v1549 = vadd.f32 %v133, %v1548
    %v1550 = vpop.f32.mrf.mxu0
    %v1551 = vadd.f32 %v133, %v1550
    %1552 = vmatmul.bf16.gmra.mxu0 %v415
    %v1553 = vpop.f32.mrf.mxu0
    %v1554 = vadd.f32 %v133, %v1553
    %v1555 = vpop.f32.mrf.mxu0
    %v1556 = vadd.f32 %v133, %v1555
    %1557 = vmatmul.bf16.gmra.mxu0 %v418
    %v1558 = vpop.f32.mrf.mxu0
    %v1559 = vadd.f32 %v133, %v1558
    %v1560 = vpop.f32.mrf.mxu0
    %v1561 = vadd.f32 %v133, %v1560
    %1562 = vmatmul.bf16.gmra.mxu0 %v421
    %v1563 = vpop.f32.mrf.mxu0
    %v1564 = vadd.f32 %v133, %v1563
    %v1565 = vpop.f32.mrf.mxu0
    %v1566 = vadd.f32 %v133, %v1565
    %1567 = vmatmul.bf16.gmra.mxu0 %v424
    %v1568 = vpop.f32.mrf.mxu0
    %v1569 = vadd.f32 %v133, %v1568
    %v1570 = vpop.f32.mrf.mxu0
    %v1571 = vadd.f32 %v133, %v1570
    %1572 = vmatmul.bf16.gmra.mxu0 %v427
    %v1573 = vpop.f32.mrf.mxu0
    %v1574 = vadd.f32 %v133, %v1573
    %v1575 = vpop.f32.mrf.mxu0
    %v1576 = vadd.f32 %v133, %v1575
    %1577 = vmatmul.bf16.gmra.mxu0 %v430
    %v1578 = vpop.f32.mrf.mxu0
    %v1579 = vadd.f32 %v133, %v1578
    %v1580 = vpop.f32.mrf.mxu0
    %v1581 = vadd.f32 %v133, %v1580
    %1582 = vmatmul.bf16.gmra.mxu0 %v433
    %v1583 = vpop.f32.mrf.mxu0
    %v1584 = vadd.f32 %v133, %v1583
    %v1585 = vpop.f32.mrf.mxu0
    %v1586 = vadd.f32 %v133, %v1585
    %1587 = vmatmul.bf16.gmra.mxu0 %v436
    %v1588 = vpop.f32.mrf.mxu0
    %v1589 = vadd.f32 %v133, %v1588
    %v1590 = vpop.f32.mrf.mxu0
    %v1591 = vadd.f32 %v133, %v1590
    %1592 = vmatmul.bf16.gmra.mxu0 %v439
    %v1593 = vpop.f32.mrf.mxu0
    %v1594 = vadd.f32 %v133, %v1593
    %v1595 = vpop.f32.mrf.mxu0
    %v1596 = vadd.f32 %v133, %v1595
    %1597 = vmatmul.bf16.gmra.mxu0 %v442
    %v1598 = vpop.f32.mrf.mxu0
    %v1599 = vadd.f32 %v133, %v1598
    %v1600 = vpop.f32.mrf.mxu0
    %v1601 = vadd.f32 %v133, %v1600
    %1602 = vmatmul.bf16.gmra.mxu0 %v445
    %v1603 = vpop.f32.mrf.mxu0
    %v1604 = vadd.f32 %v133, %v1603
    %v1605 = vpop.f32.mrf.mxu0
    %v1606 = vadd.f32 %v133, %v1605
    %1607 = vmatmul.bf16.gmra.mxu0 %v448
    %v1608 = vpop.f32.mrf.mxu0
    %v1609 = vadd.f32 %v133, %v1608
    %v1610 = vpop.f32.mrf.mxu0
    %v1611 = vadd.f32 %v133, %v1610
    %1612 = vmatmul.bf16.gmra.mxu0 %v451
    %v1613 = vpop.f32.mrf.mxu0
    %v1614 = vadd.f32 %v133, %v1613
    %v1615 = vpop.f32.mrf.mxu0
    %v1616 = vadd.f32 %v133, %v1615
    %1617 = vmatmul.bf16.gmra.mxu0 %v454
    %v1618 = vpop.f32.mrf.mxu0
    %v1619 = vadd.f32 %v133, %v1618
    %v1620 = vpop.f32.mrf.mxu0
    %v1621 = vadd.f32 %v133, %v1620
    %1622 = vmatmul.bf16.gmra.mxu0 %v457
    %v1623 = vpop.f32.mrf.mxu0
    %v1624 = vadd.f32 %v133, %v1623
    %v1625 = vpop.f32.mrf.mxu0
    %v1626 = vadd.f32 %v133, %v1625
    %1627 = vmatmul.bf16.gmra.mxu0 %v460
    %v1628 = vpop.f32.mrf.mxu0
    %v1629 = vadd.f32 %v133, %v1628
    %v1630 = vpop.f32.mrf.mxu0
    %v1631 = vadd.f32 %v133, %v1630
    %1632 = vmatmul.bf16.gmra.mxu0 %v463
    %v1633 = vpop.f32.mrf.mxu0
    %v1634 = vadd.f32 %v133, %v1633
    %v1635 = vpop.f32.mrf.mxu0
    %v1636 = vadd.f32 %v133, %v1635
    %1637 = vmatmul.bf16.gmra.mxu0 %v466
    %v1638 = vpop.f32.mrf.mxu0
    %v1639 = vadd.f32 %v133, %v1638
    %v1640 = vpop.f32.mrf.mxu0
    %v1641 = vadd.f32 %v133, %v1640
    %1642 = vmatmul.bf16.gmra.mxu0 %v469
    %v1643 = vpop.f32.mrf.mxu0
    %v1644 = vadd.f32 %v133, %v1643
    %v1645 = vpop.f32.mrf.mxu0
    %v1646 = vadd.f32 %v133, %v1645
    %1647 = vmatmul.bf16.gmra.mxu0 %v472
    %v1648 = vpop.f32.mrf.mxu0
    %v1649 = vadd.f32 %v133, %v1648
    %v1650 = vpop.f32.mrf.mxu0
    %v1651 = vadd.f32 %v133, %v1650
    %1652 = vmatmul.bf16.gmra.mxu0 %v475
    %v1653 = vpop.f32.mrf.mxu0
    %v1654 = vadd.f32 %v133, %v1653
    %v1655 = vpop.f32.mrf.mxu0
    %v1656 = vadd.f32 %v133, %v1655
    %1657 = vmatmul.bf16.gmra.mxu0 %v478
    %v1658 = vpop.f32.mrf.mxu0
    %v1659 = vadd.f32 %v133, %v1658
    %v1660 = vpop.f32.mrf.mxu0
    %v1661 = vadd.f32 %v133, %v1660
    %1662 = vdwg.mxu0
    %1663 = vmatpush.bf16.msra.mxu0 0
    %1664 = vmatpush.bf16.msra.mxu0 0
    %1665 = vmatpush.bf16.msra.mxu0 0
    %1666 = vmatpush.bf16.msra.mxu0 0
    %1667 = vmatpush.bf16.msra.mxu0 0
    %1668 = vmatpush.bf16.msra.mxu0 0
    %1669 = vmatpush.bf16.msra.mxu0 %v366
    %1670 = vmatpush.bf16.msra.mxu0 %v358
    %1671 = vmatmul.bf16.gmra.mxu0 %v385
    %v1672 = vpop.f32.mrf.mxu0
    %v1673 = vadd.f32 %v134, %v1672
    %v1674 = vpop.f32.mrf.mxu0
    %v1675 = vadd.f32 %v134, %v1674
    %1676 = vmatmul.bf16.gmra.mxu0 %v388
    %v1677 = vpop.f32.mrf.mxu0
    %v1678 = vadd.f32 %v134, %v1677
    %v1679 = vpop.f32.mrf.mxu0
    %v1680 = vadd.f32 %v134, %v1679
    %1681 = vmatmul.bf16.gmra.mxu0 %v391
    %v1682 = vpop.f32.mrf.mxu0
    %v1683 = vadd.f32 %v134, %v1682
    %v1684 = vpop.f32.mrf.mxu0
    %v1685 = vadd.f32 %v134, %v1684
    %1686 = vmatmul.bf16.gmra.mxu0 %v394
    %v1687 = vpop.f32.mrf.mxu0
    %v1688 = vadd.f32 %v134, %v1687
    %v1689 = vpop.f32.mrf.mxu0
    %v1690 = vadd.f32 %v134, %v1689
    %1691 = vmatmul.bf16.gmra.mxu0 %v397
    %v1692 = vpop.f32.mrf.mxu0
    %v1693 = vadd.f32 %v134, %v1692
    %v1694 = vpop.f32.mrf.mxu0
    %v1695 = vadd.f32 %v134, %v1694
    %1696 = vmatmul.bf16.gmra.mxu0 %v400
    %v1697 = vpop.f32.mrf.mxu0
    %v1698 = vadd.f32 %v134, %v1697
    %v1699 = vpop.f32.mrf.mxu0
    %v1700 = vadd.f32 %v134, %v1699
    %1701 = vmatmul.bf16.gmra.mxu0 %v403
    %v1702 = vpop.f32.mrf.mxu0
    %v1703 = vadd.f32 %v134, %v1702
    %v1704 = vpop.f32.mrf.mxu0
    %v1705 = vadd.f32 %v134, %v1704
    %1706 = vmatmul.bf16.gmra.mxu0 %v406
    %v1707 = vpop.f32.mrf.mxu0
    %v1708 = vadd.f32 %v134, %v1707
    %v1709 = vpop.f32.mrf.mxu0
    %v1710 = vadd.f32 %v134, %v1709
    %1711 = vmatmul.bf16.gmra.mxu0 %v409
    %v1712 = vpop.f32.mrf.mxu0
    %v1713 = vadd.f32 %v134, %v1712
    %v1714 = vpop.f32.mrf.mxu0
    %v1715 = vadd.f32 %v134, %v1714
    %1716 = vmatmul.bf16.gmra.mxu0 %v412
    %v1717 = vpop.f32.mrf.mxu0
    %v1718 = vadd.f32 %v134, %v1717
    %v1719 = vpop.f32.mrf.mxu0
    %v1720 = vadd.f32 %v134, %v1719
    %1721 = vmatmul.bf16.gmra.mxu0 %v415
    %v1722 = vpop.f32.mrf.mxu0
    %v1723 = vadd.f32 %v134, %v1722
    %v1724 = vpop.f32.mrf.mxu0
    %v1725 = vadd.f32 %v134, %v1724
    %1726 = vmatmul.bf16.gmra.mxu0 %v418
    %v1727 = vpop.f32.mrf.mxu0
    %v1728 = vadd.f32 %v134, %v1727
    %v1729 = vpop.f32.mrf.mxu0
    %v1730 = vadd.f32 %v134, %v1729
    %1731 = vmatmul.bf16.gmra.mxu0 %v421
    %v1732 = vpop.f32.mrf.mxu0
    %v1733 = vadd.f32 %v134, %v1732
    %v1734 = vpop.f32.mrf.mxu0
    %v1735 = vadd.f32 %v134, %v1734
    %1736 = vmatmul.bf16.gmra.mxu0 %v424
    %v1737 = vpop.f32.mrf.mxu0
    %v1738 = vadd.f32 %v134, %v1737
    %v1739 = vpop.f32.mrf.mxu0
    %v1740 = vadd.f32 %v134, %v1739
    %1741 = vmatmul.bf16.gmra.mxu0 %v427
    %v1742 = vpop.f32.mrf.mxu0
    %v1743 = vadd.f32 %v134, %v1742
    %v1744 = vpop.f32.mrf.mxu0
    %v1745 = vadd.f32 %v134, %v1744
    %1746 = vmatmul.bf16.gmra.mxu0 %v430
    %v1747 = vpop.f32.mrf.mxu0
    %v1748 = vadd.f32 %v134, %v1747
    %v1749 = vpop.f32.mrf.mxu0
    %v1750 = vadd.f32 %v134, %v1749
    %1751 = vmatmul.bf16.gmra.mxu0 %v433
    %v1752 = vpop.f32.mrf.mxu0
    %v1753 = vadd.f32 %v134, %v1752
    %v1754 = vpop.f32.mrf.mxu0
    %v1755 = vadd.f32 %v134, %v1754
    %1756 = vmatmul.bf16.gmra.mxu0 %v436
    %v1757 = vpop.f32.mrf.mxu0
    %v1758 = vadd.f32 %v134, %v1757
    %v1759 = vpop.f32.mrf.mxu0
    %v1760 = vadd.f32 %v134, %v1759
    %1761 = vmatmul.bf16.gmra.mxu0 %v439
    %v1762 = vpop.f32.mrf.mxu0
    %v1763 = vadd.f32 %v134, %v1762
    %v1764 = vpop.f32.mrf.mxu0
    %v1765 = vadd.f32 %v134, %v1764
    %1766 = vmatmul.bf16.gmra.mxu0 %v442
    %v1767 = vpop.f32.mrf.mxu0
    %v1768 = vadd.f32 %v134, %v1767
    %v1769 = vpop.f32.mrf.mxu0
    %v1770 = vadd.f32 %v134, %v1769
    %1771 = vmatmul.bf16.gmra.mxu0 %v445
    %v1772 = vpop.f32.mrf.mxu0
    %v1773 = vadd.f32 %v134, %v1772
    %v1774 = vpop.f32.mrf.mxu0
    %v1775 = vadd.f32 %v134, %v1774
    %1776 = vmatmul.bf16.gmra.mxu0 %v448
    %v1777 = vpop.f32.mrf.mxu0
    %v1778 = vadd.f32 %v134, %v1777
    %v1779 = vpop.f32.mrf.mxu0
    %v1780 = vadd.f32 %v134, %v1779
    %1781 = vmatmul.bf16.gmra.mxu0 %v451
    %v1782 = vpop.f32.mrf.mxu0
    %v1783 = vadd.f32 %v134, %v1782
    %v1784 = vpop.f32.mrf.mxu0
    %v1785 = vadd.f32 %v134, %v1784
    %1786 = vmatmul.bf16.gmra.mxu0 %v454
    %v1787 = vpop.f32.mrf.mxu0
    %v1788 = vadd.f32 %v134, %v1787
    %v1789 = vpop.f32.mrf.mxu0
    %v1790 = vadd.f32 %v134, %v1789
    %1791 = vmatmul.bf16.gmra.mxu0 %v457
    %v1792 = vpop.f32.mrf.mxu0
    %v1793 = vadd.f32 %v134, %v1792
    %v1794 = vpop.f32.mrf.mxu0
    %v1795 = vadd.f32 %v134, %v1794
    %1796 = vmatmul.bf16.gmra.mxu0 %v460
    %v1797 = vpop.f32.mrf.mxu0
    %v1798 = vadd.f32 %v134, %v1797
    %v1799 = vpop.f32.mrf.mxu0
    %v1800 = vadd.f32 %v134, %v1799
    %1801 = vmatmul.bf16.gmra.mxu0 %v463
    %v1802 = vpop.f32.mrf.mxu0
    %v1803 = vadd.f32 %v134, %v1802
    %v1804 = vpop.f32.mrf.mxu0
    %v1805 = vadd.f32 %v134, %v1804
    %1806 = vmatmul.bf16.gmra.mxu0 %v466
    %v1807 = vpop.f32.mrf.mxu0
    %v1808 = vadd.f32 %v134, %v1807
    %v1809 = vpop.f32.mrf.mxu0
    %v1810 = vadd.f32 %v134, %v1809
    %1811 = vmatmul.bf16.gmra.mxu0 %v469
    %v1812 = vpop.f32.mrf.mxu0
    %v1813 = vadd.f32 %v134, %v1812
    %v1814 = vpop.f32.mrf.mxu0
    %v1815 = vadd.f32 %v134, %v1814
    %1816 = vmatmul.bf16.gmra.mxu0 %v472
    %v1817 = vpop.f32.mrf.mxu0
    %v1818 = vadd.f32 %v134, %v1817
    %v1819 = vpop.f32.mrf.mxu0
    %v1820 = vadd.f32 %v134, %v1819
    %1821 = vmatmul.bf16.gmra.mxu0 %v475
    %v1822 = vpop.f32.mrf.mxu0
    %v1823 = vadd.f32 %v134, %v1822
    %v1824 = vpop.f32.mrf.mxu0
    %v1825 = vadd.f32 %v134, %v1824
    %1826 = vmatmul.bf16.gmra.mxu0 %v478
    %v1827 = vpop.f32.mrf.mxu0
    %v1828 = vadd.f32 %v134, %v1827
    %v1829 = vpop.f32.mrf.mxu0
    %v1830 = vadd.f32 %v134, %v1829
    %1831 = vdwg.mxu0
    %v1832 = vmax.f32 %v490, 0.0
    %v1833 = vmax.f32 %v659, 0.0
    %v1834 = vmax.f32 %v828, 0.0
    %v1835 = vmax.f32 %v997, 0.0
    %v1836 = vmax.f32 %v1166, 0.0
    %v1837 = vmax.f32 %v1335, 0.0
    %v1838 = vmax.f32 %v1504, 0.0
    %v1839 = vmax.f32 %v1673, 0.0
    %v1840 = vmax.f32 %v492, 0.0
    %v1841 = vmax.f32 %v661, 0.0
    %v1842 = vmax.f32 %v830, 0.0
    %v1843 = vmax.f32 %v999, 0.0
    %v1844 = vmax.f32 %v1168, 0.0
    %v1845 = vmax.f32 %v1337, 0.0
    %v1846 = vmax.f32 %v1506, 0.0
    %v1847 = vmax.f32 %v1675, 0.0
    %v1848 = vmax.f32 %v495, 0.0
    %v1849 = vmax.f32 %v664, 0.0
    %v1850 = vmax.f32 %v833, 0.0
    %v1851 = vmax.f32 %v1002, 0.0
    %v1852 = vmax.f32 %v1171, 0.0
    %v1853 = vmax.f32 %v1340, 0.0
    %v1854 = vmax.f32 %v1509, 0.0
    %v1855 = vmax.f32 %v1678, 0.0
    %v1856 = vmax.f32 %v497, 0.0
    %v1857 = vmax.f32 %v666, 0.0
    %v1858 = vmax.f32 %v835, 0.0
    %v1859 = vmax.f32 %v1004, 0.0
    %v1860 = vmax.f32 %v1173, 0.0
    %v1861 = vmax.f32 %v1342, 0.0
    %v1862 = vmax.f32 %v1511, 0.0
    %v1863 = vmax.f32 %v1680, 0.0
    %v1864 = vmax.f32 %v500, 0.0
    %v1865 = vmax.f32 %v669, 0.0
    %v1866 = vmax.f32 %v838, 0.0
    %v1867 = vmax.f32 %v1007, 0.0
    %v1868 = vmax.f32 %v1176, 0.0
    %v1869 = vmax.f32 %v1345, 0.0
    %v1870 = vmax.f32 %v1514, 0.0
    %v1871 = vmax.f32 %v1683, 0.0
    %v1872 = vmax.f32 %v502, 0.0
    %v1873 = vmax.f32 %v671, 0.0
    %v1874 = vmax.f32 %v840, 0.0
    %v1875 = vmax.f32 %v1009, 0.0
    %v1876 = vmax.f32 %v1178, 0.0
    %v1877 = vmax.f32 %v1347, 0.0
    %v1878 = vmax.f32 %v1516, 0.0
    %v1879 = vmax.f32 %v1685, 0.0
    %v1880 = vmax.f32 %v505, 0.0
    %v1881 = vmax.f32 %v674, 0.0
    %v1882 = vmax.f32 %v843, 0.0
    %v1883 = vmax.f32 %v1012, 0.0
    %v1884 = vmax.f32 %v1181, 0.0
    %v1885 = vmax.f32 %v1350, 0.0
    %v1886 = vmax.f32 %v1519, 0.0
    %v1887 = vmax.f32 %v1688, 0.0
    %v1888 = vmax.f32 %v507, 0.0
    %v1889 = vmax.f32 %v676, 0.0
    %v1890 = vmax.f32 %v845, 0.0
    %v1891 = vmax.f32 %v1014, 0.0
    %v1892 = vmax.f32 %v1183, 0.0
    %v1893 = vmax.f32 %v1352, 0.0
    %v1894 = vmax.f32 %v1521, 0.0
    %v1895 = vmax.f32 %v1690, 0.0
    %v1896 = vmax.f32 %v510, 0.0
    %v1897 = vmax.f32 %v679, 0.0
    %v1898 = vmax.f32 %v848, 0.0
    %v1899 = vmax.f32 %v1017, 0.0
    %v1900 = vmax.f32 %v1186, 0.0
    %v1901 = vmax.f32 %v1355, 0.0
    %v1902 = vmax.f32 %v1524, 0.0
    %v1903 = vmax.f32 %v1693, 0.0
    %v1904 = vmax.f32 %v512, 0.0
    %v1905 = vmax.f32 %v681, 0.0
    %v1906 = vmax.f32 %v850, 0.0
    %v1907 = vmax.f32 %v1019, 0.0
    %v1908 = vmax.f32 %v1188, 0.0
    %v1909 = vmax.f32 %v1357, 0.0
    %v1910 = vmax.f32 %v1526, 0.0
    %v1911 = vmax.f32 %v1695, 0.0
    %v1912 = vmax.f32 %v515, 0.0
    %v1913 = vmax.f32 %v684, 0.0
    %v1914 = vmax.f32 %v853, 0.0
    %v1915 = vmax.f32 %v1022, 0.0
    %v1916 = vmax.f32 %v1191, 0.0
    %v1917 = vmax.f32 %v1360, 0.0
    %v1918 = vmax.f32 %v1529, 0.0
    %v1919 = vmax.f32 %v1698, 0.0
    %v1920 = vmax.f32 %v517, 0.0
    %v1921 = vmax.f32 %v686, 0.0
    %v1922 = vmax.f32 %v855, 0.0
    %v1923 = vmax.f32 %v1024, 0.0
    %v1924 = vmax.f32 %v1193, 0.0
    %v1925 = vmax.f32 %v1362, 0.0
    %v1926 = vmax.f32 %v1531, 0.0
    %v1927 = vmax.f32 %v1700, 0.0
    %v1928 = vmax.f32 %v520, 0.0
    %v1929 = vmax.f32 %v689, 0.0
    %v1930 = vmax.f32 %v858, 0.0
    %v1931 = vmax.f32 %v1027, 0.0
    %v1932 = vmax.f32 %v1196, 0.0
    %v1933 = vmax.f32 %v1365, 0.0
    %v1934 = vmax.f32 %v1534, 0.0
    %v1935 = vmax.f32 %v1703, 0.0
    %v1936 = vmax.f32 %v522, 0.0
    %v1937 = vmax.f32 %v691, 0.0
    %v1938 = vmax.f32 %v860, 0.0
    %v1939 = vmax.f32 %v1029, 0.0
    %v1940 = vmax.f32 %v1198, 0.0
    %v1941 = vmax.f32 %v1367, 0.0
    %v1942 = vmax.f32 %v1536, 0.0
    %v1943 = vmax.f32 %v1705, 0.0
    %v1944 = vmax.f32 %v525, 0.0
    %v1945 = vmax.f32 %v694, 0.0
    %v1946 = vmax.f32 %v863, 0.0
    %v1947 = vmax.f32 %v1032, 0.0
    %v1948 = vmax.f32 %v1201, 0.0
    %v1949 = vmax.f32 %v1370, 0.0
    %v1950 = vmax.f32 %v1539, 0.0
    %v1951 = vmax.f32 %v1708, 0.0
    %v1952 = vmax.f32 %v527, 0.0
    %v1953 = vmax.f32 %v696, 0.0
    %v1954 = vmax.f32 %v865, 0.0
    %v1955 = vmax.f32 %v1034, 0.0
    %v1956 = vmax.f32 %v1203, 0.0
    %v1957 = vmax.f32 %v1372, 0.0
    %v1958 = vmax.f32 %v1541, 0.0
    %v1959 = vmax.f32 %v1710, 0.0
    %v1960 = vmax.f32 %v530, 0.0
    %v1961 = vmax.f32 %v699, 0.0
    %v1962 = vmax.f32 %v868, 0.0
    %v1963 = vmax.f32 %v1037, 0.0
    %v1964 = vmax.f32 %v1206, 0.0
    %v1965 = vmax.f32 %v1375, 0.0
    %v1966 = vmax.f32 %v1544, 0.0
    %v1967 = vmax.f32 %v1713, 0.0
    %v1968 = vmax.f32 %v532, 0.0
    %v1969 = vmax.f32 %v701, 0.0
    %v1970 = vmax.f32 %v870, 0.0
    %v1971 = vmax.f32 %v1039, 0.0
    %v1972 = vmax.f32 %v1208, 0.0
    %v1973 = vmax.f32 %v1377, 0.0
    %v1974 = vmax.f32 %v1546, 0.0
    %v1975 = vmax.f32 %v1715, 0.0
    %v1976 = vmax.f32 %v535, 0.0
    %v1977 = vmax.f32 %v704, 0.0
    %v1978 = vmax.f32 %v873, 0.0
    %v1979 = vmax.f32 %v1042, 0.0
    %v1980 = vmax.f32 %v1211, 0.0
    %v1981 = vmax.f32 %v1380, 0.0
    %v1982 = vmax.f32 %v1549, 0.0
    %v1983 = vmax.f32 %v1718, 0.0
    %v1984 = vmax.f32 %v537, 0.0
    %v1985 = vmax.f32 %v706, 0.0
    %v1986 = vmax.f32 %v875, 0.0
    %v1987 = vmax.f32 %v1044, 0.0
    %v1988 = vmax.f32 %v1213, 0.0
    %v1989 = vmax.f32 %v1382, 0.0
    %v1990 = vmax.f32 %v1551, 0.0
    %v1991 = vmax.f32 %v1720, 0.0
    %v1992 = vmax.f32 %v540, 0.0
    %v1993 = vmax.f32 %v709, 0.0
    %v1994 = vmax.f32 %v878, 0.0
    %v1995 = vmax.f32 %v1047, 0.0
    %v1996 = vmax.f32 %v1216, 0.0
    %v1997 = vmax.f32 %v1385, 0.0
    %v1998 = vmax.f32 %v1554, 0.0
    %v1999 = vmax.f32 %v1723, 0.0
    %v2000 = vmax.f32 %v542, 0.0
    %v2001 = vmax.f32 %v711, 0.0
    %v2002 = vmax.f32 %v880, 0.0
    %v2003 = vmax.f32 %v1049, 0.0
    %v2004 = vmax.f32 %v1218, 0.0
    %v2005 = vmax.f32 %v1387, 0.0
    %v2006 = vmax.f32 %v1556, 0.0
    %v2007 = vmax.f32 %v1725, 0.0
    %v2008 = vmax.f32 %v545, 0.0
    %v2009 = vmax.f32 %v714, 0.0
    %v2010 = vmax.f32 %v883, 0.0
    %v2011 = vmax.f32 %v1052, 0.0
    %v2012 = vmax.f32 %v1221, 0.0
    %v2013 = vmax.f32 %v1390, 0.0
    %v2014 = vmax.f32 %v1559, 0.0
    %v2015 = vmax.f32 %v1728, 0.0
    %v2016 = vmax.f32 %v547, 0.0
    %v2017 = vmax.f32 %v716, 0.0
    %v2018 = vmax.f32 %v885, 0.0
    %v2019 = vmax.f32 %v1054, 0.0
    %v2020 = vmax.f32 %v1223, 0.0
    %v2021 = vmax.f32 %v1392, 0.0
    %v2022 = vmax.f32 %v1561, 0.0
    %v2023 = vmax.f32 %v1730, 0.0
    %v2024 = vmax.f32 %v550, 0.0
    %v2025 = vmax.f32 %v719, 0.0
    %v2026 = vmax.f32 %v888, 0.0
    %v2027 = vmax.f32 %v1057, 0.0
    %v2028 = vmax.f32 %v1226, 0.0
    %v2029 = vmax.f32 %v1395, 0.0
    %v2030 = vmax.f32 %v1564, 0.0
    %v2031 = vmax.f32 %v1733, 0.0
    %v2032 = vmax.f32 %v552, 0.0
    %v2033 = vmax.f32 %v721, 0.0
    %v2034 = vmax.f32 %v890, 0.0
    %v2035 = vmax.f32 %v1059, 0.0
    %v2036 = vmax.f32 %v1228, 0.0
    %v2037 = vmax.f32 %v1397, 0.0
    %v2038 = vmax.f32 %v1566, 0.0
    %v2039 = vmax.f32 %v1735, 0.0
    %v2040 = vmax.f32 %v555, 0.0
    %v2041 = vmax.f32 %v724, 0.0
    %v2042 = vmax.f32 %v893, 0.0
    %v2043 = vmax.f32 %v1062, 0.0
    %v2044 = vmax.f32 %v1231, 0.0
    %v2045 = vmax.f32 %v1400, 0.0
    %v2046 = vmax.f32 %v1569, 0.0
    %v2047 = vmax.f32 %v1738, 0.0
    %v2048 = vmax.f32 %v557, 0.0
    %v2049 = vmax.f32 %v726, 0.0
    %v2050 = vmax.f32 %v895, 0.0
    %v2051 = vmax.f32 %v1064, 0.0
    %v2052 = vmax.f32 %v1233, 0.0
    %v2053 = vmax.f32 %v1402, 0.0
    %v2054 = vmax.f32 %v1571, 0.0
    %v2055 = vmax.f32 %v1740, 0.0
    %v2056 = vmax.f32 %v560, 0.0
    %v2057 = vmax.f32 %v729, 0.0
    %v2058 = vmax.f32 %v898, 0.0
    %v2059 = vmax.f32 %v1067, 0.0
    %v2060 = vmax.f32 %v1236, 0.0
    %v2061 = vmax.f32 %v1405, 0.0
    %v2062 = vmax.f32 %v1574, 0.0
    %v2063 = vmax.f32 %v1743, 0.0
    %v2064 = vmax.f32 %v562, 0.0
    %v2065 = vmax.f32 %v731, 0.0
    %v2066 = vmax.f32 %v900, 0.0
    %v2067 = vmax.f32 %v1069, 0.0
    %v2068 = vmax.f32 %v1238, 0.0
    %v2069 = vmax.f32 %v1407, 0.0
    %v2070 = vmax.f32 %v1576, 0.0
    %v2071 = vmax.f32 %v1745, 0.0
    %v2072 = vmax.f32 %v565, 0.0
    %v2073 = vmax.f32 %v734, 0.0
    %v2074 = vmax.f32 %v903, 0.0
    %v2075 = vmax.f32 %v1072, 0.0
    %v2076 = vmax.f32 %v1241, 0.0
    %v2077 = vmax.f32 %v1410, 0.0
    %v2078 = vmax.f32 %v1579, 0.0
    %v2079 = vmax.f32 %v1748, 0.0
    %v2080 = vmax.f32 %v567, 0.0
    %v2081 = vmax.f32 %v736, 0.0
    %v2082 = vmax.f32 %v905, 0.0
    %v2083 = vmax.f32 %v1074, 0.0
    %v2084 = vmax.f32 %v1243, 0.0
    %v2085 = vmax.f32 %v1412, 0.0
    %v2086 = vmax.f32 %v1581, 0.0
    %v2087 = vmax.f32 %v1750, 0.0
    %v2088 = vmax.f32 %v570, 0.0
    %v2089 = vmax.f32 %v739, 0.0
    %v2090 = vmax.f32 %v908, 0.0
    %v2091 = vmax.f32 %v1077, 0.0
    %v2092 = vmax.f32 %v1246, 0.0
    %v2093 = vmax.f32 %v1415, 0.0
    %v2094 = vmax.f32 %v1584, 0.0
    %v2095 = vmax.f32 %v1753, 0.0
    %v2096 = vmax.f32 %v572, 0.0
    %v2097 = vmax.f32 %v741, 0.0
    %v2098 = vmax.f32 %v910, 0.0
    %v2099 = vmax.f32 %v1079, 0.0
    %v2100 = vmax.f32 %v1248, 0.0
    %v2101 = vmax.f32 %v1417, 0.0
    %v2102 = vmax.f32 %v1586, 0.0
    %v2103 = vmax.f32 %v1755, 0.0
    %v2104 = vmax.f32 %v575, 0.0
    %v2105 = vmax.f32 %v744, 0.0
    %v2106 = vmax.f32 %v913, 0.0
    %v2107 = vmax.f32 %v1082, 0.0
    %v2108 = vmax.f32 %v1251, 0.0
    %v2109 = vmax.f32 %v1420, 0.0
    %v2110 = vmax.f32 %v1589, 0.0
    %v2111 = vmax.f32 %v1758, 0.0
    %v2112 = vmax.f32 %v577, 0.0
    %v2113 = vmax.f32 %v746, 0.0
    %v2114 = vmax.f32 %v915, 0.0
    %v2115 = vmax.f32 %v1084, 0.0
    %v2116 = vmax.f32 %v1253, 0.0
    %v2117 = vmax.f32 %v1422, 0.0
    %v2118 = vmax.f32 %v1591, 0.0
    %v2119 = vmax.f32 %v1760, 0.0
    %v2120 = vmax.f32 %v580, 0.0
    %v2121 = vmax.f32 %v749, 0.0
    %v2122 = vmax.f32 %v918, 0.0
    %v2123 = vmax.f32 %v1087, 0.0
    %v2124 = vmax.f32 %v1256, 0.0
    %v2125 = vmax.f32 %v1425, 0.0
    %v2126 = vmax.f32 %v1594, 0.0
    %v2127 = vmax.f32 %v1763, 0.0
    %v2128 = vmax.f32 %v582, 0.0
    %v2129 = vmax.f32 %v751, 0.0
    %v2130 = vmax.f32 %v920, 0.0
    %v2131 = vmax.f32 %v1089, 0.0
    %v2132 = vmax.f32 %v1258, 0.0
    %v2133 = vmax.f32 %v1427, 0.0
    %v2134 = vmax.f32 %v1596, 0.0
    %v2135 = vmax.f32 %v1765, 0.0
    %v2136 = vmax.f32 %v585, 0.0
    %v2137 = vmax.f32 %v754, 0.0
    %v2138 = vmax.f32 %v923, 0.0
    %v2139 = vmax.f32 %v1092, 0.0
    %v2140 = vmax.f32 %v1261, 0.0
    %v2141 = vmax.f32 %v1430, 0.0
    %v2142 = vmax.f32 %v1599, 0.0
    %v2143 = vmax.f32 %v1768, 0.0
    %v2144 = vmax.f32 %v587, 0.0
    %v2145 = vmax.f32 %v756, 0.0
    %v2146 = vmax.f32 %v925, 0.0
    %v2147 = vmax.f32 %v1094, 0.0
    %v2148 = vmax.f32 %v1263, 0.0
    %v2149 = vmax.f32 %v1432, 0.0
    %v2150 = vmax.f32 %v1601, 0.0
    %v2151 = vmax.f32 %v1770, 0.0
    %v2152 = vmax.f32 %v590, 0.0
    %v2153 = vmax.f32 %v759, 0.0
    %v2154 = vmax.f32 %v928, 0.0
    %v2155 = vmax.f32 %v1097, 0.0
    %v2156 = vmax.f32 %v1266, 0.0
    %v2157 = vmax.f32 %v1435, 0.0
    %v2158 = vmax.f32 %v1604, 0.0
    %v2159 = vmax.f32 %v1773, 0.0
    %v2160 = vmax.f32 %v592, 0.0
    %v2161 = vmax.f32 %v761, 0.0
    %v2162 = vmax.f32 %v930, 0.0
    %v2163 = vmax.f32 %v1099, 0.0
    %v2164 = vmax.f32 %v1268, 0.0
    %v2165 = vmax.f32 %v1437, 0.0
    %v2166 = vmax.f32 %v1606, 0.0
    %v2167 = vmax.f32 %v1775, 0.0
    %v2168 = vmax.f32 %v595, 0.0
    %v2169 = vmax.f32 %v764, 0.0
    %v2170 = vmax.f32 %v933, 0.0
    %v2171 = vmax.f32 %v1102, 0.0
    %v2172 = vmax.f32 %v1271, 0.0
    %v2173 = vmax.f32 %v1440, 0.0
    %v2174 = vmax.f32 %v1609, 0.0
    %v2175 = vmax.f32 %v1778, 0.0
    %v2176 = vmax.f32 %v597, 0.0
    %v2177 = vmax.f32 %v766, 0.0
    %v2178 = vmax.f32 %v935, 0.0
    %v2179 = vmax.f32 %v1104, 0.0
    %v2180 = vmax.f32 %v1273, 0.0
    %v2181 = vmax.f32 %v1442, 0.0
    %v2182 = vmax.f32 %v1611, 0.0
    %v2183 = vmax.f32 %v1780, 0.0
    %v2184 = vmax.f32 %v600, 0.0
    %v2185 = vmax.f32 %v769, 0.0
    %v2186 = vmax.f32 %v938, 0.0
    %v2187 = vmax.f32 %v1107, 0.0
    %v2188 = vmax.f32 %v1276, 0.0
    %v2189 = vmax.f32 %v1445, 0.0
    %v2190 = vmax.f32 %v1614, 0.0
    %v2191 = vmax.f32 %v1783, 0.0
    %v2192 = vmax.f32 %v602, 0.0
    %v2193 = vmax.f32 %v771, 0.0
    %v2194 = vmax.f32 %v940, 0.0
    %v2195 = vmax.f32 %v1109, 0.0
    %v2196 = vmax.f32 %v1278, 0.0
    %v2197 = vmax.f32 %v1447, 0.0
    %v2198 = vmax.f32 %v1616, 0.0
    %v2199 = vmax.f32 %v1785, 0.0
    %v2200 = vmax.f32 %v605, 0.0
    %v2201 = vmax.f32 %v774, 0.0
    %v2202 = vmax.f32 %v943, 0.0
    %v2203 = vmax.f32 %v1112, 0.0
    %v2204 = vmax.f32 %v1281, 0.0
    %v2205 = vmax.f32 %v1450, 0.0
    %v2206 = vmax.f32 %v1619, 0.0
    %v2207 = vmax.f32 %v1788, 0.0
    %v2208 = vmax.f32 %v607, 0.0
    %v2209 = vmax.f32 %v776, 0.0
    %v2210 = vmax.f32 %v945, 0.0
    %v2211 = vmax.f32 %v1114, 0.0
    %v2212 = vmax.f32 %v1283, 0.0
    %v2213 = vmax.f32 %v1452, 0.0
    %v2214 = vmax.f32 %v1621, 0.0
    %v2215 = vmax.f32 %v1790, 0.0
    %v2216 = vmax.f32 %v610, 0.0
    %v2217 = vmax.f32 %v779, 0.0
    %v2218 = vmax.f32 %v948, 0.0
    %v2219 = vmax.f32 %v1117, 0.0
    %v2220 = vmax.f32 %v1286, 0.0
    %v2221 = vmax.f32 %v1455, 0.0
    %v2222 = vmax.f32 %v1624, 0.0
    %v2223 = vmax.f32 %v1793, 0.0
    %v2224 = vmax.f32 %v612, 0.0
    %v2225 = vmax.f32 %v781, 0.0
    %v2226 = vmax.f32 %v950, 0.0
    %v2227 = vmax.f32 %v1119, 0.0
    %v2228 = vmax.f32 %v1288, 0.0
    %v2229 = vmax.f32 %v1457, 0.0
    %v2230 = vmax.f32 %v1626, 0.0
    %v2231 = vmax.f32 %v1795, 0.0
    %v2232 = vmax.f32 %v615, 0.0
    %v2233 = vmax.f32 %v784, 0.0
    %v2234 = vmax.f32 %v953, 0.0
    %v2235 = vmax.f32 %v1122, 0.0
    %v2236 = vmax.f32 %v1291, 0.0
    %v2237 = vmax.f32 %v1460, 0.0
    %v2238 = vmax.f32 %v1629, 0.0
    %v2239 = vmax.f32 %v1798, 0.0
    %v2240 = vmax.f32 %v617, 0.0
    %v2241 = vmax.f32 %v786, 0.0
    %v2242 = vmax.f32 %v955, 0.0
    %v2243 = vmax.f32 %v1124, 0.0
    %v2244 = vmax.f32 %v1293, 0.0
    %v2245 = vmax.f32 %v1462, 0.0
    %v2246 = vmax.f32 %v1631, 0.0
    %v2247 = vmax.f32 %v1800, 0.0
    %v2248 = vmax.f32 %v620, 0.0
    %v2249 = vmax.f32 %v789, 0.0
    %v2250 = vmax.f32 %v958, 0.0
    %v2251 = vmax.f32 %v1127, 0.0
    %v2252 = vmax.f32 %v1296, 0.0
    %v2253 = vmax.f32 %v1465, 0.0
    %v2254 = vmax.f32 %v1634, 0.0
    %v2255 = vmax.f32 %v1803, 0.0
    %v2256 = vmax.f32 %v622, 0.0
    %v2257 = vmax.f32 %v791, 0.0
    %v2258 = vmax.f32 %v960, 0.0
    %v2259 = vmax.f32 %v1129, 0.0
    %v2260 = vmax.f32 %v1298, 0.0
    %v2261 = vmax.f32 %v1467, 0.0
    %v2262 = vmax.f32 %v1636, 0.0
    %v2263 = vmax.f32 %v1805, 0.0
    %v2264 = vmax.f32 %v625, 0.0
    %v2265 = vmax.f32 %v794, 0.0
    %v2266 = vmax.f32 %v963, 0.0
    %v2267 = vmax.f32 %v1132, 0.0
    %v2268 = vmax.f32 %v1301, 0.0
    %v2269 = vmax.f32 %v1470, 0.0
    %v2270 = vmax.f32 %v1639, 0.0
    %v2271 = vmax.f32 %v1808, 0.0
    %v2272 = vmax.f32 %v627, 0.0
    %v2273 = vmax.f32 %v796, 0.0
    %v2274 = vmax.f32 %v965, 0.0
    %v2275 = vmax.f32 %v1134, 0.0
    %v2276 = vmax.f32 %v1303, 0.0
    %v2277 = vmax.f32 %v1472, 0.0
    %v2278 = vmax.f32 %v1641, 0.0
    %v2279 = vmax.f32 %v1810, 0.0
    %v2280 = vmax.f32 %v630, 0.0
    %v2281 = vmax.f32 %v799, 0.0
    %v2282 = vmax.f32 %v968, 0.0
    %v2283 = vmax.f32 %v1137, 0.0
    %v2284 = vmax.f32 %v1306, 0.0
    %v2285 = vmax.f32 %v1475, 0.0
    %v2286 = vmax.f32 %v1644, 0.0
    %v2287 = vmax.f32 %v1813, 0.0
    %v2288 = vmax.f32 %v632, 0.0
    %v2289 = vmax.f32 %v801, 0.0
    %v2290 = vmax.f32 %v970, 0.0
    %v2291 = vmax.f32 %v1139, 0.0
    %v2292 = vmax.f32 %v1308, 0.0
    %v2293 = vmax.f32 %v1477, 0.0
    %v2294 = vmax.f32 %v1646, 0.0
    %v2295 = vmax.f32 %v1815, 0.0
    %v2296 = vmax.f32 %v635, 0.0
    %v2297 = vmax.f32 %v804, 0.0
    %v2298 = vmax.f32 %v973, 0.0
    %v2299 = vmax.f32 %v1142, 0.0
    %v2300 = vmax.f32 %v1311, 0.0
    %v2301 = vmax.f32 %v1480, 0.0
    %v2302 = vmax.f32 %v1649, 0.0
    %v2303 = vmax.f32 %v1818, 0.0
    %v2304 = vmax.f32 %v637, 0.0
    %v2305 = vmax.f32 %v806, 0.0
    %v2306 = vmax.f32 %v975, 0.0
    %v2307 = vmax.f32 %v1144, 0.0
    %v2308 = vmax.f32 %v1313, 0.0
    %v2309 = vmax.f32 %v1482, 0.0
    %v2310 = vmax.f32 %v1651, 0.0
    %v2311 = vmax.f32 %v1820, 0.0
    %v2312 = vmax.f32 %v640, 0.0
    %v2313 = vmax.f32 %v809, 0.0
    %v2314 = vmax.f32 %v978, 0.0
    %v2315 = vmax.f32 %v1147, 0.0
    %v2316 = vmax.f32 %v1316, 0.0
    %v2317 = vmax.f32 %v1485, 0.0
    %v2318 = vmax.f32 %v1654, 0.0
    %v2319 = vmax.f32 %v1823, 0.0
    %v2320 = vmax.f32 %v642, 0.0
    %v2321 = vmax.f32 %v811, 0.0
    %v2322 = vmax.f32 %v980, 0.0
    %v2323 = vmax.f32 %v1149, 0.0
    %v2324 = vmax.f32 %v1318, 0.0
    %v2325 = vmax.f32 %v1487, 0.0
    %v2326 = vmax.f32 %v1656, 0.0
    %v2327 = vmax.f32 %v1825, 0.0
    %v2328 = vmax.f32 %v645, 0.0
    %v2329 = vmax.f32 %v814, 0.0
    %v2330 = vmax.f32 %v983, 0.0
    %v2331 = vmax.f32 %v1152, 0.0
    %v2332 = vmax.f32 %v1321, 0.0
    %v2333 = vmax.f32 %v1490, 0.0
    %v2334 = vmax.f32 %v1659, 0.0
    %v2335 = vmax.f32 %v1828, 0.0
    %v2336 = vmax.f32 %v647, 0.0
    %v2337 = vmax.f32 %v816, 0.0
    %v2338 = vmax.f32 %v985, 0.0
    %v2339 = vmax.f32 %v1154, 0.0
    %v2340 = vmax.f32 %v1323, 0.0
    %v2341 = vmax.f32 %v1492, 0.0
    %v2342 = vmax.f32 %v1661, 0.0
    %v2343 = vmax.f32 %v1830, 0.0
    %v2344 = vpack.c.bf16 %v1840, %v1832
    %v2345 = vpack.c.bf16 %v1841, %v1833
    %v2346 = vpack.c.bf16 %v1842, %v1834
    %v2347 = vpack.c.bf16 %v1843, %v1835
    %v2348 = vpack.c.bf16 %v1844, %v1836
    %v2349 = vpack.c.bf16 %v1845, %v1837
    %v2350 = vpack.c.bf16 %v1846, %v1838
    %v2351 = vpack.c.bf16 %v1847, %v1839
    %v2352 = vpack.c.bf16 %v1856, %v1848
    %v2353 = vpack.c.bf16 %v1857, %v1849
    %v2354 = vpack.c.bf16 %v1858, %v1850
    %v2355 = vpack.c.bf16 %v1859, %v1851
    %v2356 = vpack.c.bf16 %v1860, %v1852
    %v2357 = vpack.c.bf16 %v1861, %v1853
    %v2358 = vpack.c.bf16 %v1862, %v1854
    %v2359 = vpack.c.bf16 %v1863, %v1855
    %v2360 = vpack.c.bf16 %v1872, %v1864
    %v2361 = vpack.c.bf16 %v1873, %v1865
    %v2362 = vpack.c.bf16 %v1874, %v1866
    %v2363 = vpack.c.bf16 %v1875, %v1867
    %v2364 = vpack.c.bf16 %v1876, %v1868
    %v2365 = vpack.c.bf16 %v1877, %v1869
    %v2366 = vpack.c.bf16 %v1878, %v1870
    %v2367 = vpack.c.bf16 %v1879, %v1871
    %v2368 = vpack.c.bf16 %v1888, %v1880
    %v2369 = vpack.c.bf16 %v1889, %v1881
    %v2370 = vpack.c.bf16 %v1890, %v1882
    %v2371 = vpack.c.bf16 %v1891, %v1883
    %v2372 = vpack.c.bf16 %v1892, %v1884
    %v2373 = vpack.c.bf16 %v1893, %v1885
    %v2374 = vpack.c.bf16 %v1894, %v1886
    %v2375 = vpack.c.bf16 %v1895, %v1887
    %v2376 = vpack.c.bf16 %v1904, %v1896
    %v2377 = vpack.c.bf16 %v1905, %v1897
    %v2378 = vpack.c.bf16 %v1906, %v1898
    %v2379 = vpack.c.bf16 %v1907, %v1899
    %v2380 = vpack.c.bf16 %v1908, %v1900
    %v2381 = vpack.c.bf16 %v1909, %v1901
    %v2382 = vpack.c.bf16 %v1910, %v1902
    %v2383 = vpack.c.bf16 %v1911, %v1903
    %v2384 = vpack.c.bf16 %v1920, %v1912
    %v2385 = vpack.c.bf16 %v1921, %v1913
    %v2386 = vpack.c.bf16 %v1922, %v1914
    %v2387 = vpack.c.bf16 %v1923, %v1915
    %v2388 = vpack.c.bf16 %v1924, %v1916
    %v2389 = vpack.c.bf16 %v1925, %v1917
    %v2390 = vpack.c.bf16 %v1926, %v1918
    %v2391 = vpack.c.bf16 %v1927, %v1919
    %v2392 = vpack.c.bf16 %v1936, %v1928
    %v2393 = vpack.c.bf16 %v1937, %v1929
    %v2394 = vpack.c.bf16 %v1938, %v1930
    %v2395 = vpack.c.bf16 %v1939, %v1931
    %v2396 = vpack.c.bf16 %v1940, %v1932
    %v2397 = vpack.c.bf16 %v1941, %v1933
    %v2398 = vpack.c.bf16 %v1942, %v1934
    %v2399 = vpack.c.bf16 %v1943, %v1935
    %v2400 = vpack.c.bf16 %v1952, %v1944
    %v2401 = vpack.c.bf16 %v1953, %v1945
    %v2402 = vpack.c.bf16 %v1954, %v1946
    %v2403 = vpack.c.bf16 %v1955, %v1947
    %v2404 = vpack.c.bf16 %v1956, %v1948
    %v2405 = vpack.c.bf16 %v1957, %v1949
    %v2406 = vpack.c.bf16 %v1958, %v1950
    %v2407 = vpack.c.bf16 %v1959, %v1951
    %v2408 = vpack.c.bf16 %v1968, %v1960
    %v2409 = vpack.c.bf16 %v1969, %v1961
    %v2410 = vpack.c.bf16 %v1970, %v1962
    %v2411 = vpack.c.bf16 %v1971, %v1963
    %v2412 = vpack.c.bf16 %v1972, %v1964
    %v2413 = vpack.c.bf16 %v1973, %v1965
    %v2414 = vpack.c.bf16 %v1974, %v1966
    %v2415 = vpack.c.bf16 %v1975, %v1967
    %v2416 = vpack.c.bf16 %v1984, %v1976
    %v2417 = vpack.c.bf16 %v1985, %v1977
    %v2418 = vpack.c.bf16 %v1986, %v1978
    %v2419 = vpack.c.bf16 %v1987, %v1979
    %v2420 = vpack.c.bf16 %v1988, %v1980
    %v2421 = vpack.c.bf16 %v1989, %v1981
    %v2422 = vpack.c.bf16 %v1990, %v1982
    %v2423 = vpack.c.bf16 %v1991, %v1983
    %v2424 = vpack.c.bf16 %v2000, %v1992
    %v2425 = vpack.c.bf16 %v2001, %v1993
    %v2426 = vpack.c.bf16 %v2002, %v1994
    %v2427 = vpack.c.bf16 %v2003, %v1995
    %v2428 = vpack.c.bf16 %v2004, %v1996
    %v2429 = vpack.c.bf16 %v2005, %v1997
    %v2430 = vpack.c.bf16 %v2006, %v1998
    %v2431 = vpack.c.bf16 %v2007, %v1999
    %v2432 = vpack.c.bf16 %v2016, %v2008
    %v2433 = vpack.c.bf16 %v2017, %v2009
    %v2434 = vpack.c.bf16 %v2018, %v2010
    %v2435 = vpack.c.bf16 %v2019, %v2011
    %v2436 = vpack.c.bf16 %v2020, %v2012
    %v2437 = vpack.c.bf16 %v2021, %v2013
    %v2438 = vpack.c.bf16 %v2022, %v2014
    %v2439 = vpack.c.bf16 %v2023, %v2015
    %v2440 = vpack.c.bf16 %v2032, %v2024
    %v2441 = vpack.c.bf16 %v2033, %v2025
    %v2442 = vpack.c.bf16 %v2034, %v2026
    %v2443 = vpack.c.bf16 %v2035, %v2027
    %v2444 = vpack.c.bf16 %v2036, %v2028
    %v2445 = vpack.c.bf16 %v2037, %v2029
    %v2446 = vpack.c.bf16 %v2038, %v2030
    %v2447 = vpack.c.bf16 %v2039, %v2031
    %v2448 = vpack.c.bf16 %v2048, %v2040
    %v2449 = vpack.c.bf16 %v2049, %v2041
    %v2450 = vpack.c.bf16 %v2050, %v2042
    %v2451 = vpack.c.bf16 %v2051, %v2043
    %v2452 = vpack.c.bf16 %v2052, %v2044
    %v2453 = vpack.c.bf16 %v2053, %v2045
    %v2454 = vpack.c.bf16 %v2054, %v2046
    %v2455 = vpack.c.bf16 %v2055, %v2047
    %v2456 = vpack.c.bf16 %v2064, %v2056
    %v2457 = vpack.c.bf16 %v2065, %v2057
    %v2458 = vpack.c.bf16 %v2066, %v2058
    %v2459 = vpack.c.bf16 %v2067, %v2059
    %v2460 = vpack.c.bf16 %v2068, %v2060
    %v2461 = vpack.c.bf16 %v2069, %v2061
    %v2462 = vpack.c.bf16 %v2070, %v2062
    %v2463 = vpack.c.bf16 %v2071, %v2063
    %v2464 = vpack.c.bf16 %v2080, %v2072
    %v2465 = vpack.c.bf16 %v2081, %v2073
    %v2466 = vpack.c.bf16 %v2082, %v2074
    %v2467 = vpack.c.bf16 %v2083, %v2075
    %v2468 = vpack.c.bf16 %v2084, %v2076
    %v2469 = vpack.c.bf16 %v2085, %v2077
    %v2470 = vpack.c.bf16 %v2086, %v2078
    %v2471 = vpack.c.bf16 %v2087, %v2079
    %v2472 = vpack.c.bf16 %v2096, %v2088
    %v2473 = vpack.c.bf16 %v2097, %v2089
    %v2474 = vpack.c.bf16 %v2098, %v2090
    %v2475 = vpack.c.bf16 %v2099, %v2091
    %v2476 = vpack.c.bf16 %v2100, %v2092
    %v2477 = vpack.c.bf16 %v2101, %v2093
    %v2478 = vpack.c.bf16 %v2102, %v2094
    %v2479 = vpack.c.bf16 %v2103, %v2095
    %v2480 = vpack.c.bf16 %v2112, %v2104
    %v2481 = vpack.c.bf16 %v2113, %v2105
    %v2482 = vpack.c.bf16 %v2114, %v2106
    %v2483 = vpack.c.bf16 %v2115, %v2107
    %v2484 = vpack.c.bf16 %v2116, %v2108
    %v2485 = vpack.c.bf16 %v2117, %v2109
    %v2486 = vpack.c.bf16 %v2118, %v2110
    %v2487 = vpack.c.bf16 %v2119, %v2111
    %v2488 = vpack.c.bf16 %v2128, %v2120
    %v2489 = vpack.c.bf16 %v2129, %v2121
    %v2490 = vpack.c.bf16 %v2130, %v2122
    %v2491 = vpack.c.bf16 %v2131, %v2123
    %v2492 = vpack.c.bf16 %v2132, %v2124
    %v2493 = vpack.c.bf16 %v2133, %v2125
    %v2494 = vpack.c.bf16 %v2134, %v2126
    %v2495 = vpack.c.bf16 %v2135, %v2127
    %v2496 = vpack.c.bf16 %v2144, %v2136
    %v2497 = vpack.c.bf16 %v2145, %v2137
    %v2498 = vpack.c.bf16 %v2146, %v2138
    %v2499 = vpack.c.bf16 %v2147, %v2139
    %v2500 = vpack.c.bf16 %v2148, %v2140
    %v2501 = vpack.c.bf16 %v2149, %v2141
    %v2502 = vpack.c.bf16 %v2150, %v2142
    %v2503 = vpack.c.bf16 %v2151, %v2143
    %v2504 = vpack.c.bf16 %v2160, %v2152
    %v2505 = vpack.c.bf16 %v2161, %v2153
    %v2506 = vpack.c.bf16 %v2162, %v2154
    %v2507 = vpack.c.bf16 %v2163, %v2155
    %v2508 = vpack.c.bf16 %v2164, %v2156
    %v2509 = vpack.c.bf16 %v2165, %v2157
    %v2510 = vpack.c.bf16 %v2166, %v2158
    %v2511 = vpack.c.bf16 %v2167, %v2159
    %v2512 = vpack.c.bf16 %v2176, %v2168
    %v2513 = vpack.c.bf16 %v2177, %v2169
    %v2514 = vpack.c.bf16 %v2178, %v2170
    %v2515 = vpack.c.bf16 %v2179, %v2171
    %v2516 = vpack.c.bf16 %v2180, %v2172
    %v2517 = vpack.c.bf16 %v2181, %v2173
    %v2518 = vpack.c.bf16 %v2182, %v2174
    %v2519 = vpack.c.bf16 %v2183, %v2175
    %v2520 = vpack.c.bf16 %v2192, %v2184
    %v2521 = vpack.c.bf16 %v2193, %v2185
    %v2522 = vpack.c.bf16 %v2194, %v2186
    %v2523 = vpack.c.bf16 %v2195, %v2187
    %v2524 = vpack.c.bf16 %v2196, %v2188
    %v2525 = vpack.c.bf16 %v2197, %v2189
    %v2526 = vpack.c.bf16 %v2198, %v2190
    %v2527 = vpack.c.bf16 %v2199, %v2191
    %v2528 = vpack.c.bf16 %v2208, %v2200
    %v2529 = vpack.c.bf16 %v2209, %v2201
    %v2530 = vpack.c.bf16 %v2210, %v2202
    %v2531 = vpack.c.bf16 %v2211, %v2203
    %v2532 = vpack.c.bf16 %v2212, %v2204
    %v2533 = vpack.c.bf16 %v2213, %v2205
    %v2534 = vpack.c.bf16 %v2214, %v2206
    %v2535 = vpack.c.bf16 %v2215, %v2207
    %v2536 = vpack.c.bf16 %v2224, %v2216
    %v2537 = vpack.c.bf16 %v2225, %v2217
    %v2538 = vpack.c.bf16 %v2226, %v2218
    %v2539 = vpack.c.bf16 %v2227, %v2219
    %v2540 = vpack.c.bf16 %v2228, %v2220
    %v2541 = vpack.c.bf16 %v2229, %v2221
    %v2542 = vpack.c.bf16 %v2230, %v2222
    %v2543 = vpack.c.bf16 %v2231, %v2223
    %v2544 = vpack.c.bf16 %v2240, %v2232
    %v2545 = vpack.c.bf16 %v2241, %v2233
    %v2546 = vpack.c.bf16 %v2242, %v2234
    %v2547 = vpack.c.bf16 %v2243, %v2235
    %v2548 = vpack.c.bf16 %v2244, %v2236
    %v2549 = vpack.c.bf16 %v2245, %v2237
    %v2550 = vpack.c.bf16 %v2246, %v2238
    %v2551 = vpack.c.bf16 %v2247, %v2239
    %v2552 = vpack.c.bf16 %v2256, %v2248
    %v2553 = vpack.c.bf16 %v2257, %v2249
    %v2554 = vpack.c.bf16 %v2258, %v2250
    %v2555 = vpack.c.bf16 %v2259, %v2251
    %v2556 = vpack.c.bf16 %v2260, %v2252
    %v2557 = vpack.c.bf16 %v2261, %v2253
    %v2558 = vpack.c.bf16 %v2262, %v2254
    %v2559 = vpack.c.bf16 %v2263, %v2255
    %v2560 = vpack.c.bf16 %v2272, %v2264
    %v2561 = vpack.c.bf16 %v2273, %v2265
    %v2562 = vpack.c.bf16 %v2274, %v2266
    %v2563 = vpack.c.bf16 %v2275, %v2267
    %v2564 = vpack.c.bf16 %v2276, %v2268
    %v2565 = vpack.c.bf16 %v2277, %v2269
    %v2566 = vpack.c.bf16 %v2278, %v2270
    %v2567 = vpack.c.bf16 %v2279, %v2271
    %v2568 = vpack.c.bf16 %v2288, %v2280
    %v2569 = vpack.c.bf16 %v2289, %v2281
    %v2570 = vpack.c.bf16 %v2290, %v2282
    %v2571 = vpack.c.bf16 %v2291, %v2283
    %v2572 = vpack.c.bf16 %v2292, %v2284
    %v2573 = vpack.c.bf16 %v2293, %v2285
    %v2574 = vpack.c.bf16 %v2294, %v2286
    %v2575 = vpack.c.bf16 %v2295, %v2287
    %v2576 = vpack.c.bf16 %v2304, %v2296
    %v2577 = vpack.c.bf16 %v2305, %v2297
    %v2578 = vpack.c.bf16 %v2306, %v2298
    %v2579 = vpack.c.bf16 %v2307, %v2299
    %v2580 = vpack.c.bf16 %v2308, %v2300
    %v2581 = vpack.c.bf16 %v2309, %v2301
    %v2582 = vpack.c.bf16 %v2310, %v2302
    %v2583 = vpack.c.bf16 %v2311, %v2303
    %v2584 = vpack.c.bf16 %v2320, %v2312
    %v2585 = vpack.c.bf16 %v2321, %v2313
    %v2586 = vpack.c.bf16 %v2322, %v2314
    %v2587 = vpack.c.bf16 %v2323, %v2315
    %v2588 = vpack.c.bf16 %v2324, %v2316
    %v2589 = vpack.c.bf16 %v2325, %v2317
    %v2590 = vpack.c.bf16 %v2326, %v2318
    %v2591 = vpack.c.bf16 %v2327, %v2319
    %v2592 = vpack.c.bf16 %v2336, %v2328
    %v2593 = vpack.c.bf16 %v2337, %v2329
    %v2594 = vpack.c.bf16 %v2338, %v2330
    %v2595 = vpack.c.bf16 %v2339, %v2331
    %v2596 = vpack.c.bf16 %v2340, %v2332
    %v2597 = vpack.c.bf16 %v2341, %v2333
    %v2598 = vpack.c.bf16 %v2342, %v2334
    %v2599 = vpack.c.bf16 %v2343, %v2335
    %v2600 = vld [vmem:[#allocation3] sm:$0xff]
    %v2601 = vld [vmem:[#allocation3 + $0x8] sm:$0xff]
    %v2602 = vld [vmem:[#allocation3 + $0x10] sm:$0xff]
    %v2603 = vld [vmem:[#allocation3 + $0x18] sm:$0xff]
    %v2604 = vld [vmem:[#allocation3 + $0x20] sm:$0xff]
    %v2605 = vld [vmem:[#allocation3 + $0x28] sm:$0xff]
    %v2606 = vld [vmem:[#allocation3 + $0x30] sm:$0xff]
    %v2607 = vld [vmem:[#allocation3 + $0x38] sm:$0xff]
    %v2608 = vld [vmem:[#allocation3 + $0x40] sm:$0xff]
    %v2609 = vld [vmem:[#allocation3 + $0x48] sm:$0xff]
    %v2610 = vld [vmem:[#allocation3 + $0x50] sm:$0xff]
    %v2611 = vld [vmem:[#allocation3 + $0x58] sm:$0xff]
    %v2612 = vld [vmem:[#allocation3 + $0x60] sm:$0xff]
    %v2613 = vld [vmem:[#allocation3 + $0x68] sm:$0xff]
    %v2614 = vld [vmem:[#allocation3 + $0x70] sm:$0xff]
    %v2615 = vld [vmem:[#allocation3 + $0x78] sm:$0xff]
    %v2616 = vld [vmem:[#allocation3 + $0x80] sm:$0xff]
    %v2617 = vld [vmem:[#allocation3 + $0x88] sm:$0xff]
    %v2618 = vld [vmem:[#allocation3 + $0x90] sm:$0xff]
    %v2619 = vld [vmem:[#allocation3 + $0x98] sm:$0xff]
    %v2620 = vld [vmem:[#allocation3 + $0xa0] sm:$0xff]
    %v2621 = vld [vmem:[#allocation3 + $0xa8] sm:$0xff]
    %v2622 = vld [vmem:[#allocation3 + $0xb0] sm:$0xff]
    %v2623 = vld [vmem:[#allocation3 + $0xb8] sm:$0xff]
    %v2624 = vld [vmem:[#allocation3 + $0xc0] sm:$0xff]
    %v2625 = vld [vmem:[#allocation3 + $0xc8] sm:$0xff]
    %v2626 = vld [vmem:[#allocation3 + $0xd0] sm:$0xff]
    %v2627 = vld [vmem:[#allocation3 + $0xd8] sm:$0xff]
    %v2628 = vld [vmem:[#allocation3 + $0xe0] sm:$0xff]
    %v2629 = vld [vmem:[#allocation3 + $0xe8] sm:$0xff]
    %v2630 = vld [vmem:[#allocation3 + $0xf0] sm:$0xff]
    %v2631 = vld [vmem:[#allocation3 + $0xf8] sm:$0xff]
    %v2632 = vld [vmem:[#allocation3 + $0x100] sm:$0xff]
    %v2633 = vld [vmem:[#allocation3 + $0x108] sm:$0xff]
    %v2634 = vld [vmem:[#allocation3 + $0x110] sm:$0xff]
    %v2635 = vld [vmem:[#allocation3 + $0x118] sm:$0xff]
    %v2636 = vld [vmem:[#allocation3 + $0x120] sm:$0xff]
    %v2637 = vld [vmem:[#allocation3 + $0x128] sm:$0xff]
    %v2638 = vld [vmem:[#allocation3 + $0x130] sm:$0xff]
    %v2639 = vld [vmem:[#allocation3 + $0x138] sm:$0xff]
    %v2640 = vld [vmem:[#allocation3 + $0x140] sm:$0xff]
    %v2641 = vld [vmem:[#allocation3 + $0x148] sm:$0xff]
    %v2642 = vld [vmem:[#allocation3 + $0x150] sm:$0xff]
    %v2643 = vld [vmem:[#allocation3 + $0x158] sm:$0xff]
    %v2644 = vld [vmem:[#allocation3 + $0x160] sm:$0xff]
    %v2645 = vld [vmem:[#allocation3 + $0x168] sm:$0xff]
    %v2646 = vld [vmem:[#allocation3 + $0x170] sm:$0xff]
    %v2647 = vld [vmem:[#allocation3 + $0x178] sm:$0xff]
    %v2648 = vld [vmem:[#allocation3 + $0x180] sm:$0xff]
    %v2649 = vld [vmem:[#allocation3 + $0x188] sm:$0xff]
    %v2650 = vld [vmem:[#allocation3 + $0x190] sm:$0xff]
    %v2651 = vld [vmem:[#allocation3 + $0x198] sm:$0xff]
    %v2652 = vld [vmem:[#allocation3 + $0x1a0] sm:$0xff]
    %v2653 = vld [vmem:[#allocation3 + $0x1a8] sm:$0xff]
    %v2654 = vld [vmem:[#allocation3 + $0x1b0] sm:$0xff]
    %v2655 = vld [vmem:[#allocation3 + $0x1b8] sm:$0xff]
    %v2656 = vld [vmem:[#allocation3 + $0x1c0] sm:$0xff]
    %v2657 = vld [vmem:[#allocation3 + $0x1c8] sm:$0xff]
    %v2658 = vld [vmem:[#allocation3 + $0x1d0] sm:$0xff]
    %v2659 = vld [vmem:[#allocation3 + $0x1d8] sm:$0xff]
    %v2660 = vld [vmem:[#allocation3 + $0x1e0] sm:$0xff]
    %v2661 = vld [vmem:[#allocation3 + $0x1e8] sm:$0xff]
    %v2662 = vld [vmem:[#allocation3 + $0x1f0] sm:$0xff]
    %v2663 = vld [vmem:[#allocation3 + $0x1f8] sm:$0xff]
    %v2664 = vld [vmem:[#allocation3 + $0x200] sm:$0xff]
    %v2665 = vld [vmem:[#allocation3 + $0x208] sm:$0xff]
    %v2666 = vld [vmem:[#allocation3 + $0x210] sm:$0xff]
    %v2667 = vld [vmem:[#allocation3 + $0x218] sm:$0xff]
    %v2668 = vld [vmem:[#allocation3 + $0x220] sm:$0xff]
    %v2669 = vld [vmem:[#allocation3 + $0x228] sm:$0xff]
    %v2670 = vld [vmem:[#allocation3 + $0x230] sm:$0xff]
    %v2671 = vld [vmem:[#allocation3 + $0x238] sm:$0xff]
    %v2672 = vld [vmem:[#allocation3 + $0x240] sm:$0xff]
    %v2673 = vld [vmem:[#allocation3 + $0x248] sm:$0xff]
    %v2674 = vld [vmem:[#allocation3 + $0x250] sm:$0xff]
    %v2675 = vld [vmem:[#allocation3 + $0x258] sm:$0xff]
    %v2676 = vld [vmem:[#allocation3 + $0x260] sm:$0xff]
    %v2677 = vld [vmem:[#allocation3 + $0x268] sm:$0xff]
    %v2678 = vld [vmem:[#allocation3 + $0x270] sm:$0xff]
    %v2679 = vld [vmem:[#allocation3 + $0x278] sm:$0xff]
    %v2680 = vld [vmem:[#allocation3 + $0x280] sm:$0xff]
    %v2681 = vld [vmem:[#allocation3 + $0x288] sm:$0xff]
    %v2682 = vld [vmem:[#allocation3 + $0x290] sm:$0xff]
    %v2683 = vld [vmem:[#allocation3 + $0x298] sm:$0xff]
    %v2684 = vld [vmem:[#allocation3 + $0x2a0] sm:$0xff]
    %v2685 = vld [vmem:[#allocation3 + $0x2a8] sm:$0xff]
    %v2686 = vld [vmem:[#allocation3 + $0x2b0] sm:$0xff]
    %v2687 = vld [vmem:[#allocation3 + $0x2b8] sm:$0xff]
    %v2688 = vld [vmem:[#allocation3 + $0x2c0] sm:$0xff]
    %v2689 = vld [vmem:[#allocation3 + $0x2c8] sm:$0xff]
    %v2690 = vld [vmem:[#allocation3 + $0x2d0] sm:$0xff]
    %v2691 = vld [vmem:[#allocation3 + $0x2d8] sm:$0xff]
    %v2692 = vld [vmem:[#allocation3 + $0x2e0] sm:$0xff]
    %v2693 = vld [vmem:[#allocation3 + $0x2e8] sm:$0xff]
    %v2694 = vld [vmem:[#allocation3 + $0x2f0] sm:$0xff]
    %v2695 = vld [vmem:[#allocation3 + $0x2f8] sm:$0xff]
    %v2696 = vld [vmem:[#allocation3 + $0x300] sm:$0xff]
    %v2697 = vld [vmem:[#allocation3 + $0x308] sm:$0xff]
    %v2698 = vld [vmem:[#allocation3 + $0x310] sm:$0xff]
    %v2699 = vld [vmem:[#allocation3 + $0x318] sm:$0xff]
    %v2700 = vld [vmem:[#allocation3 + $0x320] sm:$0xff]
    %v2701 = vld [vmem:[#allocation3 + $0x328] sm:$0xff]
    %v2702 = vld [vmem:[#allocation3 + $0x330] sm:$0xff]
    %v2703 = vld [vmem:[#allocation3 + $0x338] sm:$0xff]
    %v2704 = vld [vmem:[#allocation3 + $0x340] sm:$0xff]
    %v2705 = vld [vmem:[#allocation3 + $0x348] sm:$0xff]
    %v2706 = vld [vmem:[#allocation3 + $0x350] sm:$0xff]
    %v2707 = vld [vmem:[#allocation3 + $0x358] sm:$0xff]
    %v2708 = vld [vmem:[#allocation3 + $0x360] sm:$0xff]
    %v2709 = vld [vmem:[#allocation3 + $0x368] sm:$0xff]
    %v2710 = vld [vmem:[#allocation3 + $0x370] sm:$0xff]
    %v2711 = vld [vmem:[#allocation3 + $0x378] sm:$0xff]
    %v2712 = vld [vmem:[#allocation3 + $0x380] sm:$0xff]
    %v2713 = vld [vmem:[#allocation3 + $0x388] sm:$0xff]
    %v2714 = vld [vmem:[#allocation3 + $0x390] sm:$0xff]
    %v2715 = vld [vmem:[#allocation3 + $0x398] sm:$0xff]
    %v2716 = vld [vmem:[#allocation3 + $0x3a0] sm:$0xff]
    %v2717 = vld [vmem:[#allocation3 + $0x3a8] sm:$0xff]
    %v2718 = vld [vmem:[#allocation3 + $0x3b0] sm:$0xff]
    %v2719 = vld [vmem:[#allocation3 + $0x3b8] sm:$0xff]
    %v2720 = vld [vmem:[#allocation3 + $0x3c0] sm:$0xff]
    %v2721 = vld [vmem:[#allocation3 + $0x3c8] sm:$0xff]
    %v2722 = vld [vmem:[#allocation3 + $0x3d0] sm:$0xff]
    %v2723 = vld [vmem:[#allocation3 + $0x3d8] sm:$0xff]
    %v2724 = vld [vmem:[#allocation3 + $0x3e0] sm:$0xff]
    %v2725 = vld [vmem:[#allocation3 + $0x3e8] sm:$0xff]
    %v2726 = vld [vmem:[#allocation3 + $0x3f0] sm:$0xff]
    %v2727 = vld [vmem:[#allocation3 + $0x3f8] sm:$0xff]
    %v2728 = vld [vmem:[#allocation3 + $0x400] sm:$0xff]
    %v2729 = vld [vmem:[#allocation3 + $0x408] sm:$0xff]
    %v2730 = vld [vmem:[#allocation3 + $0x410] sm:$0xff]
    %v2731 = vld [vmem:[#allocation3 + $0x418] sm:$0xff]
    %v2732 = vld [vmem:[#allocation3 + $0x420] sm:$0xff]
    %v2733 = vld [vmem:[#allocation3 + $0x428] sm:$0xff]
    %v2734 = vld [vmem:[#allocation3 + $0x430] sm:$0xff]
    %v2735 = vld [vmem:[#allocation3 + $0x438] sm:$0xff]
    %v2736 = vld [vmem:[#allocation3 + $0x440] sm:$0xff]
    %v2737 = vld [vmem:[#allocation3 + $0x448] sm:$0xff]
    %v2738 = vld [vmem:[#allocation3 + $0x450] sm:$0xff]
    %v2739 = vld [vmem:[#allocation3 + $0x458] sm:$0xff]
    %v2740 = vld [vmem:[#allocation3 + $0x460] sm:$0xff]
    %v2741 = vld [vmem:[#allocation3 + $0x468] sm:$0xff]
    %v2742 = vld [vmem:[#allocation3 + $0x470] sm:$0xff]
    %v2743 = vld [vmem:[#allocation3 + $0x478] sm:$0xff]
    %v2744 = vld [vmem:[#allocation3 + $0x480] sm:$0xff]
    %v2745 = vld [vmem:[#allocation3 + $0x488] sm:$0xff]
    %v2746 = vld [vmem:[#allocation3 + $0x490] sm:$0xff]
    %v2747 = vld [vmem:[#allocation3 + $0x498] sm:$0xff]
    %v2748 = vld [vmem:[#allocation3 + $0x4a0] sm:$0xff]
    %v2749 = vld [vmem:[#allocation3 + $0x4a8] sm:$0xff]
    %v2750 = vld [vmem:[#allocation3 + $0x4b0] sm:$0xff]
    %v2751 = vld [vmem:[#allocation3 + $0x4b8] sm:$0xff]
    %v2752 = vld [vmem:[#allocation3 + $0x4c0] sm:$0xff]
    %v2753 = vld [vmem:[#allocation3 + $0x4c8] sm:$0xff]
    %v2754 = vld [vmem:[#allocation3 + $0x4d0] sm:$0xff]
    %v2755 = vld [vmem:[#allocation3 + $0x4d8] sm:$0xff]
    %v2756 = vld [vmem:[#allocation3 + $0x4e0] sm:$0xff]
    %v2757 = vld [vmem:[#allocation3 + $0x4e8] sm:$0xff]
    %v2758 = vld [vmem:[#allocation3 + $0x4f0] sm:$0xff]
    %v2759 = vld [vmem:[#allocation3 + $0x4f8] sm:$0xff]
    %v2760 = vld [vmem:[#allocation3 + $0x500] sm:$0xff]
    %v2761 = vld [vmem:[#allocation3 + $0x508] sm:$0xff]
    %v2762 = vld [vmem:[#allocation3 + $0x510] sm:$0xff]
    %v2763 = vld [vmem:[#allocation3 + $0x518] sm:$0xff]
    %v2764 = vld [vmem:[#allocation3 + $0x520] sm:$0xff]
    %v2765 = vld [vmem:[#allocation3 + $0x528] sm:$0xff]
    %v2766 = vld [vmem:[#allocation3 + $0x530] sm:$0xff]
    %v2767 = vld [vmem:[#allocation3 + $0x538] sm:$0xff]
    %v2768 = vld [vmem:[#allocation3 + $0x540] sm:$0xff]
    %v2769 = vld [vmem:[#allocation3 + $0x548] sm:$0xff]
    %v2770 = vld [vmem:[#allocation3 + $0x550] sm:$0xff]
    %v2771 = vld [vmem:[#allocation3 + $0x558] sm:$0xff]
    %v2772 = vld [vmem:[#allocation3 + $0x560] sm:$0xff]
    %v2773 = vld [vmem:[#allocation3 + $0x568] sm:$0xff]
    %v2774 = vld [vmem:[#allocation3 + $0x570] sm:$0xff]
    %v2775 = vld [vmem:[#allocation3 + $0x578] sm:$0xff]
    %v2776 = vld [vmem:[#allocation3 + $0x580] sm:$0xff]
    %v2777 = vld [vmem:[#allocation3 + $0x588] sm:$0xff]
    %v2778 = vld [vmem:[#allocation3 + $0x590] sm:$0xff]
    %v2779 = vld [vmem:[#allocation3 + $0x598] sm:$0xff]
    %v2780 = vld [vmem:[#allocation3 + $0x5a0] sm:$0xff]
    %v2781 = vld [vmem:[#allocation3 + $0x5a8] sm:$0xff]
    %v2782 = vld [vmem:[#allocation3 + $0x5b0] sm:$0xff]
    %v2783 = vld [vmem:[#allocation3 + $0x5b8] sm:$0xff]
    %v2784 = vld [vmem:[#allocation3 + $0x5c0] sm:$0xff]
    %v2785 = vld [vmem:[#allocation3 + $0x5c8] sm:$0xff]
    %v2786 = vld [vmem:[#allocation3 + $0x5d0] sm:$0xff]
    %v2787 = vld [vmem:[#allocation3 + $0x5d8] sm:$0xff]
    %v2788 = vld [vmem:[#allocation3 + $0x5e0] sm:$0xff]
    %v2789 = vld [vmem:[#allocation3 + $0x5e8] sm:$0xff]
    %v2790 = vld [vmem:[#allocation3 + $0x5f0] sm:$0xff]
    %v2791 = vld [vmem:[#allocation3 + $0x5f8] sm:$0xff]
    %v2792 = vld [vmem:[#allocation3 + $0x600] sm:$0xff]
    %v2793 = vld [vmem:[#allocation3 + $0x608] sm:$0xff]
    %v2794 = vld [vmem:[#allocation3 + $0x610] sm:$0xff]
    %v2795 = vld [vmem:[#allocation3 + $0x618] sm:$0xff]
    %v2796 = vld [vmem:[#allocation3 + $0x620] sm:$0xff]
    %v2797 = vld [vmem:[#allocation3 + $0x628] sm:$0xff]
    %v2798 = vld [vmem:[#allocation3 + $0x630] sm:$0xff]
    %v2799 = vld [vmem:[#allocation3 + $0x638] sm:$0xff]
    %v2800 = vld [vmem:[#allocation3 + $0x640] sm:$0xff]
    %v2801 = vld [vmem:[#allocation3 + $0x648] sm:$0xff]
    %v2802 = vld [vmem:[#allocation3 + $0x650] sm:$0xff]
    %v2803 = vld [vmem:[#allocation3 + $0x658] sm:$0xff]
    %v2804 = vld [vmem:[#allocation3 + $0x660] sm:$0xff]
    %v2805 = vld [vmem:[#allocation3 + $0x668] sm:$0xff]
    %v2806 = vld [vmem:[#allocation3 + $0x670] sm:$0xff]
    %v2807 = vld [vmem:[#allocation3 + $0x678] sm:$0xff]
    %v2808 = vld [vmem:[#allocation3 + $0x680] sm:$0xff]
    %v2809 = vld [vmem:[#allocation3 + $0x688] sm:$0xff]
    %v2810 = vld [vmem:[#allocation3 + $0x690] sm:$0xff]
    %v2811 = vld [vmem:[#allocation3 + $0x698] sm:$0xff]
    %v2812 = vld [vmem:[#allocation3 + $0x6a0] sm:$0xff]
    %v2813 = vld [vmem:[#allocation3 + $0x6a8] sm:$0xff]
    %v2814 = vld [vmem:[#allocation3 + $0x6b0] sm:$0xff]
    %v2815 = vld [vmem:[#allocation3 + $0x6b8] sm:$0xff]
    %v2816 = vld [vmem:[#allocation3 + $0x6c0] sm:$0xff]
    %v2817 = vld [vmem:[#allocation3 + $0x6c8] sm:$0xff]
    %v2818 = vld [vmem:[#allocation3 + $0x6d0] sm:$0xff]
    %v2819 = vld [vmem:[#allocation3 + $0x6d8] sm:$0xff]
    %v2820 = vld [vmem:[#allocation3 + $0x6e0] sm:$0xff]
    %v2821 = vld [vmem:[#allocation3 + $0x6e8] sm:$0xff]
    %v2822 = vld [vmem:[#allocation3 + $0x6f0] sm:$0xff]
    %v2823 = vld [vmem:[#allocation3 + $0x6f8] sm:$0xff]
    %v2824 = vld [vmem:[#allocation3 + $0x700] sm:$0xff]
    %v2825 = vld [vmem:[#allocation3 + $0x708] sm:$0xff]
    %v2826 = vld [vmem:[#allocation3 + $0x710] sm:$0xff]
    %v2827 = vld [vmem:[#allocation3 + $0x718] sm:$0xff]
    %v2828 = vld [vmem:[#allocation3 + $0x720] sm:$0xff]
    %v2829 = vld [vmem:[#allocation3 + $0x728] sm:$0xff]
    %v2830 = vld [vmem:[#allocation3 + $0x730] sm:$0xff]
    %v2831 = vld [vmem:[#allocation3 + $0x738] sm:$0xff]
    %v2832 = vld [vmem:[#allocation3 + $0x740] sm:$0xff]
    %v2833 = vld [vmem:[#allocation3 + $0x748] sm:$0xff]
    %v2834 = vld [vmem:[#allocation3 + $0x750] sm:$0xff]
    %v2835 = vld [vmem:[#allocation3 + $0x758] sm:$0xff]
    %v2836 = vld [vmem:[#allocation3 + $0x760] sm:$0xff]
    %v2837 = vld [vmem:[#allocation3 + $0x768] sm:$0xff]
    %v2838 = vld [vmem:[#allocation3 + $0x770] sm:$0xff]
    %v2839 = vld [vmem:[#allocation3 + $0x778] sm:$0xff]
    %v2840 = vld [vmem:[#allocation3 + $0x780] sm:$0xff]
    %v2841 = vld [vmem:[#allocation3 + $0x788] sm:$0xff]
    %v2842 = vld [vmem:[#allocation3 + $0x790] sm:$0xff]
    %v2843 = vld [vmem:[#allocation3 + $0x798] sm:$0xff]
    %v2844 = vld [vmem:[#allocation3 + $0x7a0] sm:$0xff]
    %v2845 = vld [vmem:[#allocation3 + $0x7a8] sm:$0xff]
    %v2846 = vld [vmem:[#allocation3 + $0x7b0] sm:$0xff]
    %v2847 = vld [vmem:[#allocation3 + $0x7b8] sm:$0xff]
    %v2848 = vld [vmem:[#allocation3 + $0x7c0] sm:$0xff]
    %v2849 = vld [vmem:[#allocation3 + $0x7c8] sm:$0xff]
    %v2850 = vld [vmem:[#allocation3 + $0x7d0] sm:$0xff]
    %v2851 = vld [vmem:[#allocation3 + $0x7d8] sm:$0xff]
    %v2852 = vld [vmem:[#allocation3 + $0x7e0] sm:$0xff]
    %v2853 = vld [vmem:[#allocation3 + $0x7e8] sm:$0xff]
    %v2854 = vld [vmem:[#allocation3 + $0x7f0] sm:$0xff]
    %v2855 = vld [vmem:[#allocation3 + $0x7f8] sm:$0xff]
    %v2856 = vld [vmem:[%s4] sm:$0xf]
    %v2858 = vperm.slane %v2856, 0
    %v2859 = vperm.slane %v2856, 1
    %v2860 = vperm.slane %v2856, 2
    %v2861 = vperm.slane %v2856, 3
    %v3122 = vunpack.c.l.b16 %v2600
    %v3123 = vunpack.c.h.b16 %v2600
    %v3124 = vunpack.c.l.b16 %v2601
    %v3125 = vunpack.c.h.b16 %v2601
    %v3126 = vunpack.c.l.b16 %v2602
    %v3127 = vunpack.c.h.b16 %v2602
    %v3128 = vunpack.c.l.b16 %v2603
    %v3129 = vunpack.c.h.b16 %v2603
    %v3130 = vunpack.c.l.b16 %v2604
    %v3131 = vunpack.c.h.b16 %v2604
    %v3132 = vunpack.c.l.b16 %v2605
    %v3133 = vunpack.c.h.b16 %v2605
    %v3134 = vunpack.c.l.b16 %v2606
    %v3135 = vunpack.c.h.b16 %v2606
    %v3136 = vunpack.c.l.b16 %v2607
    %v3137 = vunpack.c.h.b16 %v2607
    %v3138 = vunpack.c.l.b16 %v2608
    %v3139 = vunpack.c.h.b16 %v2608
    %v3140 = vunpack.c.l.b16 %v2609
    %v3141 = vunpack.c.h.b16 %v2609
    %v3142 = vunpack.c.l.b16 %v2610
    %v3143 = vunpack.c.h.b16 %v2610
    %v3144 = vunpack.c.l.b16 %v2611
    %v3145 = vunpack.c.h.b16 %v2611
    %v3146 = vunpack.c.l.b16 %v2612
    %v3147 = vunpack.c.h.b16 %v2612
    %v3148 = vunpack.c.l.b16 %v2613
    %v3149 = vunpack.c.h.b16 %v2613
    %v3150 = vunpack.c.l.b16 %v2614
    %v3151 = vunpack.c.h.b16 %v2614
    %v3152 = vunpack.c.l.b16 %v2615
    %v3153 = vunpack.c.h.b16 %v2615
    %v3154 = vunpack.c.l.b16 %v2616
    %v3155 = vunpack.c.h.b16 %v2616
    %v3156 = vunpack.c.l.b16 %v2617
    %v3157 = vunpack.c.h.b16 %v2617
    %v3158 = vunpack.c.l.b16 %v2618
    %v3159 = vunpack.c.h.b16 %v2618
    %v3160 = vunpack.c.l.b16 %v2619
    %v3161 = vunpack.c.h.b16 %v2619
    %v3162 = vunpack.c.l.b16 %v2620
    %v3163 = vunpack.c.h.b16 %v2620
    %v3164 = vunpack.c.l.b16 %v2621
    %v3165 = vunpack.c.h.b16 %v2621
    %v3166 = vunpack.c.l.b16 %v2622
    %v3167 = vunpack.c.h.b16 %v2622
    %v3168 = vunpack.c.l.b16 %v2623
    %v3169 = vunpack.c.h.b16 %v2623
    %v3170 = vunpack.c.l.b16 %v2624
    %v3171 = vunpack.c.h.b16 %v2624
    %v3172 = vunpack.c.l.b16 %v2625
    %v3173 = vunpack.c.h.b16 %v2625
    %v3174 = vunpack.c.l.b16 %v2626
    %v3175 = vunpack.c.h.b16 %v2626
    %v3176 = vunpack.c.l.b16 %v2627
    %v3177 = vunpack.c.h.b16 %v2627
    %v3178 = vunpack.c.l.b16 %v2628
    %v3179 = vunpack.c.h.b16 %v2628
    %v3180 = vunpack.c.l.b16 %v2629
    %v3181 = vunpack.c.h.b16 %v2629
    %v3182 = vunpack.c.l.b16 %v2630
    %v3183 = vunpack.c.h.b16 %v2630
    %v3184 = vunpack.c.l.b16 %v2631
    %v3185 = vunpack.c.h.b16 %v2631
    %v3186 = vunpack.c.l.b16 %v2632
    %v3187 = vunpack.c.h.b16 %v2632
    %v3188 = vunpack.c.l.b16 %v2633
    %v3189 = vunpack.c.h.b16 %v2633
    %v3190 = vunpack.c.l.b16 %v2634
    %v3191 = vunpack.c.h.b16 %v2634
    %v3192 = vunpack.c.l.b16 %v2635
    %v3193 = vunpack.c.h.b16 %v2635
    %v3194 = vunpack.c.l.b16 %v2636
    %v3195 = vunpack.c.h.b16 %v2636
    %v3196 = vunpack.c.l.b16 %v2637
    %v3197 = vunpack.c.h.b16 %v2637
    %v3198 = vunpack.c.l.b16 %v2638
    %v3199 = vunpack.c.h.b16 %v2638
    %v3200 = vunpack.c.l.b16 %v2639
    %v3201 = vunpack.c.h.b16 %v2639
    %v3202 = vunpack.c.l.b16 %v2640
    %v3203 = vunpack.c.h.b16 %v2640
    %v3204 = vunpack.c.l.b16 %v2641
    %v3205 = vunpack.c.h.b16 %v2641
    %v3206 = vunpack.c.l.b16 %v2642
    %v3207 = vunpack.c.h.b16 %v2642
    %v3208 = vunpack.c.l.b16 %v2643
    %v3209 = vunpack.c.h.b16 %v2643
    %v3210 = vunpack.c.l.b16 %v2644
    %v3211 = vunpack.c.h.b16 %v2644
    %v3212 = vunpack.c.l.b16 %v2645
    %v3213 = vunpack.c.h.b16 %v2645
    %v3214 = vunpack.c.l.b16 %v2646
    %v3215 = vunpack.c.h.b16 %v2646
    %v3216 = vunpack.c.l.b16 %v2647
    %v3217 = vunpack.c.h.b16 %v2647
    %v3218 = vunpack.c.l.b16 %v2648
    %v3219 = vunpack.c.h.b16 %v2648
    %v3220 = vunpack.c.l.b16 %v2649
    %v3221 = vunpack.c.h.b16 %v2649
    %v3222 = vunpack.c.l.b16 %v2650
    %v3223 = vunpack.c.h.b16 %v2650
    %v3224 = vunpack.c.l.b16 %v2651
    %v3225 = vunpack.c.h.b16 %v2651
    %v3226 = vunpack.c.l.b16 %v2652
    %v3227 = vunpack.c.h.b16 %v2652
    %v3228 = vunpack.c.l.b16 %v2653
    %v3229 = vunpack.c.h.b16 %v2653
    %v3230 = vunpack.c.l.b16 %v2654
    %v3231 = vunpack.c.h.b16 %v2654
    %v3232 = vunpack.c.l.b16 %v2655
    %v3233 = vunpack.c.h.b16 %v2655
    %v3234 = vunpack.c.l.b16 %v2656
    %v3235 = vunpack.c.h.b16 %v2656
    %v3236 = vunpack.c.l.b16 %v2657
    %v3237 = vunpack.c.h.b16 %v2657
    %v3238 = vunpack.c.l.b16 %v2658
    %v3239 = vunpack.c.h.b16 %v2658
    %v3240 = vunpack.c.l.b16 %v2659
    %v3241 = vunpack.c.h.b16 %v2659
    %v3242 = vunpack.c.l.b16 %v2660
    %v3243 = vunpack.c.h.b16 %v2660
    %v3244 = vunpack.c.l.b16 %v2661
    %v3245 = vunpack.c.h.b16 %v2661
    %v3246 = vunpack.c.l.b16 %v2662
    %v3247 = vunpack.c.h.b16 %v2662
    %v3248 = vunpack.c.l.b16 %v2663
    %v3249 = vunpack.c.h.b16 %v2663
    %v3250 = vunpack.c.l.b16 %v2664
    %v3251 = vunpack.c.h.b16 %v2664
    %v3252 = vunpack.c.l.b16 %v2665
    %v3253 = vunpack.c.h.b16 %v2665
    %v3254 = vunpack.c.l.b16 %v2666
    %v3255 = vunpack.c.h.b16 %v2666
    %v3256 = vunpack.c.l.b16 %v2667
    %v3257 = vunpack.c.h.b16 %v2667
    %v3258 = vunpack.c.l.b16 %v2668
    %v3259 = vunpack.c.h.b16 %v2668
    %v3260 = vunpack.c.l.b16 %v2669
    %v3261 = vunpack.c.h.b16 %v2669
    %v3262 = vunpack.c.l.b16 %v2670
    %v3263 = vunpack.c.h.b16 %v2670
    %v3264 = vunpack.c.l.b16 %v2671
    %v3265 = vunpack.c.h.b16 %v2671
    %v3266 = vunpack.c.l.b16 %v2672
    %v3267 = vunpack.c.h.b16 %v2672
    %v3268 = vunpack.c.l.b16 %v2673
    %v3269 = vunpack.c.h.b16 %v2673
    %v3270 = vunpack.c.l.b16 %v2674
    %v3271 = vunpack.c.h.b16 %v2674
    %v3272 = vunpack.c.l.b16 %v2675
    %v3273 = vunpack.c.h.b16 %v2675
    %v3274 = vunpack.c.l.b16 %v2676
    %v3275 = vunpack.c.h.b16 %v2676
    %v3276 = vunpack.c.l.b16 %v2677
    %v3277 = vunpack.c.h.b16 %v2677
    %v3278 = vunpack.c.l.b16 %v2678
    %v3279 = vunpack.c.h.b16 %v2678
    %v3280 = vunpack.c.l.b16 %v2679
    %v3281 = vunpack.c.h.b16 %v2679
    %v3282 = vunpack.c.l.b16 %v2680
    %v3283 = vunpack.c.h.b16 %v2680
    %v3284 = vunpack.c.l.b16 %v2681
    %v3285 = vunpack.c.h.b16 %v2681
    %v3286 = vunpack.c.l.b16 %v2682
    %v3287 = vunpack.c.h.b16 %v2682
    %v3288 = vunpack.c.l.b16 %v2683
    %v3289 = vunpack.c.h.b16 %v2683
    %v3290 = vunpack.c.l.b16 %v2684
    %v3291 = vunpack.c.h.b16 %v2684
    %v3292 = vunpack.c.l.b16 %v2685
    %v3293 = vunpack.c.h.b16 %v2685
    %v3294 = vunpack.c.l.b16 %v2686
    %v3295 = vunpack.c.h.b16 %v2686
    %v3296 = vunpack.c.l.b16 %v2687
    %v3297 = vunpack.c.h.b16 %v2687
    %v3298 = vunpack.c.l.b16 %v2688
    %v3299 = vunpack.c.h.b16 %v2688
    %v3300 = vunpack.c.l.b16 %v2689
    %v3301 = vunpack.c.h.b16 %v2689
    %v3302 = vunpack.c.l.b16 %v2690
    %v3303 = vunpack.c.h.b16 %v2690
    %v3304 = vunpack.c.l.b16 %v2691
    %v3305 = vunpack.c.h.b16 %v2691
    %v3306 = vunpack.c.l.b16 %v2692
    %v3307 = vunpack.c.h.b16 %v2692
    %v3308 = vunpack.c.l.b16 %v2693
    %v3309 = vunpack.c.h.b16 %v2693
    %v3310 = vunpack.c.l.b16 %v2694
    %v3311 = vunpack.c.h.b16 %v2694
    %v3312 = vunpack.c.l.b16 %v2695
    %v3313 = vunpack.c.h.b16 %v2695
    %v3314 = vunpack.c.l.b16 %v2696
    %v3315 = vunpack.c.h.b16 %v2696
    %v3316 = vunpack.c.l.b16 %v2697
    %v3317 = vunpack.c.h.b16 %v2697
    %v3318 = vunpack.c.l.b16 %v2698
    %v3319 = vunpack.c.h.b16 %v2698
    %v3320 = vunpack.c.l.b16 %v2699
    %v3321 = vunpack.c.h.b16 %v2699
    %v3322 = vunpack.c.l.b16 %v2700
    %v3323 = vunpack.c.h.b16 %v2700
    %v3324 = vunpack.c.l.b16 %v2701
    %v3325 = vunpack.c.h.b16 %v2701
    %v3326 = vunpack.c.l.b16 %v2702
    %v3327 = vunpack.c.h.b16 %v2702
    %v3328 = vunpack.c.l.b16 %v2703
    %v3329 = vunpack.c.h.b16 %v2703
    %v3330 = vunpack.c.l.b16 %v2704
    %v3331 = vunpack.c.h.b16 %v2704
    %v3332 = vunpack.c.l.b16 %v2705
    %v3333 = vunpack.c.h.b16 %v2705
    %v3334 = vunpack.c.l.b16 %v2706
    %v3335 = vunpack.c.h.b16 %v2706
    %v3336 = vunpack.c.l.b16 %v2707
    %v3337 = vunpack.c.h.b16 %v2707
    %v3338 = vunpack.c.l.b16 %v2708
    %v3339 = vunpack.c.h.b16 %v2708
    %v3340 = vunpack.c.l.b16 %v2709
    %v3341 = vunpack.c.h.b16 %v2709
    %v3342 = vunpack.c.l.b16 %v2710
    %v3343 = vunpack.c.h.b16 %v2710
    %v3344 = vunpack.c.l.b16 %v2711
    %v3345 = vunpack.c.h.b16 %v2711
    %v3346 = vunpack.c.l.b16 %v2712
    %v3347 = vunpack.c.h.b16 %v2712
    %v3348 = vunpack.c.l.b16 %v2713
    %v3349 = vunpack.c.h.b16 %v2713
    %v3350 = vunpack.c.l.b16 %v2714
    %v3351 = vunpack.c.h.b16 %v2714
    %v3352 = vunpack.c.l.b16 %v2715
    %v3353 = vunpack.c.h.b16 %v2715
    %v3354 = vunpack.c.l.b16 %v2716
    %v3355 = vunpack.c.h.b16 %v2716
    %v3356 = vunpack.c.l.b16 %v2717
    %v3357 = vunpack.c.h.b16 %v2717
    %v3358 = vunpack.c.l.b16 %v2718
    %v3359 = vunpack.c.h.b16 %v2718
    %v3360 = vunpack.c.l.b16 %v2719
    %v3361 = vunpack.c.h.b16 %v2719
    %v3362 = vunpack.c.l.b16 %v2720
    %v3363 = vunpack.c.h.b16 %v2720
    %v3364 = vunpack.c.l.b16 %v2721
    %v3365 = vunpack.c.h.b16 %v2721
    %v3366 = vunpack.c.l.b16 %v2722
    %v3367 = vunpack.c.h.b16 %v2722
    %v3368 = vunpack.c.l.b16 %v2723
    %v3369 = vunpack.c.h.b16 %v2723
    %v3370 = vunpack.c.l.b16 %v2724
    %v3371 = vunpack.c.h.b16 %v2724
    %v3372 = vunpack.c.l.b16 %v2725
    %v3373 = vunpack.c.h.b16 %v2725
    %v3374 = vunpack.c.l.b16 %v2726
    %v3375 = vunpack.c.h.b16 %v2726
    %v3376 = vunpack.c.l.b16 %v2727
    %v3377 = vunpack.c.h.b16 %v2727
    %v3378 = vunpack.c.l.b16 %v2728
    %v3379 = vunpack.c.h.b16 %v2728
    %v3380 = vunpack.c.l.b16 %v2729
    %v3381 = vunpack.c.h.b16 %v2729
    %v3382 = vunpack.c.l.b16 %v2730
    %v3383 = vunpack.c.h.b16 %v2730
    %v3384 = vunpack.c.l.b16 %v2731
    %v3385 = vunpack.c.h.b16 %v2731
    %v3386 = vunpack.c.l.b16 %v2732
    %v3387 = vunpack.c.h.b16 %v2732
    %v3388 = vunpack.c.l.b16 %v2733
    %v3389 = vunpack.c.h.b16 %v2733
    %v3390 = vunpack.c.l.b16 %v2734
    %v3391 = vunpack.c.h.b16 %v2734
    %v3392 = vunpack.c.l.b16 %v2735
    %v3393 = vunpack.c.h.b16 %v2735
    %v3394 = vunpack.c.l.b16 %v2736
    %v3395 = vunpack.c.h.b16 %v2736
    %v3396 = vunpack.c.l.b16 %v2737
    %v3397 = vunpack.c.h.b16 %v2737
    %v3398 = vunpack.c.l.b16 %v2738
    %v3399 = vunpack.c.h.b16 %v2738
    %v3400 = vunpack.c.l.b16 %v2739
    %v3401 = vunpack.c.h.b16 %v2739
    %v3402 = vunpack.c.l.b16 %v2740
    %v3403 = vunpack.c.h.b16 %v2740
    %v3404 = vunpack.c.l.b16 %v2741
    %v3405 = vunpack.c.h.b16 %v2741
    %v3406 = vunpack.c.l.b16 %v2742
    %v3407 = vunpack.c.h.b16 %v2742
    %v3408 = vunpack.c.l.b16 %v2743
    %v3409 = vunpack.c.h.b16 %v2743
    %v3410 = vunpack.c.l.b16 %v2744
    %v3411 = vunpack.c.h.b16 %v2744
    %v3412 = vunpack.c.l.b16 %v2745
    %v3413 = vunpack.c.h.b16 %v2745
    %v3414 = vunpack.c.l.b16 %v2746
    %v3415 = vunpack.c.h.b16 %v2746
    %v3416 = vunpack.c.l.b16 %v2747
    %v3417 = vunpack.c.h.b16 %v2747
    %v3418 = vunpack.c.l.b16 %v2748
    %v3419 = vunpack.c.h.b16 %v2748
    %v3420 = vunpack.c.l.b16 %v2749
    %v3421 = vunpack.c.h.b16 %v2749
    %v3422 = vunpack.c.l.b16 %v2750
    %v3423 = vunpack.c.h.b16 %v2750
    %v3424 = vunpack.c.l.b16 %v2751
    %v3425 = vunpack.c.h.b16 %v2751
    %v3426 = vunpack.c.l.b16 %v2752
    %v3427 = vunpack.c.h.b16 %v2752
    %v3428 = vunpack.c.l.b16 %v2753
    %v3429 = vunpack.c.h.b16 %v2753
    %v3430 = vunpack.c.l.b16 %v2754
    %v3431 = vunpack.c.h.b16 %v2754
    %v3432 = vunpack.c.l.b16 %v2755
    %v3433 = vunpack.c.h.b16 %v2755
    %v3434 = vunpack.c.l.b16 %v2756
    %v3435 = vunpack.c.h.b16 %v2756
    %v3436 = vunpack.c.l.b16 %v2757
    %v3437 = vunpack.c.h.b16 %v2757
    %v3438 = vunpack.c.l.b16 %v2758
    %v3439 = vunpack.c.h.b16 %v2758
    %v3440 = vunpack.c.l.b16 %v2759
    %v3441 = vunpack.c.h.b16 %v2759
    %v3442 = vunpack.c.l.b16 %v2760
    %v3443 = vunpack.c.h.b16 %v2760
    %v3444 = vunpack.c.l.b16 %v2761
    %v3445 = vunpack.c.h.b16 %v2761
    %v3446 = vunpack.c.l.b16 %v2762
    %v3447 = vunpack.c.h.b16 %v2762
    %v3448 = vunpack.c.l.b16 %v2763
    %v3449 = vunpack.c.h.b16 %v2763
    %v3450 = vunpack.c.l.b16 %v2764
    %v3451 = vunpack.c.h.b16 %v2764
    %v3452 = vunpack.c.l.b16 %v2765
    %v3453 = vunpack.c.h.b16 %v2765
    %v3454 = vunpack.c.l.b16 %v2766
    %v3455 = vunpack.c.h.b16 %v2766
    %v3456 = vunpack.c.l.b16 %v2767
    %v3457 = vunpack.c.h.b16 %v2767
    %v3458 = vunpack.c.l.b16 %v2768
    %v3459 = vunpack.c.h.b16 %v2768
    %v3460 = vunpack.c.l.b16 %v2769
    %v3461 = vunpack.c.h.b16 %v2769
    %v3462 = vunpack.c.l.b16 %v2770
    %v3463 = vunpack.c.h.b16 %v2770
    %v3464 = vunpack.c.l.b16 %v2771
    %v3465 = vunpack.c.h.b16 %v2771
    %v3466 = vunpack.c.l.b16 %v2772
    %v3467 = vunpack.c.h.b16 %v2772
    %v3468 = vunpack.c.l.b16 %v2773
    %v3469 = vunpack.c.h.b16 %v2773
    %v3470 = vunpack.c.l.b16 %v2774
    %v3471 = vunpack.c.h.b16 %v2774
    %v3472 = vunpack.c.l.b16 %v2775
    %v3473 = vunpack.c.h.b16 %v2775
    %v3474 = vunpack.c.l.b16 %v2776
    %v3475 = vunpack.c.h.b16 %v2776
    %v3476 = vunpack.c.l.b16 %v2777
    %v3477 = vunpack.c.h.b16 %v2777
    %v3478 = vunpack.c.l.b16 %v2778
    %v3479 = vunpack.c.h.b16 %v2778
    %v3480 = vunpack.c.l.b16 %v2779
    %v3481 = vunpack.c.h.b16 %v2779
    %v3482 = vunpack.c.l.b16 %v2780
    %v3483 = vunpack.c.h.b16 %v2780
    %v3484 = vunpack.c.l.b16 %v2781
    %v3485 = vunpack.c.h.b16 %v2781
    %v3486 = vunpack.c.l.b16 %v2782
    %v3487 = vunpack.c.h.b16 %v2782
    %v3488 = vunpack.c.l.b16 %v2783
    %v3489 = vunpack.c.h.b16 %v2783
    %v3490 = vunpack.c.l.b16 %v2784
    %v3491 = vunpack.c.h.b16 %v2784
    %v3492 = vunpack.c.l.b16 %v2785
    %v3493 = vunpack.c.h.b16 %v2785
    %v3494 = vunpack.c.l.b16 %v2786
    %v3495 = vunpack.c.h.b16 %v2786
    %v3496 = vunpack.c.l.b16 %v2787
    %v3497 = vunpack.c.h.b16 %v2787
    %v3498 = vunpack.c.l.b16 %v2788
    %v3499 = vunpack.c.h.b16 %v2788
    %v3500 = vunpack.c.l.b16 %v2789
    %v3501 = vunpack.c.h.b16 %v2789
    %v3502 = vunpack.c.l.b16 %v2790
    %v3503 = vunpack.c.h.b16 %v2790
    %v3504 = vunpack.c.l.b16 %v2791
    %v3505 = vunpack.c.h.b16 %v2791
    %v3506 = vunpack.c.l.b16 %v2792
    %v3507 = vunpack.c.h.b16 %v2792
    %v3508 = vunpack.c.l.b16 %v2793
    %v3509 = vunpack.c.h.b16 %v2793
    %v3510 = vunpack.c.l.b16 %v2794
    %v3511 = vunpack.c.h.b16 %v2794
    %v3512 = vunpack.c.l.b16 %v2795
    %v3513 = vunpack.c.h.b16 %v2795
    %v3514 = vunpack.c.l.b16 %v2796
    %v3515 = vunpack.c.h.b16 %v2796
    %v3516 = vunpack.c.l.b16 %v2797
    %v3517 = vunpack.c.h.b16 %v2797
    %v3518 = vunpack.c.l.b16 %v2798
    %v3519 = vunpack.c.h.b16 %v2798
    %v3520 = vunpack.c.l.b16 %v2799
    %v3521 = vunpack.c.h.b16 %v2799
    %v3522 = vunpack.c.l.b16 %v2800
    %v3523 = vunpack.c.h.b16 %v2800
    %v3524 = vunpack.c.l.b16 %v2801
    %v3525 = vunpack.c.h.b16 %v2801
    %v3526 = vunpack.c.l.b16 %v2802
    %v3527 = vunpack.c.h.b16 %v2802
    %v3528 = vunpack.c.l.b16 %v2803
    %v3529 = vunpack.c.h.b16 %v2803
    %v3530 = vunpack.c.l.b16 %v2804
    %v3531 = vunpack.c.h.b16 %v2804
    %v3532 = vunpack.c.l.b16 %v2805
    %v3533 = vunpack.c.h.b16 %v2805
    %v3534 = vunpack.c.l.b16 %v2806
    %v3535 = vunpack.c.h.b16 %v2806
    %v3536 = vunpack.c.l.b16 %v2807
    %v3537 = vunpack.c.h.b16 %v2807
    %v3538 = vunpack.c.l.b16 %v2808
    %v3539 = vunpack.c.h.b16 %v2808
    %v3540 = vunpack.c.l.b16 %v2809
    %v3541 = vunpack.c.h.b16 %v2809
    %v3542 = vunpack.c.l.b16 %v2810
    %v3543 = vunpack.c.h.b16 %v2810
    %v3544 = vunpack.c.l.b16 %v2811
    %v3545 = vunpack.c.h.b16 %v2811
    %v3546 = vunpack.c.l.b16 %v2812
    %v3547 = vunpack.c.h.b16 %v2812
    %v3548 = vunpack.c.l.b16 %v2813
    %v3549 = vunpack.c.h.b16 %v2813
    %v3550 = vunpack.c.l.b16 %v2814
    %v3551 = vunpack.c.h.b16 %v2814
    %v3552 = vunpack.c.l.b16 %v2815
    %v3553 = vunpack.c.h.b16 %v2815
    %v3554 = vunpack.c.l.b16 %v2816
    %v3555 = vunpack.c.h.b16 %v2816
    %v3556 = vunpack.c.l.b16 %v2817
    %v3557 = vunpack.c.h.b16 %v2817
    %v3558 = vunpack.c.l.b16 %v2818
    %v3559 = vunpack.c.h.b16 %v2818
    %v3560 = vunpack.c.l.b16 %v2819
    %v3561 = vunpack.c.h.b16 %v2819
    %v3562 = vunpack.c.l.b16 %v2820
    %v3563 = vunpack.c.h.b16 %v2820
    %v3564 = vunpack.c.l.b16 %v2821
    %v3565 = vunpack.c.h.b16 %v2821
    %v3566 = vunpack.c.l.b16 %v2822
    %v3567 = vunpack.c.h.b16 %v2822
    %v3568 = vunpack.c.l.b16 %v2823
    %v3569 = vunpack.c.h.b16 %v2823
    %v3570 = vunpack.c.l.b16 %v2824
    %v3571 = vunpack.c.h.b16 %v2824
    %v3572 = vunpack.c.l.b16 %v2825
    %v3573 = vunpack.c.h.b16 %v2825
    %v3574 = vunpack.c.l.b16 %v2826
    %v3575 = vunpack.c.h.b16 %v2826
    %v3576 = vunpack.c.l.b16 %v2827
    %v3577 = vunpack.c.h.b16 %v2827
    %v3578 = vunpack.c.l.b16 %v2828
    %v3579 = vunpack.c.h.b16 %v2828
    %v3580 = vunpack.c.l.b16 %v2829
    %v3581 = vunpack.c.h.b16 %v2829
    %v3582 = vunpack.c.l.b16 %v2830
    %v3583 = vunpack.c.h.b16 %v2830
    %v3584 = vunpack.c.l.b16 %v2831
    %v3585 = vunpack.c.h.b16 %v2831
    %v3586 = vunpack.c.l.b16 %v2832
    %v3587 = vunpack.c.h.b16 %v2832
    %v3588 = vunpack.c.l.b16 %v2833
    %v3589 = vunpack.c.h.b16 %v2833
    %v3590 = vunpack.c.l.b16 %v2834
    %v3591 = vunpack.c.h.b16 %v2834
    %v3592 = vunpack.c.l.b16 %v2835
    %v3593 = vunpack.c.h.b16 %v2835
    %v3594 = vunpack.c.l.b16 %v2836
    %v3595 = vunpack.c.h.b16 %v2836
    %v3596 = vunpack.c.l.b16 %v2837
    %v3597 = vunpack.c.h.b16 %v2837
    %v3598 = vunpack.c.l.b16 %v2838
    %v3599 = vunpack.c.h.b16 %v2838
    %v3600 = vunpack.c.l.b16 %v2839
    %v3601 = vunpack.c.h.b16 %v2839
    %v3602 = vunpack.c.l.b16 %v2840
    %v3603 = vunpack.c.h.b16 %v2840
    %v3604 = vunpack.c.l.b16 %v2841
    %v3605 = vunpack.c.h.b16 %v2841
    %v3606 = vunpack.c.l.b16 %v2842
    %v3607 = vunpack.c.h.b16 %v2842
    %v3608 = vunpack.c.l.b16 %v2843
    %v3609 = vunpack.c.h.b16 %v2843
    %v3610 = vunpack.c.l.b16 %v2844
    %v3611 = vunpack.c.h.b16 %v2844
    %v3612 = vunpack.c.l.b16 %v2845
    %v3613 = vunpack.c.h.b16 %v2845
    %v3614 = vunpack.c.l.b16 %v2846
    %v3615 = vunpack.c.h.b16 %v2846
    %v3616 = vunpack.c.l.b16 %v2847
    %v3617 = vunpack.c.h.b16 %v2847
    %v3618 = vunpack.c.l.b16 %v2848
    %v3619 = vunpack.c.h.b16 %v2848
    %v3620 = vunpack.c.l.b16 %v2849
    %v3621 = vunpack.c.h.b16 %v2849
    %v3622 = vunpack.c.l.b16 %v2850
    %v3623 = vunpack.c.h.b16 %v2850
    %v3624 = vunpack.c.l.b16 %v2851
    %v3625 = vunpack.c.h.b16 %v2851
    %v3626 = vunpack.c.l.b16 %v2852
    %v3627 = vunpack.c.h.b16 %v2852
    %v3628 = vunpack.c.l.b16 %v2853
    %v3629 = vunpack.c.h.b16 %v2853
    %v3630 = vunpack.c.l.b16 %v2854
    %v3631 = vunpack.c.h.b16 %v2854
    %v3632 = vunpack.c.l.b16 %v2855
    %v3633 = vunpack.c.h.b16 %v2855
    %v3634 = vpack.c.b16 %v3126, %v3122
    %v3635 = vpack.c.b16 %v3127, %v3123
    %v3636 = vpack.c.b16 %v3128, %v3124
    %v3637 = vpack.c.b16 %v3129, %v3125
    %v3638 = vpack.c.b16 %v3134, %v3130
    %v3639 = vpack.c.b16 %v3135, %v3131
    %v3640 = vpack.c.b16 %v3136, %v3132
    %v3641 = vpack.c.b16 %v3137, %v3133
    %v3642 = vpack.c.b16 %v3142, %v3138
    %v3643 = vpack.c.b16 %v3143, %v3139
    %v3644 = vpack.c.b16 %v3144, %v3140
    %v3645 = vpack.c.b16 %v3145, %v3141
    %v3646 = vpack.c.b16 %v3150, %v3146
    %v3647 = vpack.c.b16 %v3151, %v3147
    %v3648 = vpack.c.b16 %v3152, %v3148
    %v3649 = vpack.c.b16 %v3153, %v3149
    %v3650 = vpack.c.b16 %v3158, %v3154
    %v3651 = vpack.c.b16 %v3159, %v3155
    %v3652 = vpack.c.b16 %v3160, %v3156
    %v3653 = vpack.c.b16 %v3161, %v3157
    %v3654 = vpack.c.b16 %v3166, %v3162
    %v3655 = vpack.c.b16 %v3167, %v3163
    %v3656 = vpack.c.b16 %v3168, %v3164
    %v3657 = vpack.c.b16 %v3169, %v3165
    %v3658 = vpack.c.b16 %v3174, %v3170
    %v3659 = vpack.c.b16 %v3175, %v3171
    %v3660 = vpack.c.b16 %v3176, %v3172
    %v3661 = vpack.c.b16 %v3177, %v3173
    %v3662 = vpack.c.b16 %v3182, %v3178
    %v3663 = vpack.c.b16 %v3183, %v3179
    %v3664 = vpack.c.b16 %v3184, %v3180
    %v3665 = vpack.c.b16 %v3185, %v3181
    %v3666 = vpack.c.b16 %v3190, %v3186
    %v3667 = vpack.c.b16 %v3191, %v3187
    %v3668 = vpack.c.b16 %v3192, %v3188
    %v3669 = vpack.c.b16 %v3193, %v3189
    %v3670 = vpack.c.b16 %v3198, %v3194
    %v3671 = vpack.c.b16 %v3199, %v3195
    %v3672 = vpack.c.b16 %v3200, %v3196
    %v3673 = vpack.c.b16 %v3201, %v3197
    %v3674 = vpack.c.b16 %v3206, %v3202
    %v3675 = vpack.c.b16 %v3207, %v3203
    %v3676 = vpack.c.b16 %v3208, %v3204
    %v3677 = vpack.c.b16 %v3209, %v3205
    %v3678 = vpack.c.b16 %v3214, %v3210
    %v3679 = vpack.c.b16 %v3215, %v3211
    %v3680 = vpack.c.b16 %v3216, %v3212
    %v3681 = vpack.c.b16 %v3217, %v3213
    %v3682 = vpack.c.b16 %v3222, %v3218
    %v3683 = vpack.c.b16 %v3223, %v3219
    %v3684 = vpack.c.b16 %v3224, %v3220
    %v3685 = vpack.c.b16 %v3225, %v3221
    %v3686 = vpack.c.b16 %v3230, %v3226
    %v3687 = vpack.c.b16 %v3231, %v3227
    %v3688 = vpack.c.b16 %v3232, %v3228
    %v3689 = vpack.c.b16 %v3233, %v3229
    %v3690 = vpack.c.b16 %v3238, %v3234
    %v3691 = vpack.c.b16 %v3239, %v3235
    %v3692 = vpack.c.b16 %v3240, %v3236
    %v3693 = vpack.c.b16 %v3241, %v3237
    %v3694 = vpack.c.b16 %v3246, %v3242
    %v3695 = vpack.c.b16 %v3247, %v3243
    %v3696 = vpack.c.b16 %v3248, %v3244
    %v3697 = vpack.c.b16 %v3249, %v3245
    %v3698 = vpack.c.b16 %v3254, %v3250
    %v3699 = vpack.c.b16 %v3255, %v3251
    %v3700 = vpack.c.b16 %v3256, %v3252
    %v3701 = vpack.c.b16 %v3257, %v3253
    %v3702 = vpack.c.b16 %v3262, %v3258
    %v3703 = vpack.c.b16 %v3263, %v3259
    %v3704 = vpack.c.b16 %v3264, %v3260
    %v3705 = vpack.c.b16 %v3265, %v3261
    %v3706 = vpack.c.b16 %v3270, %v3266
    %v3707 = vpack.c.b16 %v3271, %v3267
    %v3708 = vpack.c.b16 %v3272, %v3268
    %v3709 = vpack.c.b16 %v3273, %v3269
    %v3710 = vpack.c.b16 %v3278, %v3274
    %v3711 = vpack.c.b16 %v3279, %v3275
    %v3712 = vpack.c.b16 %v3280, %v3276
    %v3713 = vpack.c.b16 %v3281, %v3277
    %v3714 = vpack.c.b16 %v3286, %v3282
    %v3715 = vpack.c.b16 %v3287, %v3283
    %v3716 = vpack.c.b16 %v3288, %v3284
    %v3717 = vpack.c.b16 %v3289, %v3285
    %v3718 = vpack.c.b16 %v3294, %v3290
    %v3719 = vpack.c.b16 %v3295, %v3291
    %v3720 = vpack.c.b16 %v3296, %v3292
    %v3721 = vpack.c.b16 %v3297, %v3293
    %v3722 = vpack.c.b16 %v3302, %v3298
    %v3723 = vpack.c.b16 %v3303, %v3299
    %v3724 = vpack.c.b16 %v3304, %v3300
    %v3725 = vpack.c.b16 %v3305, %v3301
    %v3726 = vpack.c.b16 %v3310, %v3306
    %v3727 = vpack.c.b16 %v3311, %v3307
    %v3728 = vpack.c.b16 %v3312, %v3308
    %v3729 = vpack.c.b16 %v3313, %v3309
    %v3730 = vpack.c.b16 %v3318, %v3314
    %v3731 = vpack.c.b16 %v3319, %v3315
    %v3732 = vpack.c.b16 %v3320, %v3316
    %v3733 = vpack.c.b16 %v3321, %v3317
    %v3734 = vpack.c.b16 %v3326, %v3322
    %v3735 = vpack.c.b16 %v3327, %v3323
    %v3736 = vpack.c.b16 %v3328, %v3324
    %v3737 = vpack.c.b16 %v3329, %v3325
    %v3738 = vpack.c.b16 %v3334, %v3330
    %v3739 = vpack.c.b16 %v3335, %v3331
    %v3740 = vpack.c.b16 %v3336, %v3332
    %v3741 = vpack.c.b16 %v3337, %v3333
    %v3742 = vpack.c.b16 %v3342, %v3338
    %v3743 = vpack.c.b16 %v3343, %v3339
    %v3744 = vpack.c.b16 %v3344, %v3340
    %v3745 = vpack.c.b16 %v3345, %v3341
    %v3746 = vpack.c.b16 %v3350, %v3346
    %v3747 = vpack.c.b16 %v3351, %v3347
    %v3748 = vpack.c.b16 %v3352, %v3348
    %v3749 = vpack.c.b16 %v3353, %v3349
    %v3750 = vpack.c.b16 %v3358, %v3354
    %v3751 = vpack.c.b16 %v3359, %v3355
    %v3752 = vpack.c.b16 %v3360, %v3356
    %v3753 = vpack.c.b16 %v3361, %v3357
    %v3754 = vpack.c.b16 %v3366, %v3362
    %v3755 = vpack.c.b16 %v3367, %v3363
    %v3756 = vpack.c.b16 %v3368, %v3364
    %v3757 = vpack.c.b16 %v3369, %v3365
    %v3758 = vpack.c.b16 %v3374, %v3370
    %v3759 = vpack.c.b16 %v3375, %v3371
    %v3760 = vpack.c.b16 %v3376, %v3372
    %v3761 = vpack.c.b16 %v3377, %v3373
    %v3762 = vpack.c.b16 %v3382, %v3378
    %v3763 = vpack.c.b16 %v3383, %v3379
    %v3764 = vpack.c.b16 %v3384, %v3380
    %v3765 = vpack.c.b16 %v3385, %v3381
    %v3766 = vpack.c.b16 %v3390, %v3386
    %v3767 = vpack.c.b16 %v3391, %v3387
    %v3768 = vpack.c.b16 %v3392, %v3388
    %v3769 = vpack.c.b16 %v3393, %v3389
    %v3770 = vpack.c.b16 %v3398, %v3394
    %v3771 = vpack.c.b16 %v3399, %v3395
    %v3772 = vpack.c.b16 %v3400, %v3396
    %v3773 = vpack.c.b16 %v3401, %v3397
    %v3774 = vpack.c.b16 %v3406, %v3402
    %v3775 = vpack.c.b16 %v3407, %v3403
    %v3776 = vpack.c.b16 %v3408, %v3404
    %v3777 = vpack.c.b16 %v3409, %v3405
    %v3778 = vpack.c.b16 %v3414, %v3410
    %v3779 = vpack.c.b16 %v3415, %v3411
    %v3780 = vpack.c.b16 %v3416, %v3412
    %v3781 = vpack.c.b16 %v3417, %v3413
    %v3782 = vpack.c.b16 %v3422, %v3418
    %v3783 = vpack.c.b16 %v3423, %v3419
    %v3784 = vpack.c.b16 %v3424, %v3420
    %v3785 = vpack.c.b16 %v3425, %v3421
    %v3786 = vpack.c.b16 %v3430, %v3426
    %v3787 = vpack.c.b16 %v3431, %v3427
    %v3788 = vpack.c.b16 %v3432, %v3428
    %v3789 = vpack.c.b16 %v3433, %v3429
    %v3790 = vpack.c.b16 %v3438, %v3434
    %v3791 = vpack.c.b16 %v3439, %v3435
    %v3792 = vpack.c.b16 %v3440, %v3436
    %v3793 = vpack.c.b16 %v3441, %v3437
    %v3794 = vpack.c.b16 %v3446, %v3442
    %v3795 = vpack.c.b16 %v3447, %v3443
    %v3796 = vpack.c.b16 %v3448, %v3444
    %v3797 = vpack.c.b16 %v3449, %v3445
    %v3798 = vpack.c.b16 %v3454, %v3450
    %v3799 = vpack.c.b16 %v3455, %v3451
    %v3800 = vpack.c.b16 %v3456, %v3452
    %v3801 = vpack.c.b16 %v3457, %v3453
    %v3802 = vpack.c.b16 %v3462, %v3458
    %v3803 = vpack.c.b16 %v3463, %v3459
    %v3804 = vpack.c.b16 %v3464, %v3460
    %v3805 = vpack.c.b16 %v3465, %v3461
    %v3806 = vpack.c.b16 %v3470, %v3466
    %v3807 = vpack.c.b16 %v3471, %v3467
    %v3808 = vpack.c.b16 %v3472, %v3468
    %v3809 = vpack.c.b16 %v3473, %v3469
    %v3810 = vpack.c.b16 %v3478, %v3474
    %v3811 = vpack.c.b16 %v3479, %v3475
    %v3812 = vpack.c.b16 %v3480, %v3476
    %v3813 = vpack.c.b16 %v3481, %v3477
    %v3814 = vpack.c.b16 %v3486, %v3482
    %v3815 = vpack.c.b16 %v3487, %v3483
    %v3816 = vpack.c.b16 %v3488, %v3484
    %v3817 = vpack.c.b16 %v3489, %v3485
    %v3818 = vpack.c.b16 %v3494, %v3490
    %v3819 = vpack.c.b16 %v3495, %v3491
    %v3820 = vpack.c.b16 %v3496, %v3492
    %v3821 = vpack.c.b16 %v3497, %v3493
    %v3822 = vpack.c.b16 %v3502, %v3498
    %v3823 = vpack.c.b16 %v3503, %v3499
    %v3824 = vpack.c.b16 %v3504, %v3500
    %v3825 = vpack.c.b16 %v3505, %v3501
    %v3826 = vpack.c.b16 %v3510, %v3506
    %v3827 = vpack.c.b16 %v3511, %v3507
    %v3828 = vpack.c.b16 %v3512, %v3508
    %v3829 = vpack.c.b16 %v3513, %v3509
    %v3830 = vpack.c.b16 %v3518, %v3514
    %v3831 = vpack.c.b16 %v3519, %v3515
    %v3832 = vpack.c.b16 %v3520, %v3516
    %v3833 = vpack.c.b16 %v3521, %v3517
    %v3834 = vpack.c.b16 %v3526, %v3522
    %v3835 = vpack.c.b16 %v3527, %v3523
    %v3836 = vpack.c.b16 %v3528, %v3524
    %v3837 = vpack.c.b16 %v3529, %v3525
    %v3838 = vpack.c.b16 %v3534, %v3530
    %v3839 = vpack.c.b16 %v3535, %v3531
    %v3840 = vpack.c.b16 %v3536, %v3532
    %v3841 = vpack.c.b16 %v3537, %v3533
    %v3842 = vpack.c.b16 %v3542, %v3538
    %v3843 = vpack.c.b16 %v3543, %v3539
    %v3844 = vpack.c.b16 %v3544, %v3540
    %v3845 = vpack.c.b16 %v3545, %v3541
    %v3846 = vpack.c.b16 %v3550, %v3546
    %v3847 = vpack.c.b16 %v3551, %v3547
    %v3848 = vpack.c.b16 %v3552, %v3548
    %v3849 = vpack.c.b16 %v3553, %v3549
    %v3850 = vpack.c.b16 %v3558, %v3554
    %v3851 = vpack.c.b16 %v3559, %v3555
    %v3852 = vpack.c.b16 %v3560, %v3556
    %v3853 = vpack.c.b16 %v3561, %v3557
    %v3854 = vpack.c.b16 %v3566, %v3562
    %v3855 = vpack.c.b16 %v3567, %v3563
    %v3856 = vpack.c.b16 %v3568, %v3564
    %v3857 = vpack.c.b16 %v3569, %v3565
    %v3858 = vpack.c.b16 %v3574, %v3570
    %v3859 = vpack.c.b16 %v3575, %v3571
    %v3860 = vpack.c.b16 %v3576, %v3572
    %v3861 = vpack.c.b16 %v3577, %v3573
    %v3862 = vpack.c.b16 %v3582, %v3578
    %v3863 = vpack.c.b16 %v3583, %v3579
    %v3864 = vpack.c.b16 %v3584, %v3580
    %v3865 = vpack.c.b16 %v3585, %v3581
    %v3866 = vpack.c.b16 %v3590, %v3586
    %v3867 = vpack.c.b16 %v3591, %v3587
    %v3868 = vpack.c.b16 %v3592, %v3588
    %v3869 = vpack.c.b16 %v3593, %v3589
    %v3870 = vpack.c.b16 %v3598, %v3594
    %v3871 = vpack.c.b16 %v3599, %v3595
    %v3872 = vpack.c.b16 %v3600, %v3596
    %v3873 = vpack.c.b16 %v3601, %v3597
    %v3874 = vpack.c.b16 %v3606, %v3602
    %v3875 = vpack.c.b16 %v3607, %v3603
    %v3876 = vpack.c.b16 %v3608, %v3604
    %v3877 = vpack.c.b16 %v3609, %v3605
    %v3878 = vpack.c.b16 %v3614, %v3610
    %v3879 = vpack.c.b16 %v3615, %v3611
    %v3880 = vpack.c.b16 %v3616, %v3612
    %v3881 = vpack.c.b16 %v3617, %v3613
    %v3882 = vpack.c.b16 %v3622, %v3618
    %v3883 = vpack.c.b16 %v3623, %v3619
    %v3884 = vpack.c.b16 %v3624, %v3620
    %v3885 = vpack.c.b16 %v3625, %v3621
    %v3886 = vpack.c.b16 %v3630, %v3626
    %v3887 = vpack.c.b16 %v3631, %v3627
    %v3888 = vpack.c.b16 %v3632, %v3628
    %v3889 = vpack.c.b16 %v3633, %v3629
    %4146 = vmatpush.bf16.msra.mxu0 %v3662
    %4147 = vmatpush.bf16.msra.mxu0 %v3658
    %4148 = vmatpush.bf16.msra.mxu0 %v3654
    %4149 = vmatpush.bf16.msra.mxu0 %v3650
    %4150 = vmatpush.bf16.msra.mxu0 %v3646
    %4151 = vmatpush.bf16.msra.mxu0 %v3642
    %4152 = vmatpush.bf16.msra.mxu0 %v3638
    %4153 = vmatpush.bf16.msra.mxu0 %v3634
    %4154 = vmatmul.bf16.gmra.mxu0 %v2344
    %v4155 = vpop.f32.mrf.mxu0
    %v4156 = vadd.f32 %v2858, %v4155
    %v4157 = vpop.f32.mrf.mxu0
    %v4158 = vadd.f32 %v2858, %v4157
    %4159 = vmatmul.bf16.gmra.mxu0 %v2352
    %v4160 = vpop.f32.mrf.mxu0
    %v4161 = vadd.f32 %v2858, %v4160
    %v4162 = vpop.f32.mrf.mxu0
    %v4163 = vadd.f32 %v2858, %v4162
    %4164 = vmatmul.bf16.gmra.mxu0 %v2360
    %v4165 = vpop.f32.mrf.mxu0
    %v4166 = vadd.f32 %v2858, %v4165
    %v4167 = vpop.f32.mrf.mxu0
    %v4168 = vadd.f32 %v2858, %v4167
    %4169 = vmatmul.bf16.gmra.mxu0 %v2368
    %v4170 = vpop.f32.mrf.mxu0
    %v4171 = vadd.f32 %v2858, %v4170
    %v4172 = vpop.f32.mrf.mxu0
    %v4173 = vadd.f32 %v2858, %v4172
    %4174 = vmatmul.bf16.gmra.mxu0 %v2376
    %v4175 = vpop.f32.mrf.mxu0
    %v4176 = vadd.f32 %v2858, %v4175
    %v4177 = vpop.f32.mrf.mxu0
    %v4178 = vadd.f32 %v2858, %v4177
    %4179 = vmatmul.bf16.gmra.mxu0 %v2384
    %v4180 = vpop.f32.mrf.mxu0
    %v4181 = vadd.f32 %v2858, %v4180
    %v4182 = vpop.f32.mrf.mxu0
    %v4183 = vadd.f32 %v2858, %v4182
    %4184 = vmatmul.bf16.gmra.mxu0 %v2392
    %v4185 = vpop.f32.mrf.mxu0
    %v4186 = vadd.f32 %v2858, %v4185
    %v4187 = vpop.f32.mrf.mxu0
    %v4188 = vadd.f32 %v2858, %v4187
    %4189 = vmatmul.bf16.gmra.mxu0 %v2400
    %v4190 = vpop.f32.mrf.mxu0
    %v4191 = vadd.f32 %v2858, %v4190
    %v4192 = vpop.f32.mrf.mxu0
    %v4193 = vadd.f32 %v2858, %v4192
    %4194 = vmatmul.bf16.gmra.mxu0 %v2408
    %v4195 = vpop.f32.mrf.mxu0
    %v4196 = vadd.f32 %v2858, %v4195
    %v4197 = vpop.f32.mrf.mxu0
    %v4198 = vadd.f32 %v2858, %v4197
    %4199 = vmatmul.bf16.gmra.mxu0 %v2416
    %v4200 = vpop.f32.mrf.mxu0
    %v4201 = vadd.f32 %v2858, %v4200
    %v4202 = vpop.f32.mrf.mxu0
    %v4203 = vadd.f32 %v2858, %v4202
    %4204 = vmatmul.bf16.gmra.mxu0 %v2424
    %v4205 = vpop.f32.mrf.mxu0
    %v4206 = vadd.f32 %v2858, %v4205
    %v4207 = vpop.f32.mrf.mxu0
    %v4208 = vadd.f32 %v2858, %v4207
    %4209 = vmatmul.bf16.gmra.mxu0 %v2432
    %v4210 = vpop.f32.mrf.mxu0
    %v4211 = vadd.f32 %v2858, %v4210
    %v4212 = vpop.f32.mrf.mxu0
    %v4213 = vadd.f32 %v2858, %v4212
    %4214 = vmatmul.bf16.gmra.mxu0 %v2440
    %v4215 = vpop.f32.mrf.mxu0
    %v4216 = vadd.f32 %v2858, %v4215
    %v4217 = vpop.f32.mrf.mxu0
    %v4218 = vadd.f32 %v2858, %v4217
    %4219 = vmatmul.bf16.gmra.mxu0 %v2448
    %v4220 = vpop.f32.mrf.mxu0
    %v4221 = vadd.f32 %v2858, %v4220
    %v4222 = vpop.f32.mrf.mxu0
    %v4223 = vadd.f32 %v2858, %v4222
    %4224 = vmatmul.bf16.gmra.mxu0 %v2456
    %v4225 = vpop.f32.mrf.mxu0
    %v4226 = vadd.f32 %v2858, %v4225
    %v4227 = vpop.f32.mrf.mxu0
    %v4228 = vadd.f32 %v2858, %v4227
    %4229 = vmatmul.bf16.gmra.mxu0 %v2464
    %v4230 = vpop.f32.mrf.mxu0
    %v4231 = vadd.f32 %v2858, %v4230
    %v4232 = vpop.f32.mrf.mxu0
    %v4233 = vadd.f32 %v2858, %v4232
    %4234 = vmatmul.bf16.gmra.mxu0 %v2472
    %v4235 = vpop.f32.mrf.mxu0
    %v4236 = vadd.f32 %v2858, %v4235
    %v4237 = vpop.f32.mrf.mxu0
    %v4238 = vadd.f32 %v2858, %v4237
    %4239 = vmatmul.bf16.gmra.mxu0 %v2480
    %v4240 = vpop.f32.mrf.mxu0
    %v4241 = vadd.f32 %v2858, %v4240
    %v4242 = vpop.f32.mrf.mxu0
    %v4243 = vadd.f32 %v2858, %v4242
    %4244 = vmatmul.bf16.gmra.mxu0 %v2488
    %v4245 = vpop.f32.mrf.mxu0
    %v4246 = vadd.f32 %v2858, %v4245
    %v4247 = vpop.f32.mrf.mxu0
    %v4248 = vadd.f32 %v2858, %v4247
    %4249 = vmatmul.bf16.gmra.mxu0 %v2496
    %v4250 = vpop.f32.mrf.mxu0
    %v4251 = vadd.f32 %v2858, %v4250
    %v4252 = vpop.f32.mrf.mxu0
    %v4253 = vadd.f32 %v2858, %v4252
    %4254 = vmatmul.bf16.gmra.mxu0 %v2504
    %v4255 = vpop.f32.mrf.mxu0
    %v4256 = vadd.f32 %v2858, %v4255
    %v4257 = vpop.f32.mrf.mxu0
    %v4258 = vadd.f32 %v2858, %v4257
    %4259 = vmatmul.bf16.gmra.mxu0 %v2512
    %v4260 = vpop.f32.mrf.mxu0
    %v4261 = vadd.f32 %v2858, %v4260
    %v4262 = vpop.f32.mrf.mxu0
    %v4263 = vadd.f32 %v2858, %v4262
    %4264 = vmatmul.bf16.gmra.mxu0 %v2520
    %v4265 = vpop.f32.mrf.mxu0
    %v4266 = vadd.f32 %v2858, %v4265
    %v4267 = vpop.f32.mrf.mxu0
    %v4268 = vadd.f32 %v2858, %v4267
    %4269 = vmatmul.bf16.gmra.mxu0 %v2528
    %v4270 = vpop.f32.mrf.mxu0
    %v4271 = vadd.f32 %v2858, %v4270
    %v4272 = vpop.f32.mrf.mxu0
    %v4273 = vadd.f32 %v2858, %v4272
    %4274 = vmatmul.bf16.gmra.mxu0 %v2536
    %v4275 = vpop.f32.mrf.mxu0
    %v4276 = vadd.f32 %v2858, %v4275
    %v4277 = vpop.f32.mrf.mxu0
    %v4278 = vadd.f32 %v2858, %v4277
    %4279 = vmatmul.bf16.gmra.mxu0 %v2544
    %v4280 = vpop.f32.mrf.mxu0
    %v4281 = vadd.f32 %v2858, %v4280
    %v4282 = vpop.f32.mrf.mxu0
    %v4283 = vadd.f32 %v2858, %v4282
    %4284 = vmatmul.bf16.gmra.mxu0 %v2552
    %v4285 = vpop.f32.mrf.mxu0
    %v4286 = vadd.f32 %v2858, %v4285
    %v4287 = vpop.f32.mrf.mxu0
    %v4288 = vadd.f32 %v2858, %v4287
    %4289 = vmatmul.bf16.gmra.mxu0 %v2560
    %v4290 = vpop.f32.mrf.mxu0
    %v4291 = vadd.f32 %v2858, %v4290
    %v4292 = vpop.f32.mrf.mxu0
    %v4293 = vadd.f32 %v2858, %v4292
    %4294 = vmatmul.bf16.gmra.mxu0 %v2568
    %v4295 = vpop.f32.mrf.mxu0
    %v4296 = vadd.f32 %v2858, %v4295
    %v4297 = vpop.f32.mrf.mxu0
    %v4298 = vadd.f32 %v2858, %v4297
    %4299 = vmatmul.bf16.gmra.mxu0 %v2576
    %v4300 = vpop.f32.mrf.mxu0
    %v4301 = vadd.f32 %v2858, %v4300
    %v4302 = vpop.f32.mrf.mxu0
    %v4303 = vadd.f32 %v2858, %v4302
    %4304 = vmatmul.bf16.gmra.mxu0 %v2584
    %v4305 = vpop.f32.mrf.mxu0
    %v4306 = vadd.f32 %v2858, %v4305
    %v4307 = vpop.f32.mrf.mxu0
    %v4308 = vadd.f32 %v2858, %v4307
    %4309 = vmatmul.bf16.gmra.mxu0 %v2592
    %v4310 = vpop.f32.mrf.mxu0
    %v4311 = vadd.f32 %v2858, %v4310
    %v4312 = vpop.f32.mrf.mxu0
    %v4313 = vadd.f32 %v2858, %v4312
    %4314 = vdwg.mxu0
    %4315 = vmatpush.bf16.msra.mxu0 %v3694
    %4316 = vmatpush.bf16.msra.mxu0 %v3690
    %4317 = vmatpush.bf16.msra.mxu0 %v3686
    %4318 = vmatpush.bf16.msra.mxu0 %v3682
    %4319 = vmatpush.bf16.msra.mxu0 %v3678
    %4320 = vmatpush.bf16.msra.mxu0 %v3674
    %4321 = vmatpush.bf16.msra.mxu0 %v3670
    %4322 = vmatpush.bf16.msra.mxu0 %v3666
    %4323 = vmatmul.bf16.gmra.mxu0 %v2345
    %v4324 = vpop.f32.mrf.mxu0
    %v4325 = vadd.f32 %v4156, %v4324
    %v4326 = vpop.f32.mrf.mxu0
    %v4327 = vadd.f32 %v4158, %v4326
    %4328 = vmatmul.bf16.gmra.mxu0 %v2353
    %v4329 = vpop.f32.mrf.mxu0
    %v4330 = vadd.f32 %v4161, %v4329
    %v4331 = vpop.f32.mrf.mxu0
    %v4332 = vadd.f32 %v4163, %v4331
    %4333 = vmatmul.bf16.gmra.mxu0 %v2361
    %v4334 = vpop.f32.mrf.mxu0
    %v4335 = vadd.f32 %v4166, %v4334
    %v4336 = vpop.f32.mrf.mxu0
    %v4337 = vadd.f32 %v4168, %v4336
    %4338 = vmatmul.bf16.gmra.mxu0 %v2369
    %v4339 = vpop.f32.mrf.mxu0
    %v4340 = vadd.f32 %v4171, %v4339
    %v4341 = vpop.f32.mrf.mxu0
    %v4342 = vadd.f32 %v4173, %v4341
    %4343 = vmatmul.bf16.gmra.mxu0 %v2377
    %v4344 = vpop.f32.mrf.mxu0
    %v4345 = vadd.f32 %v4176, %v4344
    %v4346 = vpop.f32.mrf.mxu0
    %v4347 = vadd.f32 %v4178, %v4346
    %4348 = vmatmul.bf16.gmra.mxu0 %v2385
    %v4349 = vpop.f32.mrf.mxu0
    %v4350 = vadd.f32 %v4181, %v4349
    %v4351 = vpop.f32.mrf.mxu0
    %v4352 = vadd.f32 %v4183, %v4351
    %4353 = vmatmul.bf16.gmra.mxu0 %v2393
    %v4354 = vpop.f32.mrf.mxu0
    %v4355 = vadd.f32 %v4186, %v4354
    %v4356 = vpop.f32.mrf.mxu0
    %v4357 = vadd.f32 %v4188, %v4356
    %4358 = vmatmul.bf16.gmra.mxu0 %v2401
    %v4359 = vpop.f32.mrf.mxu0
    %v4360 = vadd.f32 %v4191, %v4359
    %v4361 = vpop.f32.mrf.mxu0
    %v4362 = vadd.f32 %v4193, %v4361
    %4363 = vmatmul.bf16.gmra.mxu0 %v2409
    %v4364 = vpop.f32.mrf.mxu0
    %v4365 = vadd.f32 %v4196, %v4364
    %v4366 = vpop.f32.mrf.mxu0
    %v4367 = vadd.f32 %v4198, %v4366
    %4368 = vmatmul.bf16.gmra.mxu0 %v2417
    %v4369 = vpop.f32.mrf.mxu0
    %v4370 = vadd.f32 %v4201, %v4369
    %v4371 = vpop.f32.mrf.mxu0
    %v4372 = vadd.f32 %v4203, %v4371
    %4373 = vmatmul.bf16.gmra.mxu0 %v2425
    %v4374 = vpop.f32.mrf.mxu0
    %v4375 = vadd.f32 %v4206, %v4374
    %v4376 = vpop.f32.mrf.mxu0
    %v4377 = vadd.f32 %v4208, %v4376
    %4378 = vmatmul.bf16.gmra.mxu0 %v2433
    %v4379 = vpop.f32.mrf.mxu0
    %v4380 = vadd.f32 %v4211, %v4379
    %v4381 = vpop.f32.mrf.mxu0
    %v4382 = vadd.f32 %v4213, %v4381
    %4383 = vmatmul.bf16.gmra.mxu0 %v2441
    %v4384 = vpop.f32.mrf.mxu0
    %v4385 = vadd.f32 %v4216, %v4384
    %v4386 = vpop.f32.mrf.mxu0
    %v4387 = vadd.f32 %v4218, %v4386
    %4388 = vmatmul.bf16.gmra.mxu0 %v2449
    %v4389 = vpop.f32.mrf.mxu0
    %v4390 = vadd.f32 %v4221, %v4389
    %v4391 = vpop.f32.mrf.mxu0
    %v4392 = vadd.f32 %v4223, %v4391
    %4393 = vmatmul.bf16.gmra.mxu0 %v2457
    %v4394 = vpop.f32.mrf.mxu0
    %v4395 = vadd.f32 %v4226, %v4394
    %v4396 = vpop.f32.mrf.mxu0
    %v4397 = vadd.f32 %v4228, %v4396
    %4398 = vmatmul.bf16.gmra.mxu0 %v2465
    %v4399 = vpop.f32.mrf.mxu0
    %v4400 = vadd.f32 %v4231, %v4399
    %v4401 = vpop.f32.mrf.mxu0
    %v4402 = vadd.f32 %v4233, %v4401
    %4403 = vmatmul.bf16.gmra.mxu0 %v2473
    %v4404 = vpop.f32.mrf.mxu0
    %v4405 = vadd.f32 %v4236, %v4404
    %v4406 = vpop.f32.mrf.mxu0
    %v4407 = vadd.f32 %v4238, %v4406
    %4408 = vmatmul.bf16.gmra.mxu0 %v2481
    %v4409 = vpop.f32.mrf.mxu0
    %v4410 = vadd.f32 %v4241, %v4409
    %v4411 = vpop.f32.mrf.mxu0
    %v4412 = vadd.f32 %v4243, %v4411
    %4413 = vmatmul.bf16.gmra.mxu0 %v2489
    %v4414 = vpop.f32.mrf.mxu0
    %v4415 = vadd.f32 %v4246, %v4414
    %v4416 = vpop.f32.mrf.mxu0
    %v4417 = vadd.f32 %v4248, %v4416
    %4418 = vmatmul.bf16.gmra.mxu0 %v2497
    %v4419 = vpop.f32.mrf.mxu0
    %v4420 = vadd.f32 %v4251, %v4419
    %v4421 = vpop.f32.mrf.mxu0
    %v4422 = vadd.f32 %v4253, %v4421
    %4423 = vmatmul.bf16.gmra.mxu0 %v2505
    %v4424 = vpop.f32.mrf.mxu0
    %v4425 = vadd.f32 %v4256, %v4424
    %v4426 = vpop.f32.mrf.mxu0
    %v4427 = vadd.f32 %v4258, %v4426
    %4428 = vmatmul.bf16.gmra.mxu0 %v2513
    %v4429 = vpop.f32.mrf.mxu0
    %v4430 = vadd.f32 %v4261, %v4429
    %v4431 = vpop.f32.mrf.mxu0
    %v4432 = vadd.f32 %v4263, %v4431
    %4433 = vmatmul.bf16.gmra.mxu0 %v2521
    %v4434 = vpop.f32.mrf.mxu0
    %v4435 = vadd.f32 %v4266, %v4434
    %v4436 = vpop.f32.mrf.mxu0
    %v4437 = vadd.f32 %v4268, %v4436
    %4438 = vmatmul.bf16.gmra.mxu0 %v2529
    %v4439 = vpop.f32.mrf.mxu0
    %v4440 = vadd.f32 %v4271, %v4439
    %v4441 = vpop.f32.mrf.mxu0
    %v4442 = vadd.f32 %v4273, %v4441
    %4443 = vmatmul.bf16.gmra.mxu0 %v2537
    %v4444 = vpop.f32.mrf.mxu0
    %v4445 = vadd.f32 %v4276, %v4444
    %v4446 = vpop.f32.mrf.mxu0
    %v4447 = vadd.f32 %v4278, %v4446
    %4448 = vmatmul.bf16.gmra.mxu0 %v2545
    %v4449 = vpop.f32.mrf.mxu0
    %v4450 = vadd.f32 %v4281, %v4449
    %v4451 = vpop.f32.mrf.mxu0
    %v4452 = vadd.f32 %v4283, %v4451
    %4453 = vmatmul.bf16.gmra.mxu0 %v2553
    %v4454 = vpop.f32.mrf.mxu0
    %v4455 = vadd.f32 %v4286, %v4454
    %v4456 = vpop.f32.mrf.mxu0
    %v4457 = vadd.f32 %v4288, %v4456
    %4458 = vmatmul.bf16.gmra.mxu0 %v2561
    %v4459 = vpop.f32.mrf.mxu0
    %v4460 = vadd.f32 %v4291, %v4459
    %v4461 = vpop.f32.mrf.mxu0
    %v4462 = vadd.f32 %v4293, %v4461
    %4463 = vmatmul.bf16.gmra.mxu0 %v2569
    %v4464 = vpop.f32.mrf.mxu0
    %v4465 = vadd.f32 %v4296, %v4464
    %v4466 = vpop.f32.mrf.mxu0
    %v4467 = vadd.f32 %v4298, %v4466
    %4468 = vmatmul.bf16.gmra.mxu0 %v2577
    %v4469 = vpop.f32.mrf.mxu0
    %v4470 = vadd.f32 %v4301, %v4469
    %v4471 = vpop.f32.mrf.mxu0
    %v4472 = vadd.f32 %v4303, %v4471
    %4473 = vmatmul.bf16.gmra.mxu0 %v2585
    %v4474 = vpop.f32.mrf.mxu0
    %v4475 = vadd.f32 %v4306, %v4474
    %v4476 = vpop.f32.mrf.mxu0
    %v4477 = vadd.f32 %v4308, %v4476
    %4478 = vmatmul.bf16.gmra.mxu0 %v2593
    %v4479 = vpop.f32.mrf.mxu0
    %v4480 = vadd.f32 %v4311, %v4479
    %v4481 = vpop.f32.mrf.mxu0
    %v4482 = vadd.f32 %v4313, %v4481
    %4483 = vdwg.mxu0
    %4484 = vmatpush.bf16.msra.mxu0 %v3726
    %4485 = vmatpush.bf16.msra.mxu0 %v3722
    %4486 = vmatpush.bf16.msra.mxu0 %v3718
    %4487 = vmatpush.bf16.msra.mxu0 %v3714
    %4488 = vmatpush.bf16.msra.mxu0 %v3710
    %4489 = vmatpush.bf16.msra.mxu0 %v3706
    %4490 = vmatpush.bf16.msra.mxu0 %v3702
    %4491 = vmatpush.bf16.msra.mxu0 %v3698
    %4492 = vmatmul.bf16.gmra.mxu0 %v2346
    %v4493 = vpop.f32.mrf.mxu0
    %v4494 = vadd.f32 %v4325, %v4493
    %v4495 = vpop.f32.mrf.mxu0
    %v4496 = vadd.f32 %v4327, %v4495
    %4497 = vmatmul.bf16.gmra.mxu0 %v2354
    %v4498 = vpop.f32.mrf.mxu0
    %v4499 = vadd.f32 %v4330, %v4498
    %v4500 = vpop.f32.mrf.mxu0
    %v4501 = vadd.f32 %v4332, %v4500
    %4502 = vmatmul.bf16.gmra.mxu0 %v2362
    %v4503 = vpop.f32.mrf.mxu0
    %v4504 = vadd.f32 %v4335, %v4503
    %v4505 = vpop.f32.mrf.mxu0
    %v4506 = vadd.f32 %v4337, %v4505
    %4507 = vmatmul.bf16.gmra.mxu0 %v2370
    %v4508 = vpop.f32.mrf.mxu0
    %v4509 = vadd.f32 %v4340, %v4508
    %v4510 = vpop.f32.mrf.mxu0
    %v4511 = vadd.f32 %v4342, %v4510
    %4512 = vmatmul.bf16.gmra.mxu0 %v2378
    %v4513 = vpop.f32.mrf.mxu0
    %v4514 = vadd.f32 %v4345, %v4513
    %v4515 = vpop.f32.mrf.mxu0
    %v4516 = vadd.f32 %v4347, %v4515
    %4517 = vmatmul.bf16.gmra.mxu0 %v2386
    %v4518 = vpop.f32.mrf.mxu0
    %v4519 = vadd.f32 %v4350, %v4518
    %v4520 = vpop.f32.mrf.mxu0
    %v4521 = vadd.f32 %v4352, %v4520
    %4522 = vmatmul.bf16.gmra.mxu0 %v2394
    %v4523 = vpop.f32.mrf.mxu0
    %v4524 = vadd.f32 %v4355, %v4523
    %v4525 = vpop.f32.mrf.mxu0
    %v4526 = vadd.f32 %v4357, %v4525
    %4527 = vmatmul.bf16.gmra.mxu0 %v2402
    %v4528 = vpop.f32.mrf.mxu0
    %v4529 = vadd.f32 %v4360, %v4528
    %v4530 = vpop.f32.mrf.mxu0
    %v4531 = vadd.f32 %v4362, %v4530
    %4532 = vmatmul.bf16.gmra.mxu0 %v2410
    %v4533 = vpop.f32.mrf.mxu0
    %v4534 = vadd.f32 %v4365, %v4533
    %v4535 = vpop.f32.mrf.mxu0
    %v4536 = vadd.f32 %v4367, %v4535
    %4537 = vmatmul.bf16.gmra.mxu0 %v2418
    %v4538 = vpop.f32.mrf.mxu0
    %v4539 = vadd.f32 %v4370, %v4538
    %v4540 = vpop.f32.mrf.mxu0
    %v4541 = vadd.f32 %v4372, %v4540
    %4542 = vmatmul.bf16.gmra.mxu0 %v2426
    %v4543 = vpop.f32.mrf.mxu0
    %v4544 = vadd.f32 %v4375, %v4543
    %v4545 = vpop.f32.mrf.mxu0
    %v4546 = vadd.f32 %v4377, %v4545
    %4547 = vmatmul.bf16.gmra.mxu0 %v2434
    %v4548 = vpop.f32.mrf.mxu0
    %v4549 = vadd.f32 %v4380, %v4548
    %v4550 = vpop.f32.mrf.mxu0
    %v4551 = vadd.f32 %v4382, %v4550
    %4552 = vmatmul.bf16.gmra.mxu0 %v2442
    %v4553 = vpop.f32.mrf.mxu0
    %v4554 = vadd.f32 %v4385, %v4553
    %v4555 = vpop.f32.mrf.mxu0
    %v4556 = vadd.f32 %v4387, %v4555
    %4557 = vmatmul.bf16.gmra.mxu0 %v2450
    %v4558 = vpop.f32.mrf.mxu0
    %v4559 = vadd.f32 %v4390, %v4558
    %v4560 = vpop.f32.mrf.mxu0
    %v4561 = vadd.f32 %v4392, %v4560
    %4562 = vmatmul.bf16.gmra.mxu0 %v2458
    %v4563 = vpop.f32.mrf.mxu0
    %v4564 = vadd.f32 %v4395, %v4563
    %v4565 = vpop.f32.mrf.mxu0
    %v4566 = vadd.f32 %v4397, %v4565
    %4567 = vmatmul.bf16.gmra.mxu0 %v2466
    %v4568 = vpop.f32.mrf.mxu0
    %v4569 = vadd.f32 %v4400, %v4568
    %v4570 = vpop.f32.mrf.mxu0
    %v4571 = vadd.f32 %v4402, %v4570
    %4572 = vmatmul.bf16.gmra.mxu0 %v2474
    %v4573 = vpop.f32.mrf.mxu0
    %v4574 = vadd.f32 %v4405, %v4573
    %v4575 = vpop.f32.mrf.mxu0
    %v4576 = vadd.f32 %v4407, %v4575
    %4577 = vmatmul.bf16.gmra.mxu0 %v2482
    %v4578 = vpop.f32.mrf.mxu0
    %v4579 = vadd.f32 %v4410, %v4578
    %v4580 = vpop.f32.mrf.mxu0
    %v4581 = vadd.f32 %v4412, %v4580
    %4582 = vmatmul.bf16.gmra.mxu0 %v2490
    %v4583 = vpop.f32.mrf.mxu0
    %v4584 = vadd.f32 %v4415, %v4583
    %v4585 = vpop.f32.mrf.mxu0
    %v4586 = vadd.f32 %v4417, %v4585
    %4587 = vmatmul.bf16.gmra.mxu0 %v2498
    %v4588 = vpop.f32.mrf.mxu0
    %v4589 = vadd.f32 %v4420, %v4588
    %v4590 = vpop.f32.mrf.mxu0
    %v4591 = vadd.f32 %v4422, %v4590
    %4592 = vmatmul.bf16.gmra.mxu0 %v2506
    %v4593 = vpop.f32.mrf.mxu0
    %v4594 = vadd.f32 %v4425, %v4593
    %v4595 = vpop.f32.mrf.mxu0
    %v4596 = vadd.f32 %v4427, %v4595
    %4597 = vmatmul.bf16.gmra.mxu0 %v2514
    %v4598 = vpop.f32.mrf.mxu0
    %v4599 = vadd.f32 %v4430, %v4598
    %v4600 = vpop.f32.mrf.mxu0
    %v4601 = vadd.f32 %v4432, %v4600
    %4602 = vmatmul.bf16.gmra.mxu0 %v2522
    %v4603 = vpop.f32.mrf.mxu0
    %v4604 = vadd.f32 %v4435, %v4603
    %v4605 = vpop.f32.mrf.mxu0
    %v4606 = vadd.f32 %v4437, %v4605
    %4607 = vmatmul.bf16.gmra.mxu0 %v2530
    %v4608 = vpop.f32.mrf.mxu0
    %v4609 = vadd.f32 %v4440, %v4608
    %v4610 = vpop.f32.mrf.mxu0
    %v4611 = vadd.f32 %v4442, %v4610
    %4612 = vmatmul.bf16.gmra.mxu0 %v2538
    %v4613 = vpop.f32.mrf.mxu0
    %v4614 = vadd.f32 %v4445, %v4613
    %v4615 = vpop.f32.mrf.mxu0
    %v4616 = vadd.f32 %v4447, %v4615
    %4617 = vmatmul.bf16.gmra.mxu0 %v2546
    %v4618 = vpop.f32.mrf.mxu0
    %v4619 = vadd.f32 %v4450, %v4618
    %v4620 = vpop.f32.mrf.mxu0
    %v4621 = vadd.f32 %v4452, %v4620
    %4622 = vmatmul.bf16.gmra.mxu0 %v2554
    %v4623 = vpop.f32.mrf.mxu0
    %v4624 = vadd.f32 %v4455, %v4623
    %v4625 = vpop.f32.mrf.mxu0
    %v4626 = vadd.f32 %v4457, %v4625
    %4627 = vmatmul.bf16.gmra.mxu0 %v2562
    %v4628 = vpop.f32.mrf.mxu0
    %v4629 = vadd.f32 %v4460, %v4628
    %v4630 = vpop.f32.mrf.mxu0
    %v4631 = vadd.f32 %v4462, %v4630
    %4632 = vmatmul.bf16.gmra.mxu0 %v2570
    %v4633 = vpop.f32.mrf.mxu0
    %v4634 = vadd.f32 %v4465, %v4633
    %v4635 = vpop.f32.mrf.mxu0
    %v4636 = vadd.f32 %v4467, %v4635
    %4637 = vmatmul.bf16.gmra.mxu0 %v2578
    %v4638 = vpop.f32.mrf.mxu0
    %v4639 = vadd.f32 %v4470, %v4638
    %v4640 = vpop.f32.mrf.mxu0
    %v4641 = vadd.f32 %v4472, %v4640
    %4642 = vmatmul.bf16.gmra.mxu0 %v2586
    %v4643 = vpop.f32.mrf.mxu0
    %v4644 = vadd.f32 %v4475, %v4643
    %v4645 = vpop.f32.mrf.mxu0
    %v4646 = vadd.f32 %v4477, %v4645
    %4647 = vmatmul.bf16.gmra.mxu0 %v2594
    %v4648 = vpop.f32.mrf.mxu0
    %v4649 = vadd.f32 %v4480, %v4648
    %v4650 = vpop.f32.mrf.mxu0
    %v4651 = vadd.f32 %v4482, %v4650
    %4652 = vdwg.mxu0
    %4653 = vmatpush.bf16.msra.mxu0 %v3758
    %4654 = vmatpush.bf16.msra.mxu0 %v3754
    %4655 = vmatpush.bf16.msra.mxu0 %v3750
    %4656 = vmatpush.bf16.msra.mxu0 %v3746
    %4657 = vmatpush.bf16.msra.mxu0 %v3742
    %4658 = vmatpush.bf16.msra.mxu0 %v3738
    %4659 = vmatpush.bf16.msra.mxu0 %v3734
    %4660 = vmatpush.bf16.msra.mxu0 %v3730
    %4661 = vmatmul.bf16.gmra.mxu0 %v2347
    %v4662 = vpop.f32.mrf.mxu0
    %v4663 = vadd.f32 %v4494, %v4662
    %v4664 = vpop.f32.mrf.mxu0
    %v4665 = vadd.f32 %v4496, %v4664
    %4666 = vmatmul.bf16.gmra.mxu0 %v2355
    %v4667 = vpop.f32.mrf.mxu0
    %v4668 = vadd.f32 %v4499, %v4667
    %v4669 = vpop.f32.mrf.mxu0
    %v4670 = vadd.f32 %v4501, %v4669
    %4671 = vmatmul.bf16.gmra.mxu0 %v2363
    %v4672 = vpop.f32.mrf.mxu0
    %v4673 = vadd.f32 %v4504, %v4672
    %v4674 = vpop.f32.mrf.mxu0
    %v4675 = vadd.f32 %v4506, %v4674
    %4676 = vmatmul.bf16.gmra.mxu0 %v2371
    %v4677 = vpop.f32.mrf.mxu0
    %v4678 = vadd.f32 %v4509, %v4677
    %v4679 = vpop.f32.mrf.mxu0
    %v4680 = vadd.f32 %v4511, %v4679
    %4681 = vmatmul.bf16.gmra.mxu0 %v2379
    %v4682 = vpop.f32.mrf.mxu0
    %v4683 = vadd.f32 %v4514, %v4682
    %v4684 = vpop.f32.mrf.mxu0
    %v4685 = vadd.f32 %v4516, %v4684
    %4686 = vmatmul.bf16.gmra.mxu0 %v2387
    %v4687 = vpop.f32.mrf.mxu0
    %v4688 = vadd.f32 %v4519, %v4687
    %v4689 = vpop.f32.mrf.mxu0
    %v4690 = vadd.f32 %v4521, %v4689
    %4691 = vmatmul.bf16.gmra.mxu0 %v2395
    %v4692 = vpop.f32.mrf.mxu0
    %v4693 = vadd.f32 %v4524, %v4692
    %v4694 = vpop.f32.mrf.mxu0
    %v4695 = vadd.f32 %v4526, %v4694
    %4696 = vmatmul.bf16.gmra.mxu0 %v2403
    %v4697 = vpop.f32.mrf.mxu0
    %v4698 = vadd.f32 %v4529, %v4697
    %v4699 = vpop.f32.mrf.mxu0
    %v4700 = vadd.f32 %v4531, %v4699
    %4701 = vmatmul.bf16.gmra.mxu0 %v2411
    %v4702 = vpop.f32.mrf.mxu0
    %v4703 = vadd.f32 %v4534, %v4702
    %v4704 = vpop.f32.mrf.mxu0
    %v4705 = vadd.f32 %v4536, %v4704
    %4706 = vmatmul.bf16.gmra.mxu0 %v2419
    %v4707 = vpop.f32.mrf.mxu0
    %v4708 = vadd.f32 %v4539, %v4707
    %v4709 = vpop.f32.mrf.mxu0
    %v4710 = vadd.f32 %v4541, %v4709
    %4711 = vmatmul.bf16.gmra.mxu0 %v2427
    %v4712 = vpop.f32.mrf.mxu0
    %v4713 = vadd.f32 %v4544, %v4712
    %v4714 = vpop.f32.mrf.mxu0
    %v4715 = vadd.f32 %v4546, %v4714
    %4716 = vmatmul.bf16.gmra.mxu0 %v2435
    %v4717 = vpop.f32.mrf.mxu0
    %v4718 = vadd.f32 %v4549, %v4717
    %v4719 = vpop.f32.mrf.mxu0
    %v4720 = vadd.f32 %v4551, %v4719
    %4721 = vmatmul.bf16.gmra.mxu0 %v2443
    %v4722 = vpop.f32.mrf.mxu0
    %v4723 = vadd.f32 %v4554, %v4722
    %v4724 = vpop.f32.mrf.mxu0
    %v4725 = vadd.f32 %v4556, %v4724
    %4726 = vmatmul.bf16.gmra.mxu0 %v2451
    %v4727 = vpop.f32.mrf.mxu0
    %v4728 = vadd.f32 %v4559, %v4727
    %v4729 = vpop.f32.mrf.mxu0
    %v4730 = vadd.f32 %v4561, %v4729
    %4731 = vmatmul.bf16.gmra.mxu0 %v2459
    %v4732 = vpop.f32.mrf.mxu0
    %v4733 = vadd.f32 %v4564, %v4732
    %v4734 = vpop.f32.mrf.mxu0
    %v4735 = vadd.f32 %v4566, %v4734
    %4736 = vmatmul.bf16.gmra.mxu0 %v2467
    %v4737 = vpop.f32.mrf.mxu0
    %v4738 = vadd.f32 %v4569, %v4737
    %v4739 = vpop.f32.mrf.mxu0
    %v4740 = vadd.f32 %v4571, %v4739
    %4741 = vmatmul.bf16.gmra.mxu0 %v2475
    %v4742 = vpop.f32.mrf.mxu0
    %v4743 = vadd.f32 %v4574, %v4742
    %v4744 = vpop.f32.mrf.mxu0
    %v4745 = vadd.f32 %v4576, %v4744
    %4746 = vmatmul.bf16.gmra.mxu0 %v2483
    %v4747 = vpop.f32.mrf.mxu0
    %v4748 = vadd.f32 %v4579, %v4747
    %v4749 = vpop.f32.mrf.mxu0
    %v4750 = vadd.f32 %v4581, %v4749
    %4751 = vmatmul.bf16.gmra.mxu0 %v2491
    %v4752 = vpop.f32.mrf.mxu0
    %v4753 = vadd.f32 %v4584, %v4752
    %v4754 = vpop.f32.mrf.mxu0
    %v4755 = vadd.f32 %v4586, %v4754
    %4756 = vmatmul.bf16.gmra.mxu0 %v2499
    %v4757 = vpop.f32.mrf.mxu0
    %v4758 = vadd.f32 %v4589, %v4757
    %v4759 = vpop.f32.mrf.mxu0
    %v4760 = vadd.f32 %v4591, %v4759
    %4761 = vmatmul.bf16.gmra.mxu0 %v2507
    %v4762 = vpop.f32.mrf.mxu0
    %v4763 = vadd.f32 %v4594, %v4762
    %v4764 = vpop.f32.mrf.mxu0
    %v4765 = vadd.f32 %v4596, %v4764
    %4766 = vmatmul.bf16.gmra.mxu0 %v2515
    %v4767 = vpop.f32.mrf.mxu0
    %v4768 = vadd.f32 %v4599, %v4767
    %v4769 = vpop.f32.mrf.mxu0
    %v4770 = vadd.f32 %v4601, %v4769
    %4771 = vmatmul.bf16.gmra.mxu0 %v2523
    %v4772 = vpop.f32.mrf.mxu0
    %v4773 = vadd.f32 %v4604, %v4772
    %v4774 = vpop.f32.mrf.mxu0
    %v4775 = vadd.f32 %v4606, %v4774
    %4776 = vmatmul.bf16.gmra.mxu0 %v2531
    %v4777 = vpop.f32.mrf.mxu0
    %v4778 = vadd.f32 %v4609, %v4777
    %v4779 = vpop.f32.mrf.mxu0
    %v4780 = vadd.f32 %v4611, %v4779
    %4781 = vmatmul.bf16.gmra.mxu0 %v2539
    %v4782 = vpop.f32.mrf.mxu0
    %v4783 = vadd.f32 %v4614, %v4782
    %v4784 = vpop.f32.mrf.mxu0
    %v4785 = vadd.f32 %v4616, %v4784
    %4786 = vmatmul.bf16.gmra.mxu0 %v2547
    %v4787 = vpop.f32.mrf.mxu0
    %v4788 = vadd.f32 %v4619, %v4787
    %v4789 = vpop.f32.mrf.mxu0
    %v4790 = vadd.f32 %v4621, %v4789
    %4791 = vmatmul.bf16.gmra.mxu0 %v2555
    %v4792 = vpop.f32.mrf.mxu0
    %v4793 = vadd.f32 %v4624, %v4792
    %v4794 = vpop.f32.mrf.mxu0
    %v4795 = vadd.f32 %v4626, %v4794
    %4796 = vmatmul.bf16.gmra.mxu0 %v2563
    %v4797 = vpop.f32.mrf.mxu0
    %v4798 = vadd.f32 %v4629, %v4797
    %v4799 = vpop.f32.mrf.mxu0
    %v4800 = vadd.f32 %v4631, %v4799
    %4801 = vmatmul.bf16.gmra.mxu0 %v2571
    %v4802 = vpop.f32.mrf.mxu0
    %v4803 = vadd.f32 %v4634, %v4802
    %v4804 = vpop.f32.mrf.mxu0
    %v4805 = vadd.f32 %v4636, %v4804
    %4806 = vmatmul.bf16.gmra.mxu0 %v2579
    %v4807 = vpop.f32.mrf.mxu0
    %v4808 = vadd.f32 %v4639, %v4807
    %v4809 = vpop.f32.mrf.mxu0
    %v4810 = vadd.f32 %v4641, %v4809
    %4811 = vmatmul.bf16.gmra.mxu0 %v2587
    %v4812 = vpop.f32.mrf.mxu0
    %v4813 = vadd.f32 %v4644, %v4812
    %v4814 = vpop.f32.mrf.mxu0
    %v4815 = vadd.f32 %v4646, %v4814
    %4816 = vmatmul.bf16.gmra.mxu0 %v2595
    %v4817 = vpop.f32.mrf.mxu0
    %v4818 = vadd.f32 %v4649, %v4817
    %v4819 = vpop.f32.mrf.mxu0
    %v4820 = vadd.f32 %v4651, %v4819
    %4821 = vdwg.mxu0
    %4822 = vmatpush.bf16.msra.mxu0 %v3790
    %4823 = vmatpush.bf16.msra.mxu0 %v3786
    %4824 = vmatpush.bf16.msra.mxu0 %v3782
    %4825 = vmatpush.bf16.msra.mxu0 %v3778
    %4826 = vmatpush.bf16.msra.mxu0 %v3774
    %4827 = vmatpush.bf16.msra.mxu0 %v3770
    %4828 = vmatpush.bf16.msra.mxu0 %v3766
    %4829 = vmatpush.bf16.msra.mxu0 %v3762
    %4830 = vmatmul.bf16.gmra.mxu0 %v2348
    %v4831 = vpop.f32.mrf.mxu0
    %v4832 = vadd.f32 %v4663, %v4831
    %v4833 = vpop.f32.mrf.mxu0
    %v4834 = vadd.f32 %v4665, %v4833
    %4835 = vmatmul.bf16.gmra.mxu0 %v2356
    %v4836 = vpop.f32.mrf.mxu0
    %v4837 = vadd.f32 %v4668, %v4836
    %v4838 = vpop.f32.mrf.mxu0
    %v4839 = vadd.f32 %v4670, %v4838
    %4840 = vmatmul.bf16.gmra.mxu0 %v2364
    %v4841 = vpop.f32.mrf.mxu0
    %v4842 = vadd.f32 %v4673, %v4841
    %v4843 = vpop.f32.mrf.mxu0
    %v4844 = vadd.f32 %v4675, %v4843
    %4845 = vmatmul.bf16.gmra.mxu0 %v2372
    %v4846 = vpop.f32.mrf.mxu0
    %v4847 = vadd.f32 %v4678, %v4846
    %v4848 = vpop.f32.mrf.mxu0
    %v4849 = vadd.f32 %v4680, %v4848
    %4850 = vmatmul.bf16.gmra.mxu0 %v2380
    %v4851 = vpop.f32.mrf.mxu0
    %v4852 = vadd.f32 %v4683, %v4851
    %v4853 = vpop.f32.mrf.mxu0
    %v4854 = vadd.f32 %v4685, %v4853
    %4855 = vmatmul.bf16.gmra.mxu0 %v2388
    %v4856 = vpop.f32.mrf.mxu0
    %v4857 = vadd.f32 %v4688, %v4856
    %v4858 = vpop.f32.mrf.mxu0
    %v4859 = vadd.f32 %v4690, %v4858
    %4860 = vmatmul.bf16.gmra.mxu0 %v2396
    %v4861 = vpop.f32.mrf.mxu0
    %v4862 = vadd.f32 %v4693, %v4861
    %v4863 = vpop.f32.mrf.mxu0
    %v4864 = vadd.f32 %v4695, %v4863
    %4865 = vmatmul.bf16.gmra.mxu0 %v2404
    %v4866 = vpop.f32.mrf.mxu0
    %v4867 = vadd.f32 %v4698, %v4866
    %v4868 = vpop.f32.mrf.mxu0
    %v4869 = vadd.f32 %v4700, %v4868
    %4870 = vmatmul.bf16.gmra.mxu0 %v2412
    %v4871 = vpop.f32.mrf.mxu0
    %v4872 = vadd.f32 %v4703, %v4871
    %v4873 = vpop.f32.mrf.mxu0
    %v4874 = vadd.f32 %v4705, %v4873
    %4875 = vmatmul.bf16.gmra.mxu0 %v2420
    %v4876 = vpop.f32.mrf.mxu0
    %v4877 = vadd.f32 %v4708, %v4876
    %v4878 = vpop.f32.mrf.mxu0
    %v4879 = vadd.f32 %v4710, %v4878
    %4880 = vmatmul.bf16.gmra.mxu0 %v2428
    %v4881 = vpop.f32.mrf.mxu0
    %v4882 = vadd.f32 %v4713, %v4881
    %v4883 = vpop.f32.mrf.mxu0
    %v4884 = vadd.f32 %v4715, %v4883
    %4885 = vmatmul.bf16.gmra.mxu0 %v2436
    %v4886 = vpop.f32.mrf.mxu0
    %v4887 = vadd.f32 %v4718, %v4886
    %v4888 = vpop.f32.mrf.mxu0
    %v4889 = vadd.f32 %v4720, %v4888
    %4890 = vmatmul.bf16.gmra.mxu0 %v2444
    %v4891 = vpop.f32.mrf.mxu0
    %v4892 = vadd.f32 %v4723, %v4891
    %v4893 = vpop.f32.mrf.mxu0
    %v4894 = vadd.f32 %v4725, %v4893
    %4895 = vmatmul.bf16.gmra.mxu0 %v2452
    %v4896 = vpop.f32.mrf.mxu0
    %v4897 = vadd.f32 %v4728, %v4896
    %v4898 = vpop.f32.mrf.mxu0
    %v4899 = vadd.f32 %v4730, %v4898
    %4900 = vmatmul.bf16.gmra.mxu0 %v2460
    %v4901 = vpop.f32.mrf.mxu0
    %v4902 = vadd.f32 %v4733, %v4901
    %v4903 = vpop.f32.mrf.mxu0
    %v4904 = vadd.f32 %v4735, %v4903
    %4905 = vmatmul.bf16.gmra.mxu0 %v2468
    %v4906 = vpop.f32.mrf.mxu0
    %v4907 = vadd.f32 %v4738, %v4906
    %v4908 = vpop.f32.mrf.mxu0
    %v4909 = vadd.f32 %v4740, %v4908
    %4910 = vmatmul.bf16.gmra.mxu0 %v2476
    %v4911 = vpop.f32.mrf.mxu0
    %v4912 = vadd.f32 %v4743, %v4911
    %v4913 = vpop.f32.mrf.mxu0
    %v4914 = vadd.f32 %v4745, %v4913
    %4915 = vmatmul.bf16.gmra.mxu0 %v2484
    %v4916 = vpop.f32.mrf.mxu0
    %v4917 = vadd.f32 %v4748, %v4916
    %v4918 = vpop.f32.mrf.mxu0
    %v4919 = vadd.f32 %v4750, %v4918
    %4920 = vmatmul.bf16.gmra.mxu0 %v2492
    %v4921 = vpop.f32.mrf.mxu0
    %v4922 = vadd.f32 %v4753, %v4921
    %v4923 = vpop.f32.mrf.mxu0
    %v4924 = vadd.f32 %v4755, %v4923
    %4925 = vmatmul.bf16.gmra.mxu0 %v2500
    %v4926 = vpop.f32.mrf.mxu0
    %v4927 = vadd.f32 %v4758, %v4926
    %v4928 = vpop.f32.mrf.mxu0
    %v4929 = vadd.f32 %v4760, %v4928
    %4930 = vmatmul.bf16.gmra.mxu0 %v2508
    %v4931 = vpop.f32.mrf.mxu0
    %v4932 = vadd.f32 %v4763, %v4931
    %v4933 = vpop.f32.mrf.mxu0
    %v4934 = vadd.f32 %v4765, %v4933
    %4935 = vmatmul.bf16.gmra.mxu0 %v2516
    %v4936 = vpop.f32.mrf.mxu0
    %v4937 = vadd.f32 %v4768, %v4936
    %v4938 = vpop.f32.mrf.mxu0
    %v4939 = vadd.f32 %v4770, %v4938
    %4940 = vmatmul.bf16.gmra.mxu0 %v2524
    %v4941 = vpop.f32.mrf.mxu0
    %v4942 = vadd.f32 %v4773, %v4941
    %v4943 = vpop.f32.mrf.mxu0
    %v4944 = vadd.f32 %v4775, %v4943
    %4945 = vmatmul.bf16.gmra.mxu0 %v2532
    %v4946 = vpop.f32.mrf.mxu0
    %v4947 = vadd.f32 %v4778, %v4946
    %v4948 = vpop.f32.mrf.mxu0
    %v4949 = vadd.f32 %v4780, %v4948
    %4950 = vmatmul.bf16.gmra.mxu0 %v2540
    %v4951 = vpop.f32.mrf.mxu0
    %v4952 = vadd.f32 %v4783, %v4951
    %v4953 = vpop.f32.mrf.mxu0
    %v4954 = vadd.f32 %v4785, %v4953
    %4955 = vmatmul.bf16.gmra.mxu0 %v2548
    %v4956 = vpop.f32.mrf.mxu0
    %v4957 = vadd.f32 %v4788, %v4956
    %v4958 = vpop.f32.mrf.mxu0
    %v4959 = vadd.f32 %v4790, %v4958
    %4960 = vmatmul.bf16.gmra.mxu0 %v2556
    %v4961 = vpop.f32.mrf.mxu0
    %v4962 = vadd.f32 %v4793, %v4961
    %v4963 = vpop.f32.mrf.mxu0
    %v4964 = vadd.f32 %v4795, %v4963
    %4965 = vmatmul.bf16.gmra.mxu0 %v2564
    %v4966 = vpop.f32.mrf.mxu0
    %v4967 = vadd.f32 %v4798, %v4966
    %v4968 = vpop.f32.mrf.mxu0
    %v4969 = vadd.f32 %v4800, %v4968
    %4970 = vmatmul.bf16.gmra.mxu0 %v2572
    %v4971 = vpop.f32.mrf.mxu0
    %v4972 = vadd.f32 %v4803, %v4971
    %v4973 = vpop.f32.mrf.mxu0
    %v4974 = vadd.f32 %v4805, %v4973
    %4975 = vmatmul.bf16.gmra.mxu0 %v2580
    %v4976 = vpop.f32.mrf.mxu0
    %v4977 = vadd.f32 %v4808, %v4976
    %v4978 = vpop.f32.mrf.mxu0
    %v4979 = vadd.f32 %v4810, %v4978
    %4980 = vmatmul.bf16.gmra.mxu0 %v2588
    %v4981 = vpop.f32.mrf.mxu0
    %v4982 = vadd.f32 %v4813, %v4981
    %v4983 = vpop.f32.mrf.mxu0
    %v4984 = vadd.f32 %v4815, %v4983
    %4985 = vmatmul.bf16.gmra.mxu0 %v2596
    %v4986 = vpop.f32.mrf.mxu0
    %v4987 = vadd.f32 %v4818, %v4986
    %v4988 = vpop.f32.mrf.mxu0
    %v4989 = vadd.f32 %v4820, %v4988
    %4990 = vdwg.mxu0
    %4991 = vmatpush.bf16.msra.mxu0 %v3822
    %4992 = vmatpush.bf16.msra.mxu0 %v3818
    %4993 = vmatpush.bf16.msra.mxu0 %v3814
    %4994 = vmatpush.bf16.msra.mxu0 %v3810
    %4995 = vmatpush.bf16.msra.mxu0 %v3806
    %4996 = vmatpush.bf16.msra.mxu0 %v3802
    %4997 = vmatpush.bf16.msra.mxu0 %v3798
    %4998 = vmatpush.bf16.msra.mxu0 %v3794
    %4999 = vmatmul.bf16.gmra.mxu0 %v2349
    %v5000 = vpop.f32.mrf.mxu0
    %v5001 = vadd.f32 %v4832, %v5000
    %v5002 = vpop.f32.mrf.mxu0
    %v5003 = vadd.f32 %v4834, %v5002
    %5004 = vmatmul.bf16.gmra.mxu0 %v2357
    %v5005 = vpop.f32.mrf.mxu0
    %v5006 = vadd.f32 %v4837, %v5005
    %v5007 = vpop.f32.mrf.mxu0
    %v5008 = vadd.f32 %v4839, %v5007
    %5009 = vmatmul.bf16.gmra.mxu0 %v2365
    %v5010 = vpop.f32.mrf.mxu0
    %v5011 = vadd.f32 %v4842, %v5010
    %v5012 = vpop.f32.mrf.mxu0
    %v5013 = vadd.f32 %v4844, %v5012
    %5014 = vmatmul.bf16.gmra.mxu0 %v2373
    %v5015 = vpop.f32.mrf.mxu0
    %v5016 = vadd.f32 %v4847, %v5015
    %v5017 = vpop.f32.mrf.mxu0
    %v5018 = vadd.f32 %v4849, %v5017
    %5019 = vmatmul.bf16.gmra.mxu0 %v2381
    %v5020 = vpop.f32.mrf.mxu0
    %v5021 = vadd.f32 %v4852, %v5020
    %v5022 = vpop.f32.mrf.mxu0
    %v5023 = vadd.f32 %v4854, %v5022
    %5024 = vmatmul.bf16.gmra.mxu0 %v2389
    %v5025 = vpop.f32.mrf.mxu0
    %v5026 = vadd.f32 %v4857, %v5025
    %v5027 = vpop.f32.mrf.mxu0
    %v5028 = vadd.f32 %v4859, %v5027
    %5029 = vmatmul.bf16.gmra.mxu0 %v2397
    %v5030 = vpop.f32.mrf.mxu0
    %v5031 = vadd.f32 %v4862, %v5030
    %v5032 = vpop.f32.mrf.mxu0
    %v5033 = vadd.f32 %v4864, %v5032
    %5034 = vmatmul.bf16.gmra.mxu0 %v2405
    %v5035 = vpop.f32.mrf.mxu0
    %v5036 = vadd.f32 %v4867, %v5035
    %v5037 = vpop.f32.mrf.mxu0
    %v5038 = vadd.f32 %v4869, %v5037
    %5039 = vmatmul.bf16.gmra.mxu0 %v2413
    %v5040 = vpop.f32.mrf.mxu0
    %v5041 = vadd.f32 %v4872, %v5040
    %v5042 = vpop.f32.mrf.mxu0
    %v5043 = vadd.f32 %v4874, %v5042
    %5044 = vmatmul.bf16.gmra.mxu0 %v2421
    %v5045 = vpop.f32.mrf.mxu0
    %v5046 = vadd.f32 %v4877, %v5045
    %v5047 = vpop.f32.mrf.mxu0
    %v5048 = vadd.f32 %v4879, %v5047
    %5049 = vmatmul.bf16.gmra.mxu0 %v2429
    %v5050 = vpop.f32.mrf.mxu0
    %v5051 = vadd.f32 %v4882, %v5050
    %v5052 = vpop.f32.mrf.mxu0
    %v5053 = vadd.f32 %v4884, %v5052
    %5054 = vmatmul.bf16.gmra.mxu0 %v2437
    %v5055 = vpop.f32.mrf.mxu0
    %v5056 = vadd.f32 %v4887, %v5055
    %v5057 = vpop.f32.mrf.mxu0
    %v5058 = vadd.f32 %v4889, %v5057
    %5059 = vmatmul.bf16.gmra.mxu0 %v2445
    %v5060 = vpop.f32.mrf.mxu0
    %v5061 = vadd.f32 %v4892, %v5060
    %v5062 = vpop.f32.mrf.mxu0
    %v5063 = vadd.f32 %v4894, %v5062
    %5064 = vmatmul.bf16.gmra.mxu0 %v2453
    %v5065 = vpop.f32.mrf.mxu0
    %v5066 = vadd.f32 %v4897, %v5065
    %v5067 = vpop.f32.mrf.mxu0
    %v5068 = vadd.f32 %v4899, %v5067
    %5069 = vmatmul.bf16.gmra.mxu0 %v2461
    %v5070 = vpop.f32.mrf.mxu0
    %v5071 = vadd.f32 %v4902, %v5070
    %v5072 = vpop.f32.mrf.mxu0
    %v5073 = vadd.f32 %v4904, %v5072
    %5074 = vmatmul.bf16.gmra.mxu0 %v2469
    %v5075 = vpop.f32.mrf.mxu0
    %v5076 = vadd.f32 %v4907, %v5075
    %v5077 = vpop.f32.mrf.mxu0
    %v5078 = vadd.f32 %v4909, %v5077
    %5079 = vmatmul.bf16.gmra.mxu0 %v2477
    %v5080 = vpop.f32.mrf.mxu0
    %v5081 = vadd.f32 %v4912, %v5080
    %v5082 = vpop.f32.mrf.mxu0
    %v5083 = vadd.f32 %v4914, %v5082
    %5084 = vmatmul.bf16.gmra.mxu0 %v2485
    %v5085 = vpop.f32.mrf.mxu0
    %v5086 = vadd.f32 %v4917, %v5085
    %v5087 = vpop.f32.mrf.mxu0
    %v5088 = vadd.f32 %v4919, %v5087
    %5089 = vmatmul.bf16.gmra.mxu0 %v2493
    %v5090 = vpop.f32.mrf.mxu0
    %v5091 = vadd.f32 %v4922, %v5090
    %v5092 = vpop.f32.mrf.mxu0
    %v5093 = vadd.f32 %v4924, %v5092
    %5094 = vmatmul.bf16.gmra.mxu0 %v2501
    %v5095 = vpop.f32.mrf.mxu0
    %v5096 = vadd.f32 %v4927, %v5095
    %v5097 = vpop.f32.mrf.mxu0
    %v5098 = vadd.f32 %v4929, %v5097
    %5099 = vmatmul.bf16.gmra.mxu0 %v2509
    %v5100 = vpop.f32.mrf.mxu0
    %v5101 = vadd.f32 %v4932, %v5100
    %v5102 = vpop.f32.mrf.mxu0
    %v5103 = vadd.f32 %v4934, %v5102
    %5104 = vmatmul.bf16.gmra.mxu0 %v2517
    %v5105 = vpop.f32.mrf.mxu0
    %v5106 = vadd.f32 %v4937, %v5105
    %v5107 = vpop.f32.mrf.mxu0
    %v5108 = vadd.f32 %v4939, %v5107
    %5109 = vmatmul.bf16.gmra.mxu0 %v2525
    %v5110 = vpop.f32.mrf.mxu0
    %v5111 = vadd.f32 %v4942, %v5110
    %v5112 = vpop.f32.mrf.mxu0
    %v5113 = vadd.f32 %v4944, %v5112
    %5114 = vmatmul.bf16.gmra.mxu0 %v2533
    %v5115 = vpop.f32.mrf.mxu0
    %v5116 = vadd.f32 %v4947, %v5115
    %v5117 = vpop.f32.mrf.mxu0
    %v5118 = vadd.f32 %v4949, %v5117
    %5119 = vmatmul.bf16.gmra.mxu0 %v2541
    %v5120 = vpop.f32.mrf.mxu0
    %v5121 = vadd.f32 %v4952, %v5120
    %v5122 = vpop.f32.mrf.mxu0
    %v5123 = vadd.f32 %v4954, %v5122
    %5124 = vmatmul.bf16.gmra.mxu0 %v2549
    %v5125 = vpop.f32.mrf.mxu0
    %v5126 = vadd.f32 %v4957, %v5125
    %v5127 = vpop.f32.mrf.mxu0
    %v5128 = vadd.f32 %v4959, %v5127
    %5129 = vmatmul.bf16.gmra.mxu0 %v2557
    %v5130 = vpop.f32.mrf.mxu0
    %v5131 = vadd.f32 %v4962, %v5130
    %v5132 = vpop.f32.mrf.mxu0
    %v5133 = vadd.f32 %v4964, %v5132
    %5134 = vmatmul.bf16.gmra.mxu0 %v2565
    %v5135 = vpop.f32.mrf.mxu0
    %v5136 = vadd.f32 %v4967, %v5135
    %v5137 = vpop.f32.mrf.mxu0
    %v5138 = vadd.f32 %v4969, %v5137
    %5139 = vmatmul.bf16.gmra.mxu0 %v2573
    %v5140 = vpop.f32.mrf.mxu0
    %v5141 = vadd.f32 %v4972, %v5140
    %v5142 = vpop.f32.mrf.mxu0
    %v5143 = vadd.f32 %v4974, %v5142
    %5144 = vmatmul.bf16.gmra.mxu0 %v2581
    %v5145 = vpop.f32.mrf.mxu0
    %v5146 = vadd.f32 %v4977, %v5145
    %v5147 = vpop.f32.mrf.mxu0
    %v5148 = vadd.f32 %v4979, %v5147
    %5149 = vmatmul.bf16.gmra.mxu0 %v2589
    %v5150 = vpop.f32.mrf.mxu0
    %v5151 = vadd.f32 %v4982, %v5150
    %v5152 = vpop.f32.mrf.mxu0
    %v5153 = vadd.f32 %v4984, %v5152
    %5154 = vmatmul.bf16.gmra.mxu0 %v2597
    %v5155 = vpop.f32.mrf.mxu0
    %v5156 = vadd.f32 %v4987, %v5155
    %v5157 = vpop.f32.mrf.mxu0
    %v5158 = vadd.f32 %v4989, %v5157
    %5159 = vdwg.mxu0
    %5160 = vmatpush.bf16.msra.mxu0 %v3854
    %5161 = vmatpush.bf16.msra.mxu0 %v3850
    %5162 = vmatpush.bf16.msra.mxu0 %v3846
    %5163 = vmatpush.bf16.msra.mxu0 %v3842
    %5164 = vmatpush.bf16.msra.mxu0 %v3838
    %5165 = vmatpush.bf16.msra.mxu0 %v3834
    %5166 = vmatpush.bf16.msra.mxu0 %v3830
    %5167 = vmatpush.bf16.msra.mxu0 %v3826
    %5168 = vmatmul.bf16.gmra.mxu0 %v2350
    %v5169 = vpop.f32.mrf.mxu0
    %v5170 = vadd.f32 %v5001, %v5169
    %v5171 = vpop.f32.mrf.mxu0
    %v5172 = vadd.f32 %v5003, %v5171
    %5173 = vmatmul.bf16.gmra.mxu0 %v2358
    %v5174 = vpop.f32.mrf.mxu0
    %v5175 = vadd.f32 %v5006, %v5174
    %v5176 = vpop.f32.mrf.mxu0
    %v5177 = vadd.f32 %v5008, %v5176
    %5178 = vmatmul.bf16.gmra.mxu0 %v2366
    %v5179 = vpop.f32.mrf.mxu0
    %v5180 = vadd.f32 %v5011, %v5179
    %v5181 = vpop.f32.mrf.mxu0
    %v5182 = vadd.f32 %v5013, %v5181
    %5183 = vmatmul.bf16.gmra.mxu0 %v2374
    %v5184 = vpop.f32.mrf.mxu0
    %v5185 = vadd.f32 %v5016, %v5184
    %v5186 = vpop.f32.mrf.mxu0
    %v5187 = vadd.f32 %v5018, %v5186
    %5188 = vmatmul.bf16.gmra.mxu0 %v2382
    %v5189 = vpop.f32.mrf.mxu0
    %v5190 = vadd.f32 %v5021, %v5189
    %v5191 = vpop.f32.mrf.mxu0
    %v5192 = vadd.f32 %v5023, %v5191
    %5193 = vmatmul.bf16.gmra.mxu0 %v2390
    %v5194 = vpop.f32.mrf.mxu0
    %v5195 = vadd.f32 %v5026, %v5194
    %v5196 = vpop.f32.mrf.mxu0
    %v5197 = vadd.f32 %v5028, %v5196
    %5198 = vmatmul.bf16.gmra.mxu0 %v2398
    %v5199 = vpop.f32.mrf.mxu0
    %v5200 = vadd.f32 %v5031, %v5199
    %v5201 = vpop.f32.mrf.mxu0
    %v5202 = vadd.f32 %v5033, %v5201
    %5203 = vmatmul.bf16.gmra.mxu0 %v2406
    %v5204 = vpop.f32.mrf.mxu0
    %v5205 = vadd.f32 %v5036, %v5204
    %v5206 = vpop.f32.mrf.mxu0
    %v5207 = vadd.f32 %v5038, %v5206
    %5208 = vmatmul.bf16.gmra.mxu0 %v2414
    %v5209 = vpop.f32.mrf.mxu0
    %v5210 = vadd.f32 %v5041, %v5209
    %v5211 = vpop.f32.mrf.mxu0
    %v5212 = vadd.f32 %v5043, %v5211
    %5213 = vmatmul.bf16.gmra.mxu0 %v2422
    %v5214 = vpop.f32.mrf.mxu0
    %v5215 = vadd.f32 %v5046, %v5214
    %v5216 = vpop.f32.mrf.mxu0
    %v5217 = vadd.f32 %v5048, %v5216
    %5218 = vmatmul.bf16.gmra.mxu0 %v2430
    %v5219 = vpop.f32.mrf.mxu0
    %v5220 = vadd.f32 %v5051, %v5219
    %v5221 = vpop.f32.mrf.mxu0
    %v5222 = vadd.f32 %v5053, %v5221
    %5223 = vmatmul.bf16.gmra.mxu0 %v2438
    %v5224 = vpop.f32.mrf.mxu0
    %v5225 = vadd.f32 %v5056, %v5224
    %v5226 = vpop.f32.mrf.mxu0
    %v5227 = vadd.f32 %v5058, %v5226
    %5228 = vmatmul.bf16.gmra.mxu0 %v2446
    %v5229 = vpop.f32.mrf.mxu0
    %v5230 = vadd.f32 %v5061, %v5229
    %v5231 = vpop.f32.mrf.mxu0
    %v5232 = vadd.f32 %v5063, %v5231
    %5233 = vmatmul.bf16.gmra.mxu0 %v2454
    %v5234 = vpop.f32.mrf.mxu0
    %v5235 = vadd.f32 %v5066, %v5234
    %v5236 = vpop.f32.mrf.mxu0
    %v5237 = vadd.f32 %v5068, %v5236
    %5238 = vmatmul.bf16.gmra.mxu0 %v2462
    %v5239 = vpop.f32.mrf.mxu0
    %v5240 = vadd.f32 %v5071, %v5239
    %v5241 = vpop.f32.mrf.mxu0
    %v5242 = vadd.f32 %v5073, %v5241
    %5243 = vmatmul.bf16.gmra.mxu0 %v2470
    %v5244 = vpop.f32.mrf.mxu0
    %v5245 = vadd.f32 %v5076, %v5244
    %v5246 = vpop.f32.mrf.mxu0
    %v5247 = vadd.f32 %v5078, %v5246
    %5248 = vmatmul.bf16.gmra.mxu0 %v2478
    %v5249 = vpop.f32.mrf.mxu0
    %v5250 = vadd.f32 %v5081, %v5249
    %v5251 = vpop.f32.mrf.mxu0
    %v5252 = vadd.f32 %v5083, %v5251
    %5253 = vmatmul.bf16.gmra.mxu0 %v2486
    %v5254 = vpop.f32.mrf.mxu0
    %v5255 = vadd.f32 %v5086, %v5254
    %v5256 = vpop.f32.mrf.mxu0
    %v5257 = vadd.f32 %v5088, %v5256
    %5258 = vmatmul.bf16.gmra.mxu0 %v2494
    %v5259 = vpop.f32.mrf.mxu0
    %v5260 = vadd.f32 %v5091, %v5259
    %v5261 = vpop.f32.mrf.mxu0
    %v5262 = vadd.f32 %v5093, %v5261
    %5263 = vmatmul.bf16.gmra.mxu0 %v2502
    %v5264 = vpop.f32.mrf.mxu0
    %v5265 = vadd.f32 %v5096, %v5264
    %v5266 = vpop.f32.mrf.mxu0
    %v5267 = vadd.f32 %v5098, %v5266
    %5268 = vmatmul.bf16.gmra.mxu0 %v2510
    %v5269 = vpop.f32.mrf.mxu0
    %v5270 = vadd.f32 %v5101, %v5269
    %v5271 = vpop.f32.mrf.mxu0
    %v5272 = vadd.f32 %v5103, %v5271
    %5273 = vmatmul.bf16.gmra.mxu0 %v2518
    %v5274 = vpop.f32.mrf.mxu0
    %v5275 = vadd.f32 %v5106, %v5274
    %v5276 = vpop.f32.mrf.mxu0
    %v5277 = vadd.f32 %v5108, %v5276
    %5278 = vmatmul.bf16.gmra.mxu0 %v2526
    %v5279 = vpop.f32.mrf.mxu0
    %v5280 = vadd.f32 %v5111, %v5279
    %v5281 = vpop.f32.mrf.mxu0
    %v5282 = vadd.f32 %v5113, %v5281
    %5283 = vmatmul.bf16.gmra.mxu0 %v2534
    %v5284 = vpop.f32.mrf.mxu0
    %v5285 = vadd.f32 %v5116, %v5284
    %v5286 = vpop.f32.mrf.mxu0
    %v5287 = vadd.f32 %v5118, %v5286
    %5288 = vmatmul.bf16.gmra.mxu0 %v2542
    %v5289 = vpop.f32.mrf.mxu0
    %v5290 = vadd.f32 %v5121, %v5289
    %v5291 = vpop.f32.mrf.mxu0
    %v5292 = vadd.f32 %v5123, %v5291
    %5293 = vmatmul.bf16.gmra.mxu0 %v2550
    %v5294 = vpop.f32.mrf.mxu0
    %v5295 = vadd.f32 %v5126, %v5294
    %v5296 = vpop.f32.mrf.mxu0
    %v5297 = vadd.f32 %v5128, %v5296
    %5298 = vmatmul.bf16.gmra.mxu0 %v2558
    %v5299 = vpop.f32.mrf.mxu0
    %v5300 = vadd.f32 %v5131, %v5299
    %v5301 = vpop.f32.mrf.mxu0
    %v5302 = vadd.f32 %v5133, %v5301
    %5303 = vmatmul.bf16.gmra.mxu0 %v2566
    %v5304 = vpop.f32.mrf.mxu0
    %v5305 = vadd.f32 %v5136, %v5304
    %v5306 = vpop.f32.mrf.mxu0
    %v5307 = vadd.f32 %v5138, %v5306
    %5308 = vmatmul.bf16.gmra.mxu0 %v2574
    %v5309 = vpop.f32.mrf.mxu0
    %v5310 = vadd.f32 %v5141, %v5309
    %v5311 = vpop.f32.mrf.mxu0
    %v5312 = vadd.f32 %v5143, %v5311
    %5313 = vmatmul.bf16.gmra.mxu0 %v2582
    %v5314 = vpop.f32.mrf.mxu0
    %v5315 = vadd.f32 %v5146, %v5314
    %v5316 = vpop.f32.mrf.mxu0
    %v5317 = vadd.f32 %v5148, %v5316
    %5318 = vmatmul.bf16.gmra.mxu0 %v2590
    %v5319 = vpop.f32.mrf.mxu0
    %v5320 = vadd.f32 %v5151, %v5319
    %v5321 = vpop.f32.mrf.mxu0
    %v5322 = vadd.f32 %v5153, %v5321
    %5323 = vmatmul.bf16.gmra.mxu0 %v2598
    %v5324 = vpop.f32.mrf.mxu0
    %v5325 = vadd.f32 %v5156, %v5324
    %v5326 = vpop.f32.mrf.mxu0
    %v5327 = vadd.f32 %v5158, %v5326
    %5328 = vdwg.mxu0
    %5329 = vmatpush.bf16.msra.mxu0 %v3886
    %5330 = vmatpush.bf16.msra.mxu0 %v3882
    %5331 = vmatpush.bf16.msra.mxu0 %v3878
    %5332 = vmatpush.bf16.msra.mxu0 %v3874
    %5333 = vmatpush.bf16.msra.mxu0 %v3870
    %5334 = vmatpush.bf16.msra.mxu0 %v3866
    %5335 = vmatpush.bf16.msra.mxu0 %v3862
    %5336 = vmatpush.bf16.msra.mxu0 %v3858
    %5337 = vmatmul.bf16.gmra.mxu0 %v2351
    %v5338 = vpop.f32.mrf.mxu0
    %v5339 = vadd.f32 %v5170, %v5338
    %v5340 = vpop.f32.mrf.mxu0
    %v5341 = vadd.f32 %v5172, %v5340
    %5342 = vmatmul.bf16.gmra.mxu0 %v2359
    %v5343 = vpop.f32.mrf.mxu0
    %v5344 = vadd.f32 %v5175, %v5343
    %v5345 = vpop.f32.mrf.mxu0
    %v5346 = vadd.f32 %v5177, %v5345
    %5347 = vmatmul.bf16.gmra.mxu0 %v2367
    %v5348 = vpop.f32.mrf.mxu0
    %v5349 = vadd.f32 %v5180, %v5348
    %v5350 = vpop.f32.mrf.mxu0
    %v5351 = vadd.f32 %v5182, %v5350
    %5352 = vmatmul.bf16.gmra.mxu0 %v2375
    %v5353 = vpop.f32.mrf.mxu0
    %v5354 = vadd.f32 %v5185, %v5353
    %v5355 = vpop.f32.mrf.mxu0
    %v5356 = vadd.f32 %v5187, %v5355
    %5357 = vmatmul.bf16.gmra.mxu0 %v2383
    %v5358 = vpop.f32.mrf.mxu0
    %v5359 = vadd.f32 %v5190, %v5358
    %v5360 = vpop.f32.mrf.mxu0
    %v5361 = vadd.f32 %v5192, %v5360
    %5362 = vmatmul.bf16.gmra.mxu0 %v2391
    %v5363 = vpop.f32.mrf.mxu0
    %v5364 = vadd.f32 %v5195, %v5363
    %v5365 = vpop.f32.mrf.mxu0
    %v5366 = vadd.f32 %v5197, %v5365
    %5367 = vmatmul.bf16.gmra.mxu0 %v2399
    %v5368 = vpop.f32.mrf.mxu0
    %v5369 = vadd.f32 %v5200, %v5368
    %v5370 = vpop.f32.mrf.mxu0
    %v5371 = vadd.f32 %v5202, %v5370
    %5372 = vmatmul.bf16.gmra.mxu0 %v2407
    %v5373 = vpop.f32.mrf.mxu0
    %v5374 = vadd.f32 %v5205, %v5373
    %v5375 = vpop.f32.mrf.mxu0
    %v5376 = vadd.f32 %v5207, %v5375
    %5377 = vmatmul.bf16.gmra.mxu0 %v2415
    %v5378 = vpop.f32.mrf.mxu0
    %v5379 = vadd.f32 %v5210, %v5378
    %v5380 = vpop.f32.mrf.mxu0
    %v5381 = vadd.f32 %v5212, %v5380
    %5382 = vmatmul.bf16.gmra.mxu0 %v2423
    %v5383 = vpop.f32.mrf.mxu0
    %v5384 = vadd.f32 %v5215, %v5383
    %v5385 = vpop.f32.mrf.mxu0
    %v5386 = vadd.f32 %v5217, %v5385
    %5387 = vmatmul.bf16.gmra.mxu0 %v2431
    %v5388 = vpop.f32.mrf.mxu0
    %v5389 = vadd.f32 %v5220, %v5388
    %v5390 = vpop.f32.mrf.mxu0
    %v5391 = vadd.f32 %v5222, %v5390
    %5392 = vmatmul.bf16.gmra.mxu0 %v2439
    %v5393 = vpop.f32.mrf.mxu0
    %v5394 = vadd.f32 %v5225, %v5393
    %v5395 = vpop.f32.mrf.mxu0
    %v5396 = vadd.f32 %v5227, %v5395
    %5397 = vmatmul.bf16.gmra.mxu0 %v2447
    %v5398 = vpop.f32.mrf.mxu0
    %v5399 = vadd.f32 %v5230, %v5398
    %v5400 = vpop.f32.mrf.mxu0
    %v5401 = vadd.f32 %v5232, %v5400
    %5402 = vmatmul.bf16.gmra.mxu0 %v2455
    %v5403 = vpop.f32.mrf.mxu0
    %v5404 = vadd.f32 %v5235, %v5403
    %v5405 = vpop.f32.mrf.mxu0
    %v5406 = vadd.f32 %v5237, %v5405
    %5407 = vmatmul.bf16.gmra.mxu0 %v2463
    %v5408 = vpop.f32.mrf.mxu0
    %v5409 = vadd.f32 %v5240, %v5408
    %v5410 = vpop.f32.mrf.mxu0
    %v5411 = vadd.f32 %v5242, %v5410
    %5412 = vmatmul.bf16.gmra.mxu0 %v2471
    %v5413 = vpop.f32.mrf.mxu0
    %v5414 = vadd.f32 %v5245, %v5413
    %v5415 = vpop.f32.mrf.mxu0
    %v5416 = vadd.f32 %v5247, %v5415
    %5417 = vmatmul.bf16.gmra.mxu0 %v2479
    %v5418 = vpop.f32.mrf.mxu0
    %v5419 = vadd.f32 %v5250, %v5418
    %v5420 = vpop.f32.mrf.mxu0
    %v5421 = vadd.f32 %v5252, %v5420
    %5422 = vmatmul.bf16.gmra.mxu0 %v2487
    %v5423 = vpop.f32.mrf.mxu0
    %v5424 = vadd.f32 %v5255, %v5423
    %v5425 = vpop.f32.mrf.mxu0
    %v5426 = vadd.f32 %v5257, %v5425
    %5427 = vmatmul.bf16.gmra.mxu0 %v2495
    %v5428 = vpop.f32.mrf.mxu0
    %v5429 = vadd.f32 %v5260, %v5428
    %v5430 = vpop.f32.mrf.mxu0
    %v5431 = vadd.f32 %v5262, %v5430
    %5432 = vmatmul.bf16.gmra.mxu0 %v2503
    %v5433 = vpop.f32.mrf.mxu0
    %v5434 = vadd.f32 %v5265, %v5433
    %v5435 = vpop.f32.mrf.mxu0
    %v5436 = vadd.f32 %v5267, %v5435
    %5437 = vmatmul.bf16.gmra.mxu0 %v2511
    %v5438 = vpop.f32.mrf.mxu0
    %v5439 = vadd.f32 %v5270, %v5438
    %v5440 = vpop.f32.mrf.mxu0
    %v5441 = vadd.f32 %v5272, %v5440
    %5442 = vmatmul.bf16.gmra.mxu0 %v2519
    %v5443 = vpop.f32.mrf.mxu0
    %v5444 = vadd.f32 %v5275, %v5443
    %v5445 = vpop.f32.mrf.mxu0
    %v5446 = vadd.f32 %v5277, %v5445
    %5447 = vmatmul.bf16.gmra.mxu0 %v2527
    %v5448 = vpop.f32.mrf.mxu0
    %v5449 = vadd.f32 %v5280, %v5448
    %v5450 = vpop.f32.mrf.mxu0
    %v5451 = vadd.f32 %v5282, %v5450
    %5452 = vmatmul.bf16.gmra.mxu0 %v2535
    %v5453 = vpop.f32.mrf.mxu0
    %v5454 = vadd.f32 %v5285, %v5453
    %v5455 = vpop.f32.mrf.mxu0
    %v5456 = vadd.f32 %v5287, %v5455
    %5457 = vmatmul.bf16.gmra.mxu0 %v2543
    %v5458 = vpop.f32.mrf.mxu0
    %v5459 = vadd.f32 %v5290, %v5458
    %v5460 = vpop.f32.mrf.mxu0
    %v5461 = vadd.f32 %v5292, %v5460
    %5462 = vmatmul.bf16.gmra.mxu0 %v2551
    %v5463 = vpop.f32.mrf.mxu0
    %v5464 = vadd.f32 %v5295, %v5463
    %v5465 = vpop.f32.mrf.mxu0
    %v5466 = vadd.f32 %v5297, %v5465
    %5467 = vmatmul.bf16.gmra.mxu0 %v2559
    %v5468 = vpop.f32.mrf.mxu0
    %v5469 = vadd.f32 %v5300, %v5468
    %v5470 = vpop.f32.mrf.mxu0
    %v5471 = vadd.f32 %v5302, %v5470
    %5472 = vmatmul.bf16.gmra.mxu0 %v2567
    %v5473 = vpop.f32.mrf.mxu0
    %v5474 = vadd.f32 %v5305, %v5473
    %v5475 = vpop.f32.mrf.mxu0
    %v5476 = vadd.f32 %v5307, %v5475
    %5477 = vmatmul.bf16.gmra.mxu0 %v2575
    %v5478 = vpop.f32.mrf.mxu0
    %v5479 = vadd.f32 %v5310, %v5478
    %v5480 = vpop.f32.mrf.mxu0
    %v5481 = vadd.f32 %v5312, %v5480
    %5482 = vmatmul.bf16.gmra.mxu0 %v2583
    %v5483 = vpop.f32.mrf.mxu0
    %v5484 = vadd.f32 %v5315, %v5483
    %v5485 = vpop.f32.mrf.mxu0
    %v5486 = vadd.f32 %v5317, %v5485
    %5487 = vmatmul.bf16.gmra.mxu0 %v2591
    %v5488 = vpop.f32.mrf.mxu0
    %v5489 = vadd.f32 %v5320, %v5488
    %v5490 = vpop.f32.mrf.mxu0
    %v5491 = vadd.f32 %v5322, %v5490
    %5492 = vmatmul.bf16.gmra.mxu0 %v2599
    %v5493 = vpop.f32.mrf.mxu0
    %v5494 = vadd.f32 %v5325, %v5493
    %v5495 = vpop.f32.mrf.mxu0
    %v5496 = vadd.f32 %v5327, %v5495
    %5497 = vdwg.mxu0
    %5498 = vmatpush.bf16.msra.mxu0 %v3663
    %5499 = vmatpush.bf16.msra.mxu0 %v3659
    %5500 = vmatpush.bf16.msra.mxu0 %v3655
    %5501 = vmatpush.bf16.msra.mxu0 %v3651
    %5502 = vmatpush.bf16.msra.mxu0 %v3647
    %5503 = vmatpush.bf16.msra.mxu0 %v3643
    %5504 = vmatpush.bf16.msra.mxu0 %v3639
    %5505 = vmatpush.bf16.msra.mxu0 %v3635
    %5506 = vmatmul.bf16.gmra.mxu0 %v2344
    %v5507 = vpop.f32.mrf.mxu0
    %v5508 = vadd.f32 %v2859, %v5507
    %v5509 = vpop.f32.mrf.mxu0
    %v5510 = vadd.f32 %v2859, %v5509
    %5511 = vmatmul.bf16.gmra.mxu0 %v2352
    %v5512 = vpop.f32.mrf.mxu0
    %v5513 = vadd.f32 %v2859, %v5512
    %v5514 = vpop.f32.mrf.mxu0
    %v5515 = vadd.f32 %v2859, %v5514
    %5516 = vmatmul.bf16.gmra.mxu0 %v2360
    %v5517 = vpop.f32.mrf.mxu0
    %v5518 = vadd.f32 %v2859, %v5517
    %v5519 = vpop.f32.mrf.mxu0
    %v5520 = vadd.f32 %v2859, %v5519
    %5521 = vmatmul.bf16.gmra.mxu0 %v2368
    %v5522 = vpop.f32.mrf.mxu0
    %v5523 = vadd.f32 %v2859, %v5522
    %v5524 = vpop.f32.mrf.mxu0
    %v5525 = vadd.f32 %v2859, %v5524
    %5526 = vmatmul.bf16.gmra.mxu0 %v2376
    %v5527 = vpop.f32.mrf.mxu0
    %v5528 = vadd.f32 %v2859, %v5527
    %v5529 = vpop.f32.mrf.mxu0
    %v5530 = vadd.f32 %v2859, %v5529
    %5531 = vmatmul.bf16.gmra.mxu0 %v2384
    %v5532 = vpop.f32.mrf.mxu0
    %v5533 = vadd.f32 %v2859, %v5532
    %v5534 = vpop.f32.mrf.mxu0
    %v5535 = vadd.f32 %v2859, %v5534
    %5536 = vmatmul.bf16.gmra.mxu0 %v2392
    %v5537 = vpop.f32.mrf.mxu0
    %v5538 = vadd.f32 %v2859, %v5537
    %v5539 = vpop.f32.mrf.mxu0
    %v5540 = vadd.f32 %v2859, %v5539
    %5541 = vmatmul.bf16.gmra.mxu0 %v2400
    %v5542 = vpop.f32.mrf.mxu0
    %v5543 = vadd.f32 %v2859, %v5542
    %v5544 = vpop.f32.mrf.mxu0
    %v5545 = vadd.f32 %v2859, %v5544
    %5546 = vmatmul.bf16.gmra.mxu0 %v2408
    %v5547 = vpop.f32.mrf.mxu0
    %v5548 = vadd.f32 %v2859, %v5547
    %v5549 = vpop.f32.mrf.mxu0
    %v5550 = vadd.f32 %v2859, %v5549
    %5551 = vmatmul.bf16.gmra.mxu0 %v2416
    %v5552 = vpop.f32.mrf.mxu0
    %v5553 = vadd.f32 %v2859, %v5552
    %v5554 = vpop.f32.mrf.mxu0
    %v5555 = vadd.f32 %v2859, %v5554
    %5556 = vmatmul.bf16.gmra.mxu0 %v2424
    %v5557 = vpop.f32.mrf.mxu0
    %v5558 = vadd.f32 %v2859, %v5557
    %v5559 = vpop.f32.mrf.mxu0
    %v5560 = vadd.f32 %v2859, %v5559
    %5561 = vmatmul.bf16.gmra.mxu0 %v2432
    %v5562 = vpop.f32.mrf.mxu0
    %v5563 = vadd.f32 %v2859, %v5562
    %v5564 = vpop.f32.mrf.mxu0
    %v5565 = vadd.f32 %v2859, %v5564
    %5566 = vmatmul.bf16.gmra.mxu0 %v2440
    %v5567 = vpop.f32.mrf.mxu0
    %v5568 = vadd.f32 %v2859, %v5567
    %v5569 = vpop.f32.mrf.mxu0
    %v5570 = vadd.f32 %v2859, %v5569
    %5571 = vmatmul.bf16.gmra.mxu0 %v2448
    %v5572 = vpop.f32.mrf.mxu0
    %v5573 = vadd.f32 %v2859, %v5572
    %v5574 = vpop.f32.mrf.mxu0
    %v5575 = vadd.f32 %v2859, %v5574
    %5576 = vmatmul.bf16.gmra.mxu0 %v2456
    %v5577 = vpop.f32.mrf.mxu0
    %v5578 = vadd.f32 %v2859, %v5577
    %v5579 = vpop.f32.mrf.mxu0
    %v5580 = vadd.f32 %v2859, %v5579
    %5581 = vmatmul.bf16.gmra.mxu0 %v2464
    %v5582 = vpop.f32.mrf.mxu0
    %v5583 = vadd.f32 %v2859, %v5582
    %v5584 = vpop.f32.mrf.mxu0
    %v5585 = vadd.f32 %v2859, %v5584
    %5586 = vmatmul.bf16.gmra.mxu0 %v2472
    %v5587 = vpop.f32.mrf.mxu0
    %v5588 = vadd.f32 %v2859, %v5587
    %v5589 = vpop.f32.mrf.mxu0
    %v5590 = vadd.f32 %v2859, %v5589
    %5591 = vmatmul.bf16.gmra.mxu0 %v2480
    %v5592 = vpop.f32.mrf.mxu0
    %v5593 = vadd.f32 %v2859, %v5592
    %v5594 = vpop.f32.mrf.mxu0
    %v5595 = vadd.f32 %v2859, %v5594
    %5596 = vmatmul.bf16.gmra.mxu0 %v2488
    %v5597 = vpop.f32.mrf.mxu0
    %v5598 = vadd.f32 %v2859, %v5597
    %v5599 = vpop.f32.mrf.mxu0
    %v5600 = vadd.f32 %v2859, %v5599
    %5601 = vmatmul.bf16.gmra.mxu0 %v2496
    %v5602 = vpop.f32.mrf.mxu0
    %v5603 = vadd.f32 %v2859, %v5602
    %v5604 = vpop.f32.mrf.mxu0
    %v5605 = vadd.f32 %v2859, %v5604
    %5606 = vmatmul.bf16.gmra.mxu0 %v2504
    %v5607 = vpop.f32.mrf.mxu0
    %v5608 = vadd.f32 %v2859, %v5607
    %v5609 = vpop.f32.mrf.mxu0
    %v5610 = vadd.f32 %v2859, %v5609
    %5611 = vmatmul.bf16.gmra.mxu0 %v2512
    %v5612 = vpop.f32.mrf.mxu0
    %v5613 = vadd.f32 %v2859, %v5612
    %v5614 = vpop.f32.mrf.mxu0
    %v5615 = vadd.f32 %v2859, %v5614
    %5616 = vmatmul.bf16.gmra.mxu0 %v2520
    %v5617 = vpop.f32.mrf.mxu0
    %v5618 = vadd.f32 %v2859, %v5617
    %v5619 = vpop.f32.mrf.mxu0
    %v5620 = vadd.f32 %v2859, %v5619
    %5621 = vmatmul.bf16.gmra.mxu0 %v2528
    %v5622 = vpop.f32.mrf.mxu0
    %v5623 = vadd.f32 %v2859, %v5622
    %v5624 = vpop.f32.mrf.mxu0
    %v5625 = vadd.f32 %v2859, %v5624
    %5626 = vmatmul.bf16.gmra.mxu0 %v2536
    %v5627 = vpop.f32.mrf.mxu0
    %v5628 = vadd.f32 %v2859, %v5627
    %v5629 = vpop.f32.mrf.mxu0
    %v5630 = vadd.f32 %v2859, %v5629
    %5631 = vmatmul.bf16.gmra.mxu0 %v2544
    %v5632 = vpop.f32.mrf.mxu0
    %v5633 = vadd.f32 %v2859, %v5632
    %v5634 = vpop.f32.mrf.mxu0
    %v5635 = vadd.f32 %v2859, %v5634
    %5636 = vmatmul.bf16.gmra.mxu0 %v2552
    %v5637 = vpop.f32.mrf.mxu0
    %v5638 = vadd.f32 %v2859, %v5637
    %v5639 = vpop.f32.mrf.mxu0
    %v5640 = vadd.f32 %v2859, %v5639
    %5641 = vmatmul.bf16.gmra.mxu0 %v2560
    %v5642 = vpop.f32.mrf.mxu0
    %v5643 = vadd.f32 %v2859, %v5642
    %v5644 = vpop.f32.mrf.mxu0
    %v5645 = vadd.f32 %v2859, %v5644
    %5646 = vmatmul.bf16.gmra.mxu0 %v2568
    %v5647 = vpop.f32.mrf.mxu0
    %v5648 = vadd.f32 %v2859, %v5647
    %v5649 = vpop.f32.mrf.mxu0
    %v5650 = vadd.f32 %v2859, %v5649
    %5651 = vmatmul.bf16.gmra.mxu0 %v2576
    %v5652 = vpop.f32.mrf.mxu0
    %v5653 = vadd.f32 %v2859, %v5652
    %v5654 = vpop.f32.mrf.mxu0
    %v5655 = vadd.f32 %v2859, %v5654
    %5656 = vmatmul.bf16.gmra.mxu0 %v2584
    %v5657 = vpop.f32.mrf.mxu0
    %v5658 = vadd.f32 %v2859, %v5657
    %v5659 = vpop.f32.mrf.mxu0
    %v5660 = vadd.f32 %v2859, %v5659
    %5661 = vmatmul.bf16.gmra.mxu0 %v2592
    %v5662 = vpop.f32.mrf.mxu0
    %v5663 = vadd.f32 %v2859, %v5662
    %v5664 = vpop.f32.mrf.mxu0
    %v5665 = vadd.f32 %v2859, %v5664
    %5666 = vdwg.mxu0
    %5667 = vmatpush.bf16.msra.mxu0 %v3695
    %5668 = vmatpush.bf16.msra.mxu0 %v3691
    %5669 = vmatpush.bf16.msra.mxu0 %v3687
    %5670 = vmatpush.bf16.msra.mxu0 %v3683
    %5671 = vmatpush.bf16.msra.mxu0 %v3679
    %5672 = vmatpush.bf16.msra.mxu0 %v3675
    %5673 = vmatpush.bf16.msra.mxu0 %v3671
    %5674 = vmatpush.bf16.msra.mxu0 %v3667
    %5675 = vmatmul.bf16.gmra.mxu0 %v2345
    %v5676 = vpop.f32.mrf.mxu0
    %v5677 = vadd.f32 %v5508, %v5676
    %v5678 = vpop.f32.mrf.mxu0
    %v5679 = vadd.f32 %v5510, %v5678
    %5680 = vmatmul.bf16.gmra.mxu0 %v2353
    %v5681 = vpop.f32.mrf.mxu0
    %v5682 = vadd.f32 %v5513, %v5681
    %v5683 = vpop.f32.mrf.mxu0
    %v5684 = vadd.f32 %v5515, %v5683
    %5685 = vmatmul.bf16.gmra.mxu0 %v2361
    %v5686 = vpop.f32.mrf.mxu0
    %v5687 = vadd.f32 %v5518, %v5686
    %v5688 = vpop.f32.mrf.mxu0
    %v5689 = vadd.f32 %v5520, %v5688
    %5690 = vmatmul.bf16.gmra.mxu0 %v2369
    %v5691 = vpop.f32.mrf.mxu0
    %v5692 = vadd.f32 %v5523, %v5691
    %v5693 = vpop.f32.mrf.mxu0
    %v5694 = vadd.f32 %v5525, %v5693
    %5695 = vmatmul.bf16.gmra.mxu0 %v2377
    %v5696 = vpop.f32.mrf.mxu0
    %v5697 = vadd.f32 %v5528, %v5696
    %v5698 = vpop.f32.mrf.mxu0
    %v5699 = vadd.f32 %v5530, %v5698
    %5700 = vmatmul.bf16.gmra.mxu0 %v2385
    %v5701 = vpop.f32.mrf.mxu0
    %v5702 = vadd.f32 %v5533, %v5701
    %v5703 = vpop.f32.mrf.mxu0
    %v5704 = vadd.f32 %v5535, %v5703
    %5705 = vmatmul.bf16.gmra.mxu0 %v2393
    %v5706 = vpop.f32.mrf.mxu0
    %v5707 = vadd.f32 %v5538, %v5706
    %v5708 = vpop.f32.mrf.mxu0
    %v5709 = vadd.f32 %v5540, %v5708
    %5710 = vmatmul.bf16.gmra.mxu0 %v2401
    %v5711 = vpop.f32.mrf.mxu0
    %v5712 = vadd.f32 %v5543, %v5711
    %v5713 = vpop.f32.mrf.mxu0
    %v5714 = vadd.f32 %v5545, %v5713
    %5715 = vmatmul.bf16.gmra.mxu0 %v2409
    %v5716 = vpop.f32.mrf.mxu0
    %v5717 = vadd.f32 %v5548, %v5716
    %v5718 = vpop.f32.mrf.mxu0
    %v5719 = vadd.f32 %v5550, %v5718
    %5720 = vmatmul.bf16.gmra.mxu0 %v2417
    %v5721 = vpop.f32.mrf.mxu0
    %v5722 = vadd.f32 %v5553, %v5721
    %v5723 = vpop.f32.mrf.mxu0
    %v5724 = vadd.f32 %v5555, %v5723
    %5725 = vmatmul.bf16.gmra.mxu0 %v2425
    %v5726 = vpop.f32.mrf.mxu0
    %v5727 = vadd.f32 %v5558, %v5726
    %v5728 = vpop.f32.mrf.mxu0
    %v5729 = vadd.f32 %v5560, %v5728
    %5730 = vmatmul.bf16.gmra.mxu0 %v2433
    %v5731 = vpop.f32.mrf.mxu0
    %v5732 = vadd.f32 %v5563, %v5731
    %v5733 = vpop.f32.mrf.mxu0
    %v5734 = vadd.f32 %v5565, %v5733
    %5735 = vmatmul.bf16.gmra.mxu0 %v2441
    %v5736 = vpop.f32.mrf.mxu0
    %v5737 = vadd.f32 %v5568, %v5736
    %v5738 = vpop.f32.mrf.mxu0
    %v5739 = vadd.f32 %v5570, %v5738
    %5740 = vmatmul.bf16.gmra.mxu0 %v2449
    %v5741 = vpop.f32.mrf.mxu0
    %v5742 = vadd.f32 %v5573, %v5741
    %v5743 = vpop.f32.mrf.mxu0
    %v5744 = vadd.f32 %v5575, %v5743
    %5745 = vmatmul.bf16.gmra.mxu0 %v2457
    %v5746 = vpop.f32.mrf.mxu0
    %v5747 = vadd.f32 %v5578, %v5746
    %v5748 = vpop.f32.mrf.mxu0
    %v5749 = vadd.f32 %v5580, %v5748
    %5750 = vmatmul.bf16.gmra.mxu0 %v2465
    %v5751 = vpop.f32.mrf.mxu0
    %v5752 = vadd.f32 %v5583, %v5751
    %v5753 = vpop.f32.mrf.mxu0
    %v5754 = vadd.f32 %v5585, %v5753
    %5755 = vmatmul.bf16.gmra.mxu0 %v2473
    %v5756 = vpop.f32.mrf.mxu0
    %v5757 = vadd.f32 %v5588, %v5756
    %v5758 = vpop.f32.mrf.mxu0
    %v5759 = vadd.f32 %v5590, %v5758
    %5760 = vmatmul.bf16.gmra.mxu0 %v2481
    %v5761 = vpop.f32.mrf.mxu0
    %v5762 = vadd.f32 %v5593, %v5761
    %v5763 = vpop.f32.mrf.mxu0
    %v5764 = vadd.f32 %v5595, %v5763
    %5765 = vmatmul.bf16.gmra.mxu0 %v2489
    %v5766 = vpop.f32.mrf.mxu0
    %v5767 = vadd.f32 %v5598, %v5766
    %v5768 = vpop.f32.mrf.mxu0
    %v5769 = vadd.f32 %v5600, %v5768
    %5770 = vmatmul.bf16.gmra.mxu0 %v2497
    %v5771 = vpop.f32.mrf.mxu0
    %v5772 = vadd.f32 %v5603, %v5771
    %v5773 = vpop.f32.mrf.mxu0
    %v5774 = vadd.f32 %v5605, %v5773
    %5775 = vmatmul.bf16.gmra.mxu0 %v2505
    %v5776 = vpop.f32.mrf.mxu0
    %v5777 = vadd.f32 %v5608, %v5776
    %v5778 = vpop.f32.mrf.mxu0
    %v5779 = vadd.f32 %v5610, %v5778
    %5780 = vmatmul.bf16.gmra.mxu0 %v2513
    %v5781 = vpop.f32.mrf.mxu0
    %v5782 = vadd.f32 %v5613, %v5781
    %v5783 = vpop.f32.mrf.mxu0
    %v5784 = vadd.f32 %v5615, %v5783
    %5785 = vmatmul.bf16.gmra.mxu0 %v2521
    %v5786 = vpop.f32.mrf.mxu0
    %v5787 = vadd.f32 %v5618, %v5786
    %v5788 = vpop.f32.mrf.mxu0
    %v5789 = vadd.f32 %v5620, %v5788
    %5790 = vmatmul.bf16.gmra.mxu0 %v2529
    %v5791 = vpop.f32.mrf.mxu0
    %v5792 = vadd.f32 %v5623, %v5791
    %v5793 = vpop.f32.mrf.mxu0
    %v5794 = vadd.f32 %v5625, %v5793
    %5795 = vmatmul.bf16.gmra.mxu0 %v2537
    %v5796 = vpop.f32.mrf.mxu0
    %v5797 = vadd.f32 %v5628, %v5796
    %v5798 = vpop.f32.mrf.mxu0
    %v5799 = vadd.f32 %v5630, %v5798
    %5800 = vmatmul.bf16.gmra.mxu0 %v2545
    %v5801 = vpop.f32.mrf.mxu0
    %v5802 = vadd.f32 %v5633, %v5801
    %v5803 = vpop.f32.mrf.mxu0
    %v5804 = vadd.f32 %v5635, %v5803
    %5805 = vmatmul.bf16.gmra.mxu0 %v2553
    %v5806 = vpop.f32.mrf.mxu0
    %v5807 = vadd.f32 %v5638, %v5806
    %v5808 = vpop.f32.mrf.mxu0
    %v5809 = vadd.f32 %v5640, %v5808
    %5810 = vmatmul.bf16.gmra.mxu0 %v2561
    %v5811 = vpop.f32.mrf.mxu0
    %v5812 = vadd.f32 %v5643, %v5811
    %v5813 = vpop.f32.mrf.mxu0
    %v5814 = vadd.f32 %v5645, %v5813
    %5815 = vmatmul.bf16.gmra.mxu0 %v2569
    %v5816 = vpop.f32.mrf.mxu0
    %v5817 = vadd.f32 %v5648, %v5816
    %v5818 = vpop.f32.mrf.mxu0
    %v5819 = vadd.f32 %v5650, %v5818
    %5820 = vmatmul.bf16.gmra.mxu0 %v2577
    %v5821 = vpop.f32.mrf.mxu0
    %v5822 = vadd.f32 %v5653, %v5821
    %v5823 = vpop.f32.mrf.mxu0
    %v5824 = vadd.f32 %v5655, %v5823
    %5825 = vmatmul.bf16.gmra.mxu0 %v2585
    %v5826 = vpop.f32.mrf.mxu0
    %v5827 = vadd.f32 %v5658, %v5826
    %v5828 = vpop.f32.mrf.mxu0
    %v5829 = vadd.f32 %v5660, %v5828
    %5830 = vmatmul.bf16.gmra.mxu0 %v2593
    %v5831 = vpop.f32.mrf.mxu0
    %v5832 = vadd.f32 %v5663, %v5831
    %v5833 = vpop.f32.mrf.mxu0
    %v5834 = vadd.f32 %v5665, %v5833
    %5835 = vdwg.mxu0
    %5836 = vmatpush.bf16.msra.mxu0 %v3727
    %5837 = vmatpush.bf16.msra.mxu0 %v3723
    %5838 = vmatpush.bf16.msra.mxu0 %v3719
    %5839 = vmatpush.bf16.msra.mxu0 %v3715
    %5840 = vmatpush.bf16.msra.mxu0 %v3711
    %5841 = vmatpush.bf16.msra.mxu0 %v3707
    %5842 = vmatpush.bf16.msra.mxu0 %v3703
    %5843 = vmatpush.bf16.msra.mxu0 %v3699
    %5844 = vmatmul.bf16.gmra.mxu0 %v2346
    %v5845 = vpop.f32.mrf.mxu0
    %v5846 = vadd.f32 %v5677, %v5845
    %v5847 = vpop.f32.mrf.mxu0
    %v5848 = vadd.f32 %v5679, %v5847
    %5849 = vmatmul.bf16.gmra.mxu0 %v2354
    %v5850 = vpop.f32.mrf.mxu0
    %v5851 = vadd.f32 %v5682, %v5850
    %v5852 = vpop.f32.mrf.mxu0
    %v5853 = vadd.f32 %v5684, %v5852
    %5854 = vmatmul.bf16.gmra.mxu0 %v2362
    %v5855 = vpop.f32.mrf.mxu0
    %v5856 = vadd.f32 %v5687, %v5855
    %v5857 = vpop.f32.mrf.mxu0
    %v5858 = vadd.f32 %v5689, %v5857
    %5859 = vmatmul.bf16.gmra.mxu0 %v2370
    %v5860 = vpop.f32.mrf.mxu0
    %v5861 = vadd.f32 %v5692, %v5860
    %v5862 = vpop.f32.mrf.mxu0
    %v5863 = vadd.f32 %v5694, %v5862
    %5864 = vmatmul.bf16.gmra.mxu0 %v2378
    %v5865 = vpop.f32.mrf.mxu0
    %v5866 = vadd.f32 %v5697, %v5865
    %v5867 = vpop.f32.mrf.mxu0
    %v5868 = vadd.f32 %v5699, %v5867
    %5869 = vmatmul.bf16.gmra.mxu0 %v2386
    %v5870 = vpop.f32.mrf.mxu0
    %v5871 = vadd.f32 %v5702, %v5870
    %v5872 = vpop.f32.mrf.mxu0
    %v5873 = vadd.f32 %v5704, %v5872
    %5874 = vmatmul.bf16.gmra.mxu0 %v2394
    %v5875 = vpop.f32.mrf.mxu0
    %v5876 = vadd.f32 %v5707, %v5875
    %v5877 = vpop.f32.mrf.mxu0
    %v5878 = vadd.f32 %v5709, %v5877
    %5879 = vmatmul.bf16.gmra.mxu0 %v2402
    %v5880 = vpop.f32.mrf.mxu0
    %v5881 = vadd.f32 %v5712, %v5880
    %v5882 = vpop.f32.mrf.mxu0
    %v5883 = vadd.f32 %v5714, %v5882
    %5884 = vmatmul.bf16.gmra.mxu0 %v2410
    %v5885 = vpop.f32.mrf.mxu0
    %v5886 = vadd.f32 %v5717, %v5885
    %v5887 = vpop.f32.mrf.mxu0
    %v5888 = vadd.f32 %v5719, %v5887
    %5889 = vmatmul.bf16.gmra.mxu0 %v2418
    %v5890 = vpop.f32.mrf.mxu0
    %v5891 = vadd.f32 %v5722, %v5890
    %v5892 = vpop.f32.mrf.mxu0
    %v5893 = vadd.f32 %v5724, %v5892
    %5894 = vmatmul.bf16.gmra.mxu0 %v2426
    %v5895 = vpop.f32.mrf.mxu0
    %v5896 = vadd.f32 %v5727, %v5895
    %v5897 = vpop.f32.mrf.mxu0
    %v5898 = vadd.f32 %v5729, %v5897
    %5899 = vmatmul.bf16.gmra.mxu0 %v2434
    %v5900 = vpop.f32.mrf.mxu0
    %v5901 = vadd.f32 %v5732, %v5900
    %v5902 = vpop.f32.mrf.mxu0
    %v5903 = vadd.f32 %v5734, %v5902
    %5904 = vmatmul.bf16.gmra.mxu0 %v2442
    %v5905 = vpop.f32.mrf.mxu0
    %v5906 = vadd.f32 %v5737, %v5905
    %v5907 = vpop.f32.mrf.mxu0
    %v5908 = vadd.f32 %v5739, %v5907
    %5909 = vmatmul.bf16.gmra.mxu0 %v2450
    %v5910 = vpop.f32.mrf.mxu0
    %v5911 = vadd.f32 %v5742, %v5910
    %v5912 = vpop.f32.mrf.mxu0
    %v5913 = vadd.f32 %v5744, %v5912
    %5914 = vmatmul.bf16.gmra.mxu0 %v2458
    %v5915 = vpop.f32.mrf.mxu0
    %v5916 = vadd.f32 %v5747, %v5915
    %v5917 = vpop.f32.mrf.mxu0
    %v5918 = vadd.f32 %v5749, %v5917
    %5919 = vmatmul.bf16.gmra.mxu0 %v2466
    %v5920 = vpop.f32.mrf.mxu0
    %v5921 = vadd.f32 %v5752, %v5920
    %v5922 = vpop.f32.mrf.mxu0
    %v5923 = vadd.f32 %v5754, %v5922
    %5924 = vmatmul.bf16.gmra.mxu0 %v2474
    %v5925 = vpop.f32.mrf.mxu0
    %v5926 = vadd.f32 %v5757, %v5925
    %v5927 = vpop.f32.mrf.mxu0
    %v5928 = vadd.f32 %v5759, %v5927
    %5929 = vmatmul.bf16.gmra.mxu0 %v2482
    %v5930 = vpop.f32.mrf.mxu0
    %v5931 = vadd.f32 %v5762, %v5930
    %v5932 = vpop.f32.mrf.mxu0
    %v5933 = vadd.f32 %v5764, %v5932
    %5934 = vmatmul.bf16.gmra.mxu0 %v2490
    %v5935 = vpop.f32.mrf.mxu0
    %v5936 = vadd.f32 %v5767, %v5935
    %v5937 = vpop.f32.mrf.mxu0
    %v5938 = vadd.f32 %v5769, %v5937
    %5939 = vmatmul.bf16.gmra.mxu0 %v2498
    %v5940 = vpop.f32.mrf.mxu0
    %v5941 = vadd.f32 %v5772, %v5940
    %v5942 = vpop.f32.mrf.mxu0
    %v5943 = vadd.f32 %v5774, %v5942
    %5944 = vmatmul.bf16.gmra.mxu0 %v2506
    %v5945 = vpop.f32.mrf.mxu0
    %v5946 = vadd.f32 %v5777, %v5945
    %v5947 = vpop.f32.mrf.mxu0
    %v5948 = vadd.f32 %v5779, %v5947
    %5949 = vmatmul.bf16.gmra.mxu0 %v2514
    %v5950 = vpop.f32.mrf.mxu0
    %v5951 = vadd.f32 %v5782, %v5950
    %v5952 = vpop.f32.mrf.mxu0
    %v5953 = vadd.f32 %v5784, %v5952
    %5954 = vmatmul.bf16.gmra.mxu0 %v2522
    %v5955 = vpop.f32.mrf.mxu0
    %v5956 = vadd.f32 %v5787, %v5955
    %v5957 = vpop.f32.mrf.mxu0
    %v5958 = vadd.f32 %v5789, %v5957
    %5959 = vmatmul.bf16.gmra.mxu0 %v2530
    %v5960 = vpop.f32.mrf.mxu0
    %v5961 = vadd.f32 %v5792, %v5960
    %v5962 = vpop.f32.mrf.mxu0
    %v5963 = vadd.f32 %v5794, %v5962
    %5964 = vmatmul.bf16.gmra.mxu0 %v2538
    %v5965 = vpop.f32.mrf.mxu0
    %v5966 = vadd.f32 %v5797, %v5965
    %v5967 = vpop.f32.mrf.mxu0
    %v5968 = vadd.f32 %v5799, %v5967
    %5969 = vmatmul.bf16.gmra.mxu0 %v2546
    %v5970 = vpop.f32.mrf.mxu0
    %v5971 = vadd.f32 %v5802, %v5970
    %v5972 = vpop.f32.mrf.mxu0
    %v5973 = vadd.f32 %v5804, %v5972
    %5974 = vmatmul.bf16.gmra.mxu0 %v2554
    %v5975 = vpop.f32.mrf.mxu0
    %v5976 = vadd.f32 %v5807, %v5975
    %v5977 = vpop.f32.mrf.mxu0
    %v5978 = vadd.f32 %v5809, %v5977
    %5979 = vmatmul.bf16.gmra.mxu0 %v2562
    %v5980 = vpop.f32.mrf.mxu0
    %v5981 = vadd.f32 %v5812, %v5980
    %v5982 = vpop.f32.mrf.mxu0
    %v5983 = vadd.f32 %v5814, %v5982
    %5984 = vmatmul.bf16.gmra.mxu0 %v2570
    %v5985 = vpop.f32.mrf.mxu0
    %v5986 = vadd.f32 %v5817, %v5985
    %v5987 = vpop.f32.mrf.mxu0
    %v5988 = vadd.f32 %v5819, %v5987
    %5989 = vmatmul.bf16.gmra.mxu0 %v2578
    %v5990 = vpop.f32.mrf.mxu0
    %v5991 = vadd.f32 %v5822, %v5990
    %v5992 = vpop.f32.mrf.mxu0
    %v5993 = vadd.f32 %v5824, %v5992
    %5994 = vmatmul.bf16.gmra.mxu0 %v2586
    %v5995 = vpop.f32.mrf.mxu0
    %v5996 = vadd.f32 %v5827, %v5995
    %v5997 = vpop.f32.mrf.mxu0
    %v5998 = vadd.f32 %v5829, %v5997
    %5999 = vmatmul.bf16.gmra.mxu0 %v2594
    %v6000 = vpop.f32.mrf.mxu0
    %v6001 = vadd.f32 %v5832, %v6000
    %v6002 = vpop.f32.mrf.mxu0
    %v6003 = vadd.f32 %v5834, %v6002
    %6004 = vdwg.mxu0
    %6005 = vmatpush.bf16.msra.mxu0 %v3759
    %6006 = vmatpush.bf16.msra.mxu0 %v3755
    %6007 = vmatpush.bf16.msra.mxu0 %v3751
    %6008 = vmatpush.bf16.msra.mxu0 %v3747
    %6009 = vmatpush.bf16.msra.mxu0 %v3743
    %6010 = vmatpush.bf16.msra.mxu0 %v3739
    %6011 = vmatpush.bf16.msra.mxu0 %v3735
    %6012 = vmatpush.bf16.msra.mxu0 %v3731
    %6013 = vmatmul.bf16.gmra.mxu0 %v2347
    %v6014 = vpop.f32.mrf.mxu0
    %v6015 = vadd.f32 %v5846, %v6014
    %v6016 = vpop.f32.mrf.mxu0
    %v6017 = vadd.f32 %v5848, %v6016
    %6018 = vmatmul.bf16.gmra.mxu0 %v2355
    %v6019 = vpop.f32.mrf.mxu0
    %v6020 = vadd.f32 %v5851, %v6019
    %v6021 = vpop.f32.mrf.mxu0
    %v6022 = vadd.f32 %v5853, %v6021
    %6023 = vmatmul.bf16.gmra.mxu0 %v2363
    %v6024 = vpop.f32.mrf.mxu0
    %v6025 = vadd.f32 %v5856, %v6024
    %v6026 = vpop.f32.mrf.mxu0
    %v6027 = vadd.f32 %v5858, %v6026
    %6028 = vmatmul.bf16.gmra.mxu0 %v2371
    %v6029 = vpop.f32.mrf.mxu0
    %v6030 = vadd.f32 %v5861, %v6029
    %v6031 = vpop.f32.mrf.mxu0
    %v6032 = vadd.f32 %v5863, %v6031
    %6033 = vmatmul.bf16.gmra.mxu0 %v2379
    %v6034 = vpop.f32.mrf.mxu0
    %v6035 = vadd.f32 %v5866, %v6034
    %v6036 = vpop.f32.mrf.mxu0
    %v6037 = vadd.f32 %v5868, %v6036
    %6038 = vmatmul.bf16.gmra.mxu0 %v2387
    %v6039 = vpop.f32.mrf.mxu0
    %v6040 = vadd.f32 %v5871, %v6039
    %v6041 = vpop.f32.mrf.mxu0
    %v6042 = vadd.f32 %v5873, %v6041
    %6043 = vmatmul.bf16.gmra.mxu0 %v2395
    %v6044 = vpop.f32.mrf.mxu0
    %v6045 = vadd.f32 %v5876, %v6044
    %v6046 = vpop.f32.mrf.mxu0
    %v6047 = vadd.f32 %v5878, %v6046
    %6048 = vmatmul.bf16.gmra.mxu0 %v2403
    %v6049 = vpop.f32.mrf.mxu0
    %v6050 = vadd.f32 %v5881, %v6049
    %v6051 = vpop.f32.mrf.mxu0
    %v6052 = vadd.f32 %v5883, %v6051
    %6053 = vmatmul.bf16.gmra.mxu0 %v2411
    %v6054 = vpop.f32.mrf.mxu0
    %v6055 = vadd.f32 %v5886, %v6054
    %v6056 = vpop.f32.mrf.mxu0
    %v6057 = vadd.f32 %v5888, %v6056
    %6058 = vmatmul.bf16.gmra.mxu0 %v2419
    %v6059 = vpop.f32.mrf.mxu0
    %v6060 = vadd.f32 %v5891, %v6059
    %v6061 = vpop.f32.mrf.mxu0
    %v6062 = vadd.f32 %v5893, %v6061
    %6063 = vmatmul.bf16.gmra.mxu0 %v2427
    %v6064 = vpop.f32.mrf.mxu0
    %v6065 = vadd.f32 %v5896, %v6064
    %v6066 = vpop.f32.mrf.mxu0
    %v6067 = vadd.f32 %v5898, %v6066
    %6068 = vmatmul.bf16.gmra.mxu0 %v2435
    %v6069 = vpop.f32.mrf.mxu0
    %v6070 = vadd.f32 %v5901, %v6069
    %v6071 = vpop.f32.mrf.mxu0
    %v6072 = vadd.f32 %v5903, %v6071
    %6073 = vmatmul.bf16.gmra.mxu0 %v2443
    %v6074 = vpop.f32.mrf.mxu0
    %v6075 = vadd.f32 %v5906, %v6074
    %v6076 = vpop.f32.mrf.mxu0
    %v6077 = vadd.f32 %v5908, %v6076
    %6078 = vmatmul.bf16.gmra.mxu0 %v2451
    %v6079 = vpop.f32.mrf.mxu0
    %v6080 = vadd.f32 %v5911, %v6079
    %v6081 = vpop.f32.mrf.mxu0
    %v6082 = vadd.f32 %v5913, %v6081
    %6083 = vmatmul.bf16.gmra.mxu0 %v2459
    %v6084 = vpop.f32.mrf.mxu0
    %v6085 = vadd.f32 %v5916, %v6084
    %v6086 = vpop.f32.mrf.mxu0
    %v6087 = vadd.f32 %v5918, %v6086
    %6088 = vmatmul.bf16.gmra.mxu0 %v2467
    %v6089 = vpop.f32.mrf.mxu0
    %v6090 = vadd.f32 %v5921, %v6089
    %v6091 = vpop.f32.mrf.mxu0
    %v6092 = vadd.f32 %v5923, %v6091
    %6093 = vmatmul.bf16.gmra.mxu0 %v2475
    %v6094 = vpop.f32.mrf.mxu0
    %v6095 = vadd.f32 %v5926, %v6094
    %v6096 = vpop.f32.mrf.mxu0
    %v6097 = vadd.f32 %v5928, %v6096
    %6098 = vmatmul.bf16.gmra.mxu0 %v2483
    %v6099 = vpop.f32.mrf.mxu0
    %v6100 = vadd.f32 %v5931, %v6099
    %v6101 = vpop.f32.mrf.mxu0
    %v6102 = vadd.f32 %v5933, %v6101
    %6103 = vmatmul.bf16.gmra.mxu0 %v2491
    %v6104 = vpop.f32.mrf.mxu0
    %v6105 = vadd.f32 %v5936, %v6104
    %v6106 = vpop.f32.mrf.mxu0
    %v6107 = vadd.f32 %v5938, %v6106
    %6108 = vmatmul.bf16.gmra.mxu0 %v2499
    %v6109 = vpop.f32.mrf.mxu0
    %v6110 = vadd.f32 %v5941, %v6109
    %v6111 = vpop.f32.mrf.mxu0
    %v6112 = vadd.f32 %v5943, %v6111
    %6113 = vmatmul.bf16.gmra.mxu0 %v2507
    %v6114 = vpop.f32.mrf.mxu0
    %v6115 = vadd.f32 %v5946, %v6114
    %v6116 = vpop.f32.mrf.mxu0
    %v6117 = vadd.f32 %v5948, %v6116
    %6118 = vmatmul.bf16.gmra.mxu0 %v2515
    %v6119 = vpop.f32.mrf.mxu0
    %v6120 = vadd.f32 %v5951, %v6119
    %v6121 = vpop.f32.mrf.mxu0
    %v6122 = vadd.f32 %v5953, %v6121
    %6123 = vmatmul.bf16.gmra.mxu0 %v2523
    %v6124 = vpop.f32.mrf.mxu0
    %v6125 = vadd.f32 %v5956, %v6124
    %v6126 = vpop.f32.mrf.mxu0
    %v6127 = vadd.f32 %v5958, %v6126
    %6128 = vmatmul.bf16.gmra.mxu0 %v2531
    %v6129 = vpop.f32.mrf.mxu0
    %v6130 = vadd.f32 %v5961, %v6129
    %v6131 = vpop.f32.mrf.mxu0
    %v6132 = vadd.f32 %v5963, %v6131
    %6133 = vmatmul.bf16.gmra.mxu0 %v2539
    %v6134 = vpop.f32.mrf.mxu0
    %v6135 = vadd.f32 %v5966, %v6134
    %v6136 = vpop.f32.mrf.mxu0
    %v6137 = vadd.f32 %v5968, %v6136
    %6138 = vmatmul.bf16.gmra.mxu0 %v2547
    %v6139 = vpop.f32.mrf.mxu0
    %v6140 = vadd.f32 %v5971, %v6139
    %v6141 = vpop.f32.mrf.mxu0
    %v6142 = vadd.f32 %v5973, %v6141
    %6143 = vmatmul.bf16.gmra.mxu0 %v2555
    %v6144 = vpop.f32.mrf.mxu0
    %v6145 = vadd.f32 %v5976, %v6144
    %v6146 = vpop.f32.mrf.mxu0
    %v6147 = vadd.f32 %v5978, %v6146
    %6148 = vmatmul.bf16.gmra.mxu0 %v2563
    %v6149 = vpop.f32.mrf.mxu0
    %v6150 = vadd.f32 %v5981, %v6149
    %v6151 = vpop.f32.mrf.mxu0
    %v6152 = vadd.f32 %v5983, %v6151
    %6153 = vmatmul.bf16.gmra.mxu0 %v2571
    %v6154 = vpop.f32.mrf.mxu0
    %v6155 = vadd.f32 %v5986, %v6154
    %v6156 = vpop.f32.mrf.mxu0
    %v6157 = vadd.f32 %v5988, %v6156
    %6158 = vmatmul.bf16.gmra.mxu0 %v2579
    %v6159 = vpop.f32.mrf.mxu0
    %v6160 = vadd.f32 %v5991, %v6159
    %v6161 = vpop.f32.mrf.mxu0
    %v6162 = vadd.f32 %v5993, %v6161
    %6163 = vmatmul.bf16.gmra.mxu0 %v2587
    %v6164 = vpop.f32.mrf.mxu0
    %v6165 = vadd.f32 %v5996, %v6164
    %v6166 = vpop.f32.mrf.mxu0
    %v6167 = vadd.f32 %v5998, %v6166
    %6168 = vmatmul.bf16.gmra.mxu0 %v2595
    %v6169 = vpop.f32.mrf.mxu0
    %v6170 = vadd.f32 %v6001, %v6169
    %v6171 = vpop.f32.mrf.mxu0
    %v6172 = vadd.f32 %v6003, %v6171
    %6173 = vdwg.mxu0
    %6174 = vmatpush.bf16.msra.mxu0 %v3791
    %6175 = vmatpush.bf16.msra.mxu0 %v3787
    %6176 = vmatpush.bf16.msra.mxu0 %v3783
    %6177 = vmatpush.bf16.msra.mxu0 %v3779
    %6178 = vmatpush.bf16.msra.mxu0 %v3775
    %6179 = vmatpush.bf16.msra.mxu0 %v3771
    %6180 = vmatpush.bf16.msra.mxu0 %v3767
    %6181 = vmatpush.bf16.msra.mxu0 %v3763
    %6182 = vmatmul.bf16.gmra.mxu0 %v2348
    %v6183 = vpop.f32.mrf.mxu0
    %v6184 = vadd.f32 %v6015, %v6183
    %v6185 = vpop.f32.mrf.mxu0
    %v6186 = vadd.f32 %v6017, %v6185
    %6187 = vmatmul.bf16.gmra.mxu0 %v2356
    %v6188 = vpop.f32.mrf.mxu0
    %v6189 = vadd.f32 %v6020, %v6188
    %v6190 = vpop.f32.mrf.mxu0
    %v6191 = vadd.f32 %v6022, %v6190
    %6192 = vmatmul.bf16.gmra.mxu0 %v2364
    %v6193 = vpop.f32.mrf.mxu0
    %v6194 = vadd.f32 %v6025, %v6193
    %v6195 = vpop.f32.mrf.mxu0
    %v6196 = vadd.f32 %v6027, %v6195
    %6197 = vmatmul.bf16.gmra.mxu0 %v2372
    %v6198 = vpop.f32.mrf.mxu0
    %v6199 = vadd.f32 %v6030, %v6198
    %v6200 = vpop.f32.mrf.mxu0
    %v6201 = vadd.f32 %v6032, %v6200
    %6202 = vmatmul.bf16.gmra.mxu0 %v2380
    %v6203 = vpop.f32.mrf.mxu0
    %v6204 = vadd.f32 %v6035, %v6203
    %v6205 = vpop.f32.mrf.mxu0
    %v6206 = vadd.f32 %v6037, %v6205
    %6207 = vmatmul.bf16.gmra.mxu0 %v2388
    %v6208 = vpop.f32.mrf.mxu0
    %v6209 = vadd.f32 %v6040, %v6208
    %v6210 = vpop.f32.mrf.mxu0
    %v6211 = vadd.f32 %v6042, %v6210
    %6212 = vmatmul.bf16.gmra.mxu0 %v2396
    %v6213 = vpop.f32.mrf.mxu0
    %v6214 = vadd.f32 %v6045, %v6213
    %v6215 = vpop.f32.mrf.mxu0
    %v6216 = vadd.f32 %v6047, %v6215
    %6217 = vmatmul.bf16.gmra.mxu0 %v2404
    %v6218 = vpop.f32.mrf.mxu0
    %v6219 = vadd.f32 %v6050, %v6218
    %v6220 = vpop.f32.mrf.mxu0
    %v6221 = vadd.f32 %v6052, %v6220
    %6222 = vmatmul.bf16.gmra.mxu0 %v2412
    %v6223 = vpop.f32.mrf.mxu0
    %v6224 = vadd.f32 %v6055, %v6223
    %v6225 = vpop.f32.mrf.mxu0
    %v6226 = vadd.f32 %v6057, %v6225
    %6227 = vmatmul.bf16.gmra.mxu0 %v2420
    %v6228 = vpop.f32.mrf.mxu0
    %v6229 = vadd.f32 %v6060, %v6228
    %v6230 = vpop.f32.mrf.mxu0
    %v6231 = vadd.f32 %v6062, %v6230
    %6232 = vmatmul.bf16.gmra.mxu0 %v2428
    %v6233 = vpop.f32.mrf.mxu0
    %v6234 = vadd.f32 %v6065, %v6233
    %v6235 = vpop.f32.mrf.mxu0
    %v6236 = vadd.f32 %v6067, %v6235
    %6237 = vmatmul.bf16.gmra.mxu0 %v2436
    %v6238 = vpop.f32.mrf.mxu0
    %v6239 = vadd.f32 %v6070, %v6238
    %v6240 = vpop.f32.mrf.mxu0
    %v6241 = vadd.f32 %v6072, %v6240
    %6242 = vmatmul.bf16.gmra.mxu0 %v2444
    %v6243 = vpop.f32.mrf.mxu0
    %v6244 = vadd.f32 %v6075, %v6243
    %v6245 = vpop.f32.mrf.mxu0
    %v6246 = vadd.f32 %v6077, %v6245
    %6247 = vmatmul.bf16.gmra.mxu0 %v2452
    %v6248 = vpop.f32.mrf.mxu0
    %v6249 = vadd.f32 %v6080, %v6248
    %v6250 = vpop.f32.mrf.mxu0
    %v6251 = vadd.f32 %v6082, %v6250
    %6252 = vmatmul.bf16.gmra.mxu0 %v2460
    %v6253 = vpop.f32.mrf.mxu0
    %v6254 = vadd.f32 %v6085, %v6253
    %v6255 = vpop.f32.mrf.mxu0
    %v6256 = vadd.f32 %v6087, %v6255
    %6257 = vmatmul.bf16.gmra.mxu0 %v2468
    %v6258 = vpop.f32.mrf.mxu0
    %v6259 = vadd.f32 %v6090, %v6258
    %v6260 = vpop.f32.mrf.mxu0
    %v6261 = vadd.f32 %v6092, %v6260
    %6262 = vmatmul.bf16.gmra.mxu0 %v2476
    %v6263 = vpop.f32.mrf.mxu0
    %v6264 = vadd.f32 %v6095, %v6263
    %v6265 = vpop.f32.mrf.mxu0
    %v6266 = vadd.f32 %v6097, %v6265
    %6267 = vmatmul.bf16.gmra.mxu0 %v2484
    %v6268 = vpop.f32.mrf.mxu0
    %v6269 = vadd.f32 %v6100, %v6268
    %v6270 = vpop.f32.mrf.mxu0
    %v6271 = vadd.f32 %v6102, %v6270
    %6272 = vmatmul.bf16.gmra.mxu0 %v2492
    %v6273 = vpop.f32.mrf.mxu0
    %v6274 = vadd.f32 %v6105, %v6273
    %v6275 = vpop.f32.mrf.mxu0
    %v6276 = vadd.f32 %v6107, %v6275
    %6277 = vmatmul.bf16.gmra.mxu0 %v2500
    %v6278 = vpop.f32.mrf.mxu0
    %v6279 = vadd.f32 %v6110, %v6278
    %v6280 = vpop.f32.mrf.mxu0
    %v6281 = vadd.f32 %v6112, %v6280
    %6282 = vmatmul.bf16.gmra.mxu0 %v2508
    %v6283 = vpop.f32.mrf.mxu0
    %v6284 = vadd.f32 %v6115, %v6283
    %v6285 = vpop.f32.mrf.mxu0
    %v6286 = vadd.f32 %v6117, %v6285
    %6287 = vmatmul.bf16.gmra.mxu0 %v2516
    %v6288 = vpop.f32.mrf.mxu0
    %v6289 = vadd.f32 %v6120, %v6288
    %v6290 = vpop.f32.mrf.mxu0
    %v6291 = vadd.f32 %v6122, %v6290
    %6292 = vmatmul.bf16.gmra.mxu0 %v2524
    %v6293 = vpop.f32.mrf.mxu0
    %v6294 = vadd.f32 %v6125, %v6293
    %v6295 = vpop.f32.mrf.mxu0
    %v6296 = vadd.f32 %v6127, %v6295
    %6297 = vmatmul.bf16.gmra.mxu0 %v2532
    %v6298 = vpop.f32.mrf.mxu0
    %v6299 = vadd.f32 %v6130, %v6298
    %v6300 = vpop.f32.mrf.mxu0
    %v6301 = vadd.f32 %v6132, %v6300
    %6302 = vmatmul.bf16.gmra.mxu0 %v2540
    %v6303 = vpop.f32.mrf.mxu0
    %v6304 = vadd.f32 %v6135, %v6303
    %v6305 = vpop.f32.mrf.mxu0
    %v6306 = vadd.f32 %v6137, %v6305
    %6307 = vmatmul.bf16.gmra.mxu0 %v2548
    %v6308 = vpop.f32.mrf.mxu0
    %v6309 = vadd.f32 %v6140, %v6308
    %v6310 = vpop.f32.mrf.mxu0
    %v6311 = vadd.f32 %v6142, %v6310
    %6312 = vmatmul.bf16.gmra.mxu0 %v2556
    %v6313 = vpop.f32.mrf.mxu0
    %v6314 = vadd.f32 %v6145, %v6313
    %v6315 = vpop.f32.mrf.mxu0
    %v6316 = vadd.f32 %v6147, %v6315
    %6317 = vmatmul.bf16.gmra.mxu0 %v2564
    %v6318 = vpop.f32.mrf.mxu0
    %v6319 = vadd.f32 %v6150, %v6318
    %v6320 = vpop.f32.mrf.mxu0
    %v6321 = vadd.f32 %v6152, %v6320
    %6322 = vmatmul.bf16.gmra.mxu0 %v2572
    %v6323 = vpop.f32.mrf.mxu0
    %v6324 = vadd.f32 %v6155, %v6323
    %v6325 = vpop.f32.mrf.mxu0
    %v6326 = vadd.f32 %v6157, %v6325
    %6327 = vmatmul.bf16.gmra.mxu0 %v2580
    %v6328 = vpop.f32.mrf.mxu0
    %v6329 = vadd.f32 %v6160, %v6328
    %v6330 = vpop.f32.mrf.mxu0
    %v6331 = vadd.f32 %v6162, %v6330
    %6332 = vmatmul.bf16.gmra.mxu0 %v2588
    %v6333 = vpop.f32.mrf.mxu0
    %v6334 = vadd.f32 %v6165, %v6333
    %v6335 = vpop.f32.mrf.mxu0
    %v6336 = vadd.f32 %v6167, %v6335
    %6337 = vmatmul.bf16.gmra.mxu0 %v2596
    %v6338 = vpop.f32.mrf.mxu0
    %v6339 = vadd.f32 %v6170, %v6338
    %v6340 = vpop.f32.mrf.mxu0
    %v6341 = vadd.f32 %v6172, %v6340
    %6342 = vdwg.mxu0
    %6343 = vmatpush.bf16.msra.mxu0 %v3823
    %6344 = vmatpush.bf16.msra.mxu0 %v3819
    %6345 = vmatpush.bf16.msra.mxu0 %v3815
    %6346 = vmatpush.bf16.msra.mxu0 %v3811
    %6347 = vmatpush.bf16.msra.mxu0 %v3807
    %6348 = vmatpush.bf16.msra.mxu0 %v3803
    %6349 = vmatpush.bf16.msra.mxu0 %v3799
    %6350 = vmatpush.bf16.msra.mxu0 %v3795
    %6351 = vmatmul.bf16.gmra.mxu0 %v2349
    %v6352 = vpop.f32.mrf.mxu0
    %v6353 = vadd.f32 %v6184, %v6352
    %v6354 = vpop.f32.mrf.mxu0
    %v6355 = vadd.f32 %v6186, %v6354
    %6356 = vmatmul.bf16.gmra.mxu0 %v2357
    %v6357 = vpop.f32.mrf.mxu0
    %v6358 = vadd.f32 %v6189, %v6357
    %v6359 = vpop.f32.mrf.mxu0
    %v6360 = vadd.f32 %v6191, %v6359
    %6361 = vmatmul.bf16.gmra.mxu0 %v2365
    %v6362 = vpop.f32.mrf.mxu0
    %v6363 = vadd.f32 %v6194, %v6362
    %v6364 = vpop.f32.mrf.mxu0
    %v6365 = vadd.f32 %v6196, %v6364
    %6366 = vmatmul.bf16.gmra.mxu0 %v2373
    %v6367 = vpop.f32.mrf.mxu0
    %v6368 = vadd.f32 %v6199, %v6367
    %v6369 = vpop.f32.mrf.mxu0
    %v6370 = vadd.f32 %v6201, %v6369
    %6371 = vmatmul.bf16.gmra.mxu0 %v2381
    %v6372 = vpop.f32.mrf.mxu0
    %v6373 = vadd.f32 %v6204, %v6372
    %v6374 = vpop.f32.mrf.mxu0
    %v6375 = vadd.f32 %v6206, %v6374
    %6376 = vmatmul.bf16.gmra.mxu0 %v2389
    %v6377 = vpop.f32.mrf.mxu0
    %v6378 = vadd.f32 %v6209, %v6377
    %v6379 = vpop.f32.mrf.mxu0
    %v6380 = vadd.f32 %v6211, %v6379
    %6381 = vmatmul.bf16.gmra.mxu0 %v2397
    %v6382 = vpop.f32.mrf.mxu0
    %v6383 = vadd.f32 %v6214, %v6382
    %v6384 = vpop.f32.mrf.mxu0
    %v6385 = vadd.f32 %v6216, %v6384
    %6386 = vmatmul.bf16.gmra.mxu0 %v2405
    %v6387 = vpop.f32.mrf.mxu0
    %v6388 = vadd.f32 %v6219, %v6387
    %v6389 = vpop.f32.mrf.mxu0
    %v6390 = vadd.f32 %v6221, %v6389
    %6391 = vmatmul.bf16.gmra.mxu0 %v2413
    %v6392 = vpop.f32.mrf.mxu0
    %v6393 = vadd.f32 %v6224, %v6392
    %v6394 = vpop.f32.mrf.mxu0
    %v6395 = vadd.f32 %v6226, %v6394
    %6396 = vmatmul.bf16.gmra.mxu0 %v2421
    %v6397 = vpop.f32.mrf.mxu0
    %v6398 = vadd.f32 %v6229, %v6397
    %v6399 = vpop.f32.mrf.mxu0
    %v6400 = vadd.f32 %v6231, %v6399
    %6401 = vmatmul.bf16.gmra.mxu0 %v2429
    %v6402 = vpop.f32.mrf.mxu0
    %v6403 = vadd.f32 %v6234, %v6402
    %v6404 = vpop.f32.mrf.mxu0
    %v6405 = vadd.f32 %v6236, %v6404
    %6406 = vmatmul.bf16.gmra.mxu0 %v2437
    %v6407 = vpop.f32.mrf.mxu0
    %v6408 = vadd.f32 %v6239, %v6407
    %v6409 = vpop.f32.mrf.mxu0
    %v6410 = vadd.f32 %v6241, %v6409
    %6411 = vmatmul.bf16.gmra.mxu0 %v2445
    %v6412 = vpop.f32.mrf.mxu0
    %v6413 = vadd.f32 %v6244, %v6412
    %v6414 = vpop.f32.mrf.mxu0
    %v6415 = vadd.f32 %v6246, %v6414
    %6416 = vmatmul.bf16.gmra.mxu0 %v2453
    %v6417 = vpop.f32.mrf.mxu0
    %v6418 = vadd.f32 %v6249, %v6417
    %v6419 = vpop.f32.mrf.mxu0
    %v6420 = vadd.f32 %v6251, %v6419
    %6421 = vmatmul.bf16.gmra.mxu0 %v2461
    %v6422 = vpop.f32.mrf.mxu0
    %v6423 = vadd.f32 %v6254, %v6422
    %v6424 = vpop.f32.mrf.mxu0
    %v6425 = vadd.f32 %v6256, %v6424
    %6426 = vmatmul.bf16.gmra.mxu0 %v2469
    %v6427 = vpop.f32.mrf.mxu0
    %v6428 = vadd.f32 %v6259, %v6427
    %v6429 = vpop.f32.mrf.mxu0
    %v6430 = vadd.f32 %v6261, %v6429
    %6431 = vmatmul.bf16.gmra.mxu0 %v2477
    %v6432 = vpop.f32.mrf.mxu0
    %v6433 = vadd.f32 %v6264, %v6432
    %v6434 = vpop.f32.mrf.mxu0
    %v6435 = vadd.f32 %v6266, %v6434
    %6436 = vmatmul.bf16.gmra.mxu0 %v2485
    %v6437 = vpop.f32.mrf.mxu0
    %v6438 = vadd.f32 %v6269, %v6437
    %v6439 = vpop.f32.mrf.mxu0
    %v6440 = vadd.f32 %v6271, %v6439
    %6441 = vmatmul.bf16.gmra.mxu0 %v2493
    %v6442 = vpop.f32.mrf.mxu0
    %v6443 = vadd.f32 %v6274, %v6442
    %v6444 = vpop.f32.mrf.mxu0
    %v6445 = vadd.f32 %v6276, %v6444
    %6446 = vmatmul.bf16.gmra.mxu0 %v2501
    %v6447 = vpop.f32.mrf.mxu0
    %v6448 = vadd.f32 %v6279, %v6447
    %v6449 = vpop.f32.mrf.mxu0
    %v6450 = vadd.f32 %v6281, %v6449
    %6451 = vmatmul.bf16.gmra.mxu0 %v2509
    %v6452 = vpop.f32.mrf.mxu0
    %v6453 = vadd.f32 %v6284, %v6452
    %v6454 = vpop.f32.mrf.mxu0
    %v6455 = vadd.f32 %v6286, %v6454
    %6456 = vmatmul.bf16.gmra.mxu0 %v2517
    %v6457 = vpop.f32.mrf.mxu0
    %v6458 = vadd.f32 %v6289, %v6457
    %v6459 = vpop.f32.mrf.mxu0
    %v6460 = vadd.f32 %v6291, %v6459
    %6461 = vmatmul.bf16.gmra.mxu0 %v2525
    %v6462 = vpop.f32.mrf.mxu0
    %v6463 = vadd.f32 %v6294, %v6462
    %v6464 = vpop.f32.mrf.mxu0
    %v6465 = vadd.f32 %v6296, %v6464
    %6466 = vmatmul.bf16.gmra.mxu0 %v2533
    %v6467 = vpop.f32.mrf.mxu0
    %v6468 = vadd.f32 %v6299, %v6467
    %v6469 = vpop.f32.mrf.mxu0
    %v6470 = vadd.f32 %v6301, %v6469
    %6471 = vmatmul.bf16.gmra.mxu0 %v2541
    %v6472 = vpop.f32.mrf.mxu0
    %v6473 = vadd.f32 %v6304, %v6472
    %v6474 = vpop.f32.mrf.mxu0
    %v6475 = vadd.f32 %v6306, %v6474
    %6476 = vmatmul.bf16.gmra.mxu0 %v2549
    %v6477 = vpop.f32.mrf.mxu0
    %v6478 = vadd.f32 %v6309, %v6477
    %v6479 = vpop.f32.mrf.mxu0
    %v6480 = vadd.f32 %v6311, %v6479
    %6481 = vmatmul.bf16.gmra.mxu0 %v2557
    %v6482 = vpop.f32.mrf.mxu0
    %v6483 = vadd.f32 %v6314, %v6482
    %v6484 = vpop.f32.mrf.mxu0
    %v6485 = vadd.f32 %v6316, %v6484
    %6486 = vmatmul.bf16.gmra.mxu0 %v2565
    %v6487 = vpop.f32.mrf.mxu0
    %v6488 = vadd.f32 %v6319, %v6487
    %v6489 = vpop.f32.mrf.mxu0
    %v6490 = vadd.f32 %v6321, %v6489
    %6491 = vmatmul.bf16.gmra.mxu0 %v2573
    %v6492 = vpop.f32.mrf.mxu0
    %v6493 = vadd.f32 %v6324, %v6492
    %v6494 = vpop.f32.mrf.mxu0
    %v6495 = vadd.f32 %v6326, %v6494
    %6496 = vmatmul.bf16.gmra.mxu0 %v2581
    %v6497 = vpop.f32.mrf.mxu0
    %v6498 = vadd.f32 %v6329, %v6497
    %v6499 = vpop.f32.mrf.mxu0
    %v6500 = vadd.f32 %v6331, %v6499
    %6501 = vmatmul.bf16.gmra.mxu0 %v2589
    %v6502 = vpop.f32.mrf.mxu0
    %v6503 = vadd.f32 %v6334, %v6502
    %v6504 = vpop.f32.mrf.mxu0
    %v6505 = vadd.f32 %v6336, %v6504
    %6506 = vmatmul.bf16.gmra.mxu0 %v2597
    %v6507 = vpop.f32.mrf.mxu0
    %v6508 = vadd.f32 %v6339, %v6507
    %v6509 = vpop.f32.mrf.mxu0
    %v6510 = vadd.f32 %v6341, %v6509
    %6511 = vdwg.mxu0
    %6512 = vmatpush.bf16.msra.mxu0 %v3855
    %6513 = vmatpush.bf16.msra.mxu0 %v3851
    %6514 = vmatpush.bf16.msra.mxu0 %v3847
    %6515 = vmatpush.bf16.msra.mxu0 %v3843
    %6516 = vmatpush.bf16.msra.mxu0 %v3839
    %6517 = vmatpush.bf16.msra.mxu0 %v3835
    %6518 = vmatpush.bf16.msra.mxu0 %v3831
    %6519 = vmatpush.bf16.msra.mxu0 %v3827
    %6520 = vmatmul.bf16.gmra.mxu0 %v2350
    %v6521 = vpop.f32.mrf.mxu0
    %v6522 = vadd.f32 %v6353, %v6521
    %v6523 = vpop.f32.mrf.mxu0
    %v6524 = vadd.f32 %v6355, %v6523
    %6525 = vmatmul.bf16.gmra.mxu0 %v2358
    %v6526 = vpop.f32.mrf.mxu0
    %v6527 = vadd.f32 %v6358, %v6526
    %v6528 = vpop.f32.mrf.mxu0
    %v6529 = vadd.f32 %v6360, %v6528
    %6530 = vmatmul.bf16.gmra.mxu0 %v2366
    %v6531 = vpop.f32.mrf.mxu0
    %v6532 = vadd.f32 %v6363, %v6531
    %v6533 = vpop.f32.mrf.mxu0
    %v6534 = vadd.f32 %v6365, %v6533
    %6535 = vmatmul.bf16.gmra.mxu0 %v2374
    %v6536 = vpop.f32.mrf.mxu0
    %v6537 = vadd.f32 %v6368, %v6536
    %v6538 = vpop.f32.mrf.mxu0
    %v6539 = vadd.f32 %v6370, %v6538
    %6540 = vmatmul.bf16.gmra.mxu0 %v2382
    %v6541 = vpop.f32.mrf.mxu0
    %v6542 = vadd.f32 %v6373, %v6541
    %v6543 = vpop.f32.mrf.mxu0
    %v6544 = vadd.f32 %v6375, %v6543
    %6545 = vmatmul.bf16.gmra.mxu0 %v2390
    %v6546 = vpop.f32.mrf.mxu0
    %v6547 = vadd.f32 %v6378, %v6546
    %v6548 = vpop.f32.mrf.mxu0
    %v6549 = vadd.f32 %v6380, %v6548
    %6550 = vmatmul.bf16.gmra.mxu0 %v2398
    %v6551 = vpop.f32.mrf.mxu0
    %v6552 = vadd.f32 %v6383, %v6551
    %v6553 = vpop.f32.mrf.mxu0
    %v6554 = vadd.f32 %v6385, %v6553
    %6555 = vmatmul.bf16.gmra.mxu0 %v2406
    %v6556 = vpop.f32.mrf.mxu0
    %v6557 = vadd.f32 %v6388, %v6556
    %v6558 = vpop.f32.mrf.mxu0
    %v6559 = vadd.f32 %v6390, %v6558
    %6560 = vmatmul.bf16.gmra.mxu0 %v2414
    %v6561 = vpop.f32.mrf.mxu0
    %v6562 = vadd.f32 %v6393, %v6561
    %v6563 = vpop.f32.mrf.mxu0
    %v6564 = vadd.f32 %v6395, %v6563
    %6565 = vmatmul.bf16.gmra.mxu0 %v2422
    %v6566 = vpop.f32.mrf.mxu0
    %v6567 = vadd.f32 %v6398, %v6566
    %v6568 = vpop.f32.mrf.mxu0
    %v6569 = vadd.f32 %v6400, %v6568
    %6570 = vmatmul.bf16.gmra.mxu0 %v2430
    %v6571 = vpop.f32.mrf.mxu0
    %v6572 = vadd.f32 %v6403, %v6571
    %v6573 = vpop.f32.mrf.mxu0
    %v6574 = vadd.f32 %v6405, %v6573
    %6575 = vmatmul.bf16.gmra.mxu0 %v2438
    %v6576 = vpop.f32.mrf.mxu0
    %v6577 = vadd.f32 %v6408, %v6576
    %v6578 = vpop.f32.mrf.mxu0
    %v6579 = vadd.f32 %v6410, %v6578
    %6580 = vmatmul.bf16.gmra.mxu0 %v2446
    %v6581 = vpop.f32.mrf.mxu0
    %v6582 = vadd.f32 %v6413, %v6581
    %v6583 = vpop.f32.mrf.mxu0
    %v6584 = vadd.f32 %v6415, %v6583
    %6585 = vmatmul.bf16.gmra.mxu0 %v2454
    %v6586 = vpop.f32.mrf.mxu0
    %v6587 = vadd.f32 %v6418, %v6586
    %v6588 = vpop.f32.mrf.mxu0
    %v6589 = vadd.f32 %v6420, %v6588
    %6590 = vmatmul.bf16.gmra.mxu0 %v2462
    %v6591 = vpop.f32.mrf.mxu0
    %v6592 = vadd.f32 %v6423, %v6591
    %v6593 = vpop.f32.mrf.mxu0
    %v6594 = vadd.f32 %v6425, %v6593
    %6595 = vmatmul.bf16.gmra.mxu0 %v2470
    %v6596 = vpop.f32.mrf.mxu0
    %v6597 = vadd.f32 %v6428, %v6596
    %v6598 = vpop.f32.mrf.mxu0
    %v6599 = vadd.f32 %v6430, %v6598
    %6600 = vmatmul.bf16.gmra.mxu0 %v2478
    %v6601 = vpop.f32.mrf.mxu0
    %v6602 = vadd.f32 %v6433, %v6601
    %v6603 = vpop.f32.mrf.mxu0
    %v6604 = vadd.f32 %v6435, %v6603
    %6605 = vmatmul.bf16.gmra.mxu0 %v2486
    %v6606 = vpop.f32.mrf.mxu0
    %v6607 = vadd.f32 %v6438, %v6606
    %v6608 = vpop.f32.mrf.mxu0
    %v6609 = vadd.f32 %v6440, %v6608
    %6610 = vmatmul.bf16.gmra.mxu0 %v2494
    %v6611 = vpop.f32.mrf.mxu0
    %v6612 = vadd.f32 %v6443, %v6611
    %v6613 = vpop.f32.mrf.mxu0
    %v6614 = vadd.f32 %v6445, %v6613
    %6615 = vmatmul.bf16.gmra.mxu0 %v2502
    %v6616 = vpop.f32.mrf.mxu0
    %v6617 = vadd.f32 %v6448, %v6616
    %v6618 = vpop.f32.mrf.mxu0
    %v6619 = vadd.f32 %v6450, %v6618
    %6620 = vmatmul.bf16.gmra.mxu0 %v2510
    %v6621 = vpop.f32.mrf.mxu0
    %v6622 = vadd.f32 %v6453, %v6621
    %v6623 = vpop.f32.mrf.mxu0
    %v6624 = vadd.f32 %v6455, %v6623
    %6625 = vmatmul.bf16.gmra.mxu0 %v2518
    %v6626 = vpop.f32.mrf.mxu0
    %v6627 = vadd.f32 %v6458, %v6626
    %v6628 = vpop.f32.mrf.mxu0
    %v6629 = vadd.f32 %v6460, %v6628
    %6630 = vmatmul.bf16.gmra.mxu0 %v2526
    %v6631 = vpop.f32.mrf.mxu0
    %v6632 = vadd.f32 %v6463, %v6631
    %v6633 = vpop.f32.mrf.mxu0
    %v6634 = vadd.f32 %v6465, %v6633
    %6635 = vmatmul.bf16.gmra.mxu0 %v2534
    %v6636 = vpop.f32.mrf.mxu0
    %v6637 = vadd.f32 %v6468, %v6636
    %v6638 = vpop.f32.mrf.mxu0
    %v6639 = vadd.f32 %v6470, %v6638
    %6640 = vmatmul.bf16.gmra.mxu0 %v2542
    %v6641 = vpop.f32.mrf.mxu0
    %v6642 = vadd.f32 %v6473, %v6641
    %v6643 = vpop.f32.mrf.mxu0
    %v6644 = vadd.f32 %v6475, %v6643
    %6645 = vmatmul.bf16.gmra.mxu0 %v2550
    %v6646 = vpop.f32.mrf.mxu0
    %v6647 = vadd.f32 %v6478, %v6646
    %v6648 = vpop.f32.mrf.mxu0
    %v6649 = vadd.f32 %v6480, %v6648
    %6650 = vmatmul.bf16.gmra.mxu0 %v2558
    %v6651 = vpop.f32.mrf.mxu0
    %v6652 = vadd.f32 %v6483, %v6651
    %v6653 = vpop.f32.mrf.mxu0
    %v6654 = vadd.f32 %v6485, %v6653
    %6655 = vmatmul.bf16.gmra.mxu0 %v2566
    %v6656 = vpop.f32.mrf.mxu0
    %v6657 = vadd.f32 %v6488, %v6656
    %v6658 = vpop.f32.mrf.mxu0
    %v6659 = vadd.f32 %v6490, %v6658
    %6660 = vmatmul.bf16.gmra.mxu0 %v2574
    %v6661 = vpop.f32.mrf.mxu0
    %v6662 = vadd.f32 %v6493, %v6661
    %v6663 = vpop.f32.mrf.mxu0
    %v6664 = vadd.f32 %v6495, %v6663
    %6665 = vmatmul.bf16.gmra.mxu0 %v2582
    %v6666 = vpop.f32.mrf.mxu0
    %v6667 = vadd.f32 %v6498, %v6666
    %v6668 = vpop.f32.mrf.mxu0
    %v6669 = vadd.f32 %v6500, %v6668
    %6670 = vmatmul.bf16.gmra.mxu0 %v2590
    %v6671 = vpop.f32.mrf.mxu0
    %v6672 = vadd.f32 %v6503, %v6671
    %v6673 = vpop.f32.mrf.mxu0
    %v6674 = vadd.f32 %v6505, %v6673
    %6675 = vmatmul.bf16.gmra.mxu0 %v2598
    %v6676 = vpop.f32.mrf.mxu0
    %v6677 = vadd.f32 %v6508, %v6676
    %v6678 = vpop.f32.mrf.mxu0
    %v6679 = vadd.f32 %v6510, %v6678
    %6680 = vdwg.mxu0
    %6681 = vmatpush.bf16.msra.mxu0 %v3887
    %6682 = vmatpush.bf16.msra.mxu0 %v3883
    %6683 = vmatpush.bf16.msra.mxu0 %v3879
    %6684 = vmatpush.bf16.msra.mxu0 %v3875
    %6685 = vmatpush.bf16.msra.mxu0 %v3871
    %6686 = vmatpush.bf16.msra.mxu0 %v3867
    %6687 = vmatpush.bf16.msra.mxu0 %v3863
    %6688 = vmatpush.bf16.msra.mxu0 %v3859
    %6689 = vmatmul.bf16.gmra.mxu0 %v2351
    %v6690 = vpop.f32.mrf.mxu0
    %v6691 = vadd.f32 %v6522, %v6690
    %v6692 = vpop.f32.mrf.mxu0
    %v6693 = vadd.f32 %v6524, %v6692
    %6694 = vmatmul.bf16.gmra.mxu0 %v2359
    %v6695 = vpop.f32.mrf.mxu0
    %v6696 = vadd.f32 %v6527, %v6695
    %v6697 = vpop.f32.mrf.mxu0
    %v6698 = vadd.f32 %v6529, %v6697
    %6699 = vmatmul.bf16.gmra.mxu0 %v2367
    %v6700 = vpop.f32.mrf.mxu0
    %v6701 = vadd.f32 %v6532, %v6700
    %v6702 = vpop.f32.mrf.mxu0
    %v6703 = vadd.f32 %v6534, %v6702
    %6704 = vmatmul.bf16.gmra.mxu0 %v2375
    %v6705 = vpop.f32.mrf.mxu0
    %v6706 = vadd.f32 %v6537, %v6705
    %v6707 = vpop.f32.mrf.mxu0
    %v6708 = vadd.f32 %v6539, %v6707
    %6709 = vmatmul.bf16.gmra.mxu0 %v2383
    %v6710 = vpop.f32.mrf.mxu0
    %v6711 = vadd.f32 %v6542, %v6710
    %v6712 = vpop.f32.mrf.mxu0
    %v6713 = vadd.f32 %v6544, %v6712
    %6714 = vmatmul.bf16.gmra.mxu0 %v2391
    %v6715 = vpop.f32.mrf.mxu0
    %v6716 = vadd.f32 %v6547, %v6715
    %v6717 = vpop.f32.mrf.mxu0
    %v6718 = vadd.f32 %v6549, %v6717
    %6719 = vmatmul.bf16.gmra.mxu0 %v2399
    %v6720 = vpop.f32.mrf.mxu0
    %v6721 = vadd.f32 %v6552, %v6720
    %v6722 = vpop.f32.mrf.mxu0
    %v6723 = vadd.f32 %v6554, %v6722
    %6724 = vmatmul.bf16.gmra.mxu0 %v2407
    %v6725 = vpop.f32.mrf.mxu0
    %v6726 = vadd.f32 %v6557, %v6725
    %v6727 = vpop.f32.mrf.mxu0
    %v6728 = vadd.f32 %v6559, %v6727
    %6729 = vmatmul.bf16.gmra.mxu0 %v2415
    %v6730 = vpop.f32.mrf.mxu0
    %v6731 = vadd.f32 %v6562, %v6730
    %v6732 = vpop.f32.mrf.mxu0
    %v6733 = vadd.f32 %v6564, %v6732
    %6734 = vmatmul.bf16.gmra.mxu0 %v2423
    %v6735 = vpop.f32.mrf.mxu0
    %v6736 = vadd.f32 %v6567, %v6735
    %v6737 = vpop.f32.mrf.mxu0
    %v6738 = vadd.f32 %v6569, %v6737
    %6739 = vmatmul.bf16.gmra.mxu0 %v2431
    %v6740 = vpop.f32.mrf.mxu0
    %v6741 = vadd.f32 %v6572, %v6740
    %v6742 = vpop.f32.mrf.mxu0
    %v6743 = vadd.f32 %v6574, %v6742
    %6744 = vmatmul.bf16.gmra.mxu0 %v2439
    %v6745 = vpop.f32.mrf.mxu0
    %v6746 = vadd.f32 %v6577, %v6745
    %v6747 = vpop.f32.mrf.mxu0
    %v6748 = vadd.f32 %v6579, %v6747
    %6749 = vmatmul.bf16.gmra.mxu0 %v2447
    %v6750 = vpop.f32.mrf.mxu0
    %v6751 = vadd.f32 %v6582, %v6750
    %v6752 = vpop.f32.mrf.mxu0
    %v6753 = vadd.f32 %v6584, %v6752
    %6754 = vmatmul.bf16.gmra.mxu0 %v2455
    %v6755 = vpop.f32.mrf.mxu0
    %v6756 = vadd.f32 %v6587, %v6755
    %v6757 = vpop.f32.mrf.mxu0
    %v6758 = vadd.f32 %v6589, %v6757
    %6759 = vmatmul.bf16.gmra.mxu0 %v2463
    %v6760 = vpop.f32.mrf.mxu0
    %v6761 = vadd.f32 %v6592, %v6760
    %v6762 = vpop.f32.mrf.mxu0
    %v6763 = vadd.f32 %v6594, %v6762
    %6764 = vmatmul.bf16.gmra.mxu0 %v2471
    %v6765 = vpop.f32.mrf.mxu0
    %v6766 = vadd.f32 %v6597, %v6765
    %v6767 = vpop.f32.mrf.mxu0
    %v6768 = vadd.f32 %v6599, %v6767
    %6769 = vmatmul.bf16.gmra.mxu0 %v2479
    %v6770 = vpop.f32.mrf.mxu0
    %v6771 = vadd.f32 %v6602, %v6770
    %v6772 = vpop.f32.mrf.mxu0
    %v6773 = vadd.f32 %v6604, %v6772
    %6774 = vmatmul.bf16.gmra.mxu0 %v2487
    %v6775 = vpop.f32.mrf.mxu0
    %v6776 = vadd.f32 %v6607, %v6775
    %v6777 = vpop.f32.mrf.mxu0
    %v6778 = vadd.f32 %v6609, %v6777
    %6779 = vmatmul.bf16.gmra.mxu0 %v2495
    %v6780 = vpop.f32.mrf.mxu0
    %v6781 = vadd.f32 %v6612, %v6780
    %v6782 = vpop.f32.mrf.mxu0
    %v6783 = vadd.f32 %v6614, %v6782
    %6784 = vmatmul.bf16.gmra.mxu0 %v2503
    %v6785 = vpop.f32.mrf.mxu0
    %v6786 = vadd.f32 %v6617, %v6785
    %v6787 = vpop.f32.mrf.mxu0
    %v6788 = vadd.f32 %v6619, %v6787
    %6789 = vmatmul.bf16.gmra.mxu0 %v2511
    %v6790 = vpop.f32.mrf.mxu0
    %v6791 = vadd.f32 %v6622, %v6790
    %v6792 = vpop.f32.mrf.mxu0
    %v6793 = vadd.f32 %v6624, %v6792
    %6794 = vmatmul.bf16.gmra.mxu0 %v2519
    %v6795 = vpop.f32.mrf.mxu0
    %v6796 = vadd.f32 %v6627, %v6795
    %v6797 = vpop.f32.mrf.mxu0
    %v6798 = vadd.f32 %v6629, %v6797
    %6799 = vmatmul.bf16.gmra.mxu0 %v2527
    %v6800 = vpop.f32.mrf.mxu0
    %v6801 = vadd.f32 %v6632, %v6800
    %v6802 = vpop.f32.mrf.mxu0
    %v6803 = vadd.f32 %v6634, %v6802
    %6804 = vmatmul.bf16.gmra.mxu0 %v2535
    %v6805 = vpop.f32.mrf.mxu0
    %v6806 = vadd.f32 %v6637, %v6805
    %v6807 = vpop.f32.mrf.mxu0
    %v6808 = vadd.f32 %v6639, %v6807
    %6809 = vmatmul.bf16.gmra.mxu0 %v2543
    %v6810 = vpop.f32.mrf.mxu0
    %v6811 = vadd.f32 %v6642, %v6810
    %v6812 = vpop.f32.mrf.mxu0
    %v6813 = vadd.f32 %v6644, %v6812
    %6814 = vmatmul.bf16.gmra.mxu0 %v2551
    %v6815 = vpop.f32.mrf.mxu0
    %v6816 = vadd.f32 %v6647, %v6815
    %v6817 = vpop.f32.mrf.mxu0
    %v6818 = vadd.f32 %v6649, %v6817
    %6819 = vmatmul.bf16.gmra.mxu0 %v2559
    %v6820 = vpop.f32.mrf.mxu0
    %v6821 = vadd.f32 %v6652, %v6820
    %v6822 = vpop.f32.mrf.mxu0
    %v6823 = vadd.f32 %v6654, %v6822
    %6824 = vmatmul.bf16.gmra.mxu0 %v2567
    %v6825 = vpop.f32.mrf.mxu0
    %v6826 = vadd.f32 %v6657, %v6825
    %v6827 = vpop.f32.mrf.mxu0
    %v6828 = vadd.f32 %v6659, %v6827
    %6829 = vmatmul.bf16.gmra.mxu0 %v2575
    %v6830 = vpop.f32.mrf.mxu0
    %v6831 = vadd.f32 %v6662, %v6830
    %v6832 = vpop.f32.mrf.mxu0
    %v6833 = vadd.f32 %v6664, %v6832
    %6834 = vmatmul.bf16.gmra.mxu0 %v2583
    %v6835 = vpop.f32.mrf.mxu0
    %v6836 = vadd.f32 %v6667, %v6835
    %v6837 = vpop.f32.mrf.mxu0
    %v6838 = vadd.f32 %v6669, %v6837
    %6839 = vmatmul.bf16.gmra.mxu0 %v2591
    %v6840 = vpop.f32.mrf.mxu0
    %v6841 = vadd.f32 %v6672, %v6840
    %v6842 = vpop.f32.mrf.mxu0
    %v6843 = vadd.f32 %v6674, %v6842
    %6844 = vmatmul.bf16.gmra.mxu0 %v2599
    %v6845 = vpop.f32.mrf.mxu0
    %v6846 = vadd.f32 %v6677, %v6845
    %v6847 = vpop.f32.mrf.mxu0
    %v6848 = vadd.f32 %v6679, %v6847
    %6849 = vdwg.mxu0
    %6850 = vmatpush.bf16.msra.mxu0 %v3664
    %6851 = vmatpush.bf16.msra.mxu0 %v3660
    %6852 = vmatpush.bf16.msra.mxu0 %v3656
    %6853 = vmatpush.bf16.msra.mxu0 %v3652
    %6854 = vmatpush.bf16.msra.mxu0 %v3648
    %6855 = vmatpush.bf16.msra.mxu0 %v3644
    %6856 = vmatpush.bf16.msra.mxu0 %v3640
    %6857 = vmatpush.bf16.msra.mxu0 %v3636
    %6858 = vmatmul.bf16.gmra.mxu0 %v2344
    %v6859 = vpop.f32.mrf.mxu0
    %v6860 = vadd.f32 %v2860, %v6859
    %v6861 = vpop.f32.mrf.mxu0
    %v6862 = vadd.f32 %v2860, %v6861
    %6863 = vmatmul.bf16.gmra.mxu0 %v2352
    %v6864 = vpop.f32.mrf.mxu0
    %v6865 = vadd.f32 %v2860, %v6864
    %v6866 = vpop.f32.mrf.mxu0
    %v6867 = vadd.f32 %v2860, %v6866
    %6868 = vmatmul.bf16.gmra.mxu0 %v2360
    %v6869 = vpop.f32.mrf.mxu0
    %v6870 = vadd.f32 %v2860, %v6869
    %v6871 = vpop.f32.mrf.mxu0
    %v6872 = vadd.f32 %v2860, %v6871
    %6873 = vmatmul.bf16.gmra.mxu0 %v2368
    %v6874 = vpop.f32.mrf.mxu0
    %v6875 = vadd.f32 %v2860, %v6874
    %v6876 = vpop.f32.mrf.mxu0
    %v6877 = vadd.f32 %v2860, %v6876
    %6878 = vmatmul.bf16.gmra.mxu0 %v2376
    %v6879 = vpop.f32.mrf.mxu0
    %v6880 = vadd.f32 %v2860, %v6879
    %v6881 = vpop.f32.mrf.mxu0
    %v6882 = vadd.f32 %v2860, %v6881
    %6883 = vmatmul.bf16.gmra.mxu0 %v2384
    %v6884 = vpop.f32.mrf.mxu0
    %v6885 = vadd.f32 %v2860, %v6884
    %v6886 = vpop.f32.mrf.mxu0
    %v6887 = vadd.f32 %v2860, %v6886
    %6888 = vmatmul.bf16.gmra.mxu0 %v2392
    %v6889 = vpop.f32.mrf.mxu0
    %v6890 = vadd.f32 %v2860, %v6889
    %v6891 = vpop.f32.mrf.mxu0
    %v6892 = vadd.f32 %v2860, %v6891
    %6893 = vmatmul.bf16.gmra.mxu0 %v2400
    %v6894 = vpop.f32.mrf.mxu0
    %v6895 = vadd.f32 %v2860, %v6894
    %v6896 = vpop.f32.mrf.mxu0
    %v6897 = vadd.f32 %v2860, %v6896
    %6898 = vmatmul.bf16.gmra.mxu0 %v2408
    %v6899 = vpop.f32.mrf.mxu0
    %v6900 = vadd.f32 %v2860, %v6899
    %v6901 = vpop.f32.mrf.mxu0
    %v6902 = vadd.f32 %v2860, %v6901
    %6903 = vmatmul.bf16.gmra.mxu0 %v2416
    %v6904 = vpop.f32.mrf.mxu0
    %v6905 = vadd.f32 %v2860, %v6904
    %v6906 = vpop.f32.mrf.mxu0
    %v6907 = vadd.f32 %v2860, %v6906
    %6908 = vmatmul.bf16.gmra.mxu0 %v2424
    %v6909 = vpop.f32.mrf.mxu0
    %v6910 = vadd.f32 %v2860, %v6909
    %v6911 = vpop.f32.mrf.mxu0
    %v6912 = vadd.f32 %v2860, %v6911
    %6913 = vmatmul.bf16.gmra.mxu0 %v2432
    %v6914 = vpop.f32.mrf.mxu0
    %v6915 = vadd.f32 %v2860, %v6914
    %v6916 = vpop.f32.mrf.mxu0
    %v6917 = vadd.f32 %v2860, %v6916
    %6918 = vmatmul.bf16.gmra.mxu0 %v2440
    %v6919 = vpop.f32.mrf.mxu0
    %v6920 = vadd.f32 %v2860, %v6919
    %v6921 = vpop.f32.mrf.mxu0
    %v6922 = vadd.f32 %v2860, %v6921
    %6923 = vmatmul.bf16.gmra.mxu0 %v2448
    %v6924 = vpop.f32.mrf.mxu0
    %v6925 = vadd.f32 %v2860, %v6924
    %v6926 = vpop.f32.mrf.mxu0
    %v6927 = vadd.f32 %v2860, %v6926
    %6928 = vmatmul.bf16.gmra.mxu0 %v2456
    %v6929 = vpop.f32.mrf.mxu0
    %v6930 = vadd.f32 %v2860, %v6929
    %v6931 = vpop.f32.mrf.mxu0
    %v6932 = vadd.f32 %v2860, %v6931
    %6933 = vmatmul.bf16.gmra.mxu0 %v2464
    %v6934 = vpop.f32.mrf.mxu0
    %v6935 = vadd.f32 %v2860, %v6934
    %v6936 = vpop.f32.mrf.mxu0
    %v6937 = vadd.f32 %v2860, %v6936
    %6938 = vmatmul.bf16.gmra.mxu0 %v2472
    %v6939 = vpop.f32.mrf.mxu0
    %v6940 = vadd.f32 %v2860, %v6939
    %v6941 = vpop.f32.mrf.mxu0
    %v6942 = vadd.f32 %v2860, %v6941
    %6943 = vmatmul.bf16.gmra.mxu0 %v2480
    %v6944 = vpop.f32.mrf.mxu0
    %v6945 = vadd.f32 %v2860, %v6944
    %v6946 = vpop.f32.mrf.mxu0
    %v6947 = vadd.f32 %v2860, %v6946
    %6948 = vmatmul.bf16.gmra.mxu0 %v2488
    %v6949 = vpop.f32.mrf.mxu0
    %v6950 = vadd.f32 %v2860, %v6949
    %v6951 = vpop.f32.mrf.mxu0
    %v6952 = vadd.f32 %v2860, %v6951
    %6953 = vmatmul.bf16.gmra.mxu0 %v2496
    %v6954 = vpop.f32.mrf.mxu0
    %v6955 = vadd.f32 %v2860, %v6954
    %v6956 = vpop.f32.mrf.mxu0
    %v6957 = vadd.f32 %v2860, %v6956
    %6958 = vmatmul.bf16.gmra.mxu0 %v2504
    %v6959 = vpop.f32.mrf.mxu0
    %v6960 = vadd.f32 %v2860, %v6959
    %v6961 = vpop.f32.mrf.mxu0
    %v6962 = vadd.f32 %v2860, %v6961
    %6963 = vmatmul.bf16.gmra.mxu0 %v2512
    %v6964 = vpop.f32.mrf.mxu0
    %v6965 = vadd.f32 %v2860, %v6964
    %v6966 = vpop.f32.mrf.mxu0
    %v6967 = vadd.f32 %v2860, %v6966
    %6968 = vmatmul.bf16.gmra.mxu0 %v2520
    %v6969 = vpop.f32.mrf.mxu0
    %v6970 = vadd.f32 %v2860, %v6969
    %v6971 = vpop.f32.mrf.mxu0
    %v6972 = vadd.f32 %v2860, %v6971
    %6973 = vmatmul.bf16.gmra.mxu0 %v2528
    %v6974 = vpop.f32.mrf.mxu0
    %v6975 = vadd.f32 %v2860, %v6974
    %v6976 = vpop.f32.mrf.mxu0
    %v6977 = vadd.f32 %v2860, %v6976
    %6978 = vmatmul.bf16.gmra.mxu0 %v2536
    %v6979 = vpop.f32.mrf.mxu0
    %v6980 = vadd.f32 %v2860, %v6979
    %v6981 = vpop.f32.mrf.mxu0
    %v6982 = vadd.f32 %v2860, %v6981
    %6983 = vmatmul.bf16.gmra.mxu0 %v2544
    %v6984 = vpop.f32.mrf.mxu0
    %v6985 = vadd.f32 %v2860, %v6984
    %v6986 = vpop.f32.mrf.mxu0
    %v6987 = vadd.f32 %v2860, %v6986
    %6988 = vmatmul.bf16.gmra.mxu0 %v2552
    %v6989 = vpop.f32.mrf.mxu0
    %v6990 = vadd.f32 %v2860, %v6989
    %v6991 = vpop.f32.mrf.mxu0
    %v6992 = vadd.f32 %v2860, %v6991
    %6993 = vmatmul.bf16.gmra.mxu0 %v2560
    %v6994 = vpop.f32.mrf.mxu0
    %v6995 = vadd.f32 %v2860, %v6994
    %v6996 = vpop.f32.mrf.mxu0
    %v6997 = vadd.f32 %v2860, %v6996
    %6998 = vmatmul.bf16.gmra.mxu0 %v2568
    %v6999 = vpop.f32.mrf.mxu0
    %v7000 = vadd.f32 %v2860, %v6999
    %v7001 = vpop.f32.mrf.mxu0
    %v7002 = vadd.f32 %v2860, %v7001
    %7003 = vmatmul.bf16.gmra.mxu0 %v2576
    %v7004 = vpop.f32.mrf.mxu0
    %v7005 = vadd.f32 %v2860, %v7004
    %v7006 = vpop.f32.mrf.mxu0
    %v7007 = vadd.f32 %v2860, %v7006
    %7008 = vmatmul.bf16.gmra.mxu0 %v2584
    %v7009 = vpop.f32.mrf.mxu0
    %v7010 = vadd.f32 %v2860, %v7009
    %v7011 = vpop.f32.mrf.mxu0
    %v7012 = vadd.f32 %v2860, %v7011
    %7013 = vmatmul.bf16.gmra.mxu0 %v2592
    %v7014 = vpop.f32.mrf.mxu0
    %v7015 = vadd.f32 %v2860, %v7014
    %v7016 = vpop.f32.mrf.mxu0
    %v7017 = vadd.f32 %v2860, %v7016
    %7018 = vdwg.mxu0
    %7019 = vmatpush.bf16.msra.mxu0 %v3696
    %7020 = vmatpush.bf16.msra.mxu0 %v3692
    %7021 = vmatpush.bf16.msra.mxu0 %v3688
    %7022 = vmatpush.bf16.msra.mxu0 %v3684
    %7023 = vmatpush.bf16.msra.mxu0 %v3680
    %7024 = vmatpush.bf16.msra.mxu0 %v3676
    %7025 = vmatpush.bf16.msra.mxu0 %v3672
    %7026 = vmatpush.bf16.msra.mxu0 %v3668
    %7027 = vmatmul.bf16.gmra.mxu0 %v2345
    %v7028 = vpop.f32.mrf.mxu0
    %v7029 = vadd.f32 %v6860, %v7028
    %v7030 = vpop.f32.mrf.mxu0
    %v7031 = vadd.f32 %v6862, %v7030
    %7032 = vmatmul.bf16.gmra.mxu0 %v2353
    %v7033 = vpop.f32.mrf.mxu0
    %v7034 = vadd.f32 %v6865, %v7033
    %v7035 = vpop.f32.mrf.mxu0
    %v7036 = vadd.f32 %v6867, %v7035
    %7037 = vmatmul.bf16.gmra.mxu0 %v2361
    %v7038 = vpop.f32.mrf.mxu0
    %v7039 = vadd.f32 %v6870, %v7038
    %v7040 = vpop.f32.mrf.mxu0
    %v7041 = vadd.f32 %v6872, %v7040
    %7042 = vmatmul.bf16.gmra.mxu0 %v2369
    %v7043 = vpop.f32.mrf.mxu0
    %v7044 = vadd.f32 %v6875, %v7043
    %v7045 = vpop.f32.mrf.mxu0
    %v7046 = vadd.f32 %v6877, %v7045
    %7047 = vmatmul.bf16.gmra.mxu0 %v2377
    %v7048 = vpop.f32.mrf.mxu0
    %v7049 = vadd.f32 %v6880, %v7048
    %v7050 = vpop.f32.mrf.mxu0
    %v7051 = vadd.f32 %v6882, %v7050
    %7052 = vmatmul.bf16.gmra.mxu0 %v2385
    %v7053 = vpop.f32.mrf.mxu0
    %v7054 = vadd.f32 %v6885, %v7053
    %v7055 = vpop.f32.mrf.mxu0
    %v7056 = vadd.f32 %v6887, %v7055
    %7057 = vmatmul.bf16.gmra.mxu0 %v2393
    %v7058 = vpop.f32.mrf.mxu0
    %v7059 = vadd.f32 %v6890, %v7058
    %v7060 = vpop.f32.mrf.mxu0
    %v7061 = vadd.f32 %v6892, %v7060
    %7062 = vmatmul.bf16.gmra.mxu0 %v2401
    %v7063 = vpop.f32.mrf.mxu0
    %v7064 = vadd.f32 %v6895, %v7063
    %v7065 = vpop.f32.mrf.mxu0
    %v7066 = vadd.f32 %v6897, %v7065
    %7067 = vmatmul.bf16.gmra.mxu0 %v2409
    %v7068 = vpop.f32.mrf.mxu0
    %v7069 = vadd.f32 %v6900, %v7068
    %v7070 = vpop.f32.mrf.mxu0
    %v7071 = vadd.f32 %v6902, %v7070
    %7072 = vmatmul.bf16.gmra.mxu0 %v2417
    %v7073 = vpop.f32.mrf.mxu0
    %v7074 = vadd.f32 %v6905, %v7073
    %v7075 = vpop.f32.mrf.mxu0
    %v7076 = vadd.f32 %v6907, %v7075
    %7077 = vmatmul.bf16.gmra.mxu0 %v2425
    %v7078 = vpop.f32.mrf.mxu0
    %v7079 = vadd.f32 %v6910, %v7078
    %v7080 = vpop.f32.mrf.mxu0
    %v7081 = vadd.f32 %v6912, %v7080
    %7082 = vmatmul.bf16.gmra.mxu0 %v2433
    %v7083 = vpop.f32.mrf.mxu0
    %v7084 = vadd.f32 %v6915, %v7083
    %v7085 = vpop.f32.mrf.mxu0
    %v7086 = vadd.f32 %v6917, %v7085
    %7087 = vmatmul.bf16.gmra.mxu0 %v2441
    %v7088 = vpop.f32.mrf.mxu0
    %v7089 = vadd.f32 %v6920, %v7088
    %v7090 = vpop.f32.mrf.mxu0
    %v7091 = vadd.f32 %v6922, %v7090
    %7092 = vmatmul.bf16.gmra.mxu0 %v2449
    %v7093 = vpop.f32.mrf.mxu0
    %v7094 = vadd.f32 %v6925, %v7093
    %v7095 = vpop.f32.mrf.mxu0
    %v7096 = vadd.f32 %v6927, %v7095
    %7097 = vmatmul.bf16.gmra.mxu0 %v2457
    %v7098 = vpop.f32.mrf.mxu0
    %v7099 = vadd.f32 %v6930, %v7098
    %v7100 = vpop.f32.mrf.mxu0
    %v7101 = vadd.f32 %v6932, %v7100
    %7102 = vmatmul.bf16.gmra.mxu0 %v2465
    %v7103 = vpop.f32.mrf.mxu0
    %v7104 = vadd.f32 %v6935, %v7103
    %v7105 = vpop.f32.mrf.mxu0
    %v7106 = vadd.f32 %v6937, %v7105
    %7107 = vmatmul.bf16.gmra.mxu0 %v2473
    %v7108 = vpop.f32.mrf.mxu0
    %v7109 = vadd.f32 %v6940, %v7108
    %v7110 = vpop.f32.mrf.mxu0
    %v7111 = vadd.f32 %v6942, %v7110
    %7112 = vmatmul.bf16.gmra.mxu0 %v2481
    %v7113 = vpop.f32.mrf.mxu0
    %v7114 = vadd.f32 %v6945, %v7113
    %v7115 = vpop.f32.mrf.mxu0
    %v7116 = vadd.f32 %v6947, %v7115
    %7117 = vmatmul.bf16.gmra.mxu0 %v2489
    %v7118 = vpop.f32.mrf.mxu0
    %v7119 = vadd.f32 %v6950, %v7118
    %v7120 = vpop.f32.mrf.mxu0
    %v7121 = vadd.f32 %v6952, %v7120
    %7122 = vmatmul.bf16.gmra.mxu0 %v2497
    %v7123 = vpop.f32.mrf.mxu0
    %v7124 = vadd.f32 %v6955, %v7123
    %v7125 = vpop.f32.mrf.mxu0
    %v7126 = vadd.f32 %v6957, %v7125
    %7127 = vmatmul.bf16.gmra.mxu0 %v2505
    %v7128 = vpop.f32.mrf.mxu0
    %v7129 = vadd.f32 %v6960, %v7128
    %v7130 = vpop.f32.mrf.mxu0
    %v7131 = vadd.f32 %v6962, %v7130
    %7132 = vmatmul.bf16.gmra.mxu0 %v2513
    %v7133 = vpop.f32.mrf.mxu0
    %v7134 = vadd.f32 %v6965, %v7133
    %v7135 = vpop.f32.mrf.mxu0
    %v7136 = vadd.f32 %v6967, %v7135
    %7137 = vmatmul.bf16.gmra.mxu0 %v2521
    %v7138 = vpop.f32.mrf.mxu0
    %v7139 = vadd.f32 %v6970, %v7138
    %v7140 = vpop.f32.mrf.mxu0
    %v7141 = vadd.f32 %v6972, %v7140
    %7142 = vmatmul.bf16.gmra.mxu0 %v2529
    %v7143 = vpop.f32.mrf.mxu0
    %v7144 = vadd.f32 %v6975, %v7143
    %v7145 = vpop.f32.mrf.mxu0
    %v7146 = vadd.f32 %v6977, %v7145
    %7147 = vmatmul.bf16.gmra.mxu0 %v2537
    %v7148 = vpop.f32.mrf.mxu0
    %v7149 = vadd.f32 %v6980, %v7148
    %v7150 = vpop.f32.mrf.mxu0
    %v7151 = vadd.f32 %v6982, %v7150
    %7152 = vmatmul.bf16.gmra.mxu0 %v2545
    %v7153 = vpop.f32.mrf.mxu0
    %v7154 = vadd.f32 %v6985, %v7153
    %v7155 = vpop.f32.mrf.mxu0
    %v7156 = vadd.f32 %v6987, %v7155
    %7157 = vmatmul.bf16.gmra.mxu0 %v2553
    %v7158 = vpop.f32.mrf.mxu0
    %v7159 = vadd.f32 %v6990, %v7158
    %v7160 = vpop.f32.mrf.mxu0
    %v7161 = vadd.f32 %v6992, %v7160
    %7162 = vmatmul.bf16.gmra.mxu0 %v2561
    %v7163 = vpop.f32.mrf.mxu0
    %v7164 = vadd.f32 %v6995, %v7163
    %v7165 = vpop.f32.mrf.mxu0
    %v7166 = vadd.f32 %v6997, %v7165
    %7167 = vmatmul.bf16.gmra.mxu0 %v2569
    %v7168 = vpop.f32.mrf.mxu0
    %v7169 = vadd.f32 %v7000, %v7168
    %v7170 = vpop.f32.mrf.mxu0
    %v7171 = vadd.f32 %v7002, %v7170
    %7172 = vmatmul.bf16.gmra.mxu0 %v2577
    %v7173 = vpop.f32.mrf.mxu0
    %v7174 = vadd.f32 %v7005, %v7173
    %v7175 = vpop.f32.mrf.mxu0
    %v7176 = vadd.f32 %v7007, %v7175
    %7177 = vmatmul.bf16.gmra.mxu0 %v2585
    %v7178 = vpop.f32.mrf.mxu0
    %v7179 = vadd.f32 %v7010, %v7178
    %v7180 = vpop.f32.mrf.mxu0
    %v7181 = vadd.f32 %v7012, %v7180
    %7182 = vmatmul.bf16.gmra.mxu0 %v2593
    %v7183 = vpop.f32.mrf.mxu0
    %v7184 = vadd.f32 %v7015, %v7183
    %v7185 = vpop.f32.mrf.mxu0
    %v7186 = vadd.f32 %v7017, %v7185
    %7187 = vdwg.mxu0
    %7188 = vmatpush.bf16.msra.mxu0 %v3728
    %7189 = vmatpush.bf16.msra.mxu0 %v3724
    %7190 = vmatpush.bf16.msra.mxu0 %v3720
    %7191 = vmatpush.bf16.msra.mxu0 %v3716
    %7192 = vmatpush.bf16.msra.mxu0 %v3712
    %7193 = vmatpush.bf16.msra.mxu0 %v3708
    %7194 = vmatpush.bf16.msra.mxu0 %v3704
    %7195 = vmatpush.bf16.msra.mxu0 %v3700
    %7196 = vmatmul.bf16.gmra.mxu0 %v2346
    %v7197 = vpop.f32.mrf.mxu0
    %v7198 = vadd.f32 %v7029, %v7197
    %v7199 = vpop.f32.mrf.mxu0
    %v7200 = vadd.f32 %v7031, %v7199
    %7201 = vmatmul.bf16.gmra.mxu0 %v2354
    %v7202 = vpop.f32.mrf.mxu0
    %v7203 = vadd.f32 %v7034, %v7202
    %v7204 = vpop.f32.mrf.mxu0
    %v7205 = vadd.f32 %v7036, %v7204
    %7206 = vmatmul.bf16.gmra.mxu0 %v2362
    %v7207 = vpop.f32.mrf.mxu0
    %v7208 = vadd.f32 %v7039, %v7207
    %v7209 = vpop.f32.mrf.mxu0
    %v7210 = vadd.f32 %v7041, %v7209
    %7211 = vmatmul.bf16.gmra.mxu0 %v2370
    %v7212 = vpop.f32.mrf.mxu0
    %v7213 = vadd.f32 %v7044, %v7212
    %v7214 = vpop.f32.mrf.mxu0
    %v7215 = vadd.f32 %v7046, %v7214
    %7216 = vmatmul.bf16.gmra.mxu0 %v2378
    %v7217 = vpop.f32.mrf.mxu0
    %v7218 = vadd.f32 %v7049, %v7217
    %v7219 = vpop.f32.mrf.mxu0
    %v7220 = vadd.f32 %v7051, %v7219
    %7221 = vmatmul.bf16.gmra.mxu0 %v2386
    %v7222 = vpop.f32.mrf.mxu0
    %v7223 = vadd.f32 %v7054, %v7222
    %v7224 = vpop.f32.mrf.mxu0
    %v7225 = vadd.f32 %v7056, %v7224
    %7226 = vmatmul.bf16.gmra.mxu0 %v2394
    %v7227 = vpop.f32.mrf.mxu0
    %v7228 = vadd.f32 %v7059, %v7227
    %v7229 = vpop.f32.mrf.mxu0
    %v7230 = vadd.f32 %v7061, %v7229
    %7231 = vmatmul.bf16.gmra.mxu0 %v2402
    %v7232 = vpop.f32.mrf.mxu0
    %v7233 = vadd.f32 %v7064, %v7232
    %v7234 = vpop.f32.mrf.mxu0
    %v7235 = vadd.f32 %v7066, %v7234
    %7236 = vmatmul.bf16.gmra.mxu0 %v2410
    %v7237 = vpop.f32.mrf.mxu0
    %v7238 = vadd.f32 %v7069, %v7237
    %v7239 = vpop.f32.mrf.mxu0
    %v7240 = vadd.f32 %v7071, %v7239
    %7241 = vmatmul.bf16.gmra.mxu0 %v2418
    %v7242 = vpop.f32.mrf.mxu0
    %v7243 = vadd.f32 %v7074, %v7242
    %v7244 = vpop.f32.mrf.mxu0
    %v7245 = vadd.f32 %v7076, %v7244
    %7246 = vmatmul.bf16.gmra.mxu0 %v2426
    %v7247 = vpop.f32.mrf.mxu0
    %v7248 = vadd.f32 %v7079, %v7247
    %v7249 = vpop.f32.mrf.mxu0
    %v7250 = vadd.f32 %v7081, %v7249
    %7251 = vmatmul.bf16.gmra.mxu0 %v2434
    %v7252 = vpop.f32.mrf.mxu0
    %v7253 = vadd.f32 %v7084, %v7252
    %v7254 = vpop.f32.mrf.mxu0
    %v7255 = vadd.f32 %v7086, %v7254
    %7256 = vmatmul.bf16.gmra.mxu0 %v2442
    %v7257 = vpop.f32.mrf.mxu0
    %v7258 = vadd.f32 %v7089, %v7257
    %v7259 = vpop.f32.mrf.mxu0
    %v7260 = vadd.f32 %v7091, %v7259
    %7261 = vmatmul.bf16.gmra.mxu0 %v2450
    %v7262 = vpop.f32.mrf.mxu0
    %v7263 = vadd.f32 %v7094, %v7262
    %v7264 = vpop.f32.mrf.mxu0
    %v7265 = vadd.f32 %v7096, %v7264
    %7266 = vmatmul.bf16.gmra.mxu0 %v2458
    %v7267 = vpop.f32.mrf.mxu0
    %v7268 = vadd.f32 %v7099, %v7267
    %v7269 = vpop.f32.mrf.mxu0
    %v7270 = vadd.f32 %v7101, %v7269
    %7271 = vmatmul.bf16.gmra.mxu0 %v2466
    %v7272 = vpop.f32.mrf.mxu0
    %v7273 = vadd.f32 %v7104, %v7272
    %v7274 = vpop.f32.mrf.mxu0
    %v7275 = vadd.f32 %v7106, %v7274
    %7276 = vmatmul.bf16.gmra.mxu0 %v2474
    %v7277 = vpop.f32.mrf.mxu0
    %v7278 = vadd.f32 %v7109, %v7277
    %v7279 = vpop.f32.mrf.mxu0
    %v7280 = vadd.f32 %v7111, %v7279
    %7281 = vmatmul.bf16.gmra.mxu0 %v2482
    %v7282 = vpop.f32.mrf.mxu0
    %v7283 = vadd.f32 %v7114, %v7282
    %v7284 = vpop.f32.mrf.mxu0
    %v7285 = vadd.f32 %v7116, %v7284
    %7286 = vmatmul.bf16.gmra.mxu0 %v2490
    %v7287 = vpop.f32.mrf.mxu0
    %v7288 = vadd.f32 %v7119, %v7287
    %v7289 = vpop.f32.mrf.mxu0
    %v7290 = vadd.f32 %v7121, %v7289
    %7291 = vmatmul.bf16.gmra.mxu0 %v2498
    %v7292 = vpop.f32.mrf.mxu0
    %v7293 = vadd.f32 %v7124, %v7292
    %v7294 = vpop.f32.mrf.mxu0
    %v7295 = vadd.f32 %v7126, %v7294
    %7296 = vmatmul.bf16.gmra.mxu0 %v2506
    %v7297 = vpop.f32.mrf.mxu0
    %v7298 = vadd.f32 %v7129, %v7297
    %v7299 = vpop.f32.mrf.mxu0
    %v7300 = vadd.f32 %v7131, %v7299
    %7301 = vmatmul.bf16.gmra.mxu0 %v2514
    %v7302 = vpop.f32.mrf.mxu0
    %v7303 = vadd.f32 %v7134, %v7302
    %v7304 = vpop.f32.mrf.mxu0
    %v7305 = vadd.f32 %v7136, %v7304
    %7306 = vmatmul.bf16.gmra.mxu0 %v2522
    %v7307 = vpop.f32.mrf.mxu0
    %v7308 = vadd.f32 %v7139, %v7307
    %v7309 = vpop.f32.mrf.mxu0
    %v7310 = vadd.f32 %v7141, %v7309
    %7311 = vmatmul.bf16.gmra.mxu0 %v2530
    %v7312 = vpop.f32.mrf.mxu0
    %v7313 = vadd.f32 %v7144, %v7312
    %v7314 = vpop.f32.mrf.mxu0
    %v7315 = vadd.f32 %v7146, %v7314
    %7316 = vmatmul.bf16.gmra.mxu0 %v2538
    %v7317 = vpop.f32.mrf.mxu0
    %v7318 = vadd.f32 %v7149, %v7317
    %v7319 = vpop.f32.mrf.mxu0
    %v7320 = vadd.f32 %v7151, %v7319
    %7321 = vmatmul.bf16.gmra.mxu0 %v2546
    %v7322 = vpop.f32.mrf.mxu0
    %v7323 = vadd.f32 %v7154, %v7322
    %v7324 = vpop.f32.mrf.mxu0
    %v7325 = vadd.f32 %v7156, %v7324
    %7326 = vmatmul.bf16.gmra.mxu0 %v2554
    %v7327 = vpop.f32.mrf.mxu0
    %v7328 = vadd.f32 %v7159, %v7327
    %v7329 = vpop.f32.mrf.mxu0
    %v7330 = vadd.f32 %v7161, %v7329
    %7331 = vmatmul.bf16.gmra.mxu0 %v2562
    %v7332 = vpop.f32.mrf.mxu0
    %v7333 = vadd.f32 %v7164, %v7332
    %v7334 = vpop.f32.mrf.mxu0
    %v7335 = vadd.f32 %v7166, %v7334
    %7336 = vmatmul.bf16.gmra.mxu0 %v2570
    %v7337 = vpop.f32.mrf.mxu0
    %v7338 = vadd.f32 %v7169, %v7337
    %v7339 = vpop.f32.mrf.mxu0
    %v7340 = vadd.f32 %v7171, %v7339
    %7341 = vmatmul.bf16.gmra.mxu0 %v2578
    %v7342 = vpop.f32.mrf.mxu0
    %v7343 = vadd.f32 %v7174, %v7342
    %v7344 = vpop.f32.mrf.mxu0
    %v7345 = vadd.f32 %v7176, %v7344
    %7346 = vmatmul.bf16.gmra.mxu0 %v2586
    %v7347 = vpop.f32.mrf.mxu0
    %v7348 = vadd.f32 %v7179, %v7347
    %v7349 = vpop.f32.mrf.mxu0
    %v7350 = vadd.f32 %v7181, %v7349
    %7351 = vmatmul.bf16.gmra.mxu0 %v2594
    %v7352 = vpop.f32.mrf.mxu0
    %v7353 = vadd.f32 %v7184, %v7352
    %v7354 = vpop.f32.mrf.mxu0
    %v7355 = vadd.f32 %v7186, %v7354
    %7356 = vdwg.mxu0
    %7357 = vmatpush.bf16.msra.mxu0 %v3760
    %7358 = vmatpush.bf16.msra.mxu0 %v3756
    %7359 = vmatpush.bf16.msra.mxu0 %v3752
    %7360 = vmatpush.bf16.msra.mxu0 %v3748
    %7361 = vmatpush.bf16.msra.mxu0 %v3744
    %7362 = vmatpush.bf16.msra.mxu0 %v3740
    %7363 = vmatpush.bf16.msra.mxu0 %v3736
    %7364 = vmatpush.bf16.msra.mxu0 %v3732
    %7365 = vmatmul.bf16.gmra.mxu0 %v2347
    %v7366 = vpop.f32.mrf.mxu0
    %v7367 = vadd.f32 %v7198, %v7366
    %v7368 = vpop.f32.mrf.mxu0
    %v7369 = vadd.f32 %v7200, %v7368
    %7370 = vmatmul.bf16.gmra.mxu0 %v2355
    %v7371 = vpop.f32.mrf.mxu0
    %v7372 = vadd.f32 %v7203, %v7371
    %v7373 = vpop.f32.mrf.mxu0
    %v7374 = vadd.f32 %v7205, %v7373
    %7375 = vmatmul.bf16.gmra.mxu0 %v2363
    %v7376 = vpop.f32.mrf.mxu0
    %v7377 = vadd.f32 %v7208, %v7376
    %v7378 = vpop.f32.mrf.mxu0
    %v7379 = vadd.f32 %v7210, %v7378
    %7380 = vmatmul.bf16.gmra.mxu0 %v2371
    %v7381 = vpop.f32.mrf.mxu0
    %v7382 = vadd.f32 %v7213, %v7381
    %v7383 = vpop.f32.mrf.mxu0
    %v7384 = vadd.f32 %v7215, %v7383
    %7385 = vmatmul.bf16.gmra.mxu0 %v2379
    %v7386 = vpop.f32.mrf.mxu0
    %v7387 = vadd.f32 %v7218, %v7386
    %v7388 = vpop.f32.mrf.mxu0
    %v7389 = vadd.f32 %v7220, %v7388
    %7390 = vmatmul.bf16.gmra.mxu0 %v2387
    %v7391 = vpop.f32.mrf.mxu0
    %v7392 = vadd.f32 %v7223, %v7391
    %v7393 = vpop.f32.mrf.mxu0
    %v7394 = vadd.f32 %v7225, %v7393
    %7395 = vmatmul.bf16.gmra.mxu0 %v2395
    %v7396 = vpop.f32.mrf.mxu0
    %v7397 = vadd.f32 %v7228, %v7396
    %v7398 = vpop.f32.mrf.mxu0
    %v7399 = vadd.f32 %v7230, %v7398
    %7400 = vmatmul.bf16.gmra.mxu0 %v2403
    %v7401 = vpop.f32.mrf.mxu0
    %v7402 = vadd.f32 %v7233, %v7401
    %v7403 = vpop.f32.mrf.mxu0
    %v7404 = vadd.f32 %v7235, %v7403
    %7405 = vmatmul.bf16.gmra.mxu0 %v2411
    %v7406 = vpop.f32.mrf.mxu0
    %v7407 = vadd.f32 %v7238, %v7406
    %v7408 = vpop.f32.mrf.mxu0
    %v7409 = vadd.f32 %v7240, %v7408
    %7410 = vmatmul.bf16.gmra.mxu0 %v2419
    %v7411 = vpop.f32.mrf.mxu0
    %v7412 = vadd.f32 %v7243, %v7411
    %v7413 = vpop.f32.mrf.mxu0
    %v7414 = vadd.f32 %v7245, %v7413
    %7415 = vmatmul.bf16.gmra.mxu0 %v2427
    %v7416 = vpop.f32.mrf.mxu0
    %v7417 = vadd.f32 %v7248, %v7416
    %v7418 = vpop.f32.mrf.mxu0
    %v7419 = vadd.f32 %v7250, %v7418
    %7420 = vmatmul.bf16.gmra.mxu0 %v2435
    %v7421 = vpop.f32.mrf.mxu0
    %v7422 = vadd.f32 %v7253, %v7421
    %v7423 = vpop.f32.mrf.mxu0
    %v7424 = vadd.f32 %v7255, %v7423
    %7425 = vmatmul.bf16.gmra.mxu0 %v2443
    %v7426 = vpop.f32.mrf.mxu0
    %v7427 = vadd.f32 %v7258, %v7426
    %v7428 = vpop.f32.mrf.mxu0
    %v7429 = vadd.f32 %v7260, %v7428
    %7430 = vmatmul.bf16.gmra.mxu0 %v2451
    %v7431 = vpop.f32.mrf.mxu0
    %v7432 = vadd.f32 %v7263, %v7431
    %v7433 = vpop.f32.mrf.mxu0
    %v7434 = vadd.f32 %v7265, %v7433
    %7435 = vmatmul.bf16.gmra.mxu0 %v2459
    %v7436 = vpop.f32.mrf.mxu0
    %v7437 = vadd.f32 %v7268, %v7436
    %v7438 = vpop.f32.mrf.mxu0
    %v7439 = vadd.f32 %v7270, %v7438
    %7440 = vmatmul.bf16.gmra.mxu0 %v2467
    %v7441 = vpop.f32.mrf.mxu0
    %v7442 = vadd.f32 %v7273, %v7441
    %v7443 = vpop.f32.mrf.mxu0
    %v7444 = vadd.f32 %v7275, %v7443
    %7445 = vmatmul.bf16.gmra.mxu0 %v2475
    %v7446 = vpop.f32.mrf.mxu0
    %v7447 = vadd.f32 %v7278, %v7446
    %v7448 = vpop.f32.mrf.mxu0
    %v7449 = vadd.f32 %v7280, %v7448
    %7450 = vmatmul.bf16.gmra.mxu0 %v2483
    %v7451 = vpop.f32.mrf.mxu0
    %v7452 = vadd.f32 %v7283, %v7451
    %v7453 = vpop.f32.mrf.mxu0
    %v7454 = vadd.f32 %v7285, %v7453
    %7455 = vmatmul.bf16.gmra.mxu0 %v2491
    %v7456 = vpop.f32.mrf.mxu0
    %v7457 = vadd.f32 %v7288, %v7456
    %v7458 = vpop.f32.mrf.mxu0
    %v7459 = vadd.f32 %v7290, %v7458
    %7460 = vmatmul.bf16.gmra.mxu0 %v2499
    %v7461 = vpop.f32.mrf.mxu0
    %v7462 = vadd.f32 %v7293, %v7461
    %v7463 = vpop.f32.mrf.mxu0
    %v7464 = vadd.f32 %v7295, %v7463
    %7465 = vmatmul.bf16.gmra.mxu0 %v2507
    %v7466 = vpop.f32.mrf.mxu0
    %v7467 = vadd.f32 %v7298, %v7466
    %v7468 = vpop.f32.mrf.mxu0
    %v7469 = vadd.f32 %v7300, %v7468
    %7470 = vmatmul.bf16.gmra.mxu0 %v2515
    %v7471 = vpop.f32.mrf.mxu0
    %v7472 = vadd.f32 %v7303, %v7471
    %v7473 = vpop.f32.mrf.mxu0
    %v7474 = vadd.f32 %v7305, %v7473
    %7475 = vmatmul.bf16.gmra.mxu0 %v2523
    %v7476 = vpop.f32.mrf.mxu0
    %v7477 = vadd.f32 %v7308, %v7476
    %v7478 = vpop.f32.mrf.mxu0
    %v7479 = vadd.f32 %v7310, %v7478
    %7480 = vmatmul.bf16.gmra.mxu0 %v2531
    %v7481 = vpop.f32.mrf.mxu0
    %v7482 = vadd.f32 %v7313, %v7481
    %v7483 = vpop.f32.mrf.mxu0
    %v7484 = vadd.f32 %v7315, %v7483
    %7485 = vmatmul.bf16.gmra.mxu0 %v2539
    %v7486 = vpop.f32.mrf.mxu0
    %v7487 = vadd.f32 %v7318, %v7486
    %v7488 = vpop.f32.mrf.mxu0
    %v7489 = vadd.f32 %v7320, %v7488
    %7490 = vmatmul.bf16.gmra.mxu0 %v2547
    %v7491 = vpop.f32.mrf.mxu0
    %v7492 = vadd.f32 %v7323, %v7491
    %v7493 = vpop.f32.mrf.mxu0
    %v7494 = vadd.f32 %v7325, %v7493
    %7495 = vmatmul.bf16.gmra.mxu0 %v2555
    %v7496 = vpop.f32.mrf.mxu0
    %v7497 = vadd.f32 %v7328, %v7496
    %v7498 = vpop.f32.mrf.mxu0
    %v7499 = vadd.f32 %v7330, %v7498
    %7500 = vmatmul.bf16.gmra.mxu0 %v2563
    %v7501 = vpop.f32.mrf.mxu0
    %v7502 = vadd.f32 %v7333, %v7501
    %v7503 = vpop.f32.mrf.mxu0
    %v7504 = vadd.f32 %v7335, %v7503
    %7505 = vmatmul.bf16.gmra.mxu0 %v2571
    %v7506 = vpop.f32.mrf.mxu0
    %v7507 = vadd.f32 %v7338, %v7506
    %v7508 = vpop.f32.mrf.mxu0
    %v7509 = vadd.f32 %v7340, %v7508
    %7510 = vmatmul.bf16.gmra.mxu0 %v2579
    %v7511 = vpop.f32.mrf.mxu0
    %v7512 = vadd.f32 %v7343, %v7511
    %v7513 = vpop.f32.mrf.mxu0
    %v7514 = vadd.f32 %v7345, %v7513
    %7515 = vmatmul.bf16.gmra.mxu0 %v2587
    %v7516 = vpop.f32.mrf.mxu0
    %v7517 = vadd.f32 %v7348, %v7516
    %v7518 = vpop.f32.mrf.mxu0
    %v7519 = vadd.f32 %v7350, %v7518
    %7520 = vmatmul.bf16.gmra.mxu0 %v2595
    %v7521 = vpop.f32.mrf.mxu0
    %v7522 = vadd.f32 %v7353, %v7521
    %v7523 = vpop.f32.mrf.mxu0
    %v7524 = vadd.f32 %v7355, %v7523
    %7525 = vdwg.mxu0
    %7526 = vmatpush.bf16.msra.mxu0 %v3792
    %7527 = vmatpush.bf16.msra.mxu0 %v3788
    %7528 = vmatpush.bf16.msra.mxu0 %v3784
    %7529 = vmatpush.bf16.msra.mxu0 %v3780
    %7530 = vmatpush.bf16.msra.mxu0 %v3776
    %7531 = vmatpush.bf16.msra.mxu0 %v3772
    %7532 = vmatpush.bf16.msra.mxu0 %v3768
    %7533 = vmatpush.bf16.msra.mxu0 %v3764
    %7534 = vmatmul.bf16.gmra.mxu0 %v2348
    %v7535 = vpop.f32.mrf.mxu0
    %v7536 = vadd.f32 %v7367, %v7535
    %v7537 = vpop.f32.mrf.mxu0
    %v7538 = vadd.f32 %v7369, %v7537
    %7539 = vmatmul.bf16.gmra.mxu0 %v2356
    %v7540 = vpop.f32.mrf.mxu0
    %v7541 = vadd.f32 %v7372, %v7540
    %v7542 = vpop.f32.mrf.mxu0
    %v7543 = vadd.f32 %v7374, %v7542
    %7544 = vmatmul.bf16.gmra.mxu0 %v2364
    %v7545 = vpop.f32.mrf.mxu0
    %v7546 = vadd.f32 %v7377, %v7545
    %v7547 = vpop.f32.mrf.mxu0
    %v7548 = vadd.f32 %v7379, %v7547
    %7549 = vmatmul.bf16.gmra.mxu0 %v2372
    %v7550 = vpop.f32.mrf.mxu0
    %v7551 = vadd.f32 %v7382, %v7550
    %v7552 = vpop.f32.mrf.mxu0
    %v7553 = vadd.f32 %v7384, %v7552
    %7554 = vmatmul.bf16.gmra.mxu0 %v2380
    %v7555 = vpop.f32.mrf.mxu0
    %v7556 = vadd.f32 %v7387, %v7555
    %v7557 = vpop.f32.mrf.mxu0
    %v7558 = vadd.f32 %v7389, %v7557
    %7559 = vmatmul.bf16.gmra.mxu0 %v2388
    %v7560 = vpop.f32.mrf.mxu0
    %v7561 = vadd.f32 %v7392, %v7560
    %v7562 = vpop.f32.mrf.mxu0
    %v7563 = vadd.f32 %v7394, %v7562
    %7564 = vmatmul.bf16.gmra.mxu0 %v2396
    %v7565 = vpop.f32.mrf.mxu0
    %v7566 = vadd.f32 %v7397, %v7565
    %v7567 = vpop.f32.mrf.mxu0
    %v7568 = vadd.f32 %v7399, %v7567
    %7569 = vmatmul.bf16.gmra.mxu0 %v2404
    %v7570 = vpop.f32.mrf.mxu0
    %v7571 = vadd.f32 %v7402, %v7570
    %v7572 = vpop.f32.mrf.mxu0
    %v7573 = vadd.f32 %v7404, %v7572
    %7574 = vmatmul.bf16.gmra.mxu0 %v2412
    %v7575 = vpop.f32.mrf.mxu0
    %v7576 = vadd.f32 %v7407, %v7575
    %v7577 = vpop.f32.mrf.mxu0
    %v7578 = vadd.f32 %v7409, %v7577
    %7579 = vmatmul.bf16.gmra.mxu0 %v2420
    %v7580 = vpop.f32.mrf.mxu0
    %v7581 = vadd.f32 %v7412, %v7580
    %v7582 = vpop.f32.mrf.mxu0
    %v7583 = vadd.f32 %v7414, %v7582
    %7584 = vmatmul.bf16.gmra.mxu0 %v2428
    %v7585 = vpop.f32.mrf.mxu0
    %v7586 = vadd.f32 %v7417, %v7585
    %v7587 = vpop.f32.mrf.mxu0
    %v7588 = vadd.f32 %v7419, %v7587
    %7589 = vmatmul.bf16.gmra.mxu0 %v2436
    %v7590 = vpop.f32.mrf.mxu0
    %v7591 = vadd.f32 %v7422, %v7590
    %v7592 = vpop.f32.mrf.mxu0
    %v7593 = vadd.f32 %v7424, %v7592
    %7594 = vmatmul.bf16.gmra.mxu0 %v2444
    %v7595 = vpop.f32.mrf.mxu0
    %v7596 = vadd.f32 %v7427, %v7595
    %v7597 = vpop.f32.mrf.mxu0
    %v7598 = vadd.f32 %v7429, %v7597
    %7599 = vmatmul.bf16.gmra.mxu0 %v2452
    %v7600 = vpop.f32.mrf.mxu0
    %v7601 = vadd.f32 %v7432, %v7600
    %v7602 = vpop.f32.mrf.mxu0
    %v7603 = vadd.f32 %v7434, %v7602
    %7604 = vmatmul.bf16.gmra.mxu0 %v2460
    %v7605 = vpop.f32.mrf.mxu0
    %v7606 = vadd.f32 %v7437, %v7605
    %v7607 = vpop.f32.mrf.mxu0
    %v7608 = vadd.f32 %v7439, %v7607
    %7609 = vmatmul.bf16.gmra.mxu0 %v2468
    %v7610 = vpop.f32.mrf.mxu0
    %v7611 = vadd.f32 %v7442, %v7610
    %v7612 = vpop.f32.mrf.mxu0
    %v7613 = vadd.f32 %v7444, %v7612
    %7614 = vmatmul.bf16.gmra.mxu0 %v2476
    %v7615 = vpop.f32.mrf.mxu0
    %v7616 = vadd.f32 %v7447, %v7615
    %v7617 = vpop.f32.mrf.mxu0
    %v7618 = vadd.f32 %v7449, %v7617
    %7619 = vmatmul.bf16.gmra.mxu0 %v2484
    %v7620 = vpop.f32.mrf.mxu0
    %v7621 = vadd.f32 %v7452, %v7620
    %v7622 = vpop.f32.mrf.mxu0
    %v7623 = vadd.f32 %v7454, %v7622
    %7624 = vmatmul.bf16.gmra.mxu0 %v2492
    %v7625 = vpop.f32.mrf.mxu0
    %v7626 = vadd.f32 %v7457, %v7625
    %v7627 = vpop.f32.mrf.mxu0
    %v7628 = vadd.f32 %v7459, %v7627
    %7629 = vmatmul.bf16.gmra.mxu0 %v2500
    %v7630 = vpop.f32.mrf.mxu0
    %v7631 = vadd.f32 %v7462, %v7630
    %v7632 = vpop.f32.mrf.mxu0
    %v7633 = vadd.f32 %v7464, %v7632
    %7634 = vmatmul.bf16.gmra.mxu0 %v2508
    %v7635 = vpop.f32.mrf.mxu0
    %v7636 = vadd.f32 %v7467, %v7635
    %v7637 = vpop.f32.mrf.mxu0
    %v7638 = vadd.f32 %v7469, %v7637
    %7639 = vmatmul.bf16.gmra.mxu0 %v2516
    %v7640 = vpop.f32.mrf.mxu0
    %v7641 = vadd.f32 %v7472, %v7640
    %v7642 = vpop.f32.mrf.mxu0
    %v7643 = vadd.f32 %v7474, %v7642
    %7644 = vmatmul.bf16.gmra.mxu0 %v2524
    %v7645 = vpop.f32.mrf.mxu0
    %v7646 = vadd.f32 %v7477, %v7645
    %v7647 = vpop.f32.mrf.mxu0
    %v7648 = vadd.f32 %v7479, %v7647
    %7649 = vmatmul.bf16.gmra.mxu0 %v2532
    %v7650 = vpop.f32.mrf.mxu0
    %v7651 = vadd.f32 %v7482, %v7650
    %v7652 = vpop.f32.mrf.mxu0
    %v7653 = vadd.f32 %v7484, %v7652
    %7654 = vmatmul.bf16.gmra.mxu0 %v2540
    %v7655 = vpop.f32.mrf.mxu0
    %v7656 = vadd.f32 %v7487, %v7655
    %v7657 = vpop.f32.mrf.mxu0
    %v7658 = vadd.f32 %v7489, %v7657
    %7659 = vmatmul.bf16.gmra.mxu0 %v2548
    %v7660 = vpop.f32.mrf.mxu0
    %v7661 = vadd.f32 %v7492, %v7660
    %v7662 = vpop.f32.mrf.mxu0
    %v7663 = vadd.f32 %v7494, %v7662
    %7664 = vmatmul.bf16.gmra.mxu0 %v2556
    %v7665 = vpop.f32.mrf.mxu0
    %v7666 = vadd.f32 %v7497, %v7665
    %v7667 = vpop.f32.mrf.mxu0
    %v7668 = vadd.f32 %v7499, %v7667
    %7669 = vmatmul.bf16.gmra.mxu0 %v2564
    %v7670 = vpop.f32.mrf.mxu0
    %v7671 = vadd.f32 %v7502, %v7670
    %v7672 = vpop.f32.mrf.mxu0
    %v7673 = vadd.f32 %v7504, %v7672
    %7674 = vmatmul.bf16.gmra.mxu0 %v2572
    %v7675 = vpop.f32.mrf.mxu0
    %v7676 = vadd.f32 %v7507, %v7675
    %v7677 = vpop.f32.mrf.mxu0
    %v7678 = vadd.f32 %v7509, %v7677
    %7679 = vmatmul.bf16.gmra.mxu0 %v2580
    %v7680 = vpop.f32.mrf.mxu0
    %v7681 = vadd.f32 %v7512, %v7680
    %v7682 = vpop.f32.mrf.mxu0
    %v7683 = vadd.f32 %v7514, %v7682
    %7684 = vmatmul.bf16.gmra.mxu0 %v2588
    %v7685 = vpop.f32.mrf.mxu0
    %v7686 = vadd.f32 %v7517, %v7685
    %v7687 = vpop.f32.mrf.mxu0
    %v7688 = vadd.f32 %v7519, %v7687
    %7689 = vmatmul.bf16.gmra.mxu0 %v2596
    %v7690 = vpop.f32.mrf.mxu0
    %v7691 = vadd.f32 %v7522, %v7690
    %v7692 = vpop.f32.mrf.mxu0
    %v7693 = vadd.f32 %v7524, %v7692
    %7694 = vdwg.mxu0
    %7695 = vmatpush.bf16.msra.mxu0 %v3824
    %7696 = vmatpush.bf16.msra.mxu0 %v3820
    %7697 = vmatpush.bf16.msra.mxu0 %v3816
    %7698 = vmatpush.bf16.msra.mxu0 %v3812
    %7699 = vmatpush.bf16.msra.mxu0 %v3808
    %7700 = vmatpush.bf16.msra.mxu0 %v3804
    %7701 = vmatpush.bf16.msra.mxu0 %v3800
    %7702 = vmatpush.bf16.msra.mxu0 %v3796
    %7703 = vmatmul.bf16.gmra.mxu0 %v2349
    %v7704 = vpop.f32.mrf.mxu0
    %v7705 = vadd.f32 %v7536, %v7704
    %v7706 = vpop.f32.mrf.mxu0
    %v7707 = vadd.f32 %v7538, %v7706
    %7708 = vmatmul.bf16.gmra.mxu0 %v2357
    %v7709 = vpop.f32.mrf.mxu0
    %v7710 = vadd.f32 %v7541, %v7709
    %v7711 = vpop.f32.mrf.mxu0
    %v7712 = vadd.f32 %v7543, %v7711
    %7713 = vmatmul.bf16.gmra.mxu0 %v2365
    %v7714 = vpop.f32.mrf.mxu0
    %v7715 = vadd.f32 %v7546, %v7714
    %v7716 = vpop.f32.mrf.mxu0
    %v7717 = vadd.f32 %v7548, %v7716
    %7718 = vmatmul.bf16.gmra.mxu0 %v2373
    %v7719 = vpop.f32.mrf.mxu0
    %v7720 = vadd.f32 %v7551, %v7719
    %v7721 = vpop.f32.mrf.mxu0
    %v7722 = vadd.f32 %v7553, %v7721
    %7723 = vmatmul.bf16.gmra.mxu0 %v2381
    %v7724 = vpop.f32.mrf.mxu0
    %v7725 = vadd.f32 %v7556, %v7724
    %v7726 = vpop.f32.mrf.mxu0
    %v7727 = vadd.f32 %v7558, %v7726
    %7728 = vmatmul.bf16.gmra.mxu0 %v2389
    %v7729 = vpop.f32.mrf.mxu0
    %v7730 = vadd.f32 %v7561, %v7729
    %v7731 = vpop.f32.mrf.mxu0
    %v7732 = vadd.f32 %v7563, %v7731
    %7733 = vmatmul.bf16.gmra.mxu0 %v2397
    %v7734 = vpop.f32.mrf.mxu0
    %v7735 = vadd.f32 %v7566, %v7734
    %v7736 = vpop.f32.mrf.mxu0
    %v7737 = vadd.f32 %v7568, %v7736
    %7738 = vmatmul.bf16.gmra.mxu0 %v2405
    %v7739 = vpop.f32.mrf.mxu0
    %v7740 = vadd.f32 %v7571, %v7739
    %v7741 = vpop.f32.mrf.mxu0
    %v7742 = vadd.f32 %v7573, %v7741
    %7743 = vmatmul.bf16.gmra.mxu0 %v2413
    %v7744 = vpop.f32.mrf.mxu0
    %v7745 = vadd.f32 %v7576, %v7744
    %v7746 = vpop.f32.mrf.mxu0
    %v7747 = vadd.f32 %v7578, %v7746
    %7748 = vmatmul.bf16.gmra.mxu0 %v2421
    %v7749 = vpop.f32.mrf.mxu0
    %v7750 = vadd.f32 %v7581, %v7749
    %v7751 = vpop.f32.mrf.mxu0
    %v7752 = vadd.f32 %v7583, %v7751
    %7753 = vmatmul.bf16.gmra.mxu0 %v2429
    %v7754 = vpop.f32.mrf.mxu0
    %v7755 = vadd.f32 %v7586, %v7754
    %v7756 = vpop.f32.mrf.mxu0
    %v7757 = vadd.f32 %v7588, %v7756
    %7758 = vmatmul.bf16.gmra.mxu0 %v2437
    %v7759 = vpop.f32.mrf.mxu0
    %v7760 = vadd.f32 %v7591, %v7759
    %v7761 = vpop.f32.mrf.mxu0
    %v7762 = vadd.f32 %v7593, %v7761
    %7763 = vmatmul.bf16.gmra.mxu0 %v2445
    %v7764 = vpop.f32.mrf.mxu0
    %v7765 = vadd.f32 %v7596, %v7764
    %v7766 = vpop.f32.mrf.mxu0
    %v7767 = vadd.f32 %v7598, %v7766
    %7768 = vmatmul.bf16.gmra.mxu0 %v2453
    %v7769 = vpop.f32.mrf.mxu0
    %v7770 = vadd.f32 %v7601, %v7769
    %v7771 = vpop.f32.mrf.mxu0
    %v7772 = vadd.f32 %v7603, %v7771
    %7773 = vmatmul.bf16.gmra.mxu0 %v2461
    %v7774 = vpop.f32.mrf.mxu0
    %v7775 = vadd.f32 %v7606, %v7774
    %v7776 = vpop.f32.mrf.mxu0
    %v7777 = vadd.f32 %v7608, %v7776
    %7778 = vmatmul.bf16.gmra.mxu0 %v2469
    %v7779 = vpop.f32.mrf.mxu0
    %v7780 = vadd.f32 %v7611, %v7779
    %v7781 = vpop.f32.mrf.mxu0
    %v7782 = vadd.f32 %v7613, %v7781
    %7783 = vmatmul.bf16.gmra.mxu0 %v2477
    %v7784 = vpop.f32.mrf.mxu0
    %v7785 = vadd.f32 %v7616, %v7784
    %v7786 = vpop.f32.mrf.mxu0
    %v7787 = vadd.f32 %v7618, %v7786
    %7788 = vmatmul.bf16.gmra.mxu0 %v2485
    %v7789 = vpop.f32.mrf.mxu0
    %v7790 = vadd.f32 %v7621, %v7789
    %v7791 = vpop.f32.mrf.mxu0
    %v7792 = vadd.f32 %v7623, %v7791
    %7793 = vmatmul.bf16.gmra.mxu0 %v2493
    %v7794 = vpop.f32.mrf.mxu0
    %v7795 = vadd.f32 %v7626, %v7794
    %v7796 = vpop.f32.mrf.mxu0
    %v7797 = vadd.f32 %v7628, %v7796
    %7798 = vmatmul.bf16.gmra.mxu0 %v2501
    %v7799 = vpop.f32.mrf.mxu0
    %v7800 = vadd.f32 %v7631, %v7799
    %v7801 = vpop.f32.mrf.mxu0
    %v7802 = vadd.f32 %v7633, %v7801
    %7803 = vmatmul.bf16.gmra.mxu0 %v2509
    %v7804 = vpop.f32.mrf.mxu0
    %v7805 = vadd.f32 %v7636, %v7804
    %v7806 = vpop.f32.mrf.mxu0
    %v7807 = vadd.f32 %v7638, %v7806
    %7808 = vmatmul.bf16.gmra.mxu0 %v2517
    %v7809 = vpop.f32.mrf.mxu0
    %v7810 = vadd.f32 %v7641, %v7809
    %v7811 = vpop.f32.mrf.mxu0
    %v7812 = vadd.f32 %v7643, %v7811
    %7813 = vmatmul.bf16.gmra.mxu0 %v2525
    %v7814 = vpop.f32.mrf.mxu0
    %v7815 = vadd.f32 %v7646, %v7814
    %v7816 = vpop.f32.mrf.mxu0
    %v7817 = vadd.f32 %v7648, %v7816
    %7818 = vmatmul.bf16.gmra.mxu0 %v2533
    %v7819 = vpop.f32.mrf.mxu0
    %v7820 = vadd.f32 %v7651, %v7819
    %v7821 = vpop.f32.mrf.mxu0
    %v7822 = vadd.f32 %v7653, %v7821
    %7823 = vmatmul.bf16.gmra.mxu0 %v2541
    %v7824 = vpop.f32.mrf.mxu0
    %v7825 = vadd.f32 %v7656, %v7824
    %v7826 = vpop.f32.mrf.mxu0
    %v7827 = vadd.f32 %v7658, %v7826
    %7828 = vmatmul.bf16.gmra.mxu0 %v2549
    %v7829 = vpop.f32.mrf.mxu0
    %v7830 = vadd.f32 %v7661, %v7829
    %v7831 = vpop.f32.mrf.mxu0
    %v7832 = vadd.f32 %v7663, %v7831
    %7833 = vmatmul.bf16.gmra.mxu0 %v2557
    %v7834 = vpop.f32.mrf.mxu0
    %v7835 = vadd.f32 %v7666, %v7834
    %v7836 = vpop.f32.mrf.mxu0
    %v7837 = vadd.f32 %v7668, %v7836
    %7838 = vmatmul.bf16.gmra.mxu0 %v2565
    %v7839 = vpop.f32.mrf.mxu0
    %v7840 = vadd.f32 %v7671, %v7839
    %v7841 = vpop.f32.mrf.mxu0
    %v7842 = vadd.f32 %v7673, %v7841
    %7843 = vmatmul.bf16.gmra.mxu0 %v2573
    %v7844 = vpop.f32.mrf.mxu0
    %v7845 = vadd.f32 %v7676, %v7844
    %v7846 = vpop.f32.mrf.mxu0
    %v7847 = vadd.f32 %v7678, %v7846
    %7848 = vmatmul.bf16.gmra.mxu0 %v2581
    %v7849 = vpop.f32.mrf.mxu0
    %v7850 = vadd.f32 %v7681, %v7849
    %v7851 = vpop.f32.mrf.mxu0
    %v7852 = vadd.f32 %v7683, %v7851
    %7853 = vmatmul.bf16.gmra.mxu0 %v2589
    %v7854 = vpop.f32.mrf.mxu0
    %v7855 = vadd.f32 %v7686, %v7854
    %v7856 = vpop.f32.mrf.mxu0
    %v7857 = vadd.f32 %v7688, %v7856
    %7858 = vmatmul.bf16.gmra.mxu0 %v2597
    %v7859 = vpop.f32.mrf.mxu0
    %v7860 = vadd.f32 %v7691, %v7859
    %v7861 = vpop.f32.mrf.mxu0
    %v7862 = vadd.f32 %v7693, %v7861
    %7863 = vdwg.mxu0
    %7864 = vmatpush.bf16.msra.mxu0 %v3856
    %7865 = vmatpush.bf16.msra.mxu0 %v3852
    %7866 = vmatpush.bf16.msra.mxu0 %v3848
    %7867 = vmatpush.bf16.msra.mxu0 %v3844
    %7868 = vmatpush.bf16.msra.mxu0 %v3840
    %7869 = vmatpush.bf16.msra.mxu0 %v3836
    %7870 = vmatpush.bf16.msra.mxu0 %v3832
    %7871 = vmatpush.bf16.msra.mxu0 %v3828
    %7872 = vmatmul.bf16.gmra.mxu0 %v2350
    %v7873 = vpop.f32.mrf.mxu0
    %v7874 = vadd.f32 %v7705, %v7873
    %v7875 = vpop.f32.mrf.mxu0
    %v7876 = vadd.f32 %v7707, %v7875
    %7877 = vmatmul.bf16.gmra.mxu0 %v2358
    %v7878 = vpop.f32.mrf.mxu0
    %v7879 = vadd.f32 %v7710, %v7878
    %v7880 = vpop.f32.mrf.mxu0
    %v7881 = vadd.f32 %v7712, %v7880
    %7882 = vmatmul.bf16.gmra.mxu0 %v2366
    %v7883 = vpop.f32.mrf.mxu0
    %v7884 = vadd.f32 %v7715, %v7883
    %v7885 = vpop.f32.mrf.mxu0
    %v7886 = vadd.f32 %v7717, %v7885
    %7887 = vmatmul.bf16.gmra.mxu0 %v2374
    %v7888 = vpop.f32.mrf.mxu0
    %v7889 = vadd.f32 %v7720, %v7888
    %v7890 = vpop.f32.mrf.mxu0
    %v7891 = vadd.f32 %v7722, %v7890
    %7892 = vmatmul.bf16.gmra.mxu0 %v2382
    %v7893 = vpop.f32.mrf.mxu0
    %v7894 = vadd.f32 %v7725, %v7893
    %v7895 = vpop.f32.mrf.mxu0
    %v7896 = vadd.f32 %v7727, %v7895
    %7897 = vmatmul.bf16.gmra.mxu0 %v2390
    %v7898 = vpop.f32.mrf.mxu0
    %v7899 = vadd.f32 %v7730, %v7898
    %v7900 = vpop.f32.mrf.mxu0
    %v7901 = vadd.f32 %v7732, %v7900
    %7902 = vmatmul.bf16.gmra.mxu0 %v2398
    %v7903 = vpop.f32.mrf.mxu0
    %v7904 = vadd.f32 %v7735, %v7903
    %v7905 = vpop.f32.mrf.mxu0
    %v7906 = vadd.f32 %v7737, %v7905
    %7907 = vmatmul.bf16.gmra.mxu0 %v2406
    %v7908 = vpop.f32.mrf.mxu0
    %v7909 = vadd.f32 %v7740, %v7908
    %v7910 = vpop.f32.mrf.mxu0
    %v7911 = vadd.f32 %v7742, %v7910
    %7912 = vmatmul.bf16.gmra.mxu0 %v2414
    %v7913 = vpop.f32.mrf.mxu0
    %v7914 = vadd.f32 %v7745, %v7913
    %v7915 = vpop.f32.mrf.mxu0
    %v7916 = vadd.f32 %v7747, %v7915
    %7917 = vmatmul.bf16.gmra.mxu0 %v2422
    %v7918 = vpop.f32.mrf.mxu0
    %v7919 = vadd.f32 %v7750, %v7918
    %v7920 = vpop.f32.mrf.mxu0
    %v7921 = vadd.f32 %v7752, %v7920
    %7922 = vmatmul.bf16.gmra.mxu0 %v2430
    %v7923 = vpop.f32.mrf.mxu0
    %v7924 = vadd.f32 %v7755, %v7923
    %v7925 = vpop.f32.mrf.mxu0
    %v7926 = vadd.f32 %v7757, %v7925
    %7927 = vmatmul.bf16.gmra.mxu0 %v2438
    %v7928 = vpop.f32.mrf.mxu0
    %v7929 = vadd.f32 %v7760, %v7928
    %v7930 = vpop.f32.mrf.mxu0
    %v7931 = vadd.f32 %v7762, %v7930
    %7932 = vmatmul.bf16.gmra.mxu0 %v2446
    %v7933 = vpop.f32.mrf.mxu0
    %v7934 = vadd.f32 %v7765, %v7933
    %v7935 = vpop.f32.mrf.mxu0
    %v7936 = vadd.f32 %v7767, %v7935
    %7937 = vmatmul.bf16.gmra.mxu0 %v2454
    %v7938 = vpop.f32.mrf.mxu0
    %v7939 = vadd.f32 %v7770, %v7938
    %v7940 = vpop.f32.mrf.mxu0
    %v7941 = vadd.f32 %v7772, %v7940
    %7942 = vmatmul.bf16.gmra.mxu0 %v2462
    %v7943 = vpop.f32.mrf.mxu0
    %v7944 = vadd.f32 %v7775, %v7943
    %v7945 = vpop.f32.mrf.mxu0
    %v7946 = vadd.f32 %v7777, %v7945
    %7947 = vmatmul.bf16.gmra.mxu0 %v2470
    %v7948 = vpop.f32.mrf.mxu0
    %v7949 = vadd.f32 %v7780, %v7948
    %v7950 = vpop.f32.mrf.mxu0
    %v7951 = vadd.f32 %v7782, %v7950
    %7952 = vmatmul.bf16.gmra.mxu0 %v2478
    %v7953 = vpop.f32.mrf.mxu0
    %v7954 = vadd.f32 %v7785, %v7953
    %v7955 = vpop.f32.mrf.mxu0
    %v7956 = vadd.f32 %v7787, %v7955
    %7957 = vmatmul.bf16.gmra.mxu0 %v2486
    %v7958 = vpop.f32.mrf.mxu0
    %v7959 = vadd.f32 %v7790, %v7958
    %v7960 = vpop.f32.mrf.mxu0
    %v7961 = vadd.f32 %v7792, %v7960
    %7962 = vmatmul.bf16.gmra.mxu0 %v2494
    %v7963 = vpop.f32.mrf.mxu0
    %v7964 = vadd.f32 %v7795, %v7963
    %v7965 = vpop.f32.mrf.mxu0
    %v7966 = vadd.f32 %v7797, %v7965
    %7967 = vmatmul.bf16.gmra.mxu0 %v2502
    %v7968 = vpop.f32.mrf.mxu0
    %v7969 = vadd.f32 %v7800, %v7968
    %v7970 = vpop.f32.mrf.mxu0
    %v7971 = vadd.f32 %v7802, %v7970
    %7972 = vmatmul.bf16.gmra.mxu0 %v2510
    %v7973 = vpop.f32.mrf.mxu0
    %v7974 = vadd.f32 %v7805, %v7973
    %v7975 = vpop.f32.mrf.mxu0
    %v7976 = vadd.f32 %v7807, %v7975
    %7977 = vmatmul.bf16.gmra.mxu0 %v2518
    %v7978 = vpop.f32.mrf.mxu0
    %v7979 = vadd.f32 %v7810, %v7978
    %v7980 = vpop.f32.mrf.mxu0
    %v7981 = vadd.f32 %v7812, %v7980
    %7982 = vmatmul.bf16.gmra.mxu0 %v2526
    %v7983 = vpop.f32.mrf.mxu0
    %v7984 = vadd.f32 %v7815, %v7983
    %v7985 = vpop.f32.mrf.mxu0
    %v7986 = vadd.f32 %v7817, %v7985
    %7987 = vmatmul.bf16.gmra.mxu0 %v2534
    %v7988 = vpop.f32.mrf.mxu0
    %v7989 = vadd.f32 %v7820, %v7988
    %v7990 = vpop.f32.mrf.mxu0
    %v7991 = vadd.f32 %v7822, %v7990
    %7992 = vmatmul.bf16.gmra.mxu0 %v2542
    %v7993 = vpop.f32.mrf.mxu0
    %v7994 = vadd.f32 %v7825, %v7993
    %v7995 = vpop.f32.mrf.mxu0
    %v7996 = vadd.f32 %v7827, %v7995
    %7997 = vmatmul.bf16.gmra.mxu0 %v2550
    %v7998 = vpop.f32.mrf.mxu0
    %v7999 = vadd.f32 %v7830, %v7998
    %v8000 = vpop.f32.mrf.mxu0
    %v8001 = vadd.f32 %v7832, %v8000
    %8002 = vmatmul.bf16.gmra.mxu0 %v2558
    %v8003 = vpop.f32.mrf.mxu0
    %v8004 = vadd.f32 %v7835, %v8003
    %v8005 = vpop.f32.mrf.mxu0
    %v8006 = vadd.f32 %v7837, %v8005
    %8007 = vmatmul.bf16.gmra.mxu0 %v2566
    %v8008 = vpop.f32.mrf.mxu0
    %v8009 = vadd.f32 %v7840, %v8008
    %v8010 = vpop.f32.mrf.mxu0
    %v8011 = vadd.f32 %v7842, %v8010
    %8012 = vmatmul.bf16.gmra.mxu0 %v2574
    %v8013 = vpop.f32.mrf.mxu0
    %v8014 = vadd.f32 %v7845, %v8013
    %v8015 = vpop.f32.mrf.mxu0
    %v8016 = vadd.f32 %v7847, %v8015
    %8017 = vmatmul.bf16.gmra.mxu0 %v2582
    %v8018 = vpop.f32.mrf.mxu0
    %v8019 = vadd.f32 %v7850, %v8018
    %v8020 = vpop.f32.mrf.mxu0
    %v8021 = vadd.f32 %v7852, %v8020
    %8022 = vmatmul.bf16.gmra.mxu0 %v2590
    %v8023 = vpop.f32.mrf.mxu0
    %v8024 = vadd.f32 %v7855, %v8023
    %v8025 = vpop.f32.mrf.mxu0
    %v8026 = vadd.f32 %v7857, %v8025
    %8027 = vmatmul.bf16.gmra.mxu0 %v2598
    %v8028 = vpop.f32.mrf.mxu0
    %v8029 = vadd.f32 %v7860, %v8028
    %v8030 = vpop.f32.mrf.mxu0
    %v8031 = vadd.f32 %v7862, %v8030
    %8032 = vdwg.mxu0
    %8033 = vmatpush.bf16.msra.mxu0 %v3888
    %8034 = vmatpush.bf16.msra.mxu0 %v3884
    %8035 = vmatpush.bf16.msra.mxu0 %v3880
    %8036 = vmatpush.bf16.msra.mxu0 %v3876
    %8037 = vmatpush.bf16.msra.mxu0 %v3872
    %8038 = vmatpush.bf16.msra.mxu0 %v3868
    %8039 = vmatpush.bf16.msra.mxu0 %v3864
    %8040 = vmatpush.bf16.msra.mxu0 %v3860
    %8041 = vmatmul.bf16.gmra.mxu0 %v2351
    %v8042 = vpop.f32.mrf.mxu0
    %v8043 = vadd.f32 %v7874, %v8042
    %v8044 = vpop.f32.mrf.mxu0
    %v8045 = vadd.f32 %v7876, %v8044
    %8046 = vmatmul.bf16.gmra.mxu0 %v2359
    %v8047 = vpop.f32.mrf.mxu0
    %v8048 = vadd.f32 %v7879, %v8047
    %v8049 = vpop.f32.mrf.mxu0
    %v8050 = vadd.f32 %v7881, %v8049
    %8051 = vmatmul.bf16.gmra.mxu0 %v2367
    %v8052 = vpop.f32.mrf.mxu0
    %v8053 = vadd.f32 %v7884, %v8052
    %v8054 = vpop.f32.mrf.mxu0
    %v8055 = vadd.f32 %v7886, %v8054
    %8056 = vmatmul.bf16.gmra.mxu0 %v2375
    %v8057 = vpop.f32.mrf.mxu0
    %v8058 = vadd.f32 %v7889, %v8057
    %v8059 = vpop.f32.mrf.mxu0
    %v8060 = vadd.f32 %v7891, %v8059
    %8061 = vmatmul.bf16.gmra.mxu0 %v2383
    %v8062 = vpop.f32.mrf.mxu0
    %v8063 = vadd.f32 %v7894, %v8062
    %v8064 = vpop.f32.mrf.mxu0
    %v8065 = vadd.f32 %v7896, %v8064
    %8066 = vmatmul.bf16.gmra.mxu0 %v2391
    %v8067 = vpop.f32.mrf.mxu0
    %v8068 = vadd.f32 %v7899, %v8067
    %v8069 = vpop.f32.mrf.mxu0
    %v8070 = vadd.f32 %v7901, %v8069
    %8071 = vmatmul.bf16.gmra.mxu0 %v2399
    %v8072 = vpop.f32.mrf.mxu0
    %v8073 = vadd.f32 %v7904, %v8072
    %v8074 = vpop.f32.mrf.mxu0
    %v8075 = vadd.f32 %v7906, %v8074
    %8076 = vmatmul.bf16.gmra.mxu0 %v2407
    %v8077 = vpop.f32.mrf.mxu0
    %v8078 = vadd.f32 %v7909, %v8077
    %v8079 = vpop.f32.mrf.mxu0
    %v8080 = vadd.f32 %v7911, %v8079
    %8081 = vmatmul.bf16.gmra.mxu0 %v2415
    %v8082 = vpop.f32.mrf.mxu0
    %v8083 = vadd.f32 %v7914, %v8082
    %v8084 = vpop.f32.mrf.mxu0
    %v8085 = vadd.f32 %v7916, %v8084
    %8086 = vmatmul.bf16.gmra.mxu0 %v2423
    %v8087 = vpop.f32.mrf.mxu0
    %v8088 = vadd.f32 %v7919, %v8087
    %v8089 = vpop.f32.mrf.mxu0
    %v8090 = vadd.f32 %v7921, %v8089
    %8091 = vmatmul.bf16.gmra.mxu0 %v2431
    %v8092 = vpop.f32.mrf.mxu0
    %v8093 = vadd.f32 %v7924, %v8092
    %v8094 = vpop.f32.mrf.mxu0
    %v8095 = vadd.f32 %v7926, %v8094
    %8096 = vmatmul.bf16.gmra.mxu0 %v2439
    %v8097 = vpop.f32.mrf.mxu0
    %v8098 = vadd.f32 %v7929, %v8097
    %v8099 = vpop.f32.mrf.mxu0
    %v8100 = vadd.f32 %v7931, %v8099
    %8101 = vmatmul.bf16.gmra.mxu0 %v2447
    %v8102 = vpop.f32.mrf.mxu0
    %v8103 = vadd.f32 %v7934, %v8102
    %v8104 = vpop.f32.mrf.mxu0
    %v8105 = vadd.f32 %v7936, %v8104
    %8106 = vmatmul.bf16.gmra.mxu0 %v2455
    %v8107 = vpop.f32.mrf.mxu0
    %v8108 = vadd.f32 %v7939, %v8107
    %v8109 = vpop.f32.mrf.mxu0
    %v8110 = vadd.f32 %v7941, %v8109
    %8111 = vmatmul.bf16.gmra.mxu0 %v2463
    %v8112 = vpop.f32.mrf.mxu0
    %v8113 = vadd.f32 %v7944, %v8112
    %v8114 = vpop.f32.mrf.mxu0
    %v8115 = vadd.f32 %v7946, %v8114
    %8116 = vmatmul.bf16.gmra.mxu0 %v2471
    %v8117 = vpop.f32.mrf.mxu0
    %v8118 = vadd.f32 %v7949, %v8117
    %v8119 = vpop.f32.mrf.mxu0
    %v8120 = vadd.f32 %v7951, %v8119
    %8121 = vmatmul.bf16.gmra.mxu0 %v2479
    %v8122 = vpop.f32.mrf.mxu0
    %v8123 = vadd.f32 %v7954, %v8122
    %v8124 = vpop.f32.mrf.mxu0
    %v8125 = vadd.f32 %v7956, %v8124
    %8126 = vmatmul.bf16.gmra.mxu0 %v2487
    %v8127 = vpop.f32.mrf.mxu0
    %v8128 = vadd.f32 %v7959, %v8127
    %v8129 = vpop.f32.mrf.mxu0
    %v8130 = vadd.f32 %v7961, %v8129
    %8131 = vmatmul.bf16.gmra.mxu0 %v2495
    %v8132 = vpop.f32.mrf.mxu0
    %v8133 = vadd.f32 %v7964, %v8132
    %v8134 = vpop.f32.mrf.mxu0
    %v8135 = vadd.f32 %v7966, %v8134
    %8136 = vmatmul.bf16.gmra.mxu0 %v2503
    %v8137 = vpop.f32.mrf.mxu0
    %v8138 = vadd.f32 %v7969, %v8137
    %v8139 = vpop.f32.mrf.mxu0
    %v8140 = vadd.f32 %v7971, %v8139
    %8141 = vmatmul.bf16.gmra.mxu0 %v2511
    %v8142 = vpop.f32.mrf.mxu0
    %v8143 = vadd.f32 %v7974, %v8142
    %v8144 = vpop.f32.mrf.mxu0
    %v8145 = vadd.f32 %v7976, %v8144
    %8146 = vmatmul.bf16.gmra.mxu0 %v2519
    %v8147 = vpop.f32.mrf.mxu0
    %v8148 = vadd.f32 %v7979, %v8147
    %v8149 = vpop.f32.mrf.mxu0
    %v8150 = vadd.f32 %v7981, %v8149
    %8151 = vmatmul.bf16.gmra.mxu0 %v2527
    %v8152 = vpop.f32.mrf.mxu0
    %v8153 = vadd.f32 %v7984, %v8152
    %v8154 = vpop.f32.mrf.mxu0
    %v8155 = vadd.f32 %v7986, %v8154
    %8156 = vmatmul.bf16.gmra.mxu0 %v2535
    %v8157 = vpop.f32.mrf.mxu0
    %v8158 = vadd.f32 %v7989, %v8157
    %v8159 = vpop.f32.mrf.mxu0
    %v8160 = vadd.f32 %v7991, %v8159
    %8161 = vmatmul.bf16.gmra.mxu0 %v2543
    %v8162 = vpop.f32.mrf.mxu0
    %v8163 = vadd.f32 %v7994, %v8162
    %v8164 = vpop.f32.mrf.mxu0
    %v8165 = vadd.f32 %v7996, %v8164
    %8166 = vmatmul.bf16.gmra.mxu0 %v2551
    %v8167 = vpop.f32.mrf.mxu0
    %v8168 = vadd.f32 %v7999, %v8167
    %v8169 = vpop.f32.mrf.mxu0
    %v8170 = vadd.f32 %v8001, %v8169
    %8171 = vmatmul.bf16.gmra.mxu0 %v2559
    %v8172 = vpop.f32.mrf.mxu0
    %v8173 = vadd.f32 %v8004, %v8172
    %v8174 = vpop.f32.mrf.mxu0
    %v8175 = vadd.f32 %v8006, %v8174
    %8176 = vmatmul.bf16.gmra.mxu0 %v2567
    %v8177 = vpop.f32.mrf.mxu0
    %v8178 = vadd.f32 %v8009, %v8177
    %v8179 = vpop.f32.mrf.mxu0
    %v8180 = vadd.f32 %v8011, %v8179
    %8181 = vmatmul.bf16.gmra.mxu0 %v2575
    %v8182 = vpop.f32.mrf.mxu0
    %v8183 = vadd.f32 %v8014, %v8182
    %v8184 = vpop.f32.mrf.mxu0
    %v8185 = vadd.f32 %v8016, %v8184
    %8186 = vmatmul.bf16.gmra.mxu0 %v2583
    %v8187 = vpop.f32.mrf.mxu0
    %v8188 = vadd.f32 %v8019, %v8187
    %v8189 = vpop.f32.mrf.mxu0
    %v8190 = vadd.f32 %v8021, %v8189
    %8191 = vmatmul.bf16.gmra.mxu0 %v2591
    %v8192 = vpop.f32.mrf.mxu0
    %v8193 = vadd.f32 %v8024, %v8192
    %v8194 = vpop.f32.mrf.mxu0
    %v8195 = vadd.f32 %v8026, %v8194
    %8196 = vmatmul.bf16.gmra.mxu0 %v2599
    %v8197 = vpop.f32.mrf.mxu0
    %v8198 = vadd.f32 %v8029, %v8197
    %v8199 = vpop.f32.mrf.mxu0
    %v8200 = vadd.f32 %v8031, %v8199
    %8201 = vdwg.mxu0
    %8202 = vmatpush.bf16.msra.mxu0 %v3665
    %8203 = vmatpush.bf16.msra.mxu0 %v3661
    %8204 = vmatpush.bf16.msra.mxu0 %v3657
    %8205 = vmatpush.bf16.msra.mxu0 %v3653
    %8206 = vmatpush.bf16.msra.mxu0 %v3649
    %8207 = vmatpush.bf16.msra.mxu0 %v3645
    %8208 = vmatpush.bf16.msra.mxu0 %v3641
    %8209 = vmatpush.bf16.msra.mxu0 %v3637
    %8210 = vmatmul.bf16.gmra.mxu0 %v2344
    %v8211 = vpop.f32.mrf.mxu0
    %v8212 = vadd.f32 %v2861, %v8211
    %v8213 = vpop.f32.mrf.mxu0
    %v8214 = vadd.f32 %v2861, %v8213
    %8215 = vmatmul.bf16.gmra.mxu0 %v2352
    %v8216 = vpop.f32.mrf.mxu0
    %v8217 = vadd.f32 %v2861, %v8216
    %v8218 = vpop.f32.mrf.mxu0
    %v8219 = vadd.f32 %v2861, %v8218
    %8220 = vmatmul.bf16.gmra.mxu0 %v2360
    %v8221 = vpop.f32.mrf.mxu0
    %v8222 = vadd.f32 %v2861, %v8221
    %v8223 = vpop.f32.mrf.mxu0
    %v8224 = vadd.f32 %v2861, %v8223
    %8225 = vmatmul.bf16.gmra.mxu0 %v2368
    %v8226 = vpop.f32.mrf.mxu0
    %v8227 = vadd.f32 %v2861, %v8226
    %v8228 = vpop.f32.mrf.mxu0
    %v8229 = vadd.f32 %v2861, %v8228
    %8230 = vmatmul.bf16.gmra.mxu0 %v2376
    %v8231 = vpop.f32.mrf.mxu0
    %v8232 = vadd.f32 %v2861, %v8231
    %v8233 = vpop.f32.mrf.mxu0
    %v8234 = vadd.f32 %v2861, %v8233
    %8235 = vmatmul.bf16.gmra.mxu0 %v2384
    %v8236 = vpop.f32.mrf.mxu0
    %v8237 = vadd.f32 %v2861, %v8236
    %v8238 = vpop.f32.mrf.mxu0
    %v8239 = vadd.f32 %v2861, %v8238
    %8240 = vmatmul.bf16.gmra.mxu0 %v2392
    %v8241 = vpop.f32.mrf.mxu0
    %v8242 = vadd.f32 %v2861, %v8241
    %v8243 = vpop.f32.mrf.mxu0
    %v8244 = vadd.f32 %v2861, %v8243
    %8245 = vmatmul.bf16.gmra.mxu0 %v2400
    %v8246 = vpop.f32.mrf.mxu0
    %v8247 = vadd.f32 %v2861, %v8246
    %v8248 = vpop.f32.mrf.mxu0
    %v8249 = vadd.f32 %v2861, %v8248
    %8250 = vmatmul.bf16.gmra.mxu0 %v2408
    %v8251 = vpop.f32.mrf.mxu0
    %v8252 = vadd.f32 %v2861, %v8251
    %v8253 = vpop.f32.mrf.mxu0
    %v8254 = vadd.f32 %v2861, %v8253
    %8255 = vmatmul.bf16.gmra.mxu0 %v2416
    %v8256 = vpop.f32.mrf.mxu0
    %v8257 = vadd.f32 %v2861, %v8256
    %v8258 = vpop.f32.mrf.mxu0
    %v8259 = vadd.f32 %v2861, %v8258
    %8260 = vmatmul.bf16.gmra.mxu0 %v2424
    %v8261 = vpop.f32.mrf.mxu0
    %v8262 = vadd.f32 %v2861, %v8261
    %v8263 = vpop.f32.mrf.mxu0
    %v8264 = vadd.f32 %v2861, %v8263
    %8265 = vmatmul.bf16.gmra.mxu0 %v2432
    %v8266 = vpop.f32.mrf.mxu0
    %v8267 = vadd.f32 %v2861, %v8266
    %v8268 = vpop.f32.mrf.mxu0
    %v8269 = vadd.f32 %v2861, %v8268
    %8270 = vmatmul.bf16.gmra.mxu0 %v2440
    %v8271 = vpop.f32.mrf.mxu0
    %v8272 = vadd.f32 %v2861, %v8271
    %v8273 = vpop.f32.mrf.mxu0
    %v8274 = vadd.f32 %v2861, %v8273
    %8275 = vmatmul.bf16.gmra.mxu0 %v2448
    %v8276 = vpop.f32.mrf.mxu0
    %v8277 = vadd.f32 %v2861, %v8276
    %v8278 = vpop.f32.mrf.mxu0
    %v8279 = vadd.f32 %v2861, %v8278
    %8280 = vmatmul.bf16.gmra.mxu0 %v2456
    %v8281 = vpop.f32.mrf.mxu0
    %v8282 = vadd.f32 %v2861, %v8281
    %v8283 = vpop.f32.mrf.mxu0
    %v8284 = vadd.f32 %v2861, %v8283
    %8285 = vmatmul.bf16.gmra.mxu0 %v2464
    %v8286 = vpop.f32.mrf.mxu0
    %v8287 = vadd.f32 %v2861, %v8286
    %v8288 = vpop.f32.mrf.mxu0
    %v8289 = vadd.f32 %v2861, %v8288
    %8290 = vmatmul.bf16.gmra.mxu0 %v2472
    %v8291 = vpop.f32.mrf.mxu0
    %v8292 = vadd.f32 %v2861, %v8291
    %v8293 = vpop.f32.mrf.mxu0
    %v8294 = vadd.f32 %v2861, %v8293
    %8295 = vmatmul.bf16.gmra.mxu0 %v2480
    %v8296 = vpop.f32.mrf.mxu0
    %v8297 = vadd.f32 %v2861, %v8296
    %v8298 = vpop.f32.mrf.mxu0
    %v8299 = vadd.f32 %v2861, %v8298
    %8300 = vmatmul.bf16.gmra.mxu0 %v2488
    %v8301 = vpop.f32.mrf.mxu0
    %v8302 = vadd.f32 %v2861, %v8301
    %v8303 = vpop.f32.mrf.mxu0
    %v8304 = vadd.f32 %v2861, %v8303
    %8305 = vmatmul.bf16.gmra.mxu0 %v2496
    %v8306 = vpop.f32.mrf.mxu0
    %v8307 = vadd.f32 %v2861, %v8306
    %v8308 = vpop.f32.mrf.mxu0
    %v8309 = vadd.f32 %v2861, %v8308
    %8310 = vmatmul.bf16.gmra.mxu0 %v2504
    %v8311 = vpop.f32.mrf.mxu0
    %v8312 = vadd.f32 %v2861, %v8311
    %v8313 = vpop.f32.mrf.mxu0
    %v8314 = vadd.f32 %v2861, %v8313
    %8315 = vmatmul.bf16.gmra.mxu0 %v2512
    %v8316 = vpop.f32.mrf.mxu0
    %v8317 = vadd.f32 %v2861, %v8316
    %v8318 = vpop.f32.mrf.mxu0
    %v8319 = vadd.f32 %v2861, %v8318
    %8320 = vmatmul.bf16.gmra.mxu0 %v2520
    %v8321 = vpop.f32.mrf.mxu0
    %v8322 = vadd.f32 %v2861, %v8321
    %v8323 = vpop.f32.mrf.mxu0
    %v8324 = vadd.f32 %v2861, %v8323
    %8325 = vmatmul.bf16.gmra.mxu0 %v2528
    %v8326 = vpop.f32.mrf.mxu0
    %v8327 = vadd.f32 %v2861, %v8326
    %v8328 = vpop.f32.mrf.mxu0
    %v8329 = vadd.f32 %v2861, %v8328
    %8330 = vmatmul.bf16.gmra.mxu0 %v2536
    %v8331 = vpop.f32.mrf.mxu0
    %v8332 = vadd.f32 %v2861, %v8331
    %v8333 = vpop.f32.mrf.mxu0
    %v8334 = vadd.f32 %v2861, %v8333
    %8335 = vmatmul.bf16.gmra.mxu0 %v2544
    %v8336 = vpop.f32.mrf.mxu0
    %v8337 = vadd.f32 %v2861, %v8336
    %v8338 = vpop.f32.mrf.mxu0
    %v8339 = vadd.f32 %v2861, %v8338
    %8340 = vmatmul.bf16.gmra.mxu0 %v2552
    %v8341 = vpop.f32.mrf.mxu0
    %v8342 = vadd.f32 %v2861, %v8341
    %v8343 = vpop.f32.mrf.mxu0
    %v8344 = vadd.f32 %v2861, %v8343
    %8345 = vmatmul.bf16.gmra.mxu0 %v2560
    %v8346 = vpop.f32.mrf.mxu0
    %v8347 = vadd.f32 %v2861, %v8346
    %v8348 = vpop.f32.mrf.mxu0
    %v8349 = vadd.f32 %v2861, %v8348
    %8350 = vmatmul.bf16.gmra.mxu0 %v2568
    %v8351 = vpop.f32.mrf.mxu0
    %v8352 = vadd.f32 %v2861, %v8351
    %v8353 = vpop.f32.mrf.mxu0
    %v8354 = vadd.f32 %v2861, %v8353
    %8355 = vmatmul.bf16.gmra.mxu0 %v2576
    %v8356 = vpop.f32.mrf.mxu0
    %v8357 = vadd.f32 %v2861, %v8356
    %v8358 = vpop.f32.mrf.mxu0
    %v8359 = vadd.f32 %v2861, %v8358
    %8360 = vmatmul.bf16.gmra.mxu0 %v2584
    %v8361 = vpop.f32.mrf.mxu0
    %v8362 = vadd.f32 %v2861, %v8361
    %v8363 = vpop.f32.mrf.mxu0
    %v8364 = vadd.f32 %v2861, %v8363
    %8365 = vmatmul.bf16.gmra.mxu0 %v2592
    %v8366 = vpop.f32.mrf.mxu0
    %v8367 = vadd.f32 %v2861, %v8366
    %v8368 = vpop.f32.mrf.mxu0
    %v8369 = vadd.f32 %v2861, %v8368
    %8370 = vdwg.mxu0
    %8371 = vmatpush.bf16.msra.mxu0 %v3697
    %8372 = vmatpush.bf16.msra.mxu0 %v3693
    %8373 = vmatpush.bf16.msra.mxu0 %v3689
    %8374 = vmatpush.bf16.msra.mxu0 %v3685
    %8375 = vmatpush.bf16.msra.mxu0 %v3681
    %8376 = vmatpush.bf16.msra.mxu0 %v3677
    %8377 = vmatpush.bf16.msra.mxu0 %v3673
    %8378 = vmatpush.bf16.msra.mxu0 %v3669
    %8379 = vmatmul.bf16.gmra.mxu0 %v2345
    %v8380 = vpop.f32.mrf.mxu0
    %v8381 = vadd.f32 %v8212, %v8380
    %v8382 = vpop.f32.mrf.mxu0
    %v8383 = vadd.f32 %v8214, %v8382
    %8384 = vmatmul.bf16.gmra.mxu0 %v2353
    %v8385 = vpop.f32.mrf.mxu0
    %v8386 = vadd.f32 %v8217, %v8385
    %v8387 = vpop.f32.mrf.mxu0
    %v8388 = vadd.f32 %v8219, %v8387
    %8389 = vmatmul.bf16.gmra.mxu0 %v2361
    %v8390 = vpop.f32.mrf.mxu0
    %v8391 = vadd.f32 %v8222, %v8390
    %v8392 = vpop.f32.mrf.mxu0
    %v8393 = vadd.f32 %v8224, %v8392
    %8394 = vmatmul.bf16.gmra.mxu0 %v2369
    %v8395 = vpop.f32.mrf.mxu0
    %v8396 = vadd.f32 %v8227, %v8395
    %v8397 = vpop.f32.mrf.mxu0
    %v8398 = vadd.f32 %v8229, %v8397
    %8399 = vmatmul.bf16.gmra.mxu0 %v2377
    %v8400 = vpop.f32.mrf.mxu0
    %v8401 = vadd.f32 %v8232, %v8400
    %v8402 = vpop.f32.mrf.mxu0
    %v8403 = vadd.f32 %v8234, %v8402
    %8404 = vmatmul.bf16.gmra.mxu0 %v2385
    %v8405 = vpop.f32.mrf.mxu0
    %v8406 = vadd.f32 %v8237, %v8405
    %v8407 = vpop.f32.mrf.mxu0
    %v8408 = vadd.f32 %v8239, %v8407
    %8409 = vmatmul.bf16.gmra.mxu0 %v2393
    %v8410 = vpop.f32.mrf.mxu0
    %v8411 = vadd.f32 %v8242, %v8410
    %v8412 = vpop.f32.mrf.mxu0
    %v8413 = vadd.f32 %v8244, %v8412
    %8414 = vmatmul.bf16.gmra.mxu0 %v2401
    %v8415 = vpop.f32.mrf.mxu0
    %v8416 = vadd.f32 %v8247, %v8415
    %v8417 = vpop.f32.mrf.mxu0
    %v8418 = vadd.f32 %v8249, %v8417
    %8419 = vmatmul.bf16.gmra.mxu0 %v2409
    %v8420 = vpop.f32.mrf.mxu0
    %v8421 = vadd.f32 %v8252, %v8420
    %v8422 = vpop.f32.mrf.mxu0
    %v8423 = vadd.f32 %v8254, %v8422
    %8424 = vmatmul.bf16.gmra.mxu0 %v2417
    %v8425 = vpop.f32.mrf.mxu0
    %v8426 = vadd.f32 %v8257, %v8425
    %v8427 = vpop.f32.mrf.mxu0
    %v8428 = vadd.f32 %v8259, %v8427
    %8429 = vmatmul.bf16.gmra.mxu0 %v2425
    %v8430 = vpop.f32.mrf.mxu0
    %v8431 = vadd.f32 %v8262, %v8430
    %v8432 = vpop.f32.mrf.mxu0
    %v8433 = vadd.f32 %v8264, %v8432
    %8434 = vmatmul.bf16.gmra.mxu0 %v2433
    %v8435 = vpop.f32.mrf.mxu0
    %v8436 = vadd.f32 %v8267, %v8435
    %v8437 = vpop.f32.mrf.mxu0
    %v8438 = vadd.f32 %v8269, %v8437
    %8439 = vmatmul.bf16.gmra.mxu0 %v2441
    %v8440 = vpop.f32.mrf.mxu0
    %v8441 = vadd.f32 %v8272, %v8440
    %v8442 = vpop.f32.mrf.mxu0
    %v8443 = vadd.f32 %v8274, %v8442
    %8444 = vmatmul.bf16.gmra.mxu0 %v2449
    %v8445 = vpop.f32.mrf.mxu0
    %v8446 = vadd.f32 %v8277, %v8445
    %v8447 = vpop.f32.mrf.mxu0
    %v8448 = vadd.f32 %v8279, %v8447
    %8449 = vmatmul.bf16.gmra.mxu0 %v2457
    %v8450 = vpop.f32.mrf.mxu0
    %v8451 = vadd.f32 %v8282, %v8450
    %v8452 = vpop.f32.mrf.mxu0
    %v8453 = vadd.f32 %v8284, %v8452
    %8454 = vmatmul.bf16.gmra.mxu0 %v2465
    %v8455 = vpop.f32.mrf.mxu0
    %v8456 = vadd.f32 %v8287, %v8455
    %v8457 = vpop.f32.mrf.mxu0
    %v8458 = vadd.f32 %v8289, %v8457
    %8459 = vmatmul.bf16.gmra.mxu0 %v2473
    %v8460 = vpop.f32.mrf.mxu0
    %v8461 = vadd.f32 %v8292, %v8460
    %v8462 = vpop.f32.mrf.mxu0
    %v8463 = vadd.f32 %v8294, %v8462
    %8464 = vmatmul.bf16.gmra.mxu0 %v2481
    %v8465 = vpop.f32.mrf.mxu0
    %v8466 = vadd.f32 %v8297, %v8465
    %v8467 = vpop.f32.mrf.mxu0
    %v8468 = vadd.f32 %v8299, %v8467
    %8469 = vmatmul.bf16.gmra.mxu0 %v2489
    %v8470 = vpop.f32.mrf.mxu0
    %v8471 = vadd.f32 %v8302, %v8470
    %v8472 = vpop.f32.mrf.mxu0
    %v8473 = vadd.f32 %v8304, %v8472
    %8474 = vmatmul.bf16.gmra.mxu0 %v2497
    %v8475 = vpop.f32.mrf.mxu0
    %v8476 = vadd.f32 %v8307, %v8475
    %v8477 = vpop.f32.mrf.mxu0
    %v8478 = vadd.f32 %v8309, %v8477
    %8479 = vmatmul.bf16.gmra.mxu0 %v2505
    %v8480 = vpop.f32.mrf.mxu0
    %v8481 = vadd.f32 %v8312, %v8480
    %v8482 = vpop.f32.mrf.mxu0
    %v8483 = vadd.f32 %v8314, %v8482
    %8484 = vmatmul.bf16.gmra.mxu0 %v2513
    %v8485 = vpop.f32.mrf.mxu0
    %v8486 = vadd.f32 %v8317, %v8485
    %v8487 = vpop.f32.mrf.mxu0
    %v8488 = vadd.f32 %v8319, %v8487
    %8489 = vmatmul.bf16.gmra.mxu0 %v2521
    %v8490 = vpop.f32.mrf.mxu0
    %v8491 = vadd.f32 %v8322, %v8490
    %v8492 = vpop.f32.mrf.mxu0
    %v8493 = vadd.f32 %v8324, %v8492
    %8494 = vmatmul.bf16.gmra.mxu0 %v2529
    %v8495 = vpop.f32.mrf.mxu0
    %v8496 = vadd.f32 %v8327, %v8495
    %v8497 = vpop.f32.mrf.mxu0
    %v8498 = vadd.f32 %v8329, %v8497
    %8499 = vmatmul.bf16.gmra.mxu0 %v2537
    %v8500 = vpop.f32.mrf.mxu0
    %v8501 = vadd.f32 %v8332, %v8500
    %v8502 = vpop.f32.mrf.mxu0
    %v8503 = vadd.f32 %v8334, %v8502
    %8504 = vmatmul.bf16.gmra.mxu0 %v2545
    %v8505 = vpop.f32.mrf.mxu0
    %v8506 = vadd.f32 %v8337, %v8505
    %v8507 = vpop.f32.mrf.mxu0
    %v8508 = vadd.f32 %v8339, %v8507
    %8509 = vmatmul.bf16.gmra.mxu0 %v2553
    %v8510 = vpop.f32.mrf.mxu0
    %v8511 = vadd.f32 %v8342, %v8510
    %v8512 = vpop.f32.mrf.mxu0
    %v8513 = vadd.f32 %v8344, %v8512
    %8514 = vmatmul.bf16.gmra.mxu0 %v2561
    %v8515 = vpop.f32.mrf.mxu0
    %v8516 = vadd.f32 %v8347, %v8515
    %v8517 = vpop.f32.mrf.mxu0
    %v8518 = vadd.f32 %v8349, %v8517
    %8519 = vmatmul.bf16.gmra.mxu0 %v2569
    %v8520 = vpop.f32.mrf.mxu0
    %v8521 = vadd.f32 %v8352, %v8520
    %v8522 = vpop.f32.mrf.mxu0
    %v8523 = vadd.f32 %v8354, %v8522
    %8524 = vmatmul.bf16.gmra.mxu0 %v2577
    %v8525 = vpop.f32.mrf.mxu0
    %v8526 = vadd.f32 %v8357, %v8525
    %v8527 = vpop.f32.mrf.mxu0
    %v8528 = vadd.f32 %v8359, %v8527
    %8529 = vmatmul.bf16.gmra.mxu0 %v2585
    %v8530 = vpop.f32.mrf.mxu0
    %v8531 = vadd.f32 %v8362, %v8530
    %v8532 = vpop.f32.mrf.mxu0
    %v8533 = vadd.f32 %v8364, %v8532
    %8534 = vmatmul.bf16.gmra.mxu0 %v2593
    %v8535 = vpop.f32.mrf.mxu0
    %v8536 = vadd.f32 %v8367, %v8535
    %v8537 = vpop.f32.mrf.mxu0
    %v8538 = vadd.f32 %v8369, %v8537
    %8539 = vdwg.mxu0
    %8540 = vmatpush.bf16.msra.mxu0 %v3729
    %8541 = vmatpush.bf16.msra.mxu0 %v3725
    %8542 = vmatpush.bf16.msra.mxu0 %v3721
    %8543 = vmatpush.bf16.msra.mxu0 %v3717
    %8544 = vmatpush.bf16.msra.mxu0 %v3713
    %8545 = vmatpush.bf16.msra.mxu0 %v3709
    %8546 = vmatpush.bf16.msra.mxu0 %v3705
    %8547 = vmatpush.bf16.msra.mxu0 %v3701
    %8548 = vmatmul.bf16.gmra.mxu0 %v2346
    %v8549 = vpop.f32.mrf.mxu0
    %v8550 = vadd.f32 %v8381, %v8549
    %v8551 = vpop.f32.mrf.mxu0
    %v8552 = vadd.f32 %v8383, %v8551
    %8553 = vmatmul.bf16.gmra.mxu0 %v2354
    %v8554 = vpop.f32.mrf.mxu0
    %v8555 = vadd.f32 %v8386, %v8554
    %v8556 = vpop.f32.mrf.mxu0
    %v8557 = vadd.f32 %v8388, %v8556
    %8558 = vmatmul.bf16.gmra.mxu0 %v2362
    %v8559 = vpop.f32.mrf.mxu0
    %v8560 = vadd.f32 %v8391, %v8559
    %v8561 = vpop.f32.mrf.mxu0
    %v8562 = vadd.f32 %v8393, %v8561
    %8563 = vmatmul.bf16.gmra.mxu0 %v2370
    %v8564 = vpop.f32.mrf.mxu0
    %v8565 = vadd.f32 %v8396, %v8564
    %v8566 = vpop.f32.mrf.mxu0
    %v8567 = vadd.f32 %v8398, %v8566
    %8568 = vmatmul.bf16.gmra.mxu0 %v2378
    %v8569 = vpop.f32.mrf.mxu0
    %v8570 = vadd.f32 %v8401, %v8569
    %v8571 = vpop.f32.mrf.mxu0
    %v8572 = vadd.f32 %v8403, %v8571
    %8573 = vmatmul.bf16.gmra.mxu0 %v2386
    %v8574 = vpop.f32.mrf.mxu0
    %v8575 = vadd.f32 %v8406, %v8574
    %v8576 = vpop.f32.mrf.mxu0
    %v8577 = vadd.f32 %v8408, %v8576
    %8578 = vmatmul.bf16.gmra.mxu0 %v2394
    %v8579 = vpop.f32.mrf.mxu0
    %v8580 = vadd.f32 %v8411, %v8579
    %v8581 = vpop.f32.mrf.mxu0
    %v8582 = vadd.f32 %v8413, %v8581
    %8583 = vmatmul.bf16.gmra.mxu0 %v2402
    %v8584 = vpop.f32.mrf.mxu0
    %v8585 = vadd.f32 %v8416, %v8584
    %v8586 = vpop.f32.mrf.mxu0
    %v8587 = vadd.f32 %v8418, %v8586
    %8588 = vmatmul.bf16.gmra.mxu0 %v2410
    %v8589 = vpop.f32.mrf.mxu0
    %v8590 = vadd.f32 %v8421, %v8589
    %v8591 = vpop.f32.mrf.mxu0
    %v8592 = vadd.f32 %v8423, %v8591
    %8593 = vmatmul.bf16.gmra.mxu0 %v2418
    %v8594 = vpop.f32.mrf.mxu0
    %v8595 = vadd.f32 %v8426, %v8594
    %v8596 = vpop.f32.mrf.mxu0
    %v8597 = vadd.f32 %v8428, %v8596
    %8598 = vmatmul.bf16.gmra.mxu0 %v2426
    %v8599 = vpop.f32.mrf.mxu0
    %v8600 = vadd.f32 %v8431, %v8599
    %v8601 = vpop.f32.mrf.mxu0
    %v8602 = vadd.f32 %v8433, %v8601
    %8603 = vmatmul.bf16.gmra.mxu0 %v2434
    %v8604 = vpop.f32.mrf.mxu0
    %v8605 = vadd.f32 %v8436, %v8604
    %v8606 = vpop.f32.mrf.mxu0
    %v8607 = vadd.f32 %v8438, %v8606
    %8608 = vmatmul.bf16.gmra.mxu0 %v2442
    %v8609 = vpop.f32.mrf.mxu0
    %v8610 = vadd.f32 %v8441, %v8609
    %v8611 = vpop.f32.mrf.mxu0
    %v8612 = vadd.f32 %v8443, %v8611
    %8613 = vmatmul.bf16.gmra.mxu0 %v2450
    %v8614 = vpop.f32.mrf.mxu0
    %v8615 = vadd.f32 %v8446, %v8614
    %v8616 = vpop.f32.mrf.mxu0
    %v8617 = vadd.f32 %v8448, %v8616
    %8618 = vmatmul.bf16.gmra.mxu0 %v2458
    %v8619 = vpop.f32.mrf.mxu0
    %v8620 = vadd.f32 %v8451, %v8619
    %v8621 = vpop.f32.mrf.mxu0
    %v8622 = vadd.f32 %v8453, %v8621
    %8623 = vmatmul.bf16.gmra.mxu0 %v2466
    %v8624 = vpop.f32.mrf.mxu0
    %v8625 = vadd.f32 %v8456, %v8624
    %v8626 = vpop.f32.mrf.mxu0
    %v8627 = vadd.f32 %v8458, %v8626
    %8628 = vmatmul.bf16.gmra.mxu0 %v2474
    %v8629 = vpop.f32.mrf.mxu0
    %v8630 = vadd.f32 %v8461, %v8629
    %v8631 = vpop.f32.mrf.mxu0
    %v8632 = vadd.f32 %v8463, %v8631
    %8633 = vmatmul.bf16.gmra.mxu0 %v2482
    %v8634 = vpop.f32.mrf.mxu0
    %v8635 = vadd.f32 %v8466, %v8634
    %v8636 = vpop.f32.mrf.mxu0
    %v8637 = vadd.f32 %v8468, %v8636
    %8638 = vmatmul.bf16.gmra.mxu0 %v2490
    %v8639 = vpop.f32.mrf.mxu0
    %v8640 = vadd.f32 %v8471, %v8639
    %v8641 = vpop.f32.mrf.mxu0
    %v8642 = vadd.f32 %v8473, %v8641
    %8643 = vmatmul.bf16.gmra.mxu0 %v2498
    %v8644 = vpop.f32.mrf.mxu0
    %v8645 = vadd.f32 %v8476, %v8644
    %v8646 = vpop.f32.mrf.mxu0
    %v8647 = vadd.f32 %v8478, %v8646
    %8648 = vmatmul.bf16.gmra.mxu0 %v2506
    %v8649 = vpop.f32.mrf.mxu0
    %v8650 = vadd.f32 %v8481, %v8649
    %v8651 = vpop.f32.mrf.mxu0
    %v8652 = vadd.f32 %v8483, %v8651
    %8653 = vmatmul.bf16.gmra.mxu0 %v2514
    %v8654 = vpop.f32.mrf.mxu0
    %v8655 = vadd.f32 %v8486, %v8654
    %v8656 = vpop.f32.mrf.mxu0
    %v8657 = vadd.f32 %v8488, %v8656
    %8658 = vmatmul.bf16.gmra.mxu0 %v2522
    %v8659 = vpop.f32.mrf.mxu0
    %v8660 = vadd.f32 %v8491, %v8659
    %v8661 = vpop.f32.mrf.mxu0
    %v8662 = vadd.f32 %v8493, %v8661
    %8663 = vmatmul.bf16.gmra.mxu0 %v2530
    %v8664 = vpop.f32.mrf.mxu0
    %v8665 = vadd.f32 %v8496, %v8664
    %v8666 = vpop.f32.mrf.mxu0
    %v8667 = vadd.f32 %v8498, %v8666
    %8668 = vmatmul.bf16.gmra.mxu0 %v2538
    %v8669 = vpop.f32.mrf.mxu0
    %v8670 = vadd.f32 %v8501, %v8669
    %v8671 = vpop.f32.mrf.mxu0
    %v8672 = vadd.f32 %v8503, %v8671
    %8673 = vmatmul.bf16.gmra.mxu0 %v2546
    %v8674 = vpop.f32.mrf.mxu0
    %v8675 = vadd.f32 %v8506, %v8674
    %v8676 = vpop.f32.mrf.mxu0
    %v8677 = vadd.f32 %v8508, %v8676
    %8678 = vmatmul.bf16.gmra.mxu0 %v2554
    %v8679 = vpop.f32.mrf.mxu0
    %v8680 = vadd.f32 %v8511, %v8679
    %v8681 = vpop.f32.mrf.mxu0
    %v8682 = vadd.f32 %v8513, %v8681
    %8683 = vmatmul.bf16.gmra.mxu0 %v2562
    %v8684 = vpop.f32.mrf.mxu0
    %v8685 = vadd.f32 %v8516, %v8684
    %v8686 = vpop.f32.mrf.mxu0
    %v8687 = vadd.f32 %v8518, %v8686
    %8688 = vmatmul.bf16.gmra.mxu0 %v2570
    %v8689 = vpop.f32.mrf.mxu0
    %v8690 = vadd.f32 %v8521, %v8689
    %v8691 = vpop.f32.mrf.mxu0
    %v8692 = vadd.f32 %v8523, %v8691
    %8693 = vmatmul.bf16.gmra.mxu0 %v2578
    %v8694 = vpop.f32.mrf.mxu0
    %v8695 = vadd.f32 %v8526, %v8694
    %v8696 = vpop.f32.mrf.mxu0
    %v8697 = vadd.f32 %v8528, %v8696
    %8698 = vmatmul.bf16.gmra.mxu0 %v2586
    %v8699 = vpop.f32.mrf.mxu0
    %v8700 = vadd.f32 %v8531, %v8699
    %v8701 = vpop.f32.mrf.mxu0
    %v8702 = vadd.f32 %v8533, %v8701
    %8703 = vmatmul.bf16.gmra.mxu0 %v2594
    %v8704 = vpop.f32.mrf.mxu0
    %v8705 = vadd.f32 %v8536, %v8704
    %v8706 = vpop.f32.mrf.mxu0
    %v8707 = vadd.f32 %v8538, %v8706
    %8708 = vdwg.mxu0
    %8709 = vmatpush.bf16.msra.mxu0 %v3761
    %8710 = vmatpush.bf16.msra.mxu0 %v3757
    %8711 = vmatpush.bf16.msra.mxu0 %v3753
    %8712 = vmatpush.bf16.msra.mxu0 %v3749
    %8713 = vmatpush.bf16.msra.mxu0 %v3745
    %8714 = vmatpush.bf16.msra.mxu0 %v3741
    %8715 = vmatpush.bf16.msra.mxu0 %v3737
    %8716 = vmatpush.bf16.msra.mxu0 %v3733
    %8717 = vmatmul.bf16.gmra.mxu0 %v2347
    %v8718 = vpop.f32.mrf.mxu0
    %v8719 = vadd.f32 %v8550, %v8718
    %v8720 = vpop.f32.mrf.mxu0
    %v8721 = vadd.f32 %v8552, %v8720
    %8722 = vmatmul.bf16.gmra.mxu0 %v2355
    %v8723 = vpop.f32.mrf.mxu0
    %v8724 = vadd.f32 %v8555, %v8723
    %v8725 = vpop.f32.mrf.mxu0
    %v8726 = vadd.f32 %v8557, %v8725
    %8727 = vmatmul.bf16.gmra.mxu0 %v2363
    %v8728 = vpop.f32.mrf.mxu0
    %v8729 = vadd.f32 %v8560, %v8728
    %v8730 = vpop.f32.mrf.mxu0
    %v8731 = vadd.f32 %v8562, %v8730
    %8732 = vmatmul.bf16.gmra.mxu0 %v2371
    %v8733 = vpop.f32.mrf.mxu0
    %v8734 = vadd.f32 %v8565, %v8733
    %v8735 = vpop.f32.mrf.mxu0
    %v8736 = vadd.f32 %v8567, %v8735
    %8737 = vmatmul.bf16.gmra.mxu0 %v2379
    %v8738 = vpop.f32.mrf.mxu0
    %v8739 = vadd.f32 %v8570, %v8738
    %v8740 = vpop.f32.mrf.mxu0
    %v8741 = vadd.f32 %v8572, %v8740
    %8742 = vmatmul.bf16.gmra.mxu0 %v2387
    %v8743 = vpop.f32.mrf.mxu0
    %v8744 = vadd.f32 %v8575, %v8743
    %v8745 = vpop.f32.mrf.mxu0
    %v8746 = vadd.f32 %v8577, %v8745
    %8747 = vmatmul.bf16.gmra.mxu0 %v2395
    %v8748 = vpop.f32.mrf.mxu0
    %v8749 = vadd.f32 %v8580, %v8748
    %v8750 = vpop.f32.mrf.mxu0
    %v8751 = vadd.f32 %v8582, %v8750
    %8752 = vmatmul.bf16.gmra.mxu0 %v2403
    %v8753 = vpop.f32.mrf.mxu0
    %v8754 = vadd.f32 %v8585, %v8753
    %v8755 = vpop.f32.mrf.mxu0
    %v8756 = vadd.f32 %v8587, %v8755
    %8757 = vmatmul.bf16.gmra.mxu0 %v2411
    %v8758 = vpop.f32.mrf.mxu0
    %v8759 = vadd.f32 %v8590, %v8758
    %v8760 = vpop.f32.mrf.mxu0
    %v8761 = vadd.f32 %v8592, %v8760
    %8762 = vmatmul.bf16.gmra.mxu0 %v2419
    %v8763 = vpop.f32.mrf.mxu0
    %v8764 = vadd.f32 %v8595, %v8763
    %v8765 = vpop.f32.mrf.mxu0
    %v8766 = vadd.f32 %v8597, %v8765
    %8767 = vmatmul.bf16.gmra.mxu0 %v2427
    %v8768 = vpop.f32.mrf.mxu0
    %v8769 = vadd.f32 %v8600, %v8768
    %v8770 = vpop.f32.mrf.mxu0
    %v8771 = vadd.f32 %v8602, %v8770
    %8772 = vmatmul.bf16.gmra.mxu0 %v2435
    %v8773 = vpop.f32.mrf.mxu0
    %v8774 = vadd.f32 %v8605, %v8773
    %v8775 = vpop.f32.mrf.mxu0
    %v8776 = vadd.f32 %v8607, %v8775
    %8777 = vmatmul.bf16.gmra.mxu0 %v2443
    %v8778 = vpop.f32.mrf.mxu0
    %v8779 = vadd.f32 %v8610, %v8778
    %v8780 = vpop.f32.mrf.mxu0
    %v8781 = vadd.f32 %v8612, %v8780
    %8782 = vmatmul.bf16.gmra.mxu0 %v2451
    %v8783 = vpop.f32.mrf.mxu0
    %v8784 = vadd.f32 %v8615, %v8783
    %v8785 = vpop.f32.mrf.mxu0
    %v8786 = vadd.f32 %v8617, %v8785
    %8787 = vmatmul.bf16.gmra.mxu0 %v2459
    %v8788 = vpop.f32.mrf.mxu0
    %v8789 = vadd.f32 %v8620, %v8788
    %v8790 = vpop.f32.mrf.mxu0
    %v8791 = vadd.f32 %v8622, %v8790
    %8792 = vmatmul.bf16.gmra.mxu0 %v2467
    %v8793 = vpop.f32.mrf.mxu0
    %v8794 = vadd.f32 %v8625, %v8793
    %v8795 = vpop.f32.mrf.mxu0
    %v8796 = vadd.f32 %v8627, %v8795
    %8797 = vmatmul.bf16.gmra.mxu0 %v2475
    %v8798 = vpop.f32.mrf.mxu0
    %v8799 = vadd.f32 %v8630, %v8798
    %v8800 = vpop.f32.mrf.mxu0
    %v8801 = vadd.f32 %v8632, %v8800
    %8802 = vmatmul.bf16.gmra.mxu0 %v2483
    %v8803 = vpop.f32.mrf.mxu0
    %v8804 = vadd.f32 %v8635, %v8803
    %v8805 = vpop.f32.mrf.mxu0
    %v8806 = vadd.f32 %v8637, %v8805
    %8807 = vmatmul.bf16.gmra.mxu0 %v2491
    %v8808 = vpop.f32.mrf.mxu0
    %v8809 = vadd.f32 %v8640, %v8808
    %v8810 = vpop.f32.mrf.mxu0
    %v8811 = vadd.f32 %v8642, %v8810
    %8812 = vmatmul.bf16.gmra.mxu0 %v2499
    %v8813 = vpop.f32.mrf.mxu0
    %v8814 = vadd.f32 %v8645, %v8813
    %v8815 = vpop.f32.mrf.mxu0
    %v8816 = vadd.f32 %v8647, %v8815
    %8817 = vmatmul.bf16.gmra.mxu0 %v2507
    %v8818 = vpop.f32.mrf.mxu0
    %v8819 = vadd.f32 %v8650, %v8818
    %v8820 = vpop.f32.mrf.mxu0
    %v8821 = vadd.f32 %v8652, %v8820
    %8822 = vmatmul.bf16.gmra.mxu0 %v2515
    %v8823 = vpop.f32.mrf.mxu0
    %v8824 = vadd.f32 %v8655, %v8823
    %v8825 = vpop.f32.mrf.mxu0
    %v8826 = vadd.f32 %v8657, %v8825
    %8827 = vmatmul.bf16.gmra.mxu0 %v2523
    %v8828 = vpop.f32.mrf.mxu0
    %v8829 = vadd.f32 %v8660, %v8828
    %v8830 = vpop.f32.mrf.mxu0
    %v8831 = vadd.f32 %v8662, %v8830
    %8832 = vmatmul.bf16.gmra.mxu0 %v2531
    %v8833 = vpop.f32.mrf.mxu0
    %v8834 = vadd.f32 %v8665, %v8833
    %v8835 = vpop.f32.mrf.mxu0
    %v8836 = vadd.f32 %v8667, %v8835
    %8837 = vmatmul.bf16.gmra.mxu0 %v2539
    %v8838 = vpop.f32.mrf.mxu0
    %v8839 = vadd.f32 %v8670, %v8838
    %v8840 = vpop.f32.mrf.mxu0
    %v8841 = vadd.f32 %v8672, %v8840
    %8842 = vmatmul.bf16.gmra.mxu0 %v2547
    %v8843 = vpop.f32.mrf.mxu0
    %v8844 = vadd.f32 %v8675, %v8843
    %v8845 = vpop.f32.mrf.mxu0
    %v8846 = vadd.f32 %v8677, %v8845
    %8847 = vmatmul.bf16.gmra.mxu0 %v2555
    %v8848 = vpop.f32.mrf.mxu0
    %v8849 = vadd.f32 %v8680, %v8848
    %v8850 = vpop.f32.mrf.mxu0
    %v8851 = vadd.f32 %v8682, %v8850
    %8852 = vmatmul.bf16.gmra.mxu0 %v2563
    %v8853 = vpop.f32.mrf.mxu0
    %v8854 = vadd.f32 %v8685, %v8853
    %v8855 = vpop.f32.mrf.mxu0
    %v8856 = vadd.f32 %v8687, %v8855
    %8857 = vmatmul.bf16.gmra.mxu0 %v2571
    %v8858 = vpop.f32.mrf.mxu0
    %v8859 = vadd.f32 %v8690, %v8858
    %v8860 = vpop.f32.mrf.mxu0
    %v8861 = vadd.f32 %v8692, %v8860
    %8862 = vmatmul.bf16.gmra.mxu0 %v2579
    %v8863 = vpop.f32.mrf.mxu0
    %v8864 = vadd.f32 %v8695, %v8863
    %v8865 = vpop.f32.mrf.mxu0
    %v8866 = vadd.f32 %v8697, %v8865
    %8867 = vmatmul.bf16.gmra.mxu0 %v2587
    %v8868 = vpop.f32.mrf.mxu0
    %v8869 = vadd.f32 %v8700, %v8868
    %v8870 = vpop.f32.mrf.mxu0
    %v8871 = vadd.f32 %v8702, %v8870
    %8872 = vmatmul.bf16.gmra.mxu0 %v2595
    %v8873 = vpop.f32.mrf.mxu0
    %v8874 = vadd.f32 %v8705, %v8873
    %v8875 = vpop.f32.mrf.mxu0
    %v8876 = vadd.f32 %v8707, %v8875
    %8877 = vdwg.mxu0
    %8878 = vmatpush.bf16.msra.mxu0 %v3793
    %8879 = vmatpush.bf16.msra.mxu0 %v3789
    %8880 = vmatpush.bf16.msra.mxu0 %v3785
    %8881 = vmatpush.bf16.msra.mxu0 %v3781
    %8882 = vmatpush.bf16.msra.mxu0 %v3777
    %8883 = vmatpush.bf16.msra.mxu0 %v3773
    %8884 = vmatpush.bf16.msra.mxu0 %v3769
    %8885 = vmatpush.bf16.msra.mxu0 %v3765
    %8886 = vmatmul.bf16.gmra.mxu0 %v2348
    %v8887 = vpop.f32.mrf.mxu0
    %v8888 = vadd.f32 %v8719, %v8887
    %v8889 = vpop.f32.mrf.mxu0
    %v8890 = vadd.f32 %v8721, %v8889
    %8891 = vmatmul.bf16.gmra.mxu0 %v2356
    %v8892 = vpop.f32.mrf.mxu0
    %v8893 = vadd.f32 %v8724, %v8892
    %v8894 = vpop.f32.mrf.mxu0
    %v8895 = vadd.f32 %v8726, %v8894
    %8896 = vmatmul.bf16.gmra.mxu0 %v2364
    %v8897 = vpop.f32.mrf.mxu0
    %v8898 = vadd.f32 %v8729, %v8897
    %v8899 = vpop.f32.mrf.mxu0
    %v8900 = vadd.f32 %v8731, %v8899
    %8901 = vmatmul.bf16.gmra.mxu0 %v2372
    %v8902 = vpop.f32.mrf.mxu0
    %v8903 = vadd.f32 %v8734, %v8902
    %v8904 = vpop.f32.mrf.mxu0
    %v8905 = vadd.f32 %v8736, %v8904
    %8906 = vmatmul.bf16.gmra.mxu0 %v2380
    %v8907 = vpop.f32.mrf.mxu0
    %v8908 = vadd.f32 %v8739, %v8907
    %v8909 = vpop.f32.mrf.mxu0
    %v8910 = vadd.f32 %v8741, %v8909
    %8911 = vmatmul.bf16.gmra.mxu0 %v2388
    %v8912 = vpop.f32.mrf.mxu0
    %v8913 = vadd.f32 %v8744, %v8912
    %v8914 = vpop.f32.mrf.mxu0
    %v8915 = vadd.f32 %v8746, %v8914
    %8916 = vmatmul.bf16.gmra.mxu0 %v2396
    %v8917 = vpop.f32.mrf.mxu0
    %v8918 = vadd.f32 %v8749, %v8917
    %v8919 = vpop.f32.mrf.mxu0
    %v8920 = vadd.f32 %v8751, %v8919
    %8921 = vmatmul.bf16.gmra.mxu0 %v2404
    %v8922 = vpop.f32.mrf.mxu0
    %v8923 = vadd.f32 %v8754, %v8922
    %v8924 = vpop.f32.mrf.mxu0
    %v8925 = vadd.f32 %v8756, %v8924
    %8926 = vmatmul.bf16.gmra.mxu0 %v2412
    %v8927 = vpop.f32.mrf.mxu0
    %v8928 = vadd.f32 %v8759, %v8927
    %v8929 = vpop.f32.mrf.mxu0
    %v8930 = vadd.f32 %v8761, %v8929
    %8931 = vmatmul.bf16.gmra.mxu0 %v2420
    %v8932 = vpop.f32.mrf.mxu0
    %v8933 = vadd.f32 %v8764, %v8932
    %v8934 = vpop.f32.mrf.mxu0
    %v8935 = vadd.f32 %v8766, %v8934
    %8936 = vmatmul.bf16.gmra.mxu0 %v2428
    %v8937 = vpop.f32.mrf.mxu0
    %v8938 = vadd.f32 %v8769, %v8937
    %v8939 = vpop.f32.mrf.mxu0
    %v8940 = vadd.f32 %v8771, %v8939
    %8941 = vmatmul.bf16.gmra.mxu0 %v2436
    %v8942 = vpop.f32.mrf.mxu0
    %v8943 = vadd.f32 %v8774, %v8942
    %v8944 = vpop.f32.mrf.mxu0
    %v8945 = vadd.f32 %v8776, %v8944
    %8946 = vmatmul.bf16.gmra.mxu0 %v2444
    %v8947 = vpop.f32.mrf.mxu0
    %v8948 = vadd.f32 %v8779, %v8947
    %v8949 = vpop.f32.mrf.mxu0
    %v8950 = vadd.f32 %v8781, %v8949
    %8951 = vmatmul.bf16.gmra.mxu0 %v2452
    %v8952 = vpop.f32.mrf.mxu0
    %v8953 = vadd.f32 %v8784, %v8952
    %v8954 = vpop.f32.mrf.mxu0
    %v8955 = vadd.f32 %v8786, %v8954
    %8956 = vmatmul.bf16.gmra.mxu0 %v2460
    %v8957 = vpop.f32.mrf.mxu0
    %v8958 = vadd.f32 %v8789, %v8957
    %v8959 = vpop.f32.mrf.mxu0
    %v8960 = vadd.f32 %v8791, %v8959
    %8961 = vmatmul.bf16.gmra.mxu0 %v2468
    %v8962 = vpop.f32.mrf.mxu0
    %v8963 = vadd.f32 %v8794, %v8962
    %v8964 = vpop.f32.mrf.mxu0
    %v8965 = vadd.f32 %v8796, %v8964
    %8966 = vmatmul.bf16.gmra.mxu0 %v2476
    %v8967 = vpop.f32.mrf.mxu0
    %v8968 = vadd.f32 %v8799, %v8967
    %v8969 = vpop.f32.mrf.mxu0
    %v8970 = vadd.f32 %v8801, %v8969
    %8971 = vmatmul.bf16.gmra.mxu0 %v2484
    %v8972 = vpop.f32.mrf.mxu0
    %v8973 = vadd.f32 %v8804, %v8972
    %v8974 = vpop.f32.mrf.mxu0
    %v8975 = vadd.f32 %v8806, %v8974
    %8976 = vmatmul.bf16.gmra.mxu0 %v2492
    %v8977 = vpop.f32.mrf.mxu0
    %v8978 = vadd.f32 %v8809, %v8977
    %v8979 = vpop.f32.mrf.mxu0
    %v8980 = vadd.f32 %v8811, %v8979
    %8981 = vmatmul.bf16.gmra.mxu0 %v2500
    %v8982 = vpop.f32.mrf.mxu0
    %v8983 = vadd.f32 %v8814, %v8982
    %v8984 = vpop.f32.mrf.mxu0
    %v8985 = vadd.f32 %v8816, %v8984
    %8986 = vmatmul.bf16.gmra.mxu0 %v2508
    %v8987 = vpop.f32.mrf.mxu0
    %v8988 = vadd.f32 %v8819, %v8987
    %v8989 = vpop.f32.mrf.mxu0
    %v8990 = vadd.f32 %v8821, %v8989
    %8991 = vmatmul.bf16.gmra.mxu0 %v2516
    %v8992 = vpop.f32.mrf.mxu0
    %v8993 = vadd.f32 %v8824, %v8992
    %v8994 = vpop.f32.mrf.mxu0
    %v8995 = vadd.f32 %v8826, %v8994
    %8996 = vmatmul.bf16.gmra.mxu0 %v2524
    %v8997 = vpop.f32.mrf.mxu0
    %v8998 = vadd.f32 %v8829, %v8997
    %v8999 = vpop.f32.mrf.mxu0
    %v9000 = vadd.f32 %v8831, %v8999
    %9001 = vmatmul.bf16.gmra.mxu0 %v2532
    %v9002 = vpop.f32.mrf.mxu0
    %v9003 = vadd.f32 %v8834, %v9002
    %v9004 = vpop.f32.mrf.mxu0
    %v9005 = vadd.f32 %v8836, %v9004
    %9006 = vmatmul.bf16.gmra.mxu0 %v2540
    %v9007 = vpop.f32.mrf.mxu0
    %v9008 = vadd.f32 %v8839, %v9007
    %v9009 = vpop.f32.mrf.mxu0
    %v9010 = vadd.f32 %v8841, %v9009
    %9011 = vmatmul.bf16.gmra.mxu0 %v2548
    %v9012 = vpop.f32.mrf.mxu0
    %v9013 = vadd.f32 %v8844, %v9012
    %v9014 = vpop.f32.mrf.mxu0
    %v9015 = vadd.f32 %v8846, %v9014
    %9016 = vmatmul.bf16.gmra.mxu0 %v2556
    %v9017 = vpop.f32.mrf.mxu0
    %v9018 = vadd.f32 %v8849, %v9017
    %v9019 = vpop.f32.mrf.mxu0
    %v9020 = vadd.f32 %v8851, %v9019
    %9021 = vmatmul.bf16.gmra.mxu0 %v2564
    %v9022 = vpop.f32.mrf.mxu0
    %v9023 = vadd.f32 %v8854, %v9022
    %v9024 = vpop.f32.mrf.mxu0
    %v9025 = vadd.f32 %v8856, %v9024
    %9026 = vmatmul.bf16.gmra.mxu0 %v2572
    %v9027 = vpop.f32.mrf.mxu0
    %v9028 = vadd.f32 %v8859, %v9027
    %v9029 = vpop.f32.mrf.mxu0
    %v9030 = vadd.f32 %v8861, %v9029
    %9031 = vmatmul.bf16.gmra.mxu0 %v2580
    %v9032 = vpop.f32.mrf.mxu0
    %v9033 = vadd.f32 %v8864, %v9032
    %v9034 = vpop.f32.mrf.mxu0
    %v9035 = vadd.f32 %v8866, %v9034
    %9036 = vmatmul.bf16.gmra.mxu0 %v2588
    %v9037 = vpop.f32.mrf.mxu0
    %v9038 = vadd.f32 %v8869, %v9037
    %v9039 = vpop.f32.mrf.mxu0
    %v9040 = vadd.f32 %v8871, %v9039
    %9041 = vmatmul.bf16.gmra.mxu0 %v2596
    %v9042 = vpop.f32.mrf.mxu0
    %v9043 = vadd.f32 %v8874, %v9042
    %v9044 = vpop.f32.mrf.mxu0
    %v9045 = vadd.f32 %v8876, %v9044
    %9046 = vdwg.mxu0
    %9047 = vmatpush.bf16.msra.mxu0 %v3825
    %9048 = vmatpush.bf16.msra.mxu0 %v3821
    %9049 = vmatpush.bf16.msra.mxu0 %v3817
    %9050 = vmatpush.bf16.msra.mxu0 %v3813
    %9051 = vmatpush.bf16.msra.mxu0 %v3809
    %9052 = vmatpush.bf16.msra.mxu0 %v3805
    %9053 = vmatpush.bf16.msra.mxu0 %v3801
    %9054 = vmatpush.bf16.msra.mxu0 %v3797
    %9055 = vmatmul.bf16.gmra.mxu0 %v2349
    %v9056 = vpop.f32.mrf.mxu0
    %v9057 = vadd.f32 %v8888, %v9056
    %v9058 = vpop.f32.mrf.mxu0
    %v9059 = vadd.f32 %v8890, %v9058
    %9060 = vmatmul.bf16.gmra.mxu0 %v2357
    %v9061 = vpop.f32.mrf.mxu0
    %v9062 = vadd.f32 %v8893, %v9061
    %v9063 = vpop.f32.mrf.mxu0
    %v9064 = vadd.f32 %v8895, %v9063
    %9065 = vmatmul.bf16.gmra.mxu0 %v2365
    %v9066 = vpop.f32.mrf.mxu0
    %v9067 = vadd.f32 %v8898, %v9066
    %v9068 = vpop.f32.mrf.mxu0
    %v9069 = vadd.f32 %v8900, %v9068
    %9070 = vmatmul.bf16.gmra.mxu0 %v2373
    %v9071 = vpop.f32.mrf.mxu0
    %v9072 = vadd.f32 %v8903, %v9071
    %v9073 = vpop.f32.mrf.mxu0
    %v9074 = vadd.f32 %v8905, %v9073
    %9075 = vmatmul.bf16.gmra.mxu0 %v2381
    %v9076 = vpop.f32.mrf.mxu0
    %v9077 = vadd.f32 %v8908, %v9076
    %v9078 = vpop.f32.mrf.mxu0
    %v9079 = vadd.f32 %v8910, %v9078
    %9080 = vmatmul.bf16.gmra.mxu0 %v2389
    %v9081 = vpop.f32.mrf.mxu0
    %v9082 = vadd.f32 %v8913, %v9081
    %v9083 = vpop.f32.mrf.mxu0
    %v9084 = vadd.f32 %v8915, %v9083
    %9085 = vmatmul.bf16.gmra.mxu0 %v2397
    %v9086 = vpop.f32.mrf.mxu0
    %v9087 = vadd.f32 %v8918, %v9086
    %v9088 = vpop.f32.mrf.mxu0
    %v9089 = vadd.f32 %v8920, %v9088
    %9090 = vmatmul.bf16.gmra.mxu0 %v2405
    %v9091 = vpop.f32.mrf.mxu0
    %v9092 = vadd.f32 %v8923, %v9091
    %v9093 = vpop.f32.mrf.mxu0
    %v9094 = vadd.f32 %v8925, %v9093
    %9095 = vmatmul.bf16.gmra.mxu0 %v2413
    %v9096 = vpop.f32.mrf.mxu0
    %v9097 = vadd.f32 %v8928, %v9096
    %v9098 = vpop.f32.mrf.mxu0
    %v9099 = vadd.f32 %v8930, %v9098
    %9100 = vmatmul.bf16.gmra.mxu0 %v2421
    %v9101 = vpop.f32.mrf.mxu0
    %v9102 = vadd.f32 %v8933, %v9101
    %v9103 = vpop.f32.mrf.mxu0
    %v9104 = vadd.f32 %v8935, %v9103
    %9105 = vmatmul.bf16.gmra.mxu0 %v2429
    %v9106 = vpop.f32.mrf.mxu0
    %v9107 = vadd.f32 %v8938, %v9106
    %v9108 = vpop.f32.mrf.mxu0
    %v9109 = vadd.f32 %v8940, %v9108
    %9110 = vmatmul.bf16.gmra.mxu0 %v2437
    %v9111 = vpop.f32.mrf.mxu0
    %v9112 = vadd.f32 %v8943, %v9111
    %v9113 = vpop.f32.mrf.mxu0
    %v9114 = vadd.f32 %v8945, %v9113
    %9115 = vmatmul.bf16.gmra.mxu0 %v2445
    %v9116 = vpop.f32.mrf.mxu0
    %v9117 = vadd.f32 %v8948, %v9116
    %v9118 = vpop.f32.mrf.mxu0
    %v9119 = vadd.f32 %v8950, %v9118
    %9120 = vmatmul.bf16.gmra.mxu0 %v2453
    %v9121 = vpop.f32.mrf.mxu0
    %v9122 = vadd.f32 %v8953, %v9121
    %v9123 = vpop.f32.mrf.mxu0
    %v9124 = vadd.f32 %v8955, %v9123
    %9125 = vmatmul.bf16.gmra.mxu0 %v2461
    %v9126 = vpop.f32.mrf.mxu0
    %v9127 = vadd.f32 %v8958, %v9126
    %v9128 = vpop.f32.mrf.mxu0
    %v9129 = vadd.f32 %v8960, %v9128
    %9130 = vmatmul.bf16.gmra.mxu0 %v2469
    %v9131 = vpop.f32.mrf.mxu0
    %v9132 = vadd.f32 %v8963, %v9131
    %v9133 = vpop.f32.mrf.mxu0
    %v9134 = vadd.f32 %v8965, %v9133
    %9135 = vmatmul.bf16.gmra.mxu0 %v2477
    %v9136 = vpop.f32.mrf.mxu0
    %v9137 = vadd.f32 %v8968, %v9136
    %v9138 = vpop.f32.mrf.mxu0
    %v9139 = vadd.f32 %v8970, %v9138
    %9140 = vmatmul.bf16.gmra.mxu0 %v2485
    %v9141 = vpop.f32.mrf.mxu0
    %v9142 = vadd.f32 %v8973, %v9141
    %v9143 = vpop.f32.mrf.mxu0
    %v9144 = vadd.f32 %v8975, %v9143
    %9145 = vmatmul.bf16.gmra.mxu0 %v2493
    %v9146 = vpop.f32.mrf.mxu0
    %v9147 = vadd.f32 %v8978, %v9146
    %v9148 = vpop.f32.mrf.mxu0
    %v9149 = vadd.f32 %v8980, %v9148
    %9150 = vmatmul.bf16.gmra.mxu0 %v2501
    %v9151 = vpop.f32.mrf.mxu0
    %v9152 = vadd.f32 %v8983, %v9151
    %v9153 = vpop.f32.mrf.mxu0
    %v9154 = vadd.f32 %v8985, %v9153
    %9155 = vmatmul.bf16.gmra.mxu0 %v2509
    %v9156 = vpop.f32.mrf.mxu0
    %v9157 = vadd.f32 %v8988, %v9156
    %v9158 = vpop.f32.mrf.mxu0
    %v9159 = vadd.f32 %v8990, %v9158
    %9160 = vmatmul.bf16.gmra.mxu0 %v2517
    %v9161 = vpop.f32.mrf.mxu0
    %v9162 = vadd.f32 %v8993, %v9161
    %v9163 = vpop.f32.mrf.mxu0
    %v9164 = vadd.f32 %v8995, %v9163
    %9165 = vmatmul.bf16.gmra.mxu0 %v2525
    %v9166 = vpop.f32.mrf.mxu0
    %v9167 = vadd.f32 %v8998, %v9166
    %v9168 = vpop.f32.mrf.mxu0
    %v9169 = vadd.f32 %v9000, %v9168
    %9170 = vmatmul.bf16.gmra.mxu0 %v2533
    %v9171 = vpop.f32.mrf.mxu0
    %v9172 = vadd.f32 %v9003, %v9171
    %v9173 = vpop.f32.mrf.mxu0
    %v9174 = vadd.f32 %v9005, %v9173
    %9175 = vmatmul.bf16.gmra.mxu0 %v2541
    %v9176 = vpop.f32.mrf.mxu0
    %v9177 = vadd.f32 %v9008, %v9176
    %v9178 = vpop.f32.mrf.mxu0
    %v9179 = vadd.f32 %v9010, %v9178
    %9180 = vmatmul.bf16.gmra.mxu0 %v2549
    %v9181 = vpop.f32.mrf.mxu0
    %v9182 = vadd.f32 %v9013, %v9181
    %v9183 = vpop.f32.mrf.mxu0
    %v9184 = vadd.f32 %v9015, %v9183
    %9185 = vmatmul.bf16.gmra.mxu0 %v2557
    %v9186 = vpop.f32.mrf.mxu0
    %v9187 = vadd.f32 %v9018, %v9186
    %v9188 = vpop.f32.mrf.mxu0
    %v9189 = vadd.f32 %v9020, %v9188
    %9190 = vmatmul.bf16.gmra.mxu0 %v2565
    %v9191 = vpop.f32.mrf.mxu0
    %v9192 = vadd.f32 %v9023, %v9191
    %v9193 = vpop.f32.mrf.mxu0
    %v9194 = vadd.f32 %v9025, %v9193
    %9195 = vmatmul.bf16.gmra.mxu0 %v2573
    %v9196 = vpop.f32.mrf.mxu0
    %v9197 = vadd.f32 %v9028, %v9196
    %v9198 = vpop.f32.mrf.mxu0
    %v9199 = vadd.f32 %v9030, %v9198
    %9200 = vmatmul.bf16.gmra.mxu0 %v2581
    %v9201 = vpop.f32.mrf.mxu0
    %v9202 = vadd.f32 %v9033, %v9201
    %v9203 = vpop.f32.mrf.mxu0
    %v9204 = vadd.f32 %v9035, %v9203
    %9205 = vmatmul.bf16.gmra.mxu0 %v2589
    %v9206 = vpop.f32.mrf.mxu0
    %v9207 = vadd.f32 %v9038, %v9206
    %v9208 = vpop.f32.mrf.mxu0
    %v9209 = vadd.f32 %v9040, %v9208
    %9210 = vmatmul.bf16.gmra.mxu0 %v2597
    %v9211 = vpop.f32.mrf.mxu0
    %v9212 = vadd.f32 %v9043, %v9211
    %v9213 = vpop.f32.mrf.mxu0
    %v9214 = vadd.f32 %v9045, %v9213
    %9215 = vdwg.mxu0
    %9216 = vmatpush.bf16.msra.mxu0 %v3857
    %9217 = vmatpush.bf16.msra.mxu0 %v3853
    %9218 = vmatpush.bf16.msra.mxu0 %v3849
    %9219 = vmatpush.bf16.msra.mxu0 %v3845
    %9220 = vmatpush.bf16.msra.mxu0 %v3841
    %9221 = vmatpush.bf16.msra.mxu0 %v3837
    %9222 = vmatpush.bf16.msra.mxu0 %v3833
    %9223 = vmatpush.bf16.msra.mxu0 %v3829
    %9224 = vmatmul.bf16.gmra.mxu0 %v2350
    %v9225 = vpop.f32.mrf.mxu0
    %v9226 = vadd.f32 %v9057, %v9225
    %v9227 = vpop.f32.mrf.mxu0
    %v9228 = vadd.f32 %v9059, %v9227
    %9229 = vmatmul.bf16.gmra.mxu0 %v2358
    %v9230 = vpop.f32.mrf.mxu0
    %v9231 = vadd.f32 %v9062, %v9230
    %v9232 = vpop.f32.mrf.mxu0
    %v9233 = vadd.f32 %v9064, %v9232
    %9234 = vmatmul.bf16.gmra.mxu0 %v2366
    %v9235 = vpop.f32.mrf.mxu0
    %v9236 = vadd.f32 %v9067, %v9235
    %v9237 = vpop.f32.mrf.mxu0
    %v9238 = vadd.f32 %v9069, %v9237
    %9239 = vmatmul.bf16.gmra.mxu0 %v2374
    %v9240 = vpop.f32.mrf.mxu0
    %v9241 = vadd.f32 %v9072, %v9240
    %v9242 = vpop.f32.mrf.mxu0
    %v9243 = vadd.f32 %v9074, %v9242
    %9244 = vmatmul.bf16.gmra.mxu0 %v2382
    %v9245 = vpop.f32.mrf.mxu0
    %v9246 = vadd.f32 %v9077, %v9245
    %v9247 = vpop.f32.mrf.mxu0
    %v9248 = vadd.f32 %v9079, %v9247
    %9249 = vmatmul.bf16.gmra.mxu0 %v2390
    %v9250 = vpop.f32.mrf.mxu0
    %v9251 = vadd.f32 %v9082, %v9250
    %v9252 = vpop.f32.mrf.mxu0
    %v9253 = vadd.f32 %v9084, %v9252
    %9254 = vmatmul.bf16.gmra.mxu0 %v2398
    %v9255 = vpop.f32.mrf.mxu0
    %v9256 = vadd.f32 %v9087, %v9255
    %v9257 = vpop.f32.mrf.mxu0
    %v9258 = vadd.f32 %v9089, %v9257
    %9259 = vmatmul.bf16.gmra.mxu0 %v2406
    %v9260 = vpop.f32.mrf.mxu0
    %v9261 = vadd.f32 %v9092, %v9260
    %v9262 = vpop.f32.mrf.mxu0
    %v9263 = vadd.f32 %v9094, %v9262
    %9264 = vmatmul.bf16.gmra.mxu0 %v2414
    %v9265 = vpop.f32.mrf.mxu0
    %v9266 = vadd.f32 %v9097, %v9265
    %v9267 = vpop.f32.mrf.mxu0
    %v9268 = vadd.f32 %v9099, %v9267
    %9269 = vmatmul.bf16.gmra.mxu0 %v2422
    %v9270 = vpop.f32.mrf.mxu0
    %v9271 = vadd.f32 %v9102, %v9270
    %v9272 = vpop.f32.mrf.mxu0
    %v9273 = vadd.f32 %v9104, %v9272
    %9274 = vmatmul.bf16.gmra.mxu0 %v2430
    %v9275 = vpop.f32.mrf.mxu0
    %v9276 = vadd.f32 %v9107, %v9275
    %v9277 = vpop.f32.mrf.mxu0
    %v9278 = vadd.f32 %v9109, %v9277
    %9279 = vmatmul.bf16.gmra.mxu0 %v2438
    %v9280 = vpop.f32.mrf.mxu0
    %v9281 = vadd.f32 %v9112, %v9280
    %v9282 = vpop.f32.mrf.mxu0
    %v9283 = vadd.f32 %v9114, %v9282
    %9284 = vmatmul.bf16.gmra.mxu0 %v2446
    %v9285 = vpop.f32.mrf.mxu0
    %v9286 = vadd.f32 %v9117, %v9285
    %v9287 = vpop.f32.mrf.mxu0
    %v9288 = vadd.f32 %v9119, %v9287
    %9289 = vmatmul.bf16.gmra.mxu0 %v2454
    %v9290 = vpop.f32.mrf.mxu0
    %v9291 = vadd.f32 %v9122, %v9290
    %v9292 = vpop.f32.mrf.mxu0
    %v9293 = vadd.f32 %v9124, %v9292
    %9294 = vmatmul.bf16.gmra.mxu0 %v2462
    %v9295 = vpop.f32.mrf.mxu0
    %v9296 = vadd.f32 %v9127, %v9295
    %v9297 = vpop.f32.mrf.mxu0
    %v9298 = vadd.f32 %v9129, %v9297
    %9299 = vmatmul.bf16.gmra.mxu0 %v2470
    %v9300 = vpop.f32.mrf.mxu0
    %v9301 = vadd.f32 %v9132, %v9300
    %v9302 = vpop.f32.mrf.mxu0
    %v9303 = vadd.f32 %v9134, %v9302
    %9304 = vmatmul.bf16.gmra.mxu0 %v2478
    %v9305 = vpop.f32.mrf.mxu0
    %v9306 = vadd.f32 %v9137, %v9305
    %v9307 = vpop.f32.mrf.mxu0
    %v9308 = vadd.f32 %v9139, %v9307
    %9309 = vmatmul.bf16.gmra.mxu0 %v2486
    %v9310 = vpop.f32.mrf.mxu0
    %v9311 = vadd.f32 %v9142, %v9310
    %v9312 = vpop.f32.mrf.mxu0
    %v9313 = vadd.f32 %v9144, %v9312
    %9314 = vmatmul.bf16.gmra.mxu0 %v2494
    %v9315 = vpop.f32.mrf.mxu0
    %v9316 = vadd.f32 %v9147, %v9315
    %v9317 = vpop.f32.mrf.mxu0
    %v9318 = vadd.f32 %v9149, %v9317
    %9319 = vmatmul.bf16.gmra.mxu0 %v2502
    %v9320 = vpop.f32.mrf.mxu0
    %v9321 = vadd.f32 %v9152, %v9320
    %v9322 = vpop.f32.mrf.mxu0
    %v9323 = vadd.f32 %v9154, %v9322
    %9324 = vmatmul.bf16.gmra.mxu0 %v2510
    %v9325 = vpop.f32.mrf.mxu0
    %v9326 = vadd.f32 %v9157, %v9325
    %v9327 = vpop.f32.mrf.mxu0
    %v9328 = vadd.f32 %v9159, %v9327
    %9329 = vmatmul.bf16.gmra.mxu0 %v2518
    %v9330 = vpop.f32.mrf.mxu0
    %v9331 = vadd.f32 %v9162, %v9330
    %v9332 = vpop.f32.mrf.mxu0
    %v9333 = vadd.f32 %v9164, %v9332
    %9334 = vmatmul.bf16.gmra.mxu0 %v2526
    %v9335 = vpop.f32.mrf.mxu0
    %v9336 = vadd.f32 %v9167, %v9335
    %v9337 = vpop.f32.mrf.mxu0
    %v9338 = vadd.f32 %v9169, %v9337
    %9339 = vmatmul.bf16.gmra.mxu0 %v2534
    %v9340 = vpop.f32.mrf.mxu0
    %v9341 = vadd.f32 %v9172, %v9340
    %v9342 = vpop.f32.mrf.mxu0
    %v9343 = vadd.f32 %v9174, %v9342
    %9344 = vmatmul.bf16.gmra.mxu0 %v2542
    %v9345 = vpop.f32.mrf.mxu0
    %v9346 = vadd.f32 %v9177, %v9345
    %v9347 = vpop.f32.mrf.mxu0
    %v9348 = vadd.f32 %v9179, %v9347
    %9349 = vmatmul.bf16.gmra.mxu0 %v2550
    %v9350 = vpop.f32.mrf.mxu0
    %v9351 = vadd.f32 %v9182, %v9350
    %v9352 = vpop.f32.mrf.mxu0
    %v9353 = vadd.f32 %v9184, %v9352
    %9354 = vmatmul.bf16.gmra.mxu0 %v2558
    %v9355 = vpop.f32.mrf.mxu0
    %v9356 = vadd.f32 %v9187, %v9355
    %v9357 = vpop.f32.mrf.mxu0
    %v9358 = vadd.f32 %v9189, %v9357
    %9359 = vmatmul.bf16.gmra.mxu0 %v2566
    %v9360 = vpop.f32.mrf.mxu0
    %v9361 = vadd.f32 %v9192, %v9360
    %v9362 = vpop.f32.mrf.mxu0
    %v9363 = vadd.f32 %v9194, %v9362
    %9364 = vmatmul.bf16.gmra.mxu0 %v2574
    %v9365 = vpop.f32.mrf.mxu0
    %v9366 = vadd.f32 %v9197, %v9365
    %v9367 = vpop.f32.mrf.mxu0
    %v9368 = vadd.f32 %v9199, %v9367
    %9369 = vmatmul.bf16.gmra.mxu0 %v2582
    %v9370 = vpop.f32.mrf.mxu0
    %v9371 = vadd.f32 %v9202, %v9370
    %v9372 = vpop.f32.mrf.mxu0
    %v9373 = vadd.f32 %v9204, %v9372
    %9374 = vmatmul.bf16.gmra.mxu0 %v2590
    %v9375 = vpop.f32.mrf.mxu0
    %v9376 = vadd.f32 %v9207, %v9375
    %v9377 = vpop.f32.mrf.mxu0
    %v9378 = vadd.f32 %v9209, %v9377
    %9379 = vmatmul.bf16.gmra.mxu0 %v2598
    %v9380 = vpop.f32.mrf.mxu0
    %v9381 = vadd.f32 %v9212, %v9380
    %v9382 = vpop.f32.mrf.mxu0
    %v9383 = vadd.f32 %v9214, %v9382
    %9384 = vdwg.mxu0
    %9385 = vmatpush.bf16.msra.mxu0 %v3889
    %9386 = vmatpush.bf16.msra.mxu0 %v3885
    %9387 = vmatpush.bf16.msra.mxu0 %v3881
    %9388 = vmatpush.bf16.msra.mxu0 %v3877
    %9389 = vmatpush.bf16.msra.mxu0 %v3873
    %9390 = vmatpush.bf16.msra.mxu0 %v3869
    %9391 = vmatpush.bf16.msra.mxu0 %v3865
    %9392 = vmatpush.bf16.msra.mxu0 %v3861
    %9393 = vmatmul.bf16.gmra.mxu0 %v2351
    %v9394 = vpop.f32.mrf.mxu0
    %v9395 = vadd.f32 %v9226, %v9394
    %v9396 = vpop.f32.mrf.mxu0
    %v9397 = vadd.f32 %v9228, %v9396
    %9398 = vmatmul.bf16.gmra.mxu0 %v2359
    %v9399 = vpop.f32.mrf.mxu0
    %v9400 = vadd.f32 %v9231, %v9399
    %v9401 = vpop.f32.mrf.mxu0
    %v9402 = vadd.f32 %v9233, %v9401
    %9403 = vmatmul.bf16.gmra.mxu0 %v2367
    %v9404 = vpop.f32.mrf.mxu0
    %v9405 = vadd.f32 %v9236, %v9404
    %v9406 = vpop.f32.mrf.mxu0
    %v9407 = vadd.f32 %v9238, %v9406
    %9408 = vmatmul.bf16.gmra.mxu0 %v2375
    %v9409 = vpop.f32.mrf.mxu0
    %v9410 = vadd.f32 %v9241, %v9409
    %v9411 = vpop.f32.mrf.mxu0
    %v9412 = vadd.f32 %v9243, %v9411
    %9413 = vmatmul.bf16.gmra.mxu0 %v2383
    %v9414 = vpop.f32.mrf.mxu0
    %v9415 = vadd.f32 %v9246, %v9414
    %v9416 = vpop.f32.mrf.mxu0
    %v9417 = vadd.f32 %v9248, %v9416
    %9418 = vmatmul.bf16.gmra.mxu0 %v2391
    %v9419 = vpop.f32.mrf.mxu0
    %v9420 = vadd.f32 %v9251, %v9419
    %v9421 = vpop.f32.mrf.mxu0
    %v9422 = vadd.f32 %v9253, %v9421
    %9423 = vmatmul.bf16.gmra.mxu0 %v2399
    %v9424 = vpop.f32.mrf.mxu0
    %v9425 = vadd.f32 %v9256, %v9424
    %v9426 = vpop.f32.mrf.mxu0
    %v9427 = vadd.f32 %v9258, %v9426
    %9428 = vmatmul.bf16.gmra.mxu0 %v2407
    %v9429 = vpop.f32.mrf.mxu0
    %v9430 = vadd.f32 %v9261, %v9429
    %v9431 = vpop.f32.mrf.mxu0
    %v9432 = vadd.f32 %v9263, %v9431
    %9433 = vmatmul.bf16.gmra.mxu0 %v2415
    %v9434 = vpop.f32.mrf.mxu0
    %v9435 = vadd.f32 %v9266, %v9434
    %v9436 = vpop.f32.mrf.mxu0
    %v9437 = vadd.f32 %v9268, %v9436
    %9438 = vmatmul.bf16.gmra.mxu0 %v2423
    %v9439 = vpop.f32.mrf.mxu0
    %v9440 = vadd.f32 %v9271, %v9439
    %v9441 = vpop.f32.mrf.mxu0
    %v9442 = vadd.f32 %v9273, %v9441
    %9443 = vmatmul.bf16.gmra.mxu0 %v2431
    %v9444 = vpop.f32.mrf.mxu0
    %v9445 = vadd.f32 %v9276, %v9444
    %v9446 = vpop.f32.mrf.mxu0
    %v9447 = vadd.f32 %v9278, %v9446
    %9448 = vmatmul.bf16.gmra.mxu0 %v2439
    %v9449 = vpop.f32.mrf.mxu0
    %v9450 = vadd.f32 %v9281, %v9449
    %v9451 = vpop.f32.mrf.mxu0
    %v9452 = vadd.f32 %v9283, %v9451
    %9453 = vmatmul.bf16.gmra.mxu0 %v2447
    %v9454 = vpop.f32.mrf.mxu0
    %v9455 = vadd.f32 %v9286, %v9454
    %v9456 = vpop.f32.mrf.mxu0
    %v9457 = vadd.f32 %v9288, %v9456
    %9458 = vmatmul.bf16.gmra.mxu0 %v2455
    %v9459 = vpop.f32.mrf.mxu0
    %v9460 = vadd.f32 %v9291, %v9459
    %v9461 = vpop.f32.mrf.mxu0
    %v9462 = vadd.f32 %v9293, %v9461
    %9463 = vmatmul.bf16.gmra.mxu0 %v2463
    %v9464 = vpop.f32.mrf.mxu0
    %v9465 = vadd.f32 %v9296, %v9464
    %v9466 = vpop.f32.mrf.mxu0
    %v9467 = vadd.f32 %v9298, %v9466
    %9468 = vmatmul.bf16.gmra.mxu0 %v2471
    %v9469 = vpop.f32.mrf.mxu0
    %v9470 = vadd.f32 %v9301, %v9469
    %v9471 = vpop.f32.mrf.mxu0
    %v9472 = vadd.f32 %v9303, %v9471
    %9473 = vmatmul.bf16.gmra.mxu0 %v2479
    %v9474 = vpop.f32.mrf.mxu0
    %v9475 = vadd.f32 %v9306, %v9474
    %v9476 = vpop.f32.mrf.mxu0
    %v9477 = vadd.f32 %v9308, %v9476
    %9478 = vmatmul.bf16.gmra.mxu0 %v2487
    %v9479 = vpop.f32.mrf.mxu0
    %v9480 = vadd.f32 %v9311, %v9479
    %v9481 = vpop.f32.mrf.mxu0
    %v9482 = vadd.f32 %v9313, %v9481
    %9483 = vmatmul.bf16.gmra.mxu0 %v2495
    %v9484 = vpop.f32.mrf.mxu0
    %v9485 = vadd.f32 %v9316, %v9484
    %v9486 = vpop.f32.mrf.mxu0
    %v9487 = vadd.f32 %v9318, %v9486
    %9488 = vmatmul.bf16.gmra.mxu0 %v2503
    %v9489 = vpop.f32.mrf.mxu0
    %v9490 = vadd.f32 %v9321, %v9489
    %v9491 = vpop.f32.mrf.mxu0
    %v9492 = vadd.f32 %v9323, %v9491
    %9493 = vmatmul.bf16.gmra.mxu0 %v2511
    %v9494 = vpop.f32.mrf.mxu0
    %v9495 = vadd.f32 %v9326, %v9494
    %v9496 = vpop.f32.mrf.mxu0
    %v9497 = vadd.f32 %v9328, %v9496
    %9498 = vmatmul.bf16.gmra.mxu0 %v2519
    %v9499 = vpop.f32.mrf.mxu0
    %v9500 = vadd.f32 %v9331, %v9499
    %v9501 = vpop.f32.mrf.mxu0
    %v9502 = vadd.f32 %v9333, %v9501
    %9503 = vmatmul.bf16.gmra.mxu0 %v2527
    %v9504 = vpop.f32.mrf.mxu0
    %v9505 = vadd.f32 %v9336, %v9504
    %v9506 = vpop.f32.mrf.mxu0
    %v9507 = vadd.f32 %v9338, %v9506
    %9508 = vmatmul.bf16.gmra.mxu0 %v2535
    %v9509 = vpop.f32.mrf.mxu0
    %v9510 = vadd.f32 %v9341, %v9509
    %v9511 = vpop.f32.mrf.mxu0
    %v9512 = vadd.f32 %v9343, %v9511
    %9513 = vmatmul.bf16.gmra.mxu0 %v2543
    %v9514 = vpop.f32.mrf.mxu0
    %v9515 = vadd.f32 %v9346, %v9514
    %v9516 = vpop.f32.mrf.mxu0
    %v9517 = vadd.f32 %v9348, %v9516
    %9518 = vmatmul.bf16.gmra.mxu0 %v2551
    %v9519 = vpop.f32.mrf.mxu0
    %v9520 = vadd.f32 %v9351, %v9519
    %v9521 = vpop.f32.mrf.mxu0
    %v9522 = vadd.f32 %v9353, %v9521
    %9523 = vmatmul.bf16.gmra.mxu0 %v2559
    %v9524 = vpop.f32.mrf.mxu0
    %v9525 = vadd.f32 %v9356, %v9524
    %v9526 = vpop.f32.mrf.mxu0
    %v9527 = vadd.f32 %v9358, %v9526
    %9528 = vmatmul.bf16.gmra.mxu0 %v2567
    %v9529 = vpop.f32.mrf.mxu0
    %v9530 = vadd.f32 %v9361, %v9529
    %v9531 = vpop.f32.mrf.mxu0
    %v9532 = vadd.f32 %v9363, %v9531
    %9533 = vmatmul.bf16.gmra.mxu0 %v2575
    %v9534 = vpop.f32.mrf.mxu0
    %v9535 = vadd.f32 %v9366, %v9534
    %v9536 = vpop.f32.mrf.mxu0
    %v9537 = vadd.f32 %v9368, %v9536
    %9538 = vmatmul.bf16.gmra.mxu0 %v2583
    %v9539 = vpop.f32.mrf.mxu0
    %v9540 = vadd.f32 %v9371, %v9539
    %v9541 = vpop.f32.mrf.mxu0
    %v9542 = vadd.f32 %v9373, %v9541
    %9543 = vmatmul.bf16.gmra.mxu0 %v2591
    %v9544 = vpop.f32.mrf.mxu0
    %v9545 = vadd.f32 %v9376, %v9544
    %v9546 = vpop.f32.mrf.mxu0
    %v9547 = vadd.f32 %v9378, %v9546
    %9548 = vmatmul.bf16.gmra.mxu0 %v2599
    %v9549 = vpop.f32.mrf.mxu0
    %v9550 = vadd.f32 %v9381, %v9549
    %v9551 = vpop.f32.mrf.mxu0
    %v9552 = vadd.f32 %v9383, %v9551
    %9553 = vdwg.mxu0
    %v9554 = vmax.f32 %v5339, 0.0
    %v9555 = vmax.f32 %v6691, 0.0
    %v9556 = vmax.f32 %v8043, 0.0
    %v9557 = vmax.f32 %v9395, 0.0
    %v9558 = vmax.f32 %v5341, 0.0
    %v9559 = vmax.f32 %v6693, 0.0
    %v9560 = vmax.f32 %v8045, 0.0
    %v9561 = vmax.f32 %v9397, 0.0
    %v9562 = vmax.f32 %v5344, 0.0
    %v9563 = vmax.f32 %v6696, 0.0
    %v9564 = vmax.f32 %v8048, 0.0
    %v9565 = vmax.f32 %v9400, 0.0
    %v9566 = vmax.f32 %v5346, 0.0
    %v9567 = vmax.f32 %v6698, 0.0
    %v9568 = vmax.f32 %v8050, 0.0
    %v9569 = vmax.f32 %v9402, 0.0
    %v9570 = vmax.f32 %v5349, 0.0
    %v9571 = vmax.f32 %v6701, 0.0
    %v9572 = vmax.f32 %v8053, 0.0
    %v9573 = vmax.f32 %v9405, 0.0
    %v9574 = vmax.f32 %v5351, 0.0
    %v9575 = vmax.f32 %v6703, 0.0
    %v9576 = vmax.f32 %v8055, 0.0
    %v9577 = vmax.f32 %v9407, 0.0
    %v9578 = vmax.f32 %v5354, 0.0
    %v9579 = vmax.f32 %v6706, 0.0
    %v9580 = vmax.f32 %v8058, 0.0
    %v9581 = vmax.f32 %v9410, 0.0
    %v9582 = vmax.f32 %v5356, 0.0
    %v9583 = vmax.f32 %v6708, 0.0
    %v9584 = vmax.f32 %v8060, 0.0
    %v9585 = vmax.f32 %v9412, 0.0
    %v9586 = vmax.f32 %v5359, 0.0
    %v9587 = vmax.f32 %v6711, 0.0
    %v9588 = vmax.f32 %v8063, 0.0
    %v9589 = vmax.f32 %v9415, 0.0
    %v9590 = vmax.f32 %v5361, 0.0
    %v9591 = vmax.f32 %v6713, 0.0
    %v9592 = vmax.f32 %v8065, 0.0
    %v9593 = vmax.f32 %v9417, 0.0
    %v9594 = vmax.f32 %v5364, 0.0
    %v9595 = vmax.f32 %v6716, 0.0
    %v9596 = vmax.f32 %v8068, 0.0
    %v9597 = vmax.f32 %v9420, 0.0
    %v9598 = vmax.f32 %v5366, 0.0
    %v9599 = vmax.f32 %v6718, 0.0
    %v9600 = vmax.f32 %v8070, 0.0
    %v9601 = vmax.f32 %v9422, 0.0
    %v9602 = vmax.f32 %v5369, 0.0
    %v9603 = vmax.f32 %v6721, 0.0
    %v9604 = vmax.f32 %v8073, 0.0
    %v9605 = vmax.f32 %v9425, 0.0
    %v9606 = vmax.f32 %v5371, 0.0
    %v9607 = vmax.f32 %v6723, 0.0
    %v9608 = vmax.f32 %v8075, 0.0
    %v9609 = vmax.f32 %v9427, 0.0
    %v9610 = vmax.f32 %v5374, 0.0
    %v9611 = vmax.f32 %v6726, 0.0
    %v9612 = vmax.f32 %v8078, 0.0
    %v9613 = vmax.f32 %v9430, 0.0
    %v9614 = vmax.f32 %v5376, 0.0
    %v9615 = vmax.f32 %v6728, 0.0
    %v9616 = vmax.f32 %v8080, 0.0
    %v9617 = vmax.f32 %v9432, 0.0
    %v9618 = vmax.f32 %v5379, 0.0
    %v9619 = vmax.f32 %v6731, 0.0
    %v9620 = vmax.f32 %v8083, 0.0
    %v9621 = vmax.f32 %v9435, 0.0
    %v9622 = vmax.f32 %v5381, 0.0
    %v9623 = vmax.f32 %v6733, 0.0
    %v9624 = vmax.f32 %v8085, 0.0
    %v9625 = vmax.f32 %v9437, 0.0
    %v9626 = vmax.f32 %v5384, 0.0
    %v9627 = vmax.f32 %v6736, 0.0
    %v9628 = vmax.f32 %v8088, 0.0
    %v9629 = vmax.f32 %v9440, 0.0
    %v9630 = vmax.f32 %v5386, 0.0
    %v9631 = vmax.f32 %v6738, 0.0
    %v9632 = vmax.f32 %v8090, 0.0
    %v9633 = vmax.f32 %v9442, 0.0
    %v9634 = vmax.f32 %v5389, 0.0
    %v9635 = vmax.f32 %v6741, 0.0
    %v9636 = vmax.f32 %v8093, 0.0
    %v9637 = vmax.f32 %v9445, 0.0
    %v9638 = vmax.f32 %v5391, 0.0
    %v9639 = vmax.f32 %v6743, 0.0
    %v9640 = vmax.f32 %v8095, 0.0
    %v9641 = vmax.f32 %v9447, 0.0
    %v9642 = vmax.f32 %v5394, 0.0
    %v9643 = vmax.f32 %v6746, 0.0
    %v9644 = vmax.f32 %v8098, 0.0
    %v9645 = vmax.f32 %v9450, 0.0
    %v9646 = vmax.f32 %v5396, 0.0
    %v9647 = vmax.f32 %v6748, 0.0
    %v9648 = vmax.f32 %v8100, 0.0
    %v9649 = vmax.f32 %v9452, 0.0
    %v9650 = vmax.f32 %v5399, 0.0
    %v9651 = vmax.f32 %v6751, 0.0
    %v9652 = vmax.f32 %v8103, 0.0
    %v9653 = vmax.f32 %v9455, 0.0
    %v9654 = vmax.f32 %v5401, 0.0
    %v9655 = vmax.f32 %v6753, 0.0
    %v9656 = vmax.f32 %v8105, 0.0
    %v9657 = vmax.f32 %v9457, 0.0
    %v9658 = vmax.f32 %v5404, 0.0
    %v9659 = vmax.f32 %v6756, 0.0
    %v9660 = vmax.f32 %v8108, 0.0
    %v9661 = vmax.f32 %v9460, 0.0
    %v9662 = vmax.f32 %v5406, 0.0
    %v9663 = vmax.f32 %v6758, 0.0
    %v9664 = vmax.f32 %v8110, 0.0
    %v9665 = vmax.f32 %v9462, 0.0
    %v9666 = vmax.f32 %v5409, 0.0
    %v9667 = vmax.f32 %v6761, 0.0
    %v9668 = vmax.f32 %v8113, 0.0
    %v9669 = vmax.f32 %v9465, 0.0
    %v9670 = vmax.f32 %v5411, 0.0
    %v9671 = vmax.f32 %v6763, 0.0
    %v9672 = vmax.f32 %v8115, 0.0
    %v9673 = vmax.f32 %v9467, 0.0
    %v9674 = vmax.f32 %v5414, 0.0
    %v9675 = vmax.f32 %v6766, 0.0
    %v9676 = vmax.f32 %v8118, 0.0
    %v9677 = vmax.f32 %v9470, 0.0
    %v9678 = vmax.f32 %v5416, 0.0
    %v9679 = vmax.f32 %v6768, 0.0
    %v9680 = vmax.f32 %v8120, 0.0
    %v9681 = vmax.f32 %v9472, 0.0
    %v9682 = vmax.f32 %v5419, 0.0
    %v9683 = vmax.f32 %v6771, 0.0
    %v9684 = vmax.f32 %v8123, 0.0
    %v9685 = vmax.f32 %v9475, 0.0
    %v9686 = vmax.f32 %v5421, 0.0
    %v9687 = vmax.f32 %v6773, 0.0
    %v9688 = vmax.f32 %v8125, 0.0
    %v9689 = vmax.f32 %v9477, 0.0
    %v9690 = vmax.f32 %v5424, 0.0
    %v9691 = vmax.f32 %v6776, 0.0
    %v9692 = vmax.f32 %v8128, 0.0
    %v9693 = vmax.f32 %v9480, 0.0
    %v9694 = vmax.f32 %v5426, 0.0
    %v9695 = vmax.f32 %v6778, 0.0
    %v9696 = vmax.f32 %v8130, 0.0
    %v9697 = vmax.f32 %v9482, 0.0
    %v9698 = vmax.f32 %v5429, 0.0
    %v9699 = vmax.f32 %v6781, 0.0
    %v9700 = vmax.f32 %v8133, 0.0
    %v9701 = vmax.f32 %v9485, 0.0
    %v9702 = vmax.f32 %v5431, 0.0
    %v9703 = vmax.f32 %v6783, 0.0
    %v9704 = vmax.f32 %v8135, 0.0
    %v9705 = vmax.f32 %v9487, 0.0
    %v9706 = vmax.f32 %v5434, 0.0
    %v9707 = vmax.f32 %v6786, 0.0
    %v9708 = vmax.f32 %v8138, 0.0
    %v9709 = vmax.f32 %v9490, 0.0
    %v9710 = vmax.f32 %v5436, 0.0
    %v9711 = vmax.f32 %v6788, 0.0
    %v9712 = vmax.f32 %v8140, 0.0
    %v9713 = vmax.f32 %v9492, 0.0
    %v9714 = vmax.f32 %v5439, 0.0
    %v9715 = vmax.f32 %v6791, 0.0
    %v9716 = vmax.f32 %v8143, 0.0
    %v9717 = vmax.f32 %v9495, 0.0
    %v9718 = vmax.f32 %v5441, 0.0
    %v9719 = vmax.f32 %v6793, 0.0
    %v9720 = vmax.f32 %v8145, 0.0
    %v9721 = vmax.f32 %v9497, 0.0
    %v9722 = vmax.f32 %v5444, 0.0
    %v9723 = vmax.f32 %v6796, 0.0
    %v9724 = vmax.f32 %v8148, 0.0
    %v9725 = vmax.f32 %v9500, 0.0
    %v9726 = vmax.f32 %v5446, 0.0
    %v9727 = vmax.f32 %v6798, 0.0
    %v9728 = vmax.f32 %v8150, 0.0
    %v9729 = vmax.f32 %v9502, 0.0
    %v9730 = vmax.f32 %v5449, 0.0
    %v9731 = vmax.f32 %v6801, 0.0
    %v9732 = vmax.f32 %v8153, 0.0
    %v9733 = vmax.f32 %v9505, 0.0
    %v9734 = vmax.f32 %v5451, 0.0
    %v9735 = vmax.f32 %v6803, 0.0
    %v9736 = vmax.f32 %v8155, 0.0
    %v9737 = vmax.f32 %v9507, 0.0
    %v9738 = vmax.f32 %v5454, 0.0
    %v9739 = vmax.f32 %v6806, 0.0
    %v9740 = vmax.f32 %v8158, 0.0
    %v9741 = vmax.f32 %v9510, 0.0
    %v9742 = vmax.f32 %v5456, 0.0
    %v9743 = vmax.f32 %v6808, 0.0
    %v9744 = vmax.f32 %v8160, 0.0
    %v9745 = vmax.f32 %v9512, 0.0
    %v9746 = vmax.f32 %v5459, 0.0
    %v9747 = vmax.f32 %v6811, 0.0
    %v9748 = vmax.f32 %v8163, 0.0
    %v9749 = vmax.f32 %v9515, 0.0
    %v9750 = vmax.f32 %v5461, 0.0
    %v9751 = vmax.f32 %v6813, 0.0
    %v9752 = vmax.f32 %v8165, 0.0
    %v9753 = vmax.f32 %v9517, 0.0
    %v9754 = vmax.f32 %v5464, 0.0
    %v9755 = vmax.f32 %v6816, 0.0
    %v9756 = vmax.f32 %v8168, 0.0
    %v9757 = vmax.f32 %v9520, 0.0
    %v9758 = vmax.f32 %v5466, 0.0
    %v9759 = vmax.f32 %v6818, 0.0
    %v9760 = vmax.f32 %v8170, 0.0
    %v9761 = vmax.f32 %v9522, 0.0
    %v9762 = vmax.f32 %v5469, 0.0
    %v9763 = vmax.f32 %v6821, 0.0
    %v9764 = vmax.f32 %v8173, 0.0
    %v9765 = vmax.f32 %v9525, 0.0
    %v9766 = vmax.f32 %v5471, 0.0
    %v9767 = vmax.f32 %v6823, 0.0
    %v9768 = vmax.f32 %v8175, 0.0
    %v9769 = vmax.f32 %v9527, 0.0
    %v9770 = vmax.f32 %v5474, 0.0
    %v9771 = vmax.f32 %v6826, 0.0
    %v9772 = vmax.f32 %v8178, 0.0
    %v9773 = vmax.f32 %v9530, 0.0
    %v9774 = vmax.f32 %v5476, 0.0
    %v9775 = vmax.f32 %v6828, 0.0
    %v9776 = vmax.f32 %v8180, 0.0
    %v9777 = vmax.f32 %v9532, 0.0
    %v9778 = vmax.f32 %v5479, 0.0
    %v9779 = vmax.f32 %v6831, 0.0
    %v9780 = vmax.f32 %v8183, 0.0
    %v9781 = vmax.f32 %v9535, 0.0
    %v9782 = vmax.f32 %v5481, 0.0
    %v9783 = vmax.f32 %v6833, 0.0
    %v9784 = vmax.f32 %v8185, 0.0
    %v9785 = vmax.f32 %v9537, 0.0
    %v9786 = vmax.f32 %v5484, 0.0
    %v9787 = vmax.f32 %v6836, 0.0
    %v9788 = vmax.f32 %v8188, 0.0
    %v9789 = vmax.f32 %v9540, 0.0
    %v9790 = vmax.f32 %v5486, 0.0
    %v9791 = vmax.f32 %v6838, 0.0
    %v9792 = vmax.f32 %v8190, 0.0
    %v9793 = vmax.f32 %v9542, 0.0
    %v9794 = vmax.f32 %v5489, 0.0
    %v9795 = vmax.f32 %v6841, 0.0
    %v9796 = vmax.f32 %v8193, 0.0
    %v9797 = vmax.f32 %v9545, 0.0
    %v9798 = vmax.f32 %v5491, 0.0
    %v9799 = vmax.f32 %v6843, 0.0
    %v9800 = vmax.f32 %v8195, 0.0
    %v9801 = vmax.f32 %v9547, 0.0
    %v9802 = vmax.f32 %v5494, 0.0
    %v9803 = vmax.f32 %v6846, 0.0
    %v9804 = vmax.f32 %v8198, 0.0
    %v9805 = vmax.f32 %v9550, 0.0
    %v9806 = vmax.f32 %v5496, 0.0
    %v9807 = vmax.f32 %v6848, 0.0
    %v9808 = vmax.f32 %v8200, 0.0
    %v9809 = vmax.f32 %v9552, 0.0
    %v9810 = vld [vmem:[%s5] sm:$0xf]
    %v9812 = vperm.slane %v9810, 0
    %v9813 = vperm.slane %v9810, 1
    %v9814 = vperm.slane %v9810, 2
    %v9815 = vperm.slane %v9810, 3
    %v9820 = vmul.f32 %v9554, %v9812
    %v9821 = vmul.f32 %v9555, %v9813
    %v9822 = vmul.f32 %v9556, %v9814
    %v9823 = vmul.f32 %v9557, %v9815
    %v9824 = vmul.f32 %v9558, %v9812
    %v9825 = vmul.f32 %v9559, %v9813
    %v9826 = vmul.f32 %v9560, %v9814
    %v9827 = vmul.f32 %v9561, %v9815
    %v9828 = vmul.f32 %v9562, %v9812
    %v9829 = vmul.f32 %v9563, %v9813
    %v9830 = vmul.f32 %v9564, %v9814
    %v9831 = vmul.f32 %v9565, %v9815
    %v9832 = vmul.f32 %v9566, %v9812
    %v9833 = vmul.f32 %v9567, %v9813
    %v9834 = vmul.f32 %v9568, %v9814
    %v9835 = vmul.f32 %v9569, %v9815
    %v9836 = vmul.f32 %v9570, %v9812
    %v9837 = vmul.f32 %v9571, %v9813
    %v9838 = vmul.f32 %v9572, %v9814
    %v9839 = vmul.f32 %v9573, %v9815
    %v9840 = vmul.f32 %v9574, %v9812
    %v9841 = vmul.f32 %v9575, %v9813
    %v9842 = vmul.f32 %v9576, %v9814
    %v9843 = vmul.f32 %v9577, %v9815
    %v9844 = vmul.f32 %v9578, %v9812
    %v9845 = vmul.f32 %v9579, %v9813
    %v9846 = vmul.f32 %v9580, %v9814
    %v9847 = vmul.f32 %v9581, %v9815
    %v9848 = vmul.f32 %v9582, %v9812
    %v9849 = vmul.f32 %v9583, %v9813
    %v9850 = vmul.f32 %v9584, %v9814
    %v9851 = vmul.f32 %v9585, %v9815
    %v9852 = vmul.f32 %v9586, %v9812
    %v9853 = vmul.f32 %v9587, %v9813
    %v9854 = vmul.f32 %v9588, %v9814
    %v9855 = vmul.f32 %v9589, %v9815
    %v9856 = vmul.f32 %v9590, %v9812
    %v9857 = vmul.f32 %v9591, %v9813
    %v9858 = vmul.f32 %v9592, %v9814
    %v9859 = vmul.f32 %v9593, %v9815
    %v9860 = vmul.f32 %v9594, %v9812
    %v9861 = vmul.f32 %v9595, %v9813
    %v9862 = vmul.f32 %v9596, %v9814
    %v9863 = vmul.f32 %v9597, %v9815
    %v9864 = vmul.f32 %v9598, %v9812
    %v9865 = vmul.f32 %v9599, %v9813
    %v9866 = vmul.f32 %v9600, %v9814
    %v9867 = vmul.f32 %v9601, %v9815
    %v9868 = vmul.f32 %v9602, %v9812
    %v9869 = vmul.f32 %v9603, %v9813
    %v9870 = vmul.f32 %v9604, %v9814
    %v9871 = vmul.f32 %v9605, %v9815
    %v9872 = vmul.f32 %v9606, %v9812
    %v9873 = vmul.f32 %v9607, %v9813
    %v9874 = vmul.f32 %v9608, %v9814
    %v9875 = vmul.f32 %v9609, %v9815
    %v9876 = vmul.f32 %v9610, %v9812
    %v9877 = vmul.f32 %v9611, %v9813
    %v9878 = vmul.f32 %v9612, %v9814
    %v9879 = vmul.f32 %v9613, %v9815
    %v9880 = vmul.f32 %v9614, %v9812
    %v9881 = vmul.f32 %v9615, %v9813
    %v9882 = vmul.f32 %v9616, %v9814
    %v9883 = vmul.f32 %v9617, %v9815
    %v9884 = vmul.f32 %v9618, %v9812
    %v9885 = vmul.f32 %v9619, %v9813
    %v9886 = vmul.f32 %v9620, %v9814
    %v9887 = vmul.f32 %v9621, %v9815
    %v9888 = vmul.f32 %v9622, %v9812
    %v9889 = vmul.f32 %v9623, %v9813
    %v9890 = vmul.f32 %v9624, %v9814
    %v9891 = vmul.f32 %v9625, %v9815
    %v9892 = vmul.f32 %v9626, %v9812
    %v9893 = vmul.f32 %v9627, %v9813
    %v9894 = vmul.f32 %v9628, %v9814
    %v9895 = vmul.f32 %v9629, %v9815
    %v9896 = vmul.f32 %v9630, %v9812
    %v9897 = vmul.f32 %v9631, %v9813
    %v9898 = vmul.f32 %v9632, %v9814
    %v9899 = vmul.f32 %v9633, %v9815
    %v9900 = vmul.f32 %v9634, %v9812
    %v9901 = vmul.f32 %v9635, %v9813
    %v9902 = vmul.f32 %v9636, %v9814
    %v9903 = vmul.f32 %v9637, %v9815
    %v9904 = vmul.f32 %v9638, %v9812
    %v9905 = vmul.f32 %v9639, %v9813
    %v9906 = vmul.f32 %v9640, %v9814
    %v9907 = vmul.f32 %v9641, %v9815
    %v9908 = vmul.f32 %v9642, %v9812
    %v9909 = vmul.f32 %v9643, %v9813
    %v9910 = vmul.f32 %v9644, %v9814
    %v9911 = vmul.f32 %v9645, %v9815
    %v9912 = vmul.f32 %v9646, %v9812
    %v9913 = vmul.f32 %v9647, %v9813
    %v9914 = vmul.f32 %v9648, %v9814
    %v9915 = vmul.f32 %v9649, %v9815
    %v9916 = vmul.f32 %v9650, %v9812
    %v9917 = vmul.f32 %v9651, %v9813
    %v9918 = vmul.f32 %v9652, %v9814
    %v9919 = vmul.f32 %v9653, %v9815
    %v9920 = vmul.f32 %v9654, %v9812
    %v9921 = vmul.f32 %v9655, %v9813
    %v9922 = vmul.f32 %v9656, %v9814
    %v9923 = vmul.f32 %v9657, %v9815
    %v9924 = vmul.f32 %v9658, %v9812
    %v9925 = vmul.f32 %v9659, %v9813
    %v9926 = vmul.f32 %v9660, %v9814
    %v9927 = vmul.f32 %v9661, %v9815
    %v9928 = vmul.f32 %v9662, %v9812
    %v9929 = vmul.f32 %v9663, %v9813
    %v9930 = vmul.f32 %v9664, %v9814
    %v9931 = vmul.f32 %v9665, %v9815
    %v9932 = vmul.f32 %v9666, %v9812
    %v9933 = vmul.f32 %v9667, %v9813
    %v9934 = vmul.f32 %v9668, %v9814
    %v9935 = vmul.f32 %v9669, %v9815
    %v9936 = vmul.f32 %v9670, %v9812
    %v9937 = vmul.f32 %v9671, %v9813
    %v9938 = vmul.f32 %v9672, %v9814
    %v9939 = vmul.f32 %v9673, %v9815
    %v9940 = vmul.f32 %v9674, %v9812
    %v9941 = vmul.f32 %v9675, %v9813
    %v9942 = vmul.f32 %v9676, %v9814
    %v9943 = vmul.f32 %v9677, %v9815
    %v9944 = vmul.f32 %v9678, %v9812
    %v9945 = vmul.f32 %v9679, %v9813
    %v9946 = vmul.f32 %v9680, %v9814
    %v9947 = vmul.f32 %v9681, %v9815
    %v9948 = vmul.f32 %v9682, %v9812
    %v9949 = vmul.f32 %v9683, %v9813
    %v9950 = vmul.f32 %v9684, %v9814
    %v9951 = vmul.f32 %v9685, %v9815
    %v9952 = vmul.f32 %v9686, %v9812
    %v9953 = vmul.f32 %v9687, %v9813
    %v9954 = vmul.f32 %v9688, %v9814
    %v9955 = vmul.f32 %v9689, %v9815
    %v9956 = vmul.f32 %v9690, %v9812
    %v9957 = vmul.f32 %v9691, %v9813
    %v9958 = vmul.f32 %v9692, %v9814
    %v9959 = vmul.f32 %v9693, %v9815
    %v9960 = vmul.f32 %v9694, %v9812
    %v9961 = vmul.f32 %v9695, %v9813
    %v9962 = vmul.f32 %v9696, %v9814
    %v9963 = vmul.f32 %v9697, %v9815
    %v9964 = vmul.f32 %v9698, %v9812
    %v9965 = vmul.f32 %v9699, %v9813
    %v9966 = vmul.f32 %v9700, %v9814
    %v9967 = vmul.f32 %v9701, %v9815
    %v9968 = vmul.f32 %v9702, %v9812
    %v9969 = vmul.f32 %v9703, %v9813
    %v9970 = vmul.f32 %v9704, %v9814
    %v9971 = vmul.f32 %v9705, %v9815
    %v9972 = vmul.f32 %v9706, %v9812
    %v9973 = vmul.f32 %v9707, %v9813
    %v9974 = vmul.f32 %v9708, %v9814
    %v9975 = vmul.f32 %v9709, %v9815
    %v9976 = vmul.f32 %v9710, %v9812
    %v9977 = vmul.f32 %v9711, %v9813
    %v9978 = vmul.f32 %v9712, %v9814
    %v9979 = vmul.f32 %v9713, %v9815
    %v9980 = vmul.f32 %v9714, %v9812
    %v9981 = vmul.f32 %v9715, %v9813
    %v9982 = vmul.f32 %v9716, %v9814
    %v9983 = vmul.f32 %v9717, %v9815
    %v9984 = vmul.f32 %v9718, %v9812
    %v9985 = vmul.f32 %v9719, %v9813
    %v9986 = vmul.f32 %v9720, %v9814
    %v9987 = vmul.f32 %v9721, %v9815
    %v9988 = vmul.f32 %v9722, %v9812
    %v9989 = vmul.f32 %v9723, %v9813
    %v9990 = vmul.f32 %v9724, %v9814
    %v9991 = vmul.f32 %v9725, %v9815
    %v9992 = vmul.f32 %v9726, %v9812
    %v9993 = vmul.f32 %v9727, %v9813
    %v9994 = vmul.f32 %v9728, %v9814
    %v9995 = vmul.f32 %v9729, %v9815
    %v9996 = vmul.f32 %v9730, %v9812
    %v9997 = vmul.f32 %v9731, %v9813
    %v9998 = vmul.f32 %v9732, %v9814
    %v9999 = vmul.f32 %v9733, %v9815
    %v10000 = vmul.f32 %v9734, %v9812
    %v10001 = vmul.f32 %v9735, %v9813
    %v10002 = vmul.f32 %v9736, %v9814
    %v10003 = vmul.f32 %v9737, %v9815
    %v10004 = vmul.f32 %v9738, %v9812
    %v10005 = vmul.f32 %v9739, %v9813
    %v10006 = vmul.f32 %v9740, %v9814
    %v10007 = vmul.f32 %v9741, %v9815
    %v10008 = vmul.f32 %v9742, %v9812
    %v10009 = vmul.f32 %v9743, %v9813
    %v10010 = vmul.f32 %v9744, %v9814
    %v10011 = vmul.f32 %v9745, %v9815
    %v10012 = vmul.f32 %v9746, %v9812
    %v10013 = vmul.f32 %v9747, %v9813
    %v10014 = vmul.f32 %v9748, %v9814
    %v10015 = vmul.f32 %v9749, %v9815
    %v10016 = vmul.f32 %v9750, %v9812
    %v10017 = vmul.f32 %v9751, %v9813
    %v10018 = vmul.f32 %v9752, %v9814
    %v10019 = vmul.f32 %v9753, %v9815
    %v10020 = vmul.f32 %v9754, %v9812
    %v10021 = vmul.f32 %v9755, %v9813
    %v10022 = vmul.f32 %v9756, %v9814
    %v10023 = vmul.f32 %v9757, %v9815
    %v10024 = vmul.f32 %v9758, %v9812
    %v10025 = vmul.f32 %v9759, %v9813
    %v10026 = vmul.f32 %v9760, %v9814
    %v10027 = vmul.f32 %v9761, %v9815
    %v10028 = vmul.f32 %v9762, %v9812
    %v10029 = vmul.f32 %v9763, %v9813
    %v10030 = vmul.f32 %v9764, %v9814
    %v10031 = vmul.f32 %v9765, %v9815
    %v10032 = vmul.f32 %v9766, %v9812
    %v10033 = vmul.f32 %v9767, %v9813
    %v10034 = vmul.f32 %v9768, %v9814
    %v10035 = vmul.f32 %v9769, %v9815
    %v10036 = vmul.f32 %v9770, %v9812
    %v10037 = vmul.f32 %v9771, %v9813
    %v10038 = vmul.f32 %v9772, %v9814
    %v10039 = vmul.f32 %v9773, %v9815
    %v10040 = vmul.f32 %v9774, %v9812
    %v10041 = vmul.f32 %v9775, %v9813
    %v10042 = vmul.f32 %v9776, %v9814
    %v10043 = vmul.f32 %v9777, %v9815
    %v10044 = vmul.f32 %v9778, %v9812
    %v10045 = vmul.f32 %v9779, %v9813
    %v10046 = vmul.f32 %v9780, %v9814
    %v10047 = vmul.f32 %v9781, %v9815
    %v10048 = vmul.f32 %v9782, %v9812
    %v10049 = vmul.f32 %v9783, %v9813
    %v10050 = vmul.f32 %v9784, %v9814
    %v10051 = vmul.f32 %v9785, %v9815
    %v10052 = vmul.f32 %v9786, %v9812
    %v10053 = vmul.f32 %v9787, %v9813
    %v10054 = vmul.f32 %v9788, %v9814
    %v10055 = vmul.f32 %v9789, %v9815
    %v10056 = vmul.f32 %v9790, %v9812
    %v10057 = vmul.f32 %v9791, %v9813
    %v10058 = vmul.f32 %v9792, %v9814
    %v10059 = vmul.f32 %v9793, %v9815
    %v10060 = vmul.f32 %v9794, %v9812
    %v10061 = vmul.f32 %v9795, %v9813
    %v10062 = vmul.f32 %v9796, %v9814
    %v10063 = vmul.f32 %v9797, %v9815
    %v10064 = vmul.f32 %v9798, %v9812
    %v10065 = vmul.f32 %v9799, %v9813
    %v10066 = vmul.f32 %v9800, %v9814
    %v10067 = vmul.f32 %v9801, %v9815
    %v10068 = vmul.f32 %v9802, %v9812
    %v10069 = vmul.f32 %v9803, %v9813
    %v10070 = vmul.f32 %v9804, %v9814
    %v10071 = vmul.f32 %v9805, %v9815
    %v10072 = vmul.f32 %v9806, %v9812
    %v10073 = vmul.f32 %v9807, %v9813
    %v10074 = vmul.f32 %v9808, %v9814
    %v10075 = vmul.f32 %v9809, %v9815
    %v10076 = vadd.f32 %v9820, %v9821
    %v10077 = vadd.f32 %v10076, %v9822
    %v10078 = vadd.f32 %v10077, %v9823
    %10079 = vadd.xlane.f32.xlu0 %v10078
    %v10080 = vpop.xlane.xlu0 %10079
    %v10081 = vadd.f32 %v9824, %v9825
    %v10082 = vadd.f32 %v10081, %v9826
    %v10083 = vadd.f32 %v10082, %v9827
    %10084 = vadd.xlane.f32.xlu0 %v10083
    %v10085 = vpop.xlane.xlu0 %10084
    %v10086 = vadd.f32 %v9828, %v9829
    %v10087 = vadd.f32 %v10086, %v9830
    %v10088 = vadd.f32 %v10087, %v9831
    %10089 = vadd.xlane.f32.xlu0 %v10088
    %v10090 = vpop.xlane.xlu0 %10089
    %v10091 = vadd.f32 %v9832, %v9833
    %v10092 = vadd.f32 %v10091, %v9834
    %v10093 = vadd.f32 %v10092, %v9835
    %10094 = vadd.xlane.f32.xlu0 %v10093
    %v10095 = vpop.xlane.xlu0 %10094
    %v10096 = vadd.f32 %v9836, %v9837
    %v10097 = vadd.f32 %v10096, %v9838
    %v10098 = vadd.f32 %v10097, %v9839
    %10099 = vadd.xlane.f32.xlu0 %v10098
    %v10100 = vpop.xlane.xlu0 %10099
    %v10101 = vadd.f32 %v9840, %v9841
    %v10102 = vadd.f32 %v10101, %v9842
    %v10103 = vadd.f32 %v10102, %v9843
    %10104 = vadd.xlane.f32.xlu0 %v10103
    %v10105 = vpop.xlane.xlu0 %10104
    %v10106 = vadd.f32 %v9844, %v9845
    %v10107 = vadd.f32 %v10106, %v9846
    %v10108 = vadd.f32 %v10107, %v9847
    %10109 = vadd.xlane.f32.xlu0 %v10108
    %v10110 = vpop.xlane.xlu0 %10109
    %v10111 = vadd.f32 %v9848, %v9849
    %v10112 = vadd.f32 %v10111, %v9850
    %v10113 = vadd.f32 %v10112, %v9851
    %10114 = vadd.xlane.f32.xlu0 %v10113
    %v10115 = vpop.xlane.xlu0 %10114
    %v10116 = vadd.f32 %v9852, %v9853
    %v10117 = vadd.f32 %v10116, %v9854
    %v10118 = vadd.f32 %v10117, %v9855
    %10119 = vadd.xlane.f32.xlu0 %v10118
    %v10120 = vpop.xlane.xlu0 %10119
    %v10121 = vadd.f32 %v9856, %v9857
    %v10122 = vadd.f32 %v10121, %v9858
    %v10123 = vadd.f32 %v10122, %v9859
    %10124 = vadd.xlane.f32.xlu0 %v10123
    %v10125 = vpop.xlane.xlu0 %10124
    %v10126 = vadd.f32 %v9860, %v9861
    %v10127 = vadd.f32 %v10126, %v9862
    %v10128 = vadd.f32 %v10127, %v9863
    %10129 = vadd.xlane.f32.xlu0 %v10128
    %v10130 = vpop.xlane.xlu0 %10129
    %v10131 = vadd.f32 %v9864, %v9865
    %v10132 = vadd.f32 %v10131, %v9866
    %v10133 = vadd.f32 %v10132, %v9867
    %10134 = vadd.xlane.f32.xlu0 %v10133
    %v10135 = vpop.xlane.xlu0 %10134
    %v10136 = vadd.f32 %v9868, %v9869
    %v10137 = vadd.f32 %v10136, %v9870
    %v10138 = vadd.f32 %v10137, %v9871
    %10139 = vadd.xlane.f32.xlu0 %v10138
    %v10140 = vpop.xlane.xlu0 %10139
    %v10141 = vadd.f32 %v9872, %v9873
    %v10142 = vadd.f32 %v10141, %v9874
    %v10143 = vadd.f32 %v10142, %v9875
    %10144 = vadd.xlane.f32.xlu0 %v10143
    %v10145 = vpop.xlane.xlu0 %10144
    %v10146 = vadd.f32 %v9876, %v9877
    %v10147 = vadd.f32 %v10146, %v9878
    %v10148 = vadd.f32 %v10147, %v9879
    %10149 = vadd.xlane.f32.xlu0 %v10148
    %v10150 = vpop.xlane.xlu0 %10149
    %v10151 = vadd.f32 %v9880, %v9881
    %v10152 = vadd.f32 %v10151, %v9882
    %v10153 = vadd.f32 %v10152, %v9883
    %10154 = vadd.xlane.f32.xlu0 %v10153
    %v10155 = vpop.xlane.xlu0 %10154
    %v10156 = vadd.f32 %v9884, %v9885
    %v10157 = vadd.f32 %v10156, %v9886
    %v10158 = vadd.f32 %v10157, %v9887
    %10159 = vadd.xlane.f32.xlu0 %v10158
    %v10160 = vpop.xlane.xlu0 %10159
    %v10161 = vadd.f32 %v9888, %v9889
    %v10162 = vadd.f32 %v10161, %v9890
    %v10163 = vadd.f32 %v10162, %v9891
    %10164 = vadd.xlane.f32.xlu0 %v10163
    %v10165 = vpop.xlane.xlu0 %10164
    %v10166 = vadd.f32 %v9892, %v9893
    %v10167 = vadd.f32 %v10166, %v9894
    %v10168 = vadd.f32 %v10167, %v9895
    %10169 = vadd.xlane.f32.xlu0 %v10168
    %v10170 = vpop.xlane.xlu0 %10169
    %v10171 = vadd.f32 %v9896, %v9897
    %v10172 = vadd.f32 %v10171, %v9898
    %v10173 = vadd.f32 %v10172, %v9899
    %10174 = vadd.xlane.f32.xlu0 %v10173
    %v10175 = vpop.xlane.xlu0 %10174
    %v10176 = vadd.f32 %v9900, %v9901
    %v10177 = vadd.f32 %v10176, %v9902
    %v10178 = vadd.f32 %v10177, %v9903
    %10179 = vadd.xlane.f32.xlu0 %v10178
    %v10180 = vpop.xlane.xlu0 %10179
    %v10181 = vadd.f32 %v9904, %v9905
    %v10182 = vadd.f32 %v10181, %v9906
    %v10183 = vadd.f32 %v10182, %v9907
    %10184 = vadd.xlane.f32.xlu0 %v10183
    %v10185 = vpop.xlane.xlu0 %10184
    %v10186 = vadd.f32 %v9908, %v9909
    %v10187 = vadd.f32 %v10186, %v9910
    %v10188 = vadd.f32 %v10187, %v9911
    %10189 = vadd.xlane.f32.xlu0 %v10188
    %v10190 = vpop.xlane.xlu0 %10189
    %v10191 = vadd.f32 %v9912, %v9913
    %v10192 = vadd.f32 %v10191, %v9914
    %v10193 = vadd.f32 %v10192, %v9915
    %10194 = vadd.xlane.f32.xlu0 %v10193
    %v10195 = vpop.xlane.xlu0 %10194
    %v10196 = vadd.f32 %v9916, %v9917
    %v10197 = vadd.f32 %v10196, %v9918
    %v10198 = vadd.f32 %v10197, %v9919
    %10199 = vadd.xlane.f32.xlu0 %v10198
    %v10200 = vpop.xlane.xlu0 %10199
    %v10201 = vadd.f32 %v9920, %v9921
    %v10202 = vadd.f32 %v10201, %v9922
    %v10203 = vadd.f32 %v10202, %v9923
    %10204 = vadd.xlane.f32.xlu0 %v10203
    %v10205 = vpop.xlane.xlu0 %10204
    %v10206 = vadd.f32 %v9924, %v9925
    %v10207 = vadd.f32 %v10206, %v9926
    %v10208 = vadd.f32 %v10207, %v9927
    %10209 = vadd.xlane.f32.xlu0 %v10208
    %v10210 = vpop.xlane.xlu0 %10209
    %v10211 = vadd.f32 %v9928, %v9929
    %v10212 = vadd.f32 %v10211, %v9930
    %v10213 = vadd.f32 %v10212, %v9931
    %10214 = vadd.xlane.f32.xlu0 %v10213
    %v10215 = vpop.xlane.xlu0 %10214
    %v10216 = vadd.f32 %v9932, %v9933
    %v10217 = vadd.f32 %v10216, %v9934
    %v10218 = vadd.f32 %v10217, %v9935
    %10219 = vadd.xlane.f32.xlu0 %v10218
    %v10220 = vpop.xlane.xlu0 %10219
    %v10221 = vadd.f32 %v9936, %v9937
    %v10222 = vadd.f32 %v10221, %v9938
    %v10223 = vadd.f32 %v10222, %v9939
    %10224 = vadd.xlane.f32.xlu0 %v10223
    %v10225 = vpop.xlane.xlu0 %10224
    %v10226 = vadd.f32 %v9940, %v9941
    %v10227 = vadd.f32 %v10226, %v9942
    %v10228 = vadd.f32 %v10227, %v9943
    %10229 = vadd.xlane.f32.xlu0 %v10228
    %v10230 = vpop.xlane.xlu0 %10229
    %v10231 = vadd.f32 %v9944, %v9945
    %v10232 = vadd.f32 %v10231, %v9946
    %v10233 = vadd.f32 %v10232, %v9947
    %10234 = vadd.xlane.f32.xlu0 %v10233
    %v10235 = vpop.xlane.xlu0 %10234
    %v10236 = vadd.f32 %v9948, %v9949
    %v10237 = vadd.f32 %v10236, %v9950
    %v10238 = vadd.f32 %v10237, %v9951
    %10239 = vadd.xlane.f32.xlu0 %v10238
    %v10240 = vpop.xlane.xlu0 %10239
    %v10241 = vadd.f32 %v9952, %v9953
    %v10242 = vadd.f32 %v10241, %v9954
    %v10243 = vadd.f32 %v10242, %v9955
    %10244 = vadd.xlane.f32.xlu0 %v10243
    %v10245 = vpop.xlane.xlu0 %10244
    %v10246 = vadd.f32 %v9956, %v9957
    %v10247 = vadd.f32 %v10246, %v9958
    %v10248 = vadd.f32 %v10247, %v9959
    %10249 = vadd.xlane.f32.xlu0 %v10248
    %v10250 = vpop.xlane.xlu0 %10249
    %v10251 = vadd.f32 %v9960, %v9961
    %v10252 = vadd.f32 %v10251, %v9962
    %v10253 = vadd.f32 %v10252, %v9963
    %10254 = vadd.xlane.f32.xlu0 %v10253
    %v10255 = vpop.xlane.xlu0 %10254
    %v10256 = vadd.f32 %v9964, %v9965
    %v10257 = vadd.f32 %v10256, %v9966
    %v10258 = vadd.f32 %v10257, %v9967
    %10259 = vadd.xlane.f32.xlu0 %v10258
    %v10260 = vpop.xlane.xlu0 %10259
    %v10261 = vadd.f32 %v9968, %v9969
    %v10262 = vadd.f32 %v10261, %v9970
    %v10263 = vadd.f32 %v10262, %v9971
    %10264 = vadd.xlane.f32.xlu0 %v10263
    %v10265 = vpop.xlane.xlu0 %10264
    %v10266 = vadd.f32 %v9972, %v9973
    %v10267 = vadd.f32 %v10266, %v9974
    %v10268 = vadd.f32 %v10267, %v9975
    %10269 = vadd.xlane.f32.xlu0 %v10268
    %v10270 = vpop.xlane.xlu0 %10269
    %v10271 = vadd.f32 %v9976, %v9977
    %v10272 = vadd.f32 %v10271, %v9978
    %v10273 = vadd.f32 %v10272, %v9979
    %10274 = vadd.xlane.f32.xlu0 %v10273
    %v10275 = vpop.xlane.xlu0 %10274
    %v10276 = vadd.f32 %v9980, %v9981
    %v10277 = vadd.f32 %v10276, %v9982
    %v10278 = vadd.f32 %v10277, %v9983
    %10279 = vadd.xlane.f32.xlu0 %v10278
    %v10280 = vpop.xlane.xlu0 %10279
    %v10281 = vadd.f32 %v9984, %v9985
    %v10282 = vadd.f32 %v10281, %v9986
    %v10283 = vadd.f32 %v10282, %v9987
    %10284 = vadd.xlane.f32.xlu0 %v10283
    %v10285 = vpop.xlane.xlu0 %10284
    %v10286 = vadd.f32 %v9988, %v9989
    %v10287 = vadd.f32 %v10286, %v9990
    %v10288 = vadd.f32 %v10287, %v9991
    %10289 = vadd.xlane.f32.xlu0 %v10288
    %v10290 = vpop.xlane.xlu0 %10289
    %v10291 = vadd.f32 %v9992, %v9993
    %v10292 = vadd.f32 %v10291, %v9994
    %v10293 = vadd.f32 %v10292, %v9995
    %10294 = vadd.xlane.f32.xlu0 %v10293
    %v10295 = vpop.xlane.xlu0 %10294
    %v10296 = vadd.f32 %v9996, %v9997
    %v10297 = vadd.f32 %v10296, %v9998
    %v10298 = vadd.f32 %v10297, %v9999
    %10299 = vadd.xlane.f32.xlu0 %v10298
    %v10300 = vpop.xlane.xlu0 %10299
    %v10301 = vadd.f32 %v10000, %v10001
    %v10302 = vadd.f32 %v10301, %v10002
    %v10303 = vadd.f32 %v10302, %v10003
    %10304 = vadd.xlane.f32.xlu0 %v10303
    %v10305 = vpop.xlane.xlu0 %10304
    %v10306 = vadd.f32 %v10004, %v10005
    %v10307 = vadd.f32 %v10306, %v10006
    %v10308 = vadd.f32 %v10307, %v10007
    %10309 = vadd.xlane.f32.xlu0 %v10308
    %v10310 = vpop.xlane.xlu0 %10309
    %v10311 = vadd.f32 %v10008, %v10009
    %v10312 = vadd.f32 %v10311, %v10010
    %v10313 = vadd.f32 %v10312, %v10011
    %10314 = vadd.xlane.f32.xlu0 %v10313
    %v10315 = vpop.xlane.xlu0 %10314
    %v10316 = vadd.f32 %v10012, %v10013
    %v10317 = vadd.f32 %v10316, %v10014
    %v10318 = vadd.f32 %v10317, %v10015
    %10319 = vadd.xlane.f32.xlu0 %v10318
    %v10320 = vpop.xlane.xlu0 %10319
    %v10321 = vadd.f32 %v10016, %v10017
    %v10322 = vadd.f32 %v10321, %v10018
    %v10323 = vadd.f32 %v10322, %v10019
    %10324 = vadd.xlane.f32.xlu0 %v10323
    %v10325 = vpop.xlane.xlu0 %10324
    %v10326 = vadd.f32 %v10020, %v10021
    %v10327 = vadd.f32 %v10326, %v10022
    %v10328 = vadd.f32 %v10327, %v10023
    %10329 = vadd.xlane.f32.xlu0 %v10328
    %v10330 = vpop.xlane.xlu0 %10329
    %v10331 = vadd.f32 %v10024, %v10025
    %v10332 = vadd.f32 %v10331, %v10026
    %v10333 = vadd.f32 %v10332, %v10027
    %10334 = vadd.xlane.f32.xlu0 %v10333
    %v10335 = vpop.xlane.xlu0 %10334
    %v10336 = vadd.f32 %v10028, %v10029
    %v10337 = vadd.f32 %v10336, %v10030
    %v10338 = vadd.f32 %v10337, %v10031
    %10339 = vadd.xlane.f32.xlu0 %v10338
    %v10340 = vpop.xlane.xlu0 %10339
    %v10341 = vadd.f32 %v10032, %v10033
    %v10342 = vadd.f32 %v10341, %v10034
    %v10343 = vadd.f32 %v10342, %v10035
    %10344 = vadd.xlane.f32.xlu0 %v10343
    %v10345 = vpop.xlane.xlu0 %10344
    %v10346 = vadd.f32 %v10036, %v10037
    %v10347 = vadd.f32 %v10346, %v10038
    %v10348 = vadd.f32 %v10347, %v10039
    %10349 = vadd.xlane.f32.xlu0 %v10348
    %v10350 = vpop.xlane.xlu0 %10349
    %v10351 = vadd.f32 %v10040, %v10041
    %v10352 = vadd.f32 %v10351, %v10042
    %v10353 = vadd.f32 %v10352, %v10043
    %10354 = vadd.xlane.f32.xlu0 %v10353
    %v10355 = vpop.xlane.xlu0 %10354
    %v10356 = vadd.f32 %v10044, %v10045
    %v10357 = vadd.f32 %v10356, %v10046
    %v10358 = vadd.f32 %v10357, %v10047
    %10359 = vadd.xlane.f32.xlu0 %v10358
    %v10360 = vpop.xlane.xlu0 %10359
    %v10361 = vadd.f32 %v10048, %v10049
    %v10362 = vadd.f32 %v10361, %v10050
    %v10363 = vadd.f32 %v10362, %v10051
    %10364 = vadd.xlane.f32.xlu0 %v10363
    %v10365 = vpop.xlane.xlu0 %10364
    %v10366 = vadd.f32 %v10052, %v10053
    %v10367 = vadd.f32 %v10366, %v10054
    %v10368 = vadd.f32 %v10367, %v10055
    %10369 = vadd.xlane.f32.xlu0 %v10368
    %v10370 = vpop.xlane.xlu0 %10369
    %v10371 = vadd.f32 %v10056, %v10057
    %v10372 = vadd.f32 %v10371, %v10058
    %v10373 = vadd.f32 %v10372, %v10059
    %10374 = vadd.xlane.f32.xlu0 %v10373
    %v10375 = vpop.xlane.xlu0 %10374
    %v10376 = vadd.f32 %v10060, %v10061
    %v10377 = vadd.f32 %v10376, %v10062
    %v10378 = vadd.f32 %v10377, %v10063
    %10379 = vadd.xlane.f32.xlu0 %v10378
    %v10380 = vpop.xlane.xlu0 %10379
    %v10381 = vadd.f32 %v10064, %v10065
    %v10382 = vadd.f32 %v10381, %v10066
    %v10383 = vadd.f32 %v10382, %v10067
    %10384 = vadd.xlane.f32.xlu0 %v10383
    %v10385 = vpop.xlane.xlu0 %10384
    %v10386 = vadd.f32 %v10068, %v10069
    %v10387 = vadd.f32 %v10386, %v10070
    %v10388 = vadd.f32 %v10387, %v10071
    %10389 = vadd.xlane.f32.xlu0 %v10388
    %v10390 = vpop.xlane.xlu0 %10389
    %v10391 = vadd.f32 %v10072, %v10073
    %v10392 = vadd.f32 %v10391, %v10074
    %v10393 = vadd.f32 %v10392, %v10075
    %10394 = vadd.xlane.f32.xlu0 %v10393
    %v10395 = vpop.xlane.xlu0 %10394
    %s10396 = sld [smem:[#allocation2]]
    %v10397 = vstv %s10396
    %v10398 = vadd.f32 %v10080, %v10397
    %v10399 = vadd.f32 %v10085, %v10397
    %v10400 = vadd.f32 %v10090, %v10397
    %v10401 = vadd.f32 %v10095, %v10397
    %v10402 = vadd.f32 %v10100, %v10397
    %v10403 = vadd.f32 %v10105, %v10397
    %v10404 = vadd.f32 %v10110, %v10397
    %v10405 = vadd.f32 %v10115, %v10397
    %v10406 = vadd.f32 %v10120, %v10397
    %v10407 = vadd.f32 %v10125, %v10397
    %v10408 = vadd.f32 %v10130, %v10397
    %v10409 = vadd.f32 %v10135, %v10397
    %v10410 = vadd.f32 %v10140, %v10397
    %v10411 = vadd.f32 %v10145, %v10397
    %v10412 = vadd.f32 %v10150, %v10397
    %v10413 = vadd.f32 %v10155, %v10397
    %v10414 = vadd.f32 %v10160, %v10397
    %v10415 = vadd.f32 %v10165, %v10397
    %v10416 = vadd.f32 %v10170, %v10397
    %v10417 = vadd.f32 %v10175, %v10397
    %v10418 = vadd.f32 %v10180, %v10397
    %v10419 = vadd.f32 %v10185, %v10397
    %v10420 = vadd.f32 %v10190, %v10397
    %v10421 = vadd.f32 %v10195, %v10397
    %v10422 = vadd.f32 %v10200, %v10397
    %v10423 = vadd.f32 %v10205, %v10397
    %v10424 = vadd.f32 %v10210, %v10397
    %v10425 = vadd.f32 %v10215, %v10397
    %v10426 = vadd.f32 %v10220, %v10397
    %v10427 = vadd.f32 %v10225, %v10397
    %v10428 = vadd.f32 %v10230, %v10397
    %v10429 = vadd.f32 %v10235, %v10397
    %v10430 = vadd.f32 %v10240, %v10397
    %v10431 = vadd.f32 %v10245, %v10397
    %v10432 = vadd.f32 %v10250, %v10397
    %v10433 = vadd.f32 %v10255, %v10397
    %v10434 = vadd.f32 %v10260, %v10397
    %v10435 = vadd.f32 %v10265, %v10397
    %v10436 = vadd.f32 %v10270, %v10397
    %v10437 = vadd.f32 %v10275, %v10397
    %v10438 = vadd.f32 %v10280, %v10397
    %v10439 = vadd.f32 %v10285, %v10397
    %v10440 = vadd.f32 %v10290, %v10397
    %v10441 = vadd.f32 %v10295, %v10397
    %v10442 = vadd.f32 %v10300, %v10397
    %v10443 = vadd.f32 %v10305, %v10397
    %v10444 = vadd.f32 %v10310, %v10397
    %v10445 = vadd.f32 %v10315, %v10397
    %v10446 = vadd.f32 %v10320, %v10397
    %v10447 = vadd.f32 %v10325, %v10397
    %v10448 = vadd.f32 %v10330, %v10397
    %v10449 = vadd.f32 %v10335, %v10397
    %v10450 = vadd.f32 %v10340, %v10397
    %v10451 = vadd.f32 %v10345, %v10397
    %v10452 = vadd.f32 %v10350, %v10397
    %v10453 = vadd.f32 %v10355, %v10397
    %v10454 = vadd.f32 %v10360, %v10397
    %v10455 = vadd.f32 %v10365, %v10397
    %v10456 = vadd.f32 %v10370, %v10397
    %v10457 = vadd.f32 %v10375, %v10397
    %v10458 = vadd.f32 %v10380, %v10397
    %v10459 = vadd.f32 %v10385, %v10397
    %v10460 = vadd.f32 %v10390, %v10397
    %v10461 = vadd.f32 %v10395, %v10397
    %v10526 = vperm.slane %v10398, 0
    %v10527 = vperm.slane %v10398, 1
    %v10528 = vperm.slane %v10398, 2
    %v10529 = vperm.slane %v10398, 3
    %v10530 = vperm.slane %v10398, 4
    %v10531 = vperm.slane %v10398, 5
    %v10532 = vperm.slane %v10398, 6
    %v10533 = vperm.slane %v10398, 7
    %v10534 = vperm.slane %v10399, 0
    %v10535 = vperm.slane %v10399, 1
    %v10536 = vperm.slane %v10399, 2
    %v10537 = vperm.slane %v10399, 3
    %v10538 = vperm.slane %v10399, 4
    %v10539 = vperm.slane %v10399, 5
    %v10540 = vperm.slane %v10399, 6
    %v10541 = vperm.slane %v10399, 7
    %v10542 = vperm.slane %v10400, 0
    %v10543 = vperm.slane %v10400, 1
    %v10544 = vperm.slane %v10400, 2
    %v10545 = vperm.slane %v10400, 3
    %v10546 = vperm.slane %v10400, 4
    %v10547 = vperm.slane %v10400, 5
    %v10548 = vperm.slane %v10400, 6
    %v10549 = vperm.slane %v10400, 7
    %v10550 = vperm.slane %v10401, 0
    %v10551 = vperm.slane %v10401, 1
    %v10552 = vperm.slane %v10401, 2
    %v10553 = vperm.slane %v10401, 3
    %v10554 = vperm.slane %v10401, 4
    %v10555 = vperm.slane %v10401, 5
    %v10556 = vperm.slane %v10401, 6
    %v10557 = vperm.slane %v10401, 7
    %v10558 = vperm.slane %v10402, 0
    %v10559 = vperm.slane %v10402, 1
    %v10560 = vperm.slane %v10402, 2
    %v10561 = vperm.slane %v10402, 3
    %v10562 = vperm.slane %v10402, 4
    %v10563 = vperm.slane %v10402, 5
    %v10564 = vperm.slane %v10402, 6
    %v10565 = vperm.slane %v10402, 7
    %v10566 = vperm.slane %v10403, 0
    %v10567 = vperm.slane %v10403, 1
    %v10568 = vperm.slane %v10403, 2
    %v10569 = vperm.slane %v10403, 3
    %v10570 = vperm.slane %v10403, 4
    %v10571 = vperm.slane %v10403, 5
    %v10572 = vperm.slane %v10403, 6
    %v10573 = vperm.slane %v10403, 7
    %v10574 = vperm.slane %v10404, 0
    %v10575 = vperm.slane %v10404, 1
    %v10576 = vperm.slane %v10404, 2
    %v10577 = vperm.slane %v10404, 3
    %v10578 = vperm.slane %v10404, 4
    %v10579 = vperm.slane %v10404, 5
    %v10580 = vperm.slane %v10404, 6
    %v10581 = vperm.slane %v10404, 7
    %v10582 = vperm.slane %v10405, 0
    %v10583 = vperm.slane %v10405, 1
    %v10584 = vperm.slane %v10405, 2
    %v10585 = vperm.slane %v10405, 3
    %v10586 = vperm.slane %v10405, 4
    %v10587 = vperm.slane %v10405, 5
    %v10588 = vperm.slane %v10405, 6
    %v10589 = vperm.slane %v10405, 7
    %v10590 = vperm.slane %v10406, 0
    %v10591 = vperm.slane %v10406, 1
    %v10592 = vperm.slane %v10406, 2
    %v10593 = vperm.slane %v10406, 3
    %v10594 = vperm.slane %v10406, 4
    %v10595 = vperm.slane %v10406, 5
    %v10596 = vperm.slane %v10406, 6
    %v10597 = vperm.slane %v10406, 7
    %v10598 = vperm.slane %v10407, 0
    %v10599 = vperm.slane %v10407, 1
    %v10600 = vperm.slane %v10407, 2
    %v10601 = vperm.slane %v10407, 3
    %v10602 = vperm.slane %v10407, 4
    %v10603 = vperm.slane %v10407, 5
    %v10604 = vperm.slane %v10407, 6
    %v10605 = vperm.slane %v10407, 7
    %v10606 = vperm.slane %v10408, 0
    %v10607 = vperm.slane %v10408, 1
    %v10608 = vperm.slane %v10408, 2
    %v10609 = vperm.slane %v10408, 3
    %v10610 = vperm.slane %v10408, 4
    %v10611 = vperm.slane %v10408, 5
    %v10612 = vperm.slane %v10408, 6
    %v10613 = vperm.slane %v10408, 7
    %v10614 = vperm.slane %v10409, 0
    %v10615 = vperm.slane %v10409, 1
    %v10616 = vperm.slane %v10409, 2
    %v10617 = vperm.slane %v10409, 3
    %v10618 = vperm.slane %v10409, 4
    %v10619 = vperm.slane %v10409, 5
    %v10620 = vperm.slane %v10409, 6
    %v10621 = vperm.slane %v10409, 7
    %v10622 = vperm.slane %v10410, 0
    %v10623 = vperm.slane %v10410, 1
    %v10624 = vperm.slane %v10410, 2
    %v10625 = vperm.slane %v10410, 3
    %v10626 = vperm.slane %v10410, 4
    %v10627 = vperm.slane %v10410, 5
    %v10628 = vperm.slane %v10410, 6
    %v10629 = vperm.slane %v10410, 7
    %v10630 = vperm.slane %v10411, 0
    %v10631 = vperm.slane %v10411, 1
    %v10632 = vperm.slane %v10411, 2
    %v10633 = vperm.slane %v10411, 3
    %v10634 = vperm.slane %v10411, 4
    %v10635 = vperm.slane %v10411, 5
    %v10636 = vperm.slane %v10411, 6
    %v10637 = vperm.slane %v10411, 7
    %v10638 = vperm.slane %v10412, 0
    %v10639 = vperm.slane %v10412, 1
    %v10640 = vperm.slane %v10412, 2
    %v10641 = vperm.slane %v10412, 3
    %v10642 = vperm.slane %v10412, 4
    %v10643 = vperm.slane %v10412, 5
    %v10644 = vperm.slane %v10412, 6
    %v10645 = vperm.slane %v10412, 7
    %v10646 = vperm.slane %v10413, 0
    %v10647 = vperm.slane %v10413, 1
    %v10648 = vperm.slane %v10413, 2
    %v10649 = vperm.slane %v10413, 3
    %v10650 = vperm.slane %v10413, 4
    %v10651 = vperm.slane %v10413, 5
    %v10652 = vperm.slane %v10413, 6
    %v10653 = vperm.slane %v10413, 7
    %v10654 = vperm.slane %v10414, 0
    %v10655 = vperm.slane %v10414, 1
    %v10656 = vperm.slane %v10414, 2
    %v10657 = vperm.slane %v10414, 3
    %v10658 = vperm.slane %v10414, 4
    %v10659 = vperm.slane %v10414, 5
    %v10660 = vperm.slane %v10414, 6
    %v10661 = vperm.slane %v10414, 7
    %v10662 = vperm.slane %v10415, 0
    %v10663 = vperm.slane %v10415, 1
    %v10664 = vperm.slane %v10415, 2
    %v10665 = vperm.slane %v10415, 3
    %v10666 = vperm.slane %v10415, 4
    %v10667 = vperm.slane %v10415, 5
    %v10668 = vperm.slane %v10415, 6
    %v10669 = vperm.slane %v10415, 7
    %v10670 = vperm.slane %v10416, 0
    %v10671 = vperm.slane %v10416, 1
    %v10672 = vperm.slane %v10416, 2
    %v10673 = vperm.slane %v10416, 3
    %v10674 = vperm.slane %v10416, 4
    %v10675 = vperm.slane %v10416, 5
    %v10676 = vperm.slane %v10416, 6
    %v10677 = vperm.slane %v10416, 7
    %v10678 = vperm.slane %v10417, 0
    %v10679 = vperm.slane %v10417, 1
    %v10680 = vperm.slane %v10417, 2
    %v10681 = vperm.slane %v10417, 3
    %v10682 = vperm.slane %v10417, 4
    %v10683 = vperm.slane %v10417, 5
    %v10684 = vperm.slane %v10417, 6
    %v10685 = vperm.slane %v10417, 7
    %v10686 = vperm.slane %v10418, 0
    %v10687 = vperm.slane %v10418, 1
    %v10688 = vperm.slane %v10418, 2
    %v10689 = vperm.slane %v10418, 3
    %v10690 = vperm.slane %v10418, 4
    %v10691 = vperm.slane %v10418, 5
    %v10692 = vperm.slane %v10418, 6
    %v10693 = vperm.slane %v10418, 7
    %v10694 = vperm.slane %v10419, 0
    %v10695 = vperm.slane %v10419, 1
    %v10696 = vperm.slane %v10419, 2
    %v10697 = vperm.slane %v10419, 3
    %v10698 = vperm.slane %v10419, 4
    %v10699 = vperm.slane %v10419, 5
    %v10700 = vperm.slane %v10419, 6
    %v10701 = vperm.slane %v10419, 7
    %v10702 = vperm.slane %v10420, 0
    %v10703 = vperm.slane %v10420, 1
    %v10704 = vperm.slane %v10420, 2
    %v10705 = vperm.slane %v10420, 3
    %v10706 = vperm.slane %v10420, 4
    %v10707 = vperm.slane %v10420, 5
    %v10708 = vperm.slane %v10420, 6
    %v10709 = vperm.slane %v10420, 7
    %v10710 = vperm.slane %v10421, 0
    %v10711 = vperm.slane %v10421, 1
    %v10712 = vperm.slane %v10421, 2
    %v10713 = vperm.slane %v10421, 3
    %v10714 = vperm.slane %v10421, 4
    %v10715 = vperm.slane %v10421, 5
    %v10716 = vperm.slane %v10421, 6
    %v10717 = vperm.slane %v10421, 7
    %v10718 = vperm.slane %v10422, 0
    %v10719 = vperm.slane %v10422, 1
    %v10720 = vperm.slane %v10422, 2
    %v10721 = vperm.slane %v10422, 3
    %v10722 = vperm.slane %v10422, 4
    %v10723 = vperm.slane %v10422, 5
    %v10724 = vperm.slane %v10422, 6
    %v10725 = vperm.slane %v10422, 7
    %v10726 = vperm.slane %v10423, 0
    %v10727 = vperm.slane %v10423, 1
    %v10728 = vperm.slane %v10423, 2
    %v10729 = vperm.slane %v10423, 3
    %v10730 = vperm.slane %v10423, 4
    %v10731 = vperm.slane %v10423, 5
    %v10732 = vperm.slane %v10423, 6
    %v10733 = vperm.slane %v10423, 7
    %v10734 = vperm.slane %v10424, 0
    %v10735 = vperm.slane %v10424, 1
    %v10736 = vperm.slane %v10424, 2
    %v10737 = vperm.slane %v10424, 3
    %v10738 = vperm.slane %v10424, 4
    %v10739 = vperm.slane %v10424, 5
    %v10740 = vperm.slane %v10424, 6
    %v10741 = vperm.slane %v10424, 7
    %v10742 = vperm.slane %v10425, 0
    %v10743 = vperm.slane %v10425, 1
    %v10744 = vperm.slane %v10425, 2
    %v10745 = vperm.slane %v10425, 3
    %v10746 = vperm.slane %v10425, 4
    %v10747 = vperm.slane %v10425, 5
    %v10748 = vperm.slane %v10425, 6
    %v10749 = vperm.slane %v10425, 7
    %v10750 = vperm.slane %v10426, 0
    %v10751 = vperm.slane %v10426, 1
    %v10752 = vperm.slane %v10426, 2
    %v10753 = vperm.slane %v10426, 3
    %v10754 = vperm.slane %v10426, 4
    %v10755 = vperm.slane %v10426, 5
    %v10756 = vperm.slane %v10426, 6
    %v10757 = vperm.slane %v10426, 7
    %v10758 = vperm.slane %v10427, 0
    %v10759 = vperm.slane %v10427, 1
    %v10760 = vperm.slane %v10427, 2
    %v10761 = vperm.slane %v10427, 3
    %v10762 = vperm.slane %v10427, 4
    %v10763 = vperm.slane %v10427, 5
    %v10764 = vperm.slane %v10427, 6
    %v10765 = vperm.slane %v10427, 7
    %v10766 = vperm.slane %v10428, 0
    %v10767 = vperm.slane %v10428, 1
    %v10768 = vperm.slane %v10428, 2
    %v10769 = vperm.slane %v10428, 3
    %v10770 = vperm.slane %v10428, 4
    %v10771 = vperm.slane %v10428, 5
    %v10772 = vperm.slane %v10428, 6
    %v10773 = vperm.slane %v10428, 7
    %v10774 = vperm.slane %v10429, 0
    %v10775 = vperm.slane %v10429, 1
    %v10776 = vperm.slane %v10429, 2
    %v10777 = vperm.slane %v10429, 3
    %v10778 = vperm.slane %v10429, 4
    %v10779 = vperm.slane %v10429, 5
    %v10780 = vperm.slane %v10429, 6
    %v10781 = vperm.slane %v10429, 7
    %v10782 = vperm.slane %v10430, 0
    %v10783 = vperm.slane %v10430, 1
    %v10784 = vperm.slane %v10430, 2
    %v10785 = vperm.slane %v10430, 3
    %v10786 = vperm.slane %v10430, 4
    %v10787 = vperm.slane %v10430, 5
    %v10788 = vperm.slane %v10430, 6
    %v10789 = vperm.slane %v10430, 7
    %v10790 = vperm.slane %v10431, 0
    %v10791 = vperm.slane %v10431, 1
    %v10792 = vperm.slane %v10431, 2
    %v10793 = vperm.slane %v10431, 3
    %v10794 = vperm.slane %v10431, 4
    %v10795 = vperm.slane %v10431, 5
    %v10796 = vperm.slane %v10431, 6
    %v10797 = vperm.slane %v10431, 7
    %v10798 = vperm.slane %v10432, 0
    %v10799 = vperm.slane %v10432, 1
    %v10800 = vperm.slane %v10432, 2
    %v10801 = vperm.slane %v10432, 3
    %v10802 = vperm.slane %v10432, 4
    %v10803 = vperm.slane %v10432, 5
    %v10804 = vperm.slane %v10432, 6
    %v10805 = vperm.slane %v10432, 7
    %v10806 = vperm.slane %v10433, 0
    %v10807 = vperm.slane %v10433, 1
    %v10808 = vperm.slane %v10433, 2
    %v10809 = vperm.slane %v10433, 3
    %v10810 = vperm.slane %v10433, 4
    %v10811 = vperm.slane %v10433, 5
    %v10812 = vperm.slane %v10433, 6
    %v10813 = vperm.slane %v10433, 7
    %v10814 = vperm.slane %v10434, 0
    %v10815 = vperm.slane %v10434, 1
    %v10816 = vperm.slane %v10434, 2
    %v10817 = vperm.slane %v10434, 3
    %v10818 = vperm.slane %v10434, 4
    %v10819 = vperm.slane %v10434, 5
    %v10820 = vperm.slane %v10434, 6
    %v10821 = vperm.slane %v10434, 7
    %v10822 = vperm.slane %v10435, 0
    %v10823 = vperm.slane %v10435, 1
    %v10824 = vperm.slane %v10435, 2
    %v10825 = vperm.slane %v10435, 3
    %v10826 = vperm.slane %v10435, 4
    %v10827 = vperm.slane %v10435, 5
    %v10828 = vperm.slane %v10435, 6
    %v10829 = vperm.slane %v10435, 7
    %v10830 = vperm.slane %v10436, 0
    %v10831 = vperm.slane %v10436, 1
    %v10832 = vperm.slane %v10436, 2
    %v10833 = vperm.slane %v10436, 3
    %v10834 = vperm.slane %v10436, 4
    %v10835 = vperm.slane %v10436, 5
    %v10836 = vperm.slane %v10436, 6
    %v10837 = vperm.slane %v10436, 7
    %v10838 = vperm.slane %v10437, 0
    %v10839 = vperm.slane %v10437, 1
    %v10840 = vperm.slane %v10437, 2
    %v10841 = vperm.slane %v10437, 3
    %v10842 = vperm.slane %v10437, 4
    %v10843 = vperm.slane %v10437, 5
    %v10844 = vperm.slane %v10437, 6
    %v10845 = vperm.slane %v10437, 7
    %v10846 = vperm.slane %v10438, 0
    %v10847 = vperm.slane %v10438, 1
    %v10848 = vperm.slane %v10438, 2
    %v10849 = vperm.slane %v10438, 3
    %v10850 = vperm.slane %v10438, 4
    %v10851 = vperm.slane %v10438, 5
    %v10852 = vperm.slane %v10438, 6
    %v10853 = vperm.slane %v10438, 7
    %v10854 = vperm.slane %v10439, 0
    %v10855 = vperm.slane %v10439, 1
    %v10856 = vperm.slane %v10439, 2
    %v10857 = vperm.slane %v10439, 3
    %v10858 = vperm.slane %v10439, 4
    %v10859 = vperm.slane %v10439, 5
    %v10860 = vperm.slane %v10439, 6
    %v10861 = vperm.slane %v10439, 7
    %v10862 = vperm.slane %v10440, 0
    %v10863 = vperm.slane %v10440, 1
    %v10864 = vperm.slane %v10440, 2
    %v10865 = vperm.slane %v10440, 3
    %v10866 = vperm.slane %v10440, 4
    %v10867 = vperm.slane %v10440, 5
    %v10868 = vperm.slane %v10440, 6
    %v10869 = vperm.slane %v10440, 7
    %v10870 = vperm.slane %v10441, 0
    %v10871 = vperm.slane %v10441, 1
    %v10872 = vperm.slane %v10441, 2
    %v10873 = vperm.slane %v10441, 3
    %v10874 = vperm.slane %v10441, 4
    %v10875 = vperm.slane %v10441, 5
    %v10876 = vperm.slane %v10441, 6
    %v10877 = vperm.slane %v10441, 7
    %v10878 = vperm.slane %v10442, 0
    %v10879 = vperm.slane %v10442, 1
    %v10880 = vperm.slane %v10442, 2
    %v10881 = vperm.slane %v10442, 3
    %v10882 = vperm.slane %v10442, 4
    %v10883 = vperm.slane %v10442, 5
    %v10884 = vperm.slane %v10442, 6
    %v10885 = vperm.slane %v10442, 7
    %v10886 = vperm.slane %v10443, 0
    %v10887 = vperm.slane %v10443, 1
    %v10888 = vperm.slane %v10443, 2
    %v10889 = vperm.slane %v10443, 3
    %v10890 = vperm.slane %v10443, 4
    %v10891 = vperm.slane %v10443, 5
    %v10892 = vperm.slane %v10443, 6
    %v10893 = vperm.slane %v10443, 7
    %v10894 = vperm.slane %v10444, 0
    %v10895 = vperm.slane %v10444, 1
    %v10896 = vperm.slane %v10444, 2
    %v10897 = vperm.slane %v10444, 3
    %v10898 = vperm.slane %v10444, 4
    %v10899 = vperm.slane %v10444, 5
    %v10900 = vperm.slane %v10444, 6
    %v10901 = vperm.slane %v10444, 7
    %v10902 = vperm.slane %v10445, 0
    %v10903 = vperm.slane %v10445, 1
    %v10904 = vperm.slane %v10445, 2
    %v10905 = vperm.slane %v10445, 3
    %v10906 = vperm.slane %v10445, 4
    %v10907 = vperm.slane %v10445, 5
    %v10908 = vperm.slane %v10445, 6
    %v10909 = vperm.slane %v10445, 7
    %v10910 = vperm.slane %v10446, 0
    %v10911 = vperm.slane %v10446, 1
    %v10912 = vperm.slane %v10446, 2
    %v10913 = vperm.slane %v10446, 3
    %v10914 = vperm.slane %v10446, 4
    %v10915 = vperm.slane %v10446, 5
    %v10916 = vperm.slane %v10446, 6
    %v10917 = vperm.slane %v10446, 7
    %v10918 = vperm.slane %v10447, 0
    %v10919 = vperm.slane %v10447, 1
    %v10920 = vperm.slane %v10447, 2
    %v10921 = vperm.slane %v10447, 3
    %v10922 = vperm.slane %v10447, 4
    %v10923 = vperm.slane %v10447, 5
    %v10924 = vperm.slane %v10447, 6
    %v10925 = vperm.slane %v10447, 7
    %v10926 = vperm.slane %v10448, 0
    %v10927 = vperm.slane %v10448, 1
    %v10928 = vperm.slane %v10448, 2
    %v10929 = vperm.slane %v10448, 3
    %v10930 = vperm.slane %v10448, 4
    %v10931 = vperm.slane %v10448, 5
    %v10932 = vperm.slane %v10448, 6
    %v10933 = vperm.slane %v10448, 7
    %v10934 = vperm.slane %v10449, 0
    %v10935 = vperm.slane %v10449, 1
    %v10936 = vperm.slane %v10449, 2
    %v10937 = vperm.slane %v10449, 3
    %v10938 = vperm.slane %v10449, 4
    %v10939 = vperm.slane %v10449, 5
    %v10940 = vperm.slane %v10449, 6
    %v10941 = vperm.slane %v10449, 7
    %v10942 = vperm.slane %v10450, 0
    %v10943 = vperm.slane %v10450, 1
    %v10944 = vperm.slane %v10450, 2
    %v10945 = vperm.slane %v10450, 3
    %v10946 = vperm.slane %v10450, 4
    %v10947 = vperm.slane %v10450, 5
    %v10948 = vperm.slane %v10450, 6
    %v10949 = vperm.slane %v10450, 7
    %v10950 = vperm.slane %v10451, 0
    %v10951 = vperm.slane %v10451, 1
    %v10952 = vperm.slane %v10451, 2
    %v10953 = vperm.slane %v10451, 3
    %v10954 = vperm.slane %v10451, 4
    %v10955 = vperm.slane %v10451, 5
    %v10956 = vperm.slane %v10451, 6
    %v10957 = vperm.slane %v10451, 7
    %v10958 = vperm.slane %v10452, 0
    %v10959 = vperm.slane %v10452, 1
    %v10960 = vperm.slane %v10452, 2
    %v10961 = vperm.slane %v10452, 3
    %v10962 = vperm.slane %v10452, 4
    %v10963 = vperm.slane %v10452, 5
    %v10964 = vperm.slane %v10452, 6
    %v10965 = vperm.slane %v10452, 7
    %v10966 = vperm.slane %v10453, 0
    %v10967 = vperm.slane %v10453, 1
    %v10968 = vperm.slane %v10453, 2
    %v10969 = vperm.slane %v10453, 3
    %v10970 = vperm.slane %v10453, 4
    %v10971 = vperm.slane %v10453, 5
    %v10972 = vperm.slane %v10453, 6
    %v10973 = vperm.slane %v10453, 7
    %v10974 = vperm.slane %v10454, 0
    %v10975 = vperm.slane %v10454, 1
    %v10976 = vperm.slane %v10454, 2
    %v10977 = vperm.slane %v10454, 3
    %v10978 = vperm.slane %v10454, 4
    %v10979 = vperm.slane %v10454, 5
    %v10980 = vperm.slane %v10454, 6
    %v10981 = vperm.slane %v10454, 7
    %v10982 = vperm.slane %v10455, 0
    %v10983 = vperm.slane %v10455, 1
    %v10984 = vperm.slane %v10455, 2
    %v10985 = vperm.slane %v10455, 3
    %v10986 = vperm.slane %v10455, 4
    %v10987 = vperm.slane %v10455, 5
    %v10988 = vperm.slane %v10455, 6
    %v10989 = vperm.slane %v10455, 7
    %v10990 = vperm.slane %v10456, 0
    %v10991 = vperm.slane %v10456, 1
    %v10992 = vperm.slane %v10456, 2
    %v10993 = vperm.slane %v10456, 3
    %v10994 = vperm.slane %v10456, 4
    %v10995 = vperm.slane %v10456, 5
    %v10996 = vperm.slane %v10456, 6
    %v10997 = vperm.slane %v10456, 7
    %v10998 = vperm.slane %v10457, 0
    %v10999 = vperm.slane %v10457, 1
    %v11000 = vperm.slane %v10457, 2
    %v11001 = vperm.slane %v10457, 3
    %v11002 = vperm.slane %v10457, 4
    %v11003 = vperm.slane %v10457, 5
    %v11004 = vperm.slane %v10457, 6
    %v11005 = vperm.slane %v10457, 7
    %v11006 = vperm.slane %v10458, 0
    %v11007 = vperm.slane %v10458, 1
    %v11008 = vperm.slane %v10458, 2
    %v11009 = vperm.slane %v10458, 3
    %v11010 = vperm.slane %v10458, 4
    %v11011 = vperm.slane %v10458, 5
    %v11012 = vperm.slane %v10458, 6
    %v11013 = vperm.slane %v10458, 7
    %v11014 = vperm.slane %v10459, 0
    %v11015 = vperm.slane %v10459, 1
    %v11016 = vperm.slane %v10459, 2
    %v11017 = vperm.slane %v10459, 3
    %v11018 = vperm.slane %v10459, 4
    %v11019 = vperm.slane %v10459, 5
    %v11020 = vperm.slane %v10459, 6
    %v11021 = vperm.slane %v10459, 7
    %v11022 = vperm.slane %v10460, 0
    %v11023 = vperm.slane %v10460, 1
    %v11024 = vperm.slane %v10460, 2
    %v11025 = vperm.slane %v10460, 3
    %v11026 = vperm.slane %v10460, 4
    %v11027 = vperm.slane %v10460, 5
    %v11028 = vperm.slane %v10460, 6
    %v11029 = vperm.slane %v10460, 7
    %v11030 = vperm.slane %v10461, 0
    %v11031 = vperm.slane %v10461, 1
    %v11032 = vperm.slane %v10461, 2
    %v11033 = vperm.slane %v10461, 3
    %v11034 = vperm.slane %v10461, 4
    %v11035 = vperm.slane %v10461, 5
    %v11036 = vperm.slane %v10461, 6
    %v11037 = vperm.slane %v10461, 7
    %11038 = vst [vmem:[#allocation1] ss:$9 sm:$0xff] %v10526
    %s11039 = scalar_lea.vmem [#allocation1], 1
    %11040 = vst [vmem:[%s11039] ss:$9 sm:$0xff] %v10527
    %s11041 = scalar_lea.vmem [#allocation1], 2
    %11042 = vst [vmem:[%s11041] ss:$9 sm:$0xff] %v10528
    %s11043 = scalar_lea.vmem [#allocation1], 3
    %11044 = vst [vmem:[%s11043] ss:$9 sm:$0xff] %v10529
    %s11045 = scalar_lea.vmem [#allocation1], 4
    %11046 = vst [vmem:[%s11045] ss:$9 sm:$0xff] %v10530
    %s11047 = scalar_lea.vmem [#allocation1], 5
    %11048 = vst [vmem:[%s11047] ss:$9 sm:$0xff] %v10531
    %s11049 = scalar_lea.vmem [#allocation1], 6
    %11050 = vst [vmem:[%s11049] ss:$9 sm:$0xff] %v10532
    %s11051 = scalar_lea.vmem [#allocation1], 7
    %11052 = vst [vmem:[%s11051] ss:$9 sm:$0xff] %v10533
    %v11053 = vld [vmem:[#allocation1] sm:$0xff]
    %11054 = vst [vmem:[#allocation1] ss:$9 sm:$0xff] %v10534
    %11055 = vst [vmem:[%s11039] ss:$9 sm:$0xff] %v10535
    %11056 = vst [vmem:[%s11041] ss:$9 sm:$0xff] %v10536
    %11057 = vst [vmem:[%s11043] ss:$9 sm:$0xff] %v10537
    %11058 = vst [vmem:[%s11045] ss:$9 sm:$0xff] %v10538
    %11059 = vst [vmem:[%s11047] ss:$9 sm:$0xff] %v10539
    %11060 = vst [vmem:[%s11049] ss:$9 sm:$0xff] %v10540
    %11061 = vst [vmem:[%s11051] ss:$9 sm:$0xff] %v10541
    %v11062 = vld [vmem:[#allocation1] sm:$0xff]
    %11063 = vst [vmem:[#allocation1] ss:$9 sm:$0xff] %v10542
    %11064 = vst [vmem:[%s11039] ss:$9 sm:$0xff] %v10543
    %11065 = vst [vmem:[%s11041] ss:$9 sm:$0xff] %v10544
    %11066 = vst [vmem:[%s11043] ss:$9 sm:$0xff] %v10545
    %11067 = vst [vmem:[%s11045] ss:$9 sm:$0xff] %v10546
    %11068 = vst [vmem:[%s11047] ss:$9 sm:$0xff] %v10547
    %11069 = vst [vmem:[%s11049] ss:$9 sm:$0xff] %v10548
    %11070 = vst [vmem:[%s11051] ss:$9 sm:$0xff] %v10549
    %v11071 = vld [vmem:[#allocation1] sm:$0xff]
    %11072 = vst [vmem:[#allocation1] ss:$9 sm:$0xff] %v10550
    %11073 = vst [vmem:[%s11039] ss:$9 sm:$0xff] %v10551
    %11074 = vst [vmem:[%s11041] ss:$9 sm:$0xff] %v10552
    %11075 = vst [vmem:[%s11043] ss:$9 sm:$0xff] %v10553
    %11076 = vst [vmem:[%s11045] ss:$9 sm:$0xff] %v10554
    %11077 = vst [vmem:[%s11047] ss:$9 sm:$0xff] %v10555
    %11078 = vst [vmem:[%s11049] ss:$9 sm:$0xff] %v10556
    %11079 = vst [vmem:[%s11051] ss:$9 sm:$0xff] %v10557
    %v11080 = vld [vmem:[#allocation1] sm:$0xff]
    %11081 = vst [vmem:[#allocation1] ss:$9 sm:$0xff] %v10558
    %11082 = vst [vmem:[%s11039] ss:$9 sm:$0xff] %v10559
    %11083 = vst [vmem:[%s11041] ss:$9 sm:$0xff] %v10560
    %11084 = vst [vmem:[%s11043] ss:$9 sm:$0xff] %v10561
    %11085 = vst [vmem:[%s11045] ss:$9 sm:$0xff] %v10562
    %11086 = vst [vmem:[%s11047] ss:$9 sm:$0xff] %v10563
    %11087 = vst [vmem:[%s11049] ss:$9 sm:$0xff] %v10564
    %11088 = vst [vmem:[%s11051] ss:$9 sm:$0xff] %v10565
    %v11089 = vld [vmem:[#allocation1] sm:$0xff]
    %11090 = vst [vmem:[#allocation1] ss:$9 sm:$0xff] %v10566
    %11091 = vst [vmem:[%s11039] ss:$9 sm:$0xff] %v10567
    %11092 = vst [vmem:[%s11041] ss:$9 sm:$0xff] %v10568
    %11093 = vst [vmem:[%s11043] ss:$9 sm:$0xff] %v10569
    %11094 = vst [vmem:[%s11045] ss:$9 sm:$0xff] %v10570
    %11095 = vst [vmem:[%s11047] ss:$9 sm:$0xff] %v10571
    %11096 = vst [vmem:[%s11049] ss:$9 sm:$0xff] %v10572
    %11097 = vst [vmem:[%s11051] ss:$9 sm:$0xff] %v10573
    %v11098 = vld [vmem:[#allocation1] sm:$0xff]
    %11099 = vst [vmem:[#allocation1] ss:$9 sm:$0xff] %v10574
    %11100 = vst [vmem:[%s11039] ss:$9 sm:$0xff] %v10575
    %11101 = vst [vmem:[%s11041] ss:$9 sm:$0xff] %v10576
    %11102 = vst [vmem:[%s11043] ss:$9 sm:$0xff] %v10577
    %11103 = vst [vmem:[%s11045] ss:$9 sm:$0xff] %v10578
    %11104 = vst [vmem:[%s11047] ss:$9 sm:$0xff] %v10579
    %11105 = vst [vmem:[%s11049] ss:$9 sm:$0xff] %v10580
    %11106 = vst [vmem:[%s11051] ss:$9 sm:$0xff] %v10581
    %v11107 = vld [vmem:[#allocation1] sm:$0xff]
    %11108 = vst [vmem:[#allocation1] ss:$9 sm:$0xff] %v10582
    %11109 = vst [vmem:[%s11039] ss:$9 sm:$0xff] %v10583
    %11110 = vst [vmem:[%s11041] ss:$9 sm:$0xff] %v10584
    %11111 = vst [vmem:[%s11043] ss:$9 sm:$0xff] %v10585
    %11112 = vst [vmem:[%s11045] ss:$9 sm:$0xff] %v10586
    %11113 = vst [vmem:[%s11047] ss:$9 sm:$0xff] %v10587
    %11114 = vst [vmem:[%s11049] ss:$9 sm:$0xff] %v10588
    %11115 = vst [vmem:[%s11051] ss:$9 sm:$0xff] %v10589
    %v11116 = vld [vmem:[#allocation1] sm:$0xff]
    %11117 = vst [vmem:[#allocation1] ss:$9 sm:$0xff] %v10590
    %11118 = vst [vmem:[%s11039] ss:$9 sm:$0xff] %v10591
    %11119 = vst [vmem:[%s11041] ss:$9 sm:$0xff] %v10592
    %11120 = vst [vmem:[%s11043] ss:$9 sm:$0xff] %v10593
    %11121 = vst [vmem:[%s11045] ss:$9 sm:$0xff] %v10594
    %11122 = vst [vmem:[%s11047] ss:$9 sm:$0xff] %v10595
    %11123 = vst [vmem:[%s11049] ss:$9 sm:$0xff] %v10596
    %11124 = vst [vmem:[%s11051] ss:$9 sm:$0xff] %v10597
    %v11125 = vld [vmem:[#allocation1] sm:$0xff]
    %11126 = vst [vmem:[#allocation1] ss:$9 sm:$0xff] %v10598
    %11127 = vst [vmem:[%s11039] ss:$9 sm:$0xff] %v10599
    %11128 = vst [vmem:[%s11041] ss:$9 sm:$0xff] %v10600
    %11129 = vst [vmem:[%s11043] ss:$9 sm:$0xff] %v10601
    %11130 = vst [vmem:[%s11045] ss:$9 sm:$0xff] %v10602
    %11131 = vst [vmem:[%s11047] ss:$9 sm:$0xff] %v10603
    %11132 = vst [vmem:[%s11049] ss:$9 sm:$0xff] %v10604
    %11133 = vst [vmem:[%s11051] ss:$9 sm:$0xff] %v10605
    %v11134 = vld [vmem:[#allocation1] sm:$0xff]
    %11135 = vst [vmem:[#allocation1] ss:$9 sm:$0xff] %v10606
    %11136 = vst [vmem:[%s11039] ss:$9 sm:$0xff] %v10607
    %11137 = vst [vmem:[%s11041] ss:$9 sm:$0xff] %v10608
    %11138 = vst [vmem:[%s11043] ss:$9 sm:$0xff] %v10609
    %11139 = vst [vmem:[%s11045] ss:$9 sm:$0xff] %v10610
    %11140 = vst [vmem:[%s11047] ss:$9 sm:$0xff] %v10611
    %11141 = vst [vmem:[%s11049] ss:$9 sm:$0xff] %v10612
    %11142 = vst [vmem:[%s11051] ss:$9 sm:$0xff] %v10613
    %v11143 = vld [vmem:[#allocation1] sm:$0xff]
    %11144 = vst [vmem:[#allocation1] ss:$9 sm:$0xff] %v10614
    %11145 = vst [vmem:[%s11039] ss:$9 sm:$0xff] %v10615
    %11146 = vst [vmem:[%s11041] ss:$9 sm:$0xff] %v10616
    %11147 = vst [vmem:[%s11043] ss:$9 sm:$0xff] %v10617
    %11148 = vst [vmem:[%s11045] ss:$9 sm:$0xff] %v10618
    %11149 = vst [vmem:[%s11047] ss:$9 sm:$0xff] %v10619
    %11150 = vst [vmem:[%s11049] ss:$9 sm:$0xff] %v10620
    %11151 = vst [vmem:[%s11051] ss:$9 sm:$0xff] %v10621
    %v11152 = vld [vmem:[#allocation1] sm:$0xff]
    %11153 = vst [vmem:[#allocation1] ss:$9 sm:$0xff] %v10622
    %11154 = vst [vmem:[%s11039] ss:$9 sm:$0xff] %v10623
    %11155 = vst [vmem:[%s11041] ss:$9 sm:$0xff] %v10624
    %11156 = vst [vmem:[%s11043] ss:$9 sm:$0xff] %v10625
    %11157 = vst [vmem:[%s11045] ss:$9 sm:$0xff] %v10626
    %11158 = vst [vmem:[%s11047] ss:$9 sm:$0xff] %v10627
    %11159 = vst [vmem:[%s11049] ss:$9 sm:$0xff] %v10628
    %11160 = vst [vmem:[%s11051] ss:$9 sm:$0xff] %v10629
    %v11161 = vld [vmem:[#allocation1] sm:$0xff]
    %11162 = vst [vmem:[#allocation1] ss:$9 sm:$0xff] %v10630
    %11163 = vst [vmem:[%s11039] ss:$9 sm:$0xff] %v10631
    %11164 = vst [vmem:[%s11041] ss:$9 sm:$0xff] %v10632
    %11165 = vst [vmem:[%s11043] ss:$9 sm:$0xff] %v10633
    %11166 = vst [vmem:[%s11045] ss:$9 sm:$0xff] %v10634
    %11167 = vst [vmem:[%s11047] ss:$9 sm:$0xff] %v10635
    %11168 = vst [vmem:[%s11049] ss:$9 sm:$0xff] %v10636
    %11169 = vst [vmem:[%s11051] ss:$9 sm:$0xff] %v10637
    %v11170 = vld [vmem:[#allocation1] sm:$0xff]
    %11171 = vst [vmem:[#allocation1] ss:$9 sm:$0xff] %v10638
    %11172 = vst [vmem:[%s11039] ss:$9 sm:$0xff] %v10639
    %11173 = vst [vmem:[%s11041] ss:$9 sm:$0xff] %v10640
    %11174 = vst [vmem:[%s11043] ss:$9 sm:$0xff] %v10641
    %11175 = vst [vmem:[%s11045] ss:$9 sm:$0xff] %v10642
    %11176 = vst [vmem:[%s11047] ss:$9 sm:$0xff] %v10643
    %11177 = vst [vmem:[%s11049] ss:$9 sm:$0xff] %v10644
    %11178 = vst [vmem:[%s11051] ss:$9 sm:$0xff] %v10645
    %v11179 = vld [vmem:[#allocation1] sm:$0xff]
    %11180 = vst [vmem:[#allocation1] ss:$9 sm:$0xff] %v10646
    %11181 = vst [vmem:[%s11039] ss:$9 sm:$0xff] %v10647
    %11182 = vst [vmem:[%s11041] ss:$9 sm:$0xff] %v10648
    %11183 = vst [vmem:[%s11043] ss:$9 sm:$0xff] %v10649
    %11184 = vst [vmem:[%s11045] ss:$9 sm:$0xff] %v10650
    %11185 = vst [vmem:[%s11047] ss:$9 sm:$0xff] %v10651
    %11186 = vst [vmem:[%s11049] ss:$9 sm:$0xff] %v10652
    %11187 = vst [vmem:[%s11051] ss:$9 sm:$0xff] %v10653
    %v11188 = vld [vmem:[#allocation1] sm:$0xff]
    %11189 = vst [vmem:[#allocation1] ss:$9 sm:$0xff] %v10654
    %11190 = vst [vmem:[%s11039] ss:$9 sm:$0xff] %v10655
    %11191 = vst [vmem:[%s11041] ss:$9 sm:$0xff] %v10656
    %11192 = vst [vmem:[%s11043] ss:$9 sm:$0xff] %v10657
    %11193 = vst [vmem:[%s11045] ss:$9 sm:$0xff] %v10658
    %11194 = vst [vmem:[%s11047] ss:$9 sm:$0xff] %v10659
    %11195 = vst [vmem:[%s11049] ss:$9 sm:$0xff] %v10660
    %11196 = vst [vmem:[%s11051] ss:$9 sm:$0xff] %v10661
    %v11197 = vld [vmem:[#allocation1] sm:$0xff]
    %11198 = vst [vmem:[#allocation1] ss:$9 sm:$0xff] %v10662
    %11199 = vst [vmem:[%s11039] ss:$9 sm:$0xff] %v10663
    %11200 = vst [vmem:[%s11041] ss:$9 sm:$0xff] %v10664
    %11201 = vst [vmem:[%s11043] ss:$9 sm:$0xff] %v10665
    %11202 = vst [vmem:[%s11045] ss:$9 sm:$0xff] %v10666
    %11203 = vst [vmem:[%s11047] ss:$9 sm:$0xff] %v10667
    %11204 = vst [vmem:[%s11049] ss:$9 sm:$0xff] %v10668
    %11205 = vst [vmem:[%s11051] ss:$9 sm:$0xff] %v10669
    %v11206 = vld [vmem:[#allocation1] sm:$0xff]
    %11207 = vst [vmem:[#allocation1] ss:$9 sm:$0xff] %v10670
    %11208 = vst [vmem:[%s11039] ss:$9 sm:$0xff] %v10671
    %11209 = vst [vmem:[%s11041] ss:$9 sm:$0xff] %v10672
    %11210 = vst [vmem:[%s11043] ss:$9 sm:$0xff] %v10673
    %11211 = vst [vmem:[%s11045] ss:$9 sm:$0xff] %v10674
    %11212 = vst [vmem:[%s11047] ss:$9 sm:$0xff] %v10675
    %11213 = vst [vmem:[%s11049] ss:$9 sm:$0xff] %v10676
    %11214 = vst [vmem:[%s11051] ss:$9 sm:$0xff] %v10677
    %v11215 = vld [vmem:[#allocation1] sm:$0xff]
    %11216 = vst [vmem:[#allocation1] ss:$9 sm:$0xff] %v10678
    %11217 = vst [vmem:[%s11039] ss:$9 sm:$0xff] %v10679
    %11218 = vst [vmem:[%s11041] ss:$9 sm:$0xff] %v10680
    %11219 = vst [vmem:[%s11043] ss:$9 sm:$0xff] %v10681
    %11220 = vst [vmem:[%s11045] ss:$9 sm:$0xff] %v10682
    %11221 = vst [vmem:[%s11047] ss:$9 sm:$0xff] %v10683
    %11222 = vst [vmem:[%s11049] ss:$9 sm:$0xff] %v10684
    %11223 = vst [vmem:[%s11051] ss:$9 sm:$0xff] %v10685
    %v11224 = vld [vmem:[#allocation1] sm:$0xff]
    %11225 = vst [vmem:[#allocation1] ss:$9 sm:$0xff] %v10686
    %11226 = vst [vmem:[%s11039] ss:$9 sm:$0xff] %v10687
    %11227 = vst [vmem:[%s11041] ss:$9 sm:$0xff] %v10688
    %11228 = vst [vmem:[%s11043] ss:$9 sm:$0xff] %v10689
    %11229 = vst [vmem:[%s11045] ss:$9 sm:$0xff] %v10690
    %11230 = vst [vmem:[%s11047] ss:$9 sm:$0xff] %v10691
    %11231 = vst [vmem:[%s11049] ss:$9 sm:$0xff] %v10692
    %11232 = vst [vmem:[%s11051] ss:$9 sm:$0xff] %v10693
    %v11233 = vld [vmem:[#allocation1] sm:$0xff]
    %11234 = vst [vmem:[#allocation1] ss:$9 sm:$0xff] %v10694
    %11235 = vst [vmem:[%s11039] ss:$9 sm:$0xff] %v10695
    %11236 = vst [vmem:[%s11041] ss:$9 sm:$0xff] %v10696
    %11237 = vst [vmem:[%s11043] ss:$9 sm:$0xff] %v10697
    %11238 = vst [vmem:[%s11045] ss:$9 sm:$0xff] %v10698
    %11239 = vst [vmem:[%s11047] ss:$9 sm:$0xff] %v10699
    %11240 = vst [vmem:[%s11049] ss:$9 sm:$0xff] %v10700
    %11241 = vst [vmem:[%s11051] ss:$9 sm:$0xff] %v10701
    %v11242 = vld [vmem:[#allocation1] sm:$0xff]
    %11243 = vst [vmem:[#allocation1] ss:$9 sm:$0xff] %v10702
    %11244 = vst [vmem:[%s11039] ss:$9 sm:$0xff] %v10703
    %11245 = vst [vmem:[%s11041] ss:$9 sm:$0xff] %v10704
    %11246 = vst [vmem:[%s11043] ss:$9 sm:$0xff] %v10705
    %11247 = vst [vmem:[%s11045] ss:$9 sm:$0xff] %v10706
    %11248 = vst [vmem:[%s11047] ss:$9 sm:$0xff] %v10707
    %11249 = vst [vmem:[%s11049] ss:$9 sm:$0xff] %v10708
    %11250 = vst [vmem:[%s11051] ss:$9 sm:$0xff] %v10709
    %v11251 = vld [vmem:[#allocation1] sm:$0xff]
    %11252 = vst [vmem:[#allocation1] ss:$9 sm:$0xff] %v10710
    %11253 = vst [vmem:[%s11039] ss:$9 sm:$0xff] %v10711
    %11254 = vst [vmem:[%s11041] ss:$9 sm:$0xff] %v10712
    %11255 = vst [vmem:[%s11043] ss:$9 sm:$0xff] %v10713
    %11256 = vst [vmem:[%s11045] ss:$9 sm:$0xff] %v10714
    %11257 = vst [vmem:[%s11047] ss:$9 sm:$0xff] %v10715
    %11258 = vst [vmem:[%s11049] ss:$9 sm:$0xff] %v10716
    %11259 = vst [vmem:[%s11051] ss:$9 sm:$0xff] %v10717
    %v11260 = vld [vmem:[#allocation1] sm:$0xff]
    %11261 = vst [vmem:[#allocation1] ss:$9 sm:$0xff] %v10718
    %11262 = vst [vmem:[%s11039] ss:$9 sm:$0xff] %v10719
    %11263 = vst [vmem:[%s11041] ss:$9 sm:$0xff] %v10720
    %11264 = vst [vmem:[%s11043] ss:$9 sm:$0xff] %v10721
    %11265 = vst [vmem:[%s11045] ss:$9 sm:$0xff] %v10722
    %11266 = vst [vmem:[%s11047] ss:$9 sm:$0xff] %v10723
    %11267 = vst [vmem:[%s11049] ss:$9 sm:$0xff] %v10724
    %11268 = vst [vmem:[%s11051] ss:$9 sm:$0xff] %v10725
    %v11269 = vld [vmem:[#allocation1] sm:$0xff]
    %11270 = vst [vmem:[#allocation1] ss:$9 sm:$0xff] %v10726
    %11271 = vst [vmem:[%s11039] ss:$9 sm:$0xff] %v10727
    %11272 = vst [vmem:[%s11041] ss:$9 sm:$0xff] %v10728
    %11273 = vst [vmem:[%s11043] ss:$9 sm:$0xff] %v10729
    %11274 = vst [vmem:[%s11045] ss:$9 sm:$0xff] %v10730
    %11275 = vst [vmem:[%s11047] ss:$9 sm:$0xff] %v10731
    %11276 = vst [vmem:[%s11049] ss:$9 sm:$0xff] %v10732
    %11277 = vst [vmem:[%s11051] ss:$9 sm:$0xff] %v10733
    %v11278 = vld [vmem:[#allocation1] sm:$0xff]
    %11279 = vst [vmem:[#allocation1] ss:$9 sm:$0xff] %v10734
    %11280 = vst [vmem:[%s11039] ss:$9 sm:$0xff] %v10735
    %11281 = vst [vmem:[%s11041] ss:$9 sm:$0xff] %v10736
    %11282 = vst [vmem:[%s11043] ss:$9 sm:$0xff] %v10737
    %11283 = vst [vmem:[%s11045] ss:$9 sm:$0xff] %v10738
    %11284 = vst [vmem:[%s11047] ss:$9 sm:$0xff] %v10739
    %11285 = vst [vmem:[%s11049] ss:$9 sm:$0xff] %v10740
    %11286 = vst [vmem:[%s11051] ss:$9 sm:$0xff] %v10741
    %v11287 = vld [vmem:[#allocation1] sm:$0xff]
    %11288 = vst [vmem:[#allocation1] ss:$9 sm:$0xff] %v10742
    %11289 = vst [vmem:[%s11039] ss:$9 sm:$0xff] %v10743
    %11290 = vst [vmem:[%s11041] ss:$9 sm:$0xff] %v10744
    %11291 = vst [vmem:[%s11043] ss:$9 sm:$0xff] %v10745
    %11292 = vst [vmem:[%s11045] ss:$9 sm:$0xff] %v10746
    %11293 = vst [vmem:[%s11047] ss:$9 sm:$0xff] %v10747
    %11294 = vst [vmem:[%s11049] ss:$9 sm:$0xff] %v10748
    %11295 = vst [vmem:[%s11051] ss:$9 sm:$0xff] %v10749
    %v11296 = vld [vmem:[#allocation1] sm:$0xff]
    %11297 = vst [vmem:[#allocation1] ss:$9 sm:$0xff] %v10750
    %11298 = vst [vmem:[%s11039] ss:$9 sm:$0xff] %v10751
    %11299 = vst [vmem:[%s11041] ss:$9 sm:$0xff] %v10752
    %11300 = vst [vmem:[%s11043] ss:$9 sm:$0xff] %v10753
    %11301 = vst [vmem:[%s11045] ss:$9 sm:$0xff] %v10754
    %11302 = vst [vmem:[%s11047] ss:$9 sm:$0xff] %v10755
    %11303 = vst [vmem:[%s11049] ss:$9 sm:$0xff] %v10756
    %11304 = vst [vmem:[%s11051] ss:$9 sm:$0xff] %v10757
    %v11305 = vld [vmem:[#allocation1] sm:$0xff]
    %11306 = vst [vmem:[#allocation1] ss:$9 sm:$0xff] %v10758
    %11307 = vst [vmem:[%s11039] ss:$9 sm:$0xff] %v10759
    %11308 = vst [vmem:[%s11041] ss:$9 sm:$0xff] %v10760
    %11309 = vst [vmem:[%s11043] ss:$9 sm:$0xff] %v10761
    %11310 = vst [vmem:[%s11045] ss:$9 sm:$0xff] %v10762
    %11311 = vst [vmem:[%s11047] ss:$9 sm:$0xff] %v10763
    %11312 = vst [vmem:[%s11049] ss:$9 sm:$0xff] %v10764
    %11313 = vst [vmem:[%s11051] ss:$9 sm:$0xff] %v10765
    %v11314 = vld [vmem:[#allocation1] sm:$0xff]
    %11315 = vst [vmem:[#allocation1] ss:$9 sm:$0xff] %v10766
    %11316 = vst [vmem:[%s11039] ss:$9 sm:$0xff] %v10767
    %11317 = vst [vmem:[%s11041] ss:$9 sm:$0xff] %v10768
    %11318 = vst [vmem:[%s11043] ss:$9 sm:$0xff] %v10769
    %11319 = vst [vmem:[%s11045] ss:$9 sm:$0xff] %v10770
    %11320 = vst [vmem:[%s11047] ss:$9 sm:$0xff] %v10771
    %11321 = vst [vmem:[%s11049] ss:$9 sm:$0xff] %v10772
    %11322 = vst [vmem:[%s11051] ss:$9 sm:$0xff] %v10773
    %v11323 = vld [vmem:[#allocation1] sm:$0xff]
    %11324 = vst [vmem:[#allocation1] ss:$9 sm:$0xff] %v10774
    %11325 = vst [vmem:[%s11039] ss:$9 sm:$0xff] %v10775
    %11326 = vst [vmem:[%s11041] ss:$9 sm:$0xff] %v10776
    %11327 = vst [vmem:[%s11043] ss:$9 sm:$0xff] %v10777
    %11328 = vst [vmem:[%s11045] ss:$9 sm:$0xff] %v10778
    %11329 = vst [vmem:[%s11047] ss:$9 sm:$0xff] %v10779
    %11330 = vst [vmem:[%s11049] ss:$9 sm:$0xff] %v10780
    %11331 = vst [vmem:[%s11051] ss:$9 sm:$0xff] %v10781
    %v11332 = vld [vmem:[#allocation1] sm:$0xff]
    %11333 = vst [vmem:[#allocation1] ss:$9 sm:$0xff] %v10782
    %11334 = vst [vmem:[%s11039] ss:$9 sm:$0xff] %v10783
    %11335 = vst [vmem:[%s11041] ss:$9 sm:$0xff] %v10784
    %11336 = vst [vmem:[%s11043] ss:$9 sm:$0xff] %v10785
    %11337 = vst [vmem:[%s11045] ss:$9 sm:$0xff] %v10786
    %11338 = vst [vmem:[%s11047] ss:$9 sm:$0xff] %v10787
    %11339 = vst [vmem:[%s11049] ss:$9 sm:$0xff] %v10788
    %11340 = vst [vmem:[%s11051] ss:$9 sm:$0xff] %v10789
    %v11341 = vld [vmem:[#allocation1] sm:$0xff]
    %11342 = vst [vmem:[#allocation1] ss:$9 sm:$0xff] %v10790
    %11343 = vst [vmem:[%s11039] ss:$9 sm:$0xff] %v10791
    %11344 = vst [vmem:[%s11041] ss:$9 sm:$0xff] %v10792
    %11345 = vst [vmem:[%s11043] ss:$9 sm:$0xff] %v10793
    %11346 = vst [vmem:[%s11045] ss:$9 sm:$0xff] %v10794
    %11347 = vst [vmem:[%s11047] ss:$9 sm:$0xff] %v10795
    %11348 = vst [vmem:[%s11049] ss:$9 sm:$0xff] %v10796
    %11349 = vst [vmem:[%s11051] ss:$9 sm:$0xff] %v10797
    %v11350 = vld [vmem:[#allocation1] sm:$0xff]
    %11351 = vst [vmem:[#allocation1] ss:$9 sm:$0xff] %v10798
    %11352 = vst [vmem:[%s11039] ss:$9 sm:$0xff] %v10799
    %11353 = vst [vmem:[%s11041] ss:$9 sm:$0xff] %v10800
    %11354 = vst [vmem:[%s11043] ss:$9 sm:$0xff] %v10801
    %11355 = vst [vmem:[%s11045] ss:$9 sm:$0xff] %v10802
    %11356 = vst [vmem:[%s11047] ss:$9 sm:$0xff] %v10803
    %11357 = vst [vmem:[%s11049] ss:$9 sm:$0xff] %v10804
    %11358 = vst [vmem:[%s11051] ss:$9 sm:$0xff] %v10805
    %v11359 = vld [vmem:[#allocation1] sm:$0xff]
    %11360 = vst [vmem:[#allocation1] ss:$9 sm:$0xff] %v10806
    %11361 = vst [vmem:[%s11039] ss:$9 sm:$0xff] %v10807
    %11362 = vst [vmem:[%s11041] ss:$9 sm:$0xff] %v10808
    %11363 = vst [vmem:[%s11043] ss:$9 sm:$0xff] %v10809
    %11364 = vst [vmem:[%s11045] ss:$9 sm:$0xff] %v10810
    %11365 = vst [vmem:[%s11047] ss:$9 sm:$0xff] %v10811
    %11366 = vst [vmem:[%s11049] ss:$9 sm:$0xff] %v10812
    %11367 = vst [vmem:[%s11051] ss:$9 sm:$0xff] %v10813
    %v11368 = vld [vmem:[#allocation1] sm:$0xff]
    %11369 = vst [vmem:[#allocation1] ss:$9 sm:$0xff] %v10814
    %11370 = vst [vmem:[%s11039] ss:$9 sm:$0xff] %v10815
    %11371 = vst [vmem:[%s11041] ss:$9 sm:$0xff] %v10816
    %11372 = vst [vmem:[%s11043] ss:$9 sm:$0xff] %v10817
    %11373 = vst [vmem:[%s11045] ss:$9 sm:$0xff] %v10818
    %11374 = vst [vmem:[%s11047] ss:$9 sm:$0xff] %v10819
    %11375 = vst [vmem:[%s11049] ss:$9 sm:$0xff] %v10820
    %11376 = vst [vmem:[%s11051] ss:$9 sm:$0xff] %v10821
    %v11377 = vld [vmem:[#allocation1] sm:$0xff]
    %11378 = vst [vmem:[#allocation1] ss:$9 sm:$0xff] %v10822
    %11379 = vst [vmem:[%s11039] ss:$9 sm:$0xff] %v10823
    %11380 = vst [vmem:[%s11041] ss:$9 sm:$0xff] %v10824
    %11381 = vst [vmem:[%s11043] ss:$9 sm:$0xff] %v10825
    %11382 = vst [vmem:[%s11045] ss:$9 sm:$0xff] %v10826
    %11383 = vst [vmem:[%s11047] ss:$9 sm:$0xff] %v10827
    %11384 = vst [vmem:[%s11049] ss:$9 sm:$0xff] %v10828
    %11385 = vst [vmem:[%s11051] ss:$9 sm:$0xff] %v10829
    %v11386 = vld [vmem:[#allocation1] sm:$0xff]
    %11387 = vst [vmem:[#allocation1] ss:$9 sm:$0xff] %v10830
    %11388 = vst [vmem:[%s11039] ss:$9 sm:$0xff] %v10831
    %11389 = vst [vmem:[%s11041] ss:$9 sm:$0xff] %v10832
    %11390 = vst [vmem:[%s11043] ss:$9 sm:$0xff] %v10833
    %11391 = vst [vmem:[%s11045] ss:$9 sm:$0xff] %v10834
    %11392 = vst [vmem:[%s11047] ss:$9 sm:$0xff] %v10835
    %11393 = vst [vmem:[%s11049] ss:$9 sm:$0xff] %v10836
    %11394 = vst [vmem:[%s11051] ss:$9 sm:$0xff] %v10837
    %v11395 = vld [vmem:[#allocation1] sm:$0xff]
    %11396 = vst [vmem:[#allocation1] ss:$9 sm:$0xff] %v10838
    %11397 = vst [vmem:[%s11039] ss:$9 sm:$0xff] %v10839
    %11398 = vst [vmem:[%s11041] ss:$9 sm:$0xff] %v10840
    %11399 = vst [vmem:[%s11043] ss:$9 sm:$0xff] %v10841
    %11400 = vst [vmem:[%s11045] ss:$9 sm:$0xff] %v10842
    %11401 = vst [vmem:[%s11047] ss:$9 sm:$0xff] %v10843
    %11402 = vst [vmem:[%s11049] ss:$9 sm:$0xff] %v10844
    %11403 = vst [vmem:[%s11051] ss:$9 sm:$0xff] %v10845
    %v11404 = vld [vmem:[#allocation1] sm:$0xff]
    %11405 = vst [vmem:[#allocation1] ss:$9 sm:$0xff] %v10846
    %11406 = vst [vmem:[%s11039] ss:$9 sm:$0xff] %v10847
    %11407 = vst [vmem:[%s11041] ss:$9 sm:$0xff] %v10848
    %11408 = vst [vmem:[%s11043] ss:$9 sm:$0xff] %v10849
    %11409 = vst [vmem:[%s11045] ss:$9 sm:$0xff] %v10850
    %11410 = vst [vmem:[%s11047] ss:$9 sm:$0xff] %v10851
    %11411 = vst [vmem:[%s11049] ss:$9 sm:$0xff] %v10852
    %11412 = vst [vmem:[%s11051] ss:$9 sm:$0xff] %v10853
    %v11413 = vld [vmem:[#allocation1] sm:$0xff]
    %11414 = vst [vmem:[#allocation1] ss:$9 sm:$0xff] %v10854
    %11415 = vst [vmem:[%s11039] ss:$9 sm:$0xff] %v10855
    %11416 = vst [vmem:[%s11041] ss:$9 sm:$0xff] %v10856
    %11417 = vst [vmem:[%s11043] ss:$9 sm:$0xff] %v10857
    %11418 = vst [vmem:[%s11045] ss:$9 sm:$0xff] %v10858
    %11419 = vst [vmem:[%s11047] ss:$9 sm:$0xff] %v10859
    %11420 = vst [vmem:[%s11049] ss:$9 sm:$0xff] %v10860
    %11421 = vst [vmem:[%s11051] ss:$9 sm:$0xff] %v10861
    %v11422 = vld [vmem:[#allocation1] sm:$0xff]
    %11423 = vst [vmem:[#allocation1] ss:$9 sm:$0xff] %v10862
    %11424 = vst [vmem:[%s11039] ss:$9 sm:$0xff] %v10863
    %11425 = vst [vmem:[%s11041] ss:$9 sm:$0xff] %v10864
    %11426 = vst [vmem:[%s11043] ss:$9 sm:$0xff] %v10865
    %11427 = vst [vmem:[%s11045] ss:$9 sm:$0xff] %v10866
    %11428 = vst [vmem:[%s11047] ss:$9 sm:$0xff] %v10867
    %11429 = vst [vmem:[%s11049] ss:$9 sm:$0xff] %v10868
    %11430 = vst [vmem:[%s11051] ss:$9 sm:$0xff] %v10869
    %v11431 = vld [vmem:[#allocation1] sm:$0xff]
    %11432 = vst [vmem:[#allocation1] ss:$9 sm:$0xff] %v10870
    %11433 = vst [vmem:[%s11039] ss:$9 sm:$0xff] %v10871
    %11434 = vst [vmem:[%s11041] ss:$9 sm:$0xff] %v10872
    %11435 = vst [vmem:[%s11043] ss:$9 sm:$0xff] %v10873
    %11436 = vst [vmem:[%s11045] ss:$9 sm:$0xff] %v10874
    %11437 = vst [vmem:[%s11047] ss:$9 sm:$0xff] %v10875
    %11438 = vst [vmem:[%s11049] ss:$9 sm:$0xff] %v10876
    %11439 = vst [vmem:[%s11051] ss:$9 sm:$0xff] %v10877
    %v11440 = vld [vmem:[#allocation1] sm:$0xff]
    %11441 = vst [vmem:[#allocation1] ss:$9 sm:$0xff] %v10878
    %11442 = vst [vmem:[%s11039] ss:$9 sm:$0xff] %v10879
    %11443 = vst [vmem:[%s11041] ss:$9 sm:$0xff] %v10880
    %11444 = vst [vmem:[%s11043] ss:$9 sm:$0xff] %v10881
    %11445 = vst [vmem:[%s11045] ss:$9 sm:$0xff] %v10882
    %11446 = vst [vmem:[%s11047] ss:$9 sm:$0xff] %v10883
    %11447 = vst [vmem:[%s11049] ss:$9 sm:$0xff] %v10884
    %11448 = vst [vmem:[%s11051] ss:$9 sm:$0xff] %v10885
    %v11449 = vld [vmem:[#allocation1] sm:$0xff]
    %11450 = vst [vmem:[#allocation1] ss:$9 sm:$0xff] %v10886
    %11451 = vst [vmem:[%s11039] ss:$9 sm:$0xff] %v10887
    %11452 = vst [vmem:[%s11041] ss:$9 sm:$0xff] %v10888
    %11453 = vst [vmem:[%s11043] ss:$9 sm:$0xff] %v10889
    %11454 = vst [vmem:[%s11045] ss:$9 sm:$0xff] %v10890
    %11455 = vst [vmem:[%s11047] ss:$9 sm:$0xff] %v10891
    %11456 = vst [vmem:[%s11049] ss:$9 sm:$0xff] %v10892
    %11457 = vst [vmem:[%s11051] ss:$9 sm:$0xff] %v10893
    %v11458 = vld [vmem:[#allocation1] sm:$0xff]
    %11459 = vst [vmem:[#allocation1] ss:$9 sm:$0xff] %v10894
    %11460 = vst [vmem:[%s11039] ss:$9 sm:$0xff] %v10895
    %11461 = vst [vmem:[%s11041] ss:$9 sm:$0xff] %v10896
    %11462 = vst [vmem:[%s11043] ss:$9 sm:$0xff] %v10897
    %11463 = vst [vmem:[%s11045] ss:$9 sm:$0xff] %v10898
    %11464 = vst [vmem:[%s11047] ss:$9 sm:$0xff] %v10899
    %11465 = vst [vmem:[%s11049] ss:$9 sm:$0xff] %v10900
    %11466 = vst [vmem:[%s11051] ss:$9 sm:$0xff] %v10901
    %v11467 = vld [vmem:[#allocation1] sm:$0xff]
    %11468 = vst [vmem:[#allocation1] ss:$9 sm:$0xff] %v10902
    %11469 = vst [vmem:[%s11039] ss:$9 sm:$0xff] %v10903
    %11470 = vst [vmem:[%s11041] ss:$9 sm:$0xff] %v10904
    %11471 = vst [vmem:[%s11043] ss:$9 sm:$0xff] %v10905
    %11472 = vst [vmem:[%s11045] ss:$9 sm:$0xff] %v10906
    %11473 = vst [vmem:[%s11047] ss:$9 sm:$0xff] %v10907
    %11474 = vst [vmem:[%s11049] ss:$9 sm:$0xff] %v10908
    %11475 = vst [vmem:[%s11051] ss:$9 sm:$0xff] %v10909
    %v11476 = vld [vmem:[#allocation1] sm:$0xff]
    %11477 = vst [vmem:[#allocation1] ss:$9 sm:$0xff] %v10910
    %11478 = vst [vmem:[%s11039] ss:$9 sm:$0xff] %v10911
    %11479 = vst [vmem:[%s11041] ss:$9 sm:$0xff] %v10912
    %11480 = vst [vmem:[%s11043] ss:$9 sm:$0xff] %v10913
    %11481 = vst [vmem:[%s11045] ss:$9 sm:$0xff] %v10914
    %11482 = vst [vmem:[%s11047] ss:$9 sm:$0xff] %v10915
    %11483 = vst [vmem:[%s11049] ss:$9 sm:$0xff] %v10916
    %11484 = vst [vmem:[%s11051] ss:$9 sm:$0xff] %v10917
    %v11485 = vld [vmem:[#allocation1] sm:$0xff]
    %11486 = vst [vmem:[#allocation1] ss:$9 sm:$0xff] %v10918
    %11487 = vst [vmem:[%s11039] ss:$9 sm:$0xff] %v10919
    %11488 = vst [vmem:[%s11041] ss:$9 sm:$0xff] %v10920
    %11489 = vst [vmem:[%s11043] ss:$9 sm:$0xff] %v10921
    %11490 = vst [vmem:[%s11045] ss:$9 sm:$0xff] %v10922
    %11491 = vst [vmem:[%s11047] ss:$9 sm:$0xff] %v10923
    %11492 = vst [vmem:[%s11049] ss:$9 sm:$0xff] %v10924
    %11493 = vst [vmem:[%s11051] ss:$9 sm:$0xff] %v10925
    %v11494 = vld [vmem:[#allocation1] sm:$0xff]
    %11495 = vst [vmem:[#allocation1] ss:$9 sm:$0xff] %v10926
    %11496 = vst [vmem:[%s11039] ss:$9 sm:$0xff] %v10927
    %11497 = vst [vmem:[%s11041] ss:$9 sm:$0xff] %v10928
    %11498 = vst [vmem:[%s11043] ss:$9 sm:$0xff] %v10929
    %11499 = vst [vmem:[%s11045] ss:$9 sm:$0xff] %v10930
    %11500 = vst [vmem:[%s11047] ss:$9 sm:$0xff] %v10931
    %11501 = vst [vmem:[%s11049] ss:$9 sm:$0xff] %v10932
    %11502 = vst [vmem:[%s11051] ss:$9 sm:$0xff] %v10933
    %v11503 = vld [vmem:[#allocation1] sm:$0xff]
    %11504 = vst [vmem:[#allocation1] ss:$9 sm:$0xff] %v10934
    %11505 = vst [vmem:[%s11039] ss:$9 sm:$0xff] %v10935
    %11506 = vst [vmem:[%s11041] ss:$9 sm:$0xff] %v10936
    %11507 = vst [vmem:[%s11043] ss:$9 sm:$0xff] %v10937
    %11508 = vst [vmem:[%s11045] ss:$9 sm:$0xff] %v10938
    %11509 = vst [vmem:[%s11047] ss:$9 sm:$0xff] %v10939
    %11510 = vst [vmem:[%s11049] ss:$9 sm:$0xff] %v10940
    %11511 = vst [vmem:[%s11051] ss:$9 sm:$0xff] %v10941
    %v11512 = vld [vmem:[#allocation1] sm:$0xff]
    %11513 = vst [vmem:[#allocation1] ss:$9 sm:$0xff] %v10942
    %11514 = vst [vmem:[%s11039] ss:$9 sm:$0xff] %v10943
    %11515 = vst [vmem:[%s11041] ss:$9 sm:$0xff] %v10944
    %11516 = vst [vmem:[%s11043] ss:$9 sm:$0xff] %v10945
    %11517 = vst [vmem:[%s11045] ss:$9 sm:$0xff] %v10946
    %11518 = vst [vmem:[%s11047] ss:$9 sm:$0xff] %v10947
    %11519 = vst [vmem:[%s11049] ss:$9 sm:$0xff] %v10948
    %11520 = vst [vmem:[%s11051] ss:$9 sm:$0xff] %v10949
    %v11521 = vld [vmem:[#allocation1] sm:$0xff]
    %11522 = vst [vmem:[#allocation1] ss:$9 sm:$0xff] %v10950
    %11523 = vst [vmem:[%s11039] ss:$9 sm:$0xff] %v10951
    %11524 = vst [vmem:[%s11041] ss:$9 sm:$0xff] %v10952
    %11525 = vst [vmem:[%s11043] ss:$9 sm:$0xff] %v10953
    %11526 = vst [vmem:[%s11045] ss:$9 sm:$0xff] %v10954
    %11527 = vst [vmem:[%s11047] ss:$9 sm:$0xff] %v10955
    %11528 = vst [vmem:[%s11049] ss:$9 sm:$0xff] %v10956
    %11529 = vst [vmem:[%s11051] ss:$9 sm:$0xff] %v10957
    %v11530 = vld [vmem:[#allocation1] sm:$0xff]
    %11531 = vst [vmem:[#allocation1] ss:$9 sm:$0xff] %v10958
    %11532 = vst [vmem:[%s11039] ss:$9 sm:$0xff] %v10959
    %11533 = vst [vmem:[%s11041] ss:$9 sm:$0xff] %v10960
    %11534 = vst [vmem:[%s11043] ss:$9 sm:$0xff] %v10961
    %11535 = vst [vmem:[%s11045] ss:$9 sm:$0xff] %v10962
    %11536 = vst [vmem:[%s11047] ss:$9 sm:$0xff] %v10963
    %11537 = vst [vmem:[%s11049] ss:$9 sm:$0xff] %v10964
    %11538 = vst [vmem:[%s11051] ss:$9 sm:$0xff] %v10965
    %v11539 = vld [vmem:[#allocation1] sm:$0xff]
    %11540 = vst [vmem:[#allocation1] ss:$9 sm:$0xff] %v10966
    %11541 = vst [vmem:[%s11039] ss:$9 sm:$0xff] %v10967
    %11542 = vst [vmem:[%s11041] ss:$9 sm:$0xff] %v10968
    %11543 = vst [vmem:[%s11043] ss:$9 sm:$0xff] %v10969
    %11544 = vst [vmem:[%s11045] ss:$9 sm:$0xff] %v10970
    %11545 = vst [vmem:[%s11047] ss:$9 sm:$0xff] %v10971
    %11546 = vst [vmem:[%s11049] ss:$9 sm:$0xff] %v10972
    %11547 = vst [vmem:[%s11051] ss:$9 sm:$0xff] %v10973
    %v11548 = vld [vmem:[#allocation1] sm:$0xff]
    %11549 = vst [vmem:[#allocation1] ss:$9 sm:$0xff] %v10974
    %11550 = vst [vmem:[%s11039] ss:$9 sm:$0xff] %v10975
    %11551 = vst [vmem:[%s11041] ss:$9 sm:$0xff] %v10976
    %11552 = vst [vmem:[%s11043] ss:$9 sm:$0xff] %v10977
    %11553 = vst [vmem:[%s11045] ss:$9 sm:$0xff] %v10978
    %11554 = vst [vmem:[%s11047] ss:$9 sm:$0xff] %v10979
    %11555 = vst [vmem:[%s11049] ss:$9 sm:$0xff] %v10980
    %11556 = vst [vmem:[%s11051] ss:$9 sm:$0xff] %v10981
    %v11557 = vld [vmem:[#allocation1] sm:$0xff]
    %11558 = vst [vmem:[#allocation1] ss:$9 sm:$0xff] %v10982
    %11559 = vst [vmem:[%s11039] ss:$9 sm:$0xff] %v10983
    %11560 = vst [vmem:[%s11041] ss:$9 sm:$0xff] %v10984
    %11561 = vst [vmem:[%s11043] ss:$9 sm:$0xff] %v10985
    %11562 = vst [vmem:[%s11045] ss:$9 sm:$0xff] %v10986
    %11563 = vst [vmem:[%s11047] ss:$9 sm:$0xff] %v10987
    %11564 = vst [vmem:[%s11049] ss:$9 sm:$0xff] %v10988
    %11565 = vst [vmem:[%s11051] ss:$9 sm:$0xff] %v10989
    %v11566 = vld [vmem:[#allocation1] sm:$0xff]
    %11567 = vst [vmem:[#allocation1] ss:$9 sm:$0xff] %v10990
    %11568 = vst [vmem:[%s11039] ss:$9 sm:$0xff] %v10991
    %11569 = vst [vmem:[%s11041] ss:$9 sm:$0xff] %v10992
    %11570 = vst [vmem:[%s11043] ss:$9 sm:$0xff] %v10993
    %11571 = vst [vmem:[%s11045] ss:$9 sm:$0xff] %v10994
    %11572 = vst [vmem:[%s11047] ss:$9 sm:$0xff] %v10995
    %11573 = vst [vmem:[%s11049] ss:$9 sm:$0xff] %v10996
    %11574 = vst [vmem:[%s11051] ss:$9 sm:$0xff] %v10997
    %v11575 = vld [vmem:[#allocation1] sm:$0xff]
    %11576 = vst [vmem:[#allocation1] ss:$9 sm:$0xff] %v10998
    %11577 = vst [vmem:[%s11039] ss:$9 sm:$0xff] %v10999
    %11578 = vst [vmem:[%s11041] ss:$9 sm:$0xff] %v11000
    %11579 = vst [vmem:[%s11043] ss:$9 sm:$0xff] %v11001
    %11580 = vst [vmem:[%s11045] ss:$9 sm:$0xff] %v11002
    %11581 = vst [vmem:[%s11047] ss:$9 sm:$0xff] %v11003
    %11582 = vst [vmem:[%s11049] ss:$9 sm:$0xff] %v11004
    %11583 = vst [vmem:[%s11051] ss:$9 sm:$0xff] %v11005
    %v11584 = vld [vmem:[#allocation1] sm:$0xff]
    %11585 = vst [vmem:[#allocation1] ss:$9 sm:$0xff] %v11006
    %11586 = vst [vmem:[%s11039] ss:$9 sm:$0xff] %v11007
    %11587 = vst [vmem:[%s11041] ss:$9 sm:$0xff] %v11008
    %11588 = vst [vmem:[%s11043] ss:$9 sm:$0xff] %v11009
    %11589 = vst [vmem:[%s11045] ss:$9 sm:$0xff] %v11010
    %11590 = vst [vmem:[%s11047] ss:$9 sm:$0xff] %v11011
    %11591 = vst [vmem:[%s11049] ss:$9 sm:$0xff] %v11012
    %11592 = vst [vmem:[%s11051] ss:$9 sm:$0xff] %v11013
    %v11593 = vld [vmem:[#allocation1] sm:$0xff]
    %11594 = vst [vmem:[#allocation1] ss:$9 sm:$0xff] %v11014
    %11595 = vst [vmem:[%s11039] ss:$9 sm:$0xff] %v11015
    %11596 = vst [vmem:[%s11041] ss:$9 sm:$0xff] %v11016
    %11597 = vst [vmem:[%s11043] ss:$9 sm:$0xff] %v11017
    %11598 = vst [vmem:[%s11045] ss:$9 sm:$0xff] %v11018
    %11599 = vst [vmem:[%s11047] ss:$9 sm:$0xff] %v11019
    %11600 = vst [vmem:[%s11049] ss:$9 sm:$0xff] %v11020
    %11601 = vst [vmem:[%s11051] ss:$9 sm:$0xff] %v11021
    %v11602 = vld [vmem:[#allocation1] sm:$0xff]
    %11603 = vst [vmem:[#allocation1] ss:$9 sm:$0xff] %v11022
    %11604 = vst [vmem:[%s11039] ss:$9 sm:$0xff] %v11023
    %11605 = vst [vmem:[%s11041] ss:$9 sm:$0xff] %v11024
    %11606 = vst [vmem:[%s11043] ss:$9 sm:$0xff] %v11025
    %11607 = vst [vmem:[%s11045] ss:$9 sm:$0xff] %v11026
    %11608 = vst [vmem:[%s11047] ss:$9 sm:$0xff] %v11027
    %11609 = vst [vmem:[%s11049] ss:$9 sm:$0xff] %v11028
    %11610 = vst [vmem:[%s11051] ss:$9 sm:$0xff] %v11029
    %v11611 = vld [vmem:[#allocation1] sm:$0xff]
    %11612 = vst [vmem:[#allocation1] ss:$9 sm:$0xff] %v11030
    %11613 = vst [vmem:[%s11039] ss:$9 sm:$0xff] %v11031
    %11614 = vst [vmem:[%s11041] ss:$9 sm:$0xff] %v11032
    %11615 = vst [vmem:[%s11043] ss:$9 sm:$0xff] %v11033
    %11616 = vst [vmem:[%s11045] ss:$9 sm:$0xff] %v11034
    %11617 = vst [vmem:[%s11047] ss:$9 sm:$0xff] %v11035
    %11618 = vst [vmem:[%s11049] ss:$9 sm:$0xff] %v11036
    %11619 = vst [vmem:[%s11051] ss:$9 sm:$0xff] %v11037
    %v11620 = vld [vmem:[#allocation1] sm:$0xff]
    %11621 = vset.pattern.permute.xlu0 0
    %11622 = vperm.xlu0 %11621, %v11053
    %v11623 = vpop.permute.xlu0 %11622
    %11624 = vset.pattern.permute.xlu0 0
    %11625 = vperm.xlu0 %11624, %v11062
    %v11626 = vpop.permute.xlu0 %11625
    %11627 = vset.pattern.permute.xlu0 0
    %11628 = vperm.xlu0 %11627, %v11071
    %v11629 = vpop.permute.xlu0 %11628
    %11630 = vset.pattern.permute.xlu0 0
    %11631 = vperm.xlu0 %11630, %v11080
    %v11632 = vpop.permute.xlu0 %11631
    %11633 = vset.pattern.permute.xlu0 0
    %11634 = vperm.xlu0 %11633, %v11089
    %v11635 = vpop.permute.xlu0 %11634
    %11636 = vset.pattern.permute.xlu0 0
    %11637 = vperm.xlu0 %11636, %v11098
    %v11638 = vpop.permute.xlu0 %11637
    %11639 = vset.pattern.permute.xlu0 0
    %11640 = vperm.xlu0 %11639, %v11107
    %v11641 = vpop.permute.xlu0 %11640
    %11642 = vset.pattern.permute.xlu0 0
    %11643 = vperm.xlu0 %11642, %v11116
    %v11644 = vpop.permute.xlu0 %11643
    %11645 = vset.pattern.permute.xlu0 0
    %11646 = vperm.xlu0 %11645, %v11125
    %v11647 = vpop.permute.xlu0 %11646
    %11648 = vset.pattern.permute.xlu0 0
    %11649 = vperm.xlu0 %11648, %v11134
    %v11650 = vpop.permute.xlu0 %11649
    %11651 = vset.pattern.permute.xlu0 0
    %11652 = vperm.xlu0 %11651, %v11143
    %v11653 = vpop.permute.xlu0 %11652
    %11654 = vset.pattern.permute.xlu0 0
    %11655 = vperm.xlu0 %11654, %v11152
    %v11656 = vpop.permute.xlu0 %11655
    %11657 = vset.pattern.permute.xlu0 0
    %11658 = vperm.xlu0 %11657, %v11161
    %v11659 = vpop.permute.xlu0 %11658
    %11660 = vset.pattern.permute.xlu0 0
    %11661 = vperm.xlu0 %11660, %v11170
    %v11662 = vpop.permute.xlu0 %11661
    %11663 = vset.pattern.permute.xlu0 0
    %11664 = vperm.xlu0 %11663, %v11179
    %v11665 = vpop.permute.xlu0 %11664
    %11666 = vset.pattern.permute.xlu0 0
    %11667 = vperm.xlu0 %11666, %v11188
    %v11668 = vpop.permute.xlu0 %11667
    %11669 = vset.pattern.permute.xlu0 0
    %11670 = vperm.xlu0 %11669, %v11197
    %v11671 = vpop.permute.xlu0 %11670
    %11672 = vset.pattern.permute.xlu0 0
    %11673 = vperm.xlu0 %11672, %v11206
    %v11674 = vpop.permute.xlu0 %11673
    %11675 = vset.pattern.permute.xlu0 0
    %11676 = vperm.xlu0 %11675, %v11215
    %v11677 = vpop.permute.xlu0 %11676
    %11678 = vset.pattern.permute.xlu0 0
    %11679 = vperm.xlu0 %11678, %v11224
    %v11680 = vpop.permute.xlu0 %11679
    %11681 = vset.pattern.permute.xlu0 0
    %11682 = vperm.xlu0 %11681, %v11233
    %v11683 = vpop.permute.xlu0 %11682
    %11684 = vset.pattern.permute.xlu0 0
    %11685 = vperm.xlu0 %11684, %v11242
    %v11686 = vpop.permute.xlu0 %11685
    %11687 = vset.pattern.permute.xlu0 0
    %11688 = vperm.xlu0 %11687, %v11251
    %v11689 = vpop.permute.xlu0 %11688
    %11690 = vset.pattern.permute.xlu0 0
    %11691 = vperm.xlu0 %11690, %v11260
    %v11692 = vpop.permute.xlu0 %11691
    %11693 = vset.pattern.permute.xlu0 0
    %11694 = vperm.xlu0 %11693, %v11269
    %v11695 = vpop.permute.xlu0 %11694
    %11696 = vset.pattern.permute.xlu0 0
    %11697 = vperm.xlu0 %11696, %v11278
    %v11698 = vpop.permute.xlu0 %11697
    %11699 = vset.pattern.permute.xlu0 0
    %11700 = vperm.xlu0 %11699, %v11287
    %v11701 = vpop.permute.xlu0 %11700
    %11702 = vset.pattern.permute.xlu0 0
    %11703 = vperm.xlu0 %11702, %v11296
    %v11704 = vpop.permute.xlu0 %11703
    %11705 = vset.pattern.permute.xlu0 0
    %11706 = vperm.xlu0 %11705, %v11305
    %v11707 = vpop.permute.xlu0 %11706
    %11708 = vset.pattern.permute.xlu0 0
    %11709 = vperm.xlu0 %11708, %v11314
    %v11710 = vpop.permute.xlu0 %11709
    %11711 = vset.pattern.permute.xlu0 0
    %11712 = vperm.xlu0 %11711, %v11323
    %v11713 = vpop.permute.xlu0 %11712
    %11714 = vset.pattern.permute.xlu0 0
    %11715 = vperm.xlu0 %11714, %v11332
    %v11716 = vpop.permute.xlu0 %11715
    %11717 = vset.pattern.permute.xlu0 0
    %11718 = vperm.xlu0 %11717, %v11341
    %v11719 = vpop.permute.xlu0 %11718
    %11720 = vset.pattern.permute.xlu0 0
    %11721 = vperm.xlu0 %11720, %v11350
    %v11722 = vpop.permute.xlu0 %11721
    %11723 = vset.pattern.permute.xlu0 0
    %11724 = vperm.xlu0 %11723, %v11359
    %v11725 = vpop.permute.xlu0 %11724
    %11726 = vset.pattern.permute.xlu0 0
    %11727 = vperm.xlu0 %11726, %v11368
    %v11728 = vpop.permute.xlu0 %11727
    %11729 = vset.pattern.permute.xlu0 0
    %11730 = vperm.xlu0 %11729, %v11377
    %v11731 = vpop.permute.xlu0 %11730
    %11732 = vset.pattern.permute.xlu0 0
    %11733 = vperm.xlu0 %11732, %v11386
    %v11734 = vpop.permute.xlu0 %11733
    %11735 = vset.pattern.permute.xlu0 0
    %11736 = vperm.xlu0 %11735, %v11395
    %v11737 = vpop.permute.xlu0 %11736
    %11738 = vset.pattern.permute.xlu0 0
    %11739 = vperm.xlu0 %11738, %v11404
    %v11740 = vpop.permute.xlu0 %11739
    %11741 = vset.pattern.permute.xlu0 0
    %11742 = vperm.xlu0 %11741, %v11413
    %v11743 = vpop.permute.xlu0 %11742
    %11744 = vset.pattern.permute.xlu0 0
    %11745 = vperm.xlu0 %11744, %v11422
    %v11746 = vpop.permute.xlu0 %11745
    %11747 = vset.pattern.permute.xlu0 0
    %11748 = vperm.xlu0 %11747, %v11431
    %v11749 = vpop.permute.xlu0 %11748
    %11750 = vset.pattern.permute.xlu0 0
    %11751 = vperm.xlu0 %11750, %v11440
    %v11752 = vpop.permute.xlu0 %11751
    %11753 = vset.pattern.permute.xlu0 0
    %11754 = vperm.xlu0 %11753, %v11449
    %v11755 = vpop.permute.xlu0 %11754
    %11756 = vset.pattern.permute.xlu0 0
    %11757 = vperm.xlu0 %11756, %v11458
    %v11758 = vpop.permute.xlu0 %11757
    %11759 = vset.pattern.permute.xlu0 0
    %11760 = vperm.xlu0 %11759, %v11467
    %v11761 = vpop.permute.xlu0 %11760
    %11762 = vset.pattern.permute.xlu0 0
    %11763 = vperm.xlu0 %11762, %v11476
    %v11764 = vpop.permute.xlu0 %11763
    %11765 = vset.pattern.permute.xlu0 0
    %11766 = vperm.xlu0 %11765, %v11485
    %v11767 = vpop.permute.xlu0 %11766
    %11768 = vset.pattern.permute.xlu0 0
    %11769 = vperm.xlu0 %11768, %v11494
    %v11770 = vpop.permute.xlu0 %11769
    %11771 = vset.pattern.permute.xlu0 0
    %11772 = vperm.xlu0 %11771, %v11503
    %v11773 = vpop.permute.xlu0 %11772
    %11774 = vset.pattern.permute.xlu0 0
    %11775 = vperm.xlu0 %11774, %v11512
    %v11776 = vpop.permute.xlu0 %11775
    %11777 = vset.pattern.permute.xlu0 0
    %11778 = vperm.xlu0 %11777, %v11521
    %v11779 = vpop.permute.xlu0 %11778
    %11780 = vset.pattern.permute.xlu0 0
    %11781 = vperm.xlu0 %11780, %v11530
    %v11782 = vpop.permute.xlu0 %11781
    %11783 = vset.pattern.permute.xlu0 0
    %11784 = vperm.xlu0 %11783, %v11539
    %v11785 = vpop.permute.xlu0 %11784
    %11786 = vset.pattern.permute.xlu0 0
    %11787 = vperm.xlu0 %11786, %v11548
    %v11788 = vpop.permute.xlu0 %11787
    %11789 = vset.pattern.permute.xlu0 0
    %11790 = vperm.xlu0 %11789, %v11557
    %v11791 = vpop.permute.xlu0 %11790
    %11792 = vset.pattern.permute.xlu0 0
    %11793 = vperm.xlu0 %11792, %v11566
    %v11794 = vpop.permute.xlu0 %11793
    %11795 = vset.pattern.permute.xlu0 0
    %11796 = vperm.xlu0 %11795, %v11575
    %v11797 = vpop.permute.xlu0 %11796
    %11798 = vset.pattern.permute.xlu0 0
    %11799 = vperm.xlu0 %11798, %v11584
    %v11800 = vpop.permute.xlu0 %11799
    %11801 = vset.pattern.permute.xlu0 0
    %11802 = vperm.xlu0 %11801, %v11593
    %v11803 = vpop.permute.xlu0 %11802
    %11804 = vset.pattern.permute.xlu0 0
    %11805 = vperm.xlu0 %11804, %v11602
    %v11806 = vpop.permute.xlu0 %11805
    %11807 = vset.pattern.permute.xlu0 0
    %11808 = vperm.xlu0 %11807, %v11611
    %v11809 = vpop.permute.xlu0 %11808
    %11810 = vset.pattern.permute.xlu0 0
    %11811 = vperm.xlu0 %11810, %v11620
    %v11812 = vpop.permute.xlu0 %11811
    %v11813 = vlaneseq
    %v11814 = vand.u32 %v11813, 127
    %v11815 = vperm.slane %v11623, %v11814
    %v11816 = vadd.s32 %v11814, 4294967288
    %v11817 = vperm.slane %v11626, %v11816
    %vm11818 = vcmask 130112
    %v11819 = vsel %vm11818, %v11817, %v11815
    %v11820 = vadd.s32 %v11814, 4294967280
    %v11821 = vperm.slane %v11629, %v11820
    %vm11822 = vcmask 195712
    %v11823 = vsel %vm11822, %v11821, %v11819
    %v11824 = vadd.s32 %v11814, 4294967272
    %v11825 = vperm.slane %v11632, %v11824
    %vm11826 = vcmask 261312
    %v11827 = vsel %vm11826, %v11825, %v11823
    %v11828 = vadd.s32 %v11814, 4294967264
    %v11829 = vperm.slane %v11635, %v11828
    %vm11830 = vcmask 326912
    %v11831 = vsel %vm11830, %v11829, %v11827
    %v11832 = vadd.s32 %v11814, 4294967256
    %v11833 = vperm.slane %v11638, %v11832
    %vm11834 = vcmask 392512
    %v11835 = vsel %vm11834, %v11833, %v11831
    %v11836 = vadd.s32 %v11814, 4294967248
    %v11837 = vperm.slane %v11641, %v11836
    %vm11838 = vcmask 458112
    %v11839 = vsel %vm11838, %v11837, %v11835
    %v11840 = vadd.s32 %v11814, 4294967240
    %v11841 = vperm.slane %v11644, %v11840
    %vm11842 = vcmask 523712
    %v11843 = vsel %vm11842, %v11841, %v11839
    %v11844 = vadd.s32 %v11814, 4294967232
    %v11845 = vperm.slane %v11647, %v11844
    %vm11846 = vcmask 589312
    %v11847 = vsel %vm11846, %v11845, %v11843
    %v11848 = vadd.s32 %v11814, 4294967224
    %v11849 = vperm.slane %v11650, %v11848
    %vm11850 = vcmask 654912
    %v11851 = vsel %vm11850, %v11849, %v11847
    %v11852 = vadd.s32 %v11814, 4294967216
    %v11853 = vperm.slane %v11653, %v11852
    %vm11854 = vcmask 720512
    %v11855 = vsel %vm11854, %v11853, %v11851
    %v11856 = vadd.s32 %v11814, 4294967208
    %v11857 = vperm.slane %v11656, %v11856
    %vm11858 = vcmask 786112
    %v11859 = vsel %vm11858, %v11857, %v11855
    %v11860 = vadd.s32 %v11814, 4294967200
    %v11861 = vperm.slane %v11659, %v11860
    %vm11862 = vcmask 851712
    %v11863 = vsel %vm11862, %v11861, %v11859
    %v11864 = vadd.s32 %v11814, 4294967192
    %v11865 = vperm.slane %v11662, %v11864
    %vm11866 = vcmask 917312
    %v11867 = vsel %vm11866, %v11865, %v11863
    %v11868 = vadd.s32 %v11814, 4294967184
    %v11869 = vperm.slane %v11665, %v11868
    %vm11870 = vcmask 982912
    %v11871 = vsel %vm11870, %v11869, %v11867
    %v11872 = vadd.s32 %v11814, 4294967176
    %v11873 = vperm.slane %v11668, %v11872
    %vm11874 = vcmask 1048512
    %v11875 = vsel %vm11874, %v11873, %v11871
    %v11876 = vperm.slane %v11671, %v11814
    %v11877 = vperm.slane %v11674, %v11816
    %v11878 = vsel %vm11818, %v11877, %v11876
    %v11879 = vperm.slane %v11677, %v11820
    %v11880 = vsel %vm11822, %v11879, %v11878
    %v11881 = vperm.slane %v11680, %v11824
    %v11882 = vsel %vm11826, %v11881, %v11880
    %v11883 = vperm.slane %v11683, %v11828
    %v11884 = vsel %vm11830, %v11883, %v11882
    %v11885 = vperm.slane %v11686, %v11832
    %v11886 = vsel %vm11834, %v11885, %v11884
    %v11887 = vperm.slane %v11689, %v11836
    %v11888 = vsel %vm11838, %v11887, %v11886
    %v11889 = vperm.slane %v11692, %v11840
    %v11890 = vsel %vm11842, %v11889, %v11888
    %v11891 = vperm.slane %v11695, %v11844
    %v11892 = vsel %vm11846, %v11891, %v11890
    %v11893 = vperm.slane %v11698, %v11848
    %v11894 = vsel %vm11850, %v11893, %v11892
    %v11895 = vperm.slane %v11701, %v11852
    %v11896 = vsel %vm11854, %v11895, %v11894
    %v11897 = vperm.slane %v11704, %v11856
    %v11898 = vsel %vm11858, %v11897, %v11896
    %v11899 = vperm.slane %v11707, %v11860
    %v11900 = vsel %vm11862, %v11899, %v11898
    %v11901 = vperm.slane %v11710, %v11864
    %v11902 = vsel %vm11866, %v11901, %v11900
    %v11903 = vperm.slane %v11713, %v11868
    %v11904 = vsel %vm11870, %v11903, %v11902
    %v11905 = vperm.slane %v11716, %v11872
    %v11906 = vsel %vm11874, %v11905, %v11904
    %v11907 = vperm.slane %v11719, %v11814
    %v11908 = vperm.slane %v11722, %v11816
    %v11909 = vsel %vm11818, %v11908, %v11907
    %v11910 = vperm.slane %v11725, %v11820
    %v11911 = vsel %vm11822, %v11910, %v11909
    %v11912 = vperm.slane %v11728, %v11824
    %v11913 = vsel %vm11826, %v11912, %v11911
    %v11914 = vperm.slane %v11731, %v11828
    %v11915 = vsel %vm11830, %v11914, %v11913
    %v11916 = vperm.slane %v11734, %v11832
    %v11917 = vsel %vm11834, %v11916, %v11915
    %v11918 = vperm.slane %v11737, %v11836
    %v11919 = vsel %vm11838, %v11918, %v11917
    %v11920 = vperm.slane %v11740, %v11840
    %v11921 = vsel %vm11842, %v11920, %v11919
    %v11922 = vperm.slane %v11743, %v11844
    %v11923 = vsel %vm11846, %v11922, %v11921
    %v11924 = vperm.slane %v11746, %v11848
    %v11925 = vsel %vm11850, %v11924, %v11923
    %v11926 = vperm.slane %v11749, %v11852
    %v11927 = vsel %vm11854, %v11926, %v11925
    %v11928 = vperm.slane %v11752, %v11856
    %v11929 = vsel %vm11858, %v11928, %v11927
    %v11930 = vperm.slane %v11755, %v11860
    %v11931 = vsel %vm11862, %v11930, %v11929
    %v11932 = vperm.slane %v11758, %v11864
    %v11933 = vsel %vm11866, %v11932, %v11931
    %v11934 = vperm.slane %v11761, %v11868
    %v11935 = vsel %vm11870, %v11934, %v11933
    %v11936 = vperm.slane %v11764, %v11872
    %v11937 = vsel %vm11874, %v11936, %v11935
    %v11938 = vperm.slane %v11767, %v11814
    %v11939 = vperm.slane %v11770, %v11816
    %v11940 = vsel %vm11818, %v11939, %v11938
    %v11941 = vperm.slane %v11773, %v11820
    %v11942 = vsel %vm11822, %v11941, %v11940
    %v11943 = vperm.slane %v11776, %v11824
    %v11944 = vsel %vm11826, %v11943, %v11942
    %v11945 = vperm.slane %v11779, %v11828
    %v11946 = vsel %vm11830, %v11945, %v11944
    %v11947 = vperm.slane %v11782, %v11832
    %v11948 = vsel %vm11834, %v11947, %v11946
    %v11949 = vperm.slane %v11785, %v11836
    %v11950 = vsel %vm11838, %v11949, %v11948
    %v11951 = vperm.slane %v11788, %v11840
    %v11952 = vsel %vm11842, %v11951, %v11950
    %v11953 = vperm.slane %v11791, %v11844
    %v11954 = vsel %vm11846, %v11953, %v11952
    %v11955 = vperm.slane %v11794, %v11848
    %v11956 = vsel %vm11850, %v11955, %v11954
    %v11957 = vperm.slane %v11797, %v11852
    %v11958 = vsel %vm11854, %v11957, %v11956
    %v11959 = vperm.slane %v11800, %v11856
    %v11960 = vsel %vm11858, %v11959, %v11958
    %v11961 = vperm.slane %v11803, %v11860
    %v11962 = vsel %vm11862, %v11961, %v11960
    %v11963 = vperm.slane %v11806, %v11864
    %v11964 = vsel %vm11866, %v11963, %v11962
    %v11965 = vperm.slane %v11809, %v11868
    %v11966 = vsel %vm11870, %v11965, %v11964
    %v11967 = vperm.slane %v11812, %v11872
    %v11968 = vsel %vm11874, %v11967, %v11966
    %v11969 = vrot.slane %v11906, 7
    %v11970 = vrot.slane %v11937, 6
    %v11971 = vrot.slane %v11968, 5
    %vm11972 = vcmask 1040384
    %v11973 = vsel %vm11972, %v11875, %v11969
    %vm11974 = vcmask 1042434
    %v11975 = vsel %vm11974, %v11970, %v11971
    %vm11976 = vcmask 1041408
    %v11977 = vsel %vm11976, %v11973, %v11975
    %v11979 = vlaneseq
    %vm11980 = vcmp.ge.s32.totalorder %v11979, 0
    %vm11981 = vcmp.lt.s32.totalorder %v11979, 512
    %vm11982 = vmand %vm11980, %vm11981
    %11983 = vst.msk [vmem:[#allocation6] sm:$0xf] %vm11982, %v11977
    // Predicated region
    $region34: #{fpn_forward.1} parent=1 // pred_check
      _
    $region35: #{fpn_forward.1} parent=1 // pred_check_branch
      %11985 = sbr.rel (0) target = $region37
    $region36: #{fpn_forward.1} parent=1 // pred_region
      %11987 = vsyncadd [#allocation5], 0
      %s11989 = sshll.u32 [#allocation6], 4
      %s11990 = int_to_ptr.vmem [resolvable:$true] %s11989
      %s11991 = sshll.u32 %s7, 4
      %s11992 = int_to_ptr.hbm [resolvable:$true] %s11991
      %11994 = dma.vmem_to_hbm [thread:$0]  %s11990, 64, %s11992, [#allocation5]
    $region37: #{fpn_forward.1} parent=1 // pred_fallthru
      _
    // Predicated region
    $region38: #{fpn_forward.1} parent=1 // pred_check
      _
    $region39: #{fpn_forward.1} parent=1 // pred_check_branch
      %11996 = sbr.rel (0) target = $region41
    $region40: #{fpn_forward.1} parent=1 // pred_region
      %11998 = dma.done [#allocation5], 64
    $region41: #{fpn_forward.1} parent=1 // pred_fallthru
      _
    %11999 = vsyncpa [#allocation4], 1
    %12000 = vsyncpa [#allocation5], 1

</llo_original>
